<compile_context>
chip_gen: v7x
topology: tpu7x:2x2x1
jax: 0.10.0
libtpu: 0.0.40
codegen_flags: <defaults>
</compile_context>

<pallas_src>
import jax
import jax.numpy as jnp
from jax import lax
from jax.experimental import pallas as pl
from jax.experimental.pallas import tpu as pltpu


def _round_up(x, m):
    return (x + m - 1) // m * m


# ----------------------------------------------------------------------------
# Kernel A: conv1 (k=8,s=4) + ReLU + conv2 (k=4,s=2) + ReLU, one sample / step.
# Both convolutions are expressed as k=2, stride-1 convolutions on
# space-to-depth inputs, so im2col is unit-stride slicing + lane concat.
# ----------------------------------------------------------------------------
def _conv_tower_kernel(x_ref, w1_ref, b1_ref, w2_ref, b2_ref, o_ref,
                       patch1_ref, h1_ref, patch2_ref):
    # x_ref block: (1, 44, 11, 16*Cin) bf16 where
    #   dim1 index = (row_parity*2 + col_parity)*11 + block_row
    #   lane dim   = stride-4 space-to-depth channels (r%4, c%4, Cin)
    n1 = w1_ref.shape[1]                 # 16 conv1 output channels

    # conv1: computed separately per output-parity class (r2, c2) so that the
    # result lands directly in the s2d(2) layout conv2 consumes.
    for r2 in range(2):
        for c2 in range(2):
            # Build the (100, 4*16*Cin) im2col matrix for this parity class.
            for a in range(10):
                parts = []
                for p in range(2):
                    u = r2 + p
                    pr, oa = u % 2, u // 2
                    for q in range(2):
                        v = c2 + q
                        pc, ob = v % 2, v // 2
                        row = (pr * 2 + pc) * 11 + oa + a
                        parts.append(x_ref[0, row, ob:ob + 10, :])    # (10, 16*Cin)
                patch1_ref[a * 10:(a + 1) * 10, :] = jnp.concatenate(parts, axis=-1)
            h = jnp.dot(patch1_ref[...], w1_ref[...],
                        preferred_element_type=jnp.float32)           # (100, 16)
            h = jnp.maximum(h + b1_ref[...], 0.0)
            c0 = (r2 * 2 + c2) * n1
            h1_ref[:, c0:c0 + n1] = h.astype(h1_ref.dtype)

    # conv2 == k=2, s=1 conv on the (10, 10, 64) s2d layout held in h1_ref
    # (row = block_row*10 + block_col, 64 chans = (r2, c2, conv1_chan)).
    for oi in range(9):
        parts = []
        for bi in range(2):
            for bj in range(2):
                start = (oi + bi) * 10 + bj
                parts.append(h1_ref[start:start + 9, :])              # (9, 64)
        patch2_ref[oi * 9:(oi + 1) * 9, :] = jnp.concatenate(parts, axis=-1)
    h2 = jnp.dot(patch2_ref[...], w2_ref[...],
                 preferred_element_type=jnp.float32)                  # (81, 32)
    h2 = jnp.maximum(h2 + b2_ref[...], 0.0)
    o_ref[0] = h2.astype(o_ref.dtype)


# ----------------------------------------------------------------------------
# Kernel B: fc1 (2688 -> 256) + ReLU + fc2 (256 -> 128-padded), one M-tile/step.
# ----------------------------------------------------------------------------
def _mlp_kernel(f_ref, w3_ref, b3_ref, w4_ref, b4_ref, o_ref):
    h = jnp.dot(f_ref[...], w3_ref[...], preferred_element_type=jnp.float32)
    h = jnp.maximum(h + b3_ref[...], 0.0).astype(jnp.bfloat16)        # (tm, 256)
    q = jnp.dot(h, w4_ref[...], preferred_element_type=jnp.float32)   # (tm, 128)
    o_ref[...] = q + b4_ref[...]


# ----------------------------------------------------------------------------
# Host-side (XLA) layout plumbing: pure reshapes/transposes/pads, tiny.
# ----------------------------------------------------------------------------
def _space_to_depth_parity(x_nchw):
    """NCHW (B, C, 84, 84) -> (B, 44, 11, 16*C) bf16 for the conv kernel."""
    B, C, H, W = x_nchw.shape
    assert H == 84 and W == 84, "hardcoded Linear(32*9*9) requires 84x84 input"
    x = jnp.transpose(x_nchw, (0, 2, 3, 1))                         # (B,84,84,C)
    # stride-4 space-to-depth: channel order (row%4, col%4, Cin)
    x = (x.reshape(B, 21, 4, 21, 4, C)
          .transpose(0, 1, 3, 2, 4, 5)
          .reshape(B, 21, 21, 16 * C))
    # split the 21x21 block grid by parity; pad 21 -> 22 so both parity planes
    # have 11 rows/cols (the pad row/col is never read by the kernel).
    x = jnp.pad(x, ((0, 0), (0, 1), (0, 1), (0, 0)))                # (B,22,22,.)
    x = (x.reshape(B, 11, 2, 11, 2, 16 * C)
          .transpose(0, 2, 4, 1, 3, 5)                              # (B,2,2,11,11,.)
          .reshape(B, 44, 11, 16 * C))
    return x.astype(jnp.bfloat16)


def _permute_conv_weights(params):
    w1 = params["w1"]                                               # (8,8,C,16)
    C = w1.shape[2]
    w1p = (w1.reshape(2, 4, 2, 4, C, 16)      # (p, r%4, q, c%4, Cin, Cout)
             .transpose(0, 2, 1, 3, 4, 5)     # (p, q, r%4, c%4, Cin, Cout)
             .reshape(64 * C, 16).astype(jnp.bfloat16))
    w2 = params["w2"]                                               # (4,4,16,32)
    w2p = (w2.reshape(2, 2, 2, 2, 16, 32)     # (bi, r2, bj, c2, C1, Cout)
             .transpose(0, 2, 1, 3, 4, 5)     # (bi, bj, r2, c2, C1, Cout)
             .reshape(256, 32).astype(jnp.bfloat16))
    return w1p, w2p


@jax.jit
def dqn_forward(params, x_nchw):
    B, C = x_nchw.shape[0], x_nchw.shape[1]
    n_actions = params["w4"].shape[1]
    kkc = 64 * C                                   # conv1 im2col width (8*8*C)

    # ---- fused conv tower -------------------------------------------------
    x_par = _space_to_depth_parity(x_nchw)         # (B, 44, 11, 16C) bf16
    w1p, w2p = _permute_conv_weights(params)
    b1 = params["b1"].reshape(1, -1).astype(jnp.float32)
    b2 = params["b2"].reshape(1, -1).astype(jnp.float32)

    conv_out = pl.pallas_call(
        _conv_tower_kernel,
        out_shape=jax.ShapeDtypeStruct((B, 81, 32), jnp.bfloat16),
        grid_spec=pltpu.PrefetchScalarGridSpec(
            num_scalar_prefetch=0,
            grid=(B,),
            in_specs=[
                pl.BlockSpec((1, 44, 11, 16 * C), lambda b: (b, 0, 0, 0)),
                pl.BlockSpec(w1p.shape, lambda b: (0, 0)),
                pl.BlockSpec(b1.shape, lambda b: (0, 0)),
                pl.BlockSpec(w2p.shape, lambda b: (0, 0)),
                pl.BlockSpec(b2.shape, lambda b: (0, 0)),
            ],
            out_specs=pl.BlockSpec((1, 81, 32), lambda b: (b, 0, 0)),
            scratch_shapes=[
                pltpu.VMEM((100, kkc), jnp.bfloat16),   # conv1 im2col (1 parity)
                pltpu.VMEM((100, 64), jnp.bfloat16),    # conv1 out, s2d(2) layout
                pltpu.VMEM((81, 256), jnp.bfloat16),    # conv2 im2col
            ],
        ),
        compiler_params=pltpu.CompilerParams(
            dimension_semantics=("parallel",),
            vmem_limit_bytes=32 * 1024 * 1024),
    )(x_par, w1p, b1, w2p, b2)

    # ---- fused MLP (fc1 + fc2) ---------------------------------------------
    k_raw = 81 * 32                                # 2592
    k_pad = _round_up(k_raw, 128)                  # 2688 (MXU-friendly K)
    m_pad = _round_up(max(B, 8), 8)                # sublane-dense M
    tile_m = m_pad if m_pad <= 256 else 256
    m_pad = _round_up(m_pad, tile_m)
    n_pad = _round_up(max(n_actions, 128), 128)    # lane-dense fc2 output

    feats = conv_out.reshape(B, k_raw)             # free row-major flatten
    feats = jnp.pad(feats, ((0, m_pad - B), (0, k_pad - k_raw)))
    w3p = jnp.pad(params["w3"], ((0, k_pad - k_raw), (0, 0))).astype(jnp.bfloat16)
    b3 = params["b3"].reshape(1, -1).astype(jnp.float32)
    w4p = jnp.pad(params["w4"], ((0, 0), (0, n_pad - n_actions))).astype(jnp.bfloat16)
    b4p = jnp.pad(params["b4"], (0, n_pad - n_actions)).reshape(1, -1).astype(jnp.float32)

    q_pad = pl.pallas_call(
        _mlp_kernel,
        out_shape=jax.ShapeDtypeStruct((m_pad, n_pad), jnp.float32),
        grid_spec=pltpu.PrefetchScalarGridSpec(
            num_scalar_prefetch=0,
            grid=(m_pad // tile_m,),
            in_specs=[
                pl.BlockSpec((tile_m, k_pad), lambda i: (i, 0)),
                pl.BlockSpec((k_pad, 256), lambda i: (0, 0)),
                pl.BlockSpec((1, 256), lambda i: (0, 0)),
                pl.BlockSpec((256, n_pad), lambda i: (0, 0)),
                pl.BlockSpec((1, n_pad), lambda i: (0, 0)),
            ],
            out_specs=pl.BlockSpec((tile_m, n_pad), lambda i: (i, 0)),
        ),
        compiler_params=pltpu.CompilerParams(
            dimension_semantics=("parallel",),
            vmem_limit_bytes=32 * 1024 * 1024),
    )(feats, w3p, b3, w4p, b4p)

    return q_pad[:B, :n_actions]


# ----------------------------------------------------------------------------
# Pure-JAX reference with the same bf16-input / f32-accumulate math.
# ----------------------------------------------------------------------------
def dqn_reference(params, x_nchw):
    bf = jnp.bfloat16
    x = jnp.transpose(x_nchw, (0, 2, 3, 1)).astype(bf)
    y = lax.conv_general_dilated(
        x, params["w1"].astype(bf), window_strides=(4, 4), padding="VALID",
        dimension_numbers=("NHWC", "HWIO", "NHWC"),
        preferred_element_type=jnp.float32)
    y = jax.nn.relu(y + params["b1"]).astype(bf)
    y = lax.conv_general_dilated(
        y, params["w2"].astype(bf), window_strides=(2, 2), padding="VALID",
        dimension_numbers=("NHWC", "HWIO", "NHWC"),
        preferred_element_type=jnp.float32)
    y = jax.nn.relu(y + params["b2"]).astype(bf)
    y = y.reshape(y.shape[0], -1)                      # (H, W, C) flatten
    h = jnp.dot(y, params["w3"].astype(bf), preferred_element_type=jnp.float32)
    h = jax.nn.relu(h + params["b3"]).astype(bf)
    q = jnp.dot(h, params["w4"].astype(bf), preferred_element_type=jnp.float32)
    return q + params["b4"]


def init_params(key, in_channels, n_actions):
    ks = jax.random.split(key, 8)

    def u(k, shape, fan_in):
        bound = 1.0 / jnp.sqrt(float(fan_in))
        return jax.random.uniform(k, shape, jnp.float32, -bound, bound)

    return dict(
        w1=u(ks[0], (8, 8, in_channels, 16), in_channels * 8 * 8),
        b1=u(ks[1], (16,), in_channels * 8 * 8),
        w2=u(ks[2], (4, 4, 16, 32), 16 * 4 * 4),
        b2=u(ks[3], (32,), 16 * 4 * 4),
        w3=u(ks[4], (32 * 9 * 9, 256), 32 * 9 * 9),   # rows in (H, W, C) order
        b3=u(ks[5], (256,), 32 * 9 * 9),
        w4=u(ks[6], (256, n_actions), 256),
        b4=u(ks[7], (n_actions,), 256),
    )


if __name__ == "__main__":
    key = jax.random.PRNGKey(0)
    pkey, xkey = jax.random.split(key)

    batch, in_channels, n_actions = 2, 4, 6
    params = init_params(pkey, in_channels, n_actions)
    # 84x84 spatial input is required by the hardcoded 32*9*9 Linear size.
    x = jax.random.uniform(xkey, (batch, in_channels, 84, 84), jnp.float32)

    q = jax.block_until_ready(dqn_forward(params, x))
    q_ref = dqn_reference(params, x)

    assert q.shape == (batch, n_actions)
    assert jnp.allclose(q, q_ref, rtol=1e-2, atol=1e-2), "mismatch vs JAX reference"
    print("KERNEL_OK")
</pallas_src>

<mosaic_0001>
module attributes {stable_mosaic.version = 11 : i64} {
  func.func @_conv_tower_kernel(%arg0: i32, %arg1: memref<1x44x11x64xbf16, #tpu.memory_space<vmem>>, %arg2: memref<256x16xbf16, #tpu.memory_space<vmem>>, %arg3: memref<1x16xf32, #tpu.memory_space<vmem>>, %arg4: memref<256x32xbf16, #tpu.memory_space<vmem>>, %arg5: memref<1x32xf32, #tpu.memory_space<vmem>>, %arg6: memref<1x81x32xbf16, #tpu.memory_space<vmem>>, %arg7: memref<100x256xbf16, #tpu.memory_space<vmem>>, %arg8: memref<100x64xbf16, #tpu.memory_space<vmem>>, %arg9: memref<81x256xbf16, #tpu.memory_space<vmem>>) attributes {dimension_semantics = [#tpu.dimension_semantics<parallel>], iteration_bounds = array<i64: 2>, scalar_prefetch = 0 : i64, scratch_operands = 3 : i64, tpu.core_type = #tpu.core_type<tc>, window_params = [{transform_indices = @transform_0, window_bounds = array<i64: 1, 44, 11, 64>}, {pipeline_mode = #tpu.pipeline_mode<synchronous>, transform_indices = @transform_1, window_bounds = array<i64: 256, 16>}, {pipeline_mode = #tpu.pipeline_mode<synchronous>, transform_indices = @transform_2, window_bounds = array<i64: 1, 16>}, {pipeline_mode = #tpu.pipeline_mode<synchronous>, transform_indices = @transform_3, window_bounds = array<i64: 256, 32>}, {pipeline_mode = #tpu.pipeline_mode<synchronous>, transform_indices = @transform_4, window_bounds = array<i64: 1, 32>}, {transform_indices = @transform_5, window_bounds = array<i64: 1, 81, 32>}]} {
    %c0 = arith.constant 0 : index
    %c0_0 = arith.constant 0 : index
    %c0_1 = arith.constant 0 : index
    %c0_2 = arith.constant 0 : index
    %0 = vector.load %arg1[%c0, %c0_0, %c0_1, %c0_2] : memref<1x44x11x64xbf16, #tpu.memory_space<vmem>>, vector<1x1x10x64xbf16>
    %1 = vector.shape_cast %0 : vector<1x1x10x64xbf16> to vector<10x64xbf16>
    %c0_3 = arith.constant 0 : index
    %c11 = arith.constant 11 : index
    %c0_4 = arith.constant 0 : index
    %c0_5 = arith.constant 0 : index
    %2 = vector.load %arg1[%c0_3, %c11, %c0_4, %c0_5] : memref<1x44x11x64xbf16, #tpu.memory_space<vmem>>, vector<1x1x10x64xbf16>
    %3 = vector.shape_cast %2 : vector<1x1x10x64xbf16> to vector<10x64xbf16>
    %c0_6 = arith.constant 0 : index
    %c22 = arith.constant 22 : index
    %c0_7 = arith.constant 0 : index
    %c0_8 = arith.constant 0 : index
    %4 = vector.load %arg1[%c0_6, %c22, %c0_7, %c0_8] : memref<1x44x11x64xbf16, #tpu.memory_space<vmem>>, vector<1x1x10x64xbf16>
    %5 = vector.shape_cast %4 : vector<1x1x10x64xbf16> to vector<10x64xbf16>
    %c0_9 = arith.constant 0 : index
    %c33 = arith.constant 33 : index
    %c0_10 = arith.constant 0 : index
    %c0_11 = arith.constant 0 : index
    %6 = vector.load %arg1[%c0_9, %c33, %c0_10, %c0_11] : memref<1x44x11x64xbf16, #tpu.memory_space<vmem>>, vector<1x1x10x64xbf16>
    %7 = vector.shape_cast %6 : vector<1x1x10x64xbf16> to vector<10x64xbf16>
    %8 = tpu.concatenate %1, %3, %5, %7 in 1 : vector<10x64xbf16>, vector<10x64xbf16>, vector<10x64xbf16>, vector<10x64xbf16> -> vector<10x256xbf16>
    %c0_12 = arith.constant 0 : index
    %c0_13 = arith.constant 0 : index
    %9 = vector.load %arg7[%c0_12, %c0_13] : memref<100x256xbf16, #tpu.memory_space<vmem>>, vector<10x256xbf16>
    tpu.vector_store %arg7[%c0_12, %c0_13], %8 {strides = array<i32>} : memref<100x256xbf16, #tpu.memory_space<vmem>>, vector<10x256xbf16>,
    %c0_14 = arith.constant 0 : index
    %c1 = arith.constant 1 : index
    %c0_15 = arith.constant 0 : index
    %c0_16 = arith.constant 0 : index
    %10 = vector.load %arg1[%c0_14, %c1, %c0_15, %c0_16] : memref<1x44x11x64xbf16, #tpu.memory_space<vmem>>, vector<1x1x10x64xbf16>
    %11 = vector.shape_cast %10 : vector<1x1x10x64xbf16> to vector<10x64xbf16>
    %c0_17 = arith.constant 0 : index
    %c12 = arith.constant 12 : index
    %c0_18 = arith.constant 0 : index
    %c0_19 = arith.constant 0 : index
    %12 = vector.load %arg1[%c0_17, %c12, %c0_18, %c0_19] : memref<1x44x11x64xbf16, #tpu.memory_space<vmem>>, vector<1x1x10x64xbf16>
    %13 = vector.shape_cast %12 : vector<1x1x10x64xbf16> to vector<10x64xbf16>
    %c0_20 = arith.constant 0 : index
    %c23 = arith.constant 23 : index
    %c0_21 = arith.constant 0 : index
    %c0_22 = arith.constant 0 : index
    %14 = vector.load %arg1[%c0_20, %c23, %c0_21, %c0_22] : memref<1x44x11x64xbf16, #tpu.memory_space<vmem>>, vector<1x1x10x64xbf16>
    %15 = vector.shape_cast %14 : vector<1x1x10x64xbf16> to vector<10x64xbf16>
    %c0_23 = arith.constant 0 : index
    %c34 = arith.constant 34 : index
    %c0_24 = arith.constant 0 : index
    %c0_25 = arith.constant 0 : index
    %16 = vector.load %arg1[%c0_23, %c34, %c0_24, %c0_25] : memref<1x44x11x64xbf16, #tpu.memory_space<vmem>>, vector<1x1x10x64xbf16>
    %17 = vector.shape_cast %16 : vector<1x1x10x64xbf16> to vector<10x64xbf16>
    %18 = tpu.concatenate %11, %13, %15, %17 in 1 : vector<10x64xbf16>, vector<10x64xbf16>, vector<10x64xbf16>, vector<10x64xbf16> -> vector<10x256xbf16>
    %c10 = arith.constant 10 : index
    %c0_26 = arith.constant 0 : index
    %19 = vector.load %arg7[%c10, %c0_26] : memref<100x256xbf16, #tpu.memory_space<vmem>>, vector<10x256xbf16>
    tpu.vector_store %arg7[%c10, %c0_26], %18 {strides = array<i32>} : memref<100x256xbf16, #tpu.memory_space<vmem>>, vector<10x256xbf16>,
    %c0_27 = arith.constant 0 : index
    %c2 = arith.constant 2 : index
    %c0_28 = arith.constant 0 : index
    %c0_29 = arith.constant 0 : index
    %20 = vector.load %arg1[%c0_27, %c2, %c0_28, %c0_29] : memref<1x44x11x64xbf16, #tpu.memory_space<vmem>>, vector<1x1x10x64xbf16>
    %21 = vector.shape_cast %20 : vector<1x1x10x64xbf16> to vector<10x64xbf16>
    %c0_30 = arith.constant 0 : index
    %c13 = arith.constant 13 : index
    %c0_31 = arith.constant 0 : index
    %c0_32 = arith.constant 0 : index
    %22 = vector.load %arg1[%c0_30, %c13, %c0_31, %c0_32] : memref<1x44x11x64xbf16, #tpu.memory_space<vmem>>, vector<1x1x10x64xbf16>
    %23 = vector.shape_cast %22 : vector<1x1x10x64xbf16> to vector<10x64xbf16>
    %c0_33 = arith.constant 0 : index
    %c24 = arith.constant 24 : index
    %c0_34 = arith.constant 0 : index
    %c0_35 = arith.constant 0 : index
    %24 = vector.load %arg1[%c0_33, %c24, %c0_34, %c0_35] : memref<1x44x11x64xbf16, #tpu.memory_space<vmem>>, vector<1x1x10x64xbf16>
    %25 = vector.shape_cast %24 : vector<1x1x10x64xbf16> to vector<10x64xbf16>
    %c0_36 = arith.constant 0 : index
    %c35 = arith.constant 35 : index
    %c0_37 = arith.constant 0 : index
    %c0_38 = arith.constant 0 : index
    %26 = vector.load %arg1[%c0_36, %c35, %c0_37, %c0_38] : memref<1x44x11x64xbf16, #tpu.memory_space<vmem>>, vector<1x1x10x64xbf16>
    %27 = vector.shape_cast %26 : vector<1x1x10x64xbf16> to vector<10x64xbf16>
    %28 = tpu.concatenate %21, %23, %25, %27 in 1 : vector<10x64xbf16>, vector<10x64xbf16>, vector<10x64xbf16>, vector<10x64xbf16> -> vector<10x256xbf16>
    %c20 = arith.constant 20 : index
    %c0_39 = arith.constant 0 : index
    %29 = vector.load %arg7[%c20, %c0_39] : memref<100x256xbf16, #tpu.memory_space<vmem>>, vector<10x256xbf16>
    tpu.vector_store %arg7[%c20, %c0_39], %28 {strides = array<i32>} : memref<100x256xbf16, #tpu.memory_space<vmem>>, vector<10x256xbf16>,
    %c0_40 = arith.constant 0 : index
    %c3 = arith.constant 3 : index
    %c0_41 = arith.constant 0 : index
    %c0_42 = arith.constant 0 : index
    %30 = vector.load %arg1[%c0_40, %c3, %c0_41, %c0_42] : memref<1x44x11x64xbf16, #tpu.memory_space<vmem>>, vector<1x1x10x64xbf16>
    %31 = vector.shape_cast %30 : vector<1x1x10x64xbf16> to vector<10x64xbf16>
    %c0_43 = arith.constant 0 : index
    %c14 = arith.constant 14 : index
    %c0_44 = arith.constant 0 : index
    %c0_45 = arith.constant 0 : index
    %32 = vector.load %arg1[%c0_43, %c14, %c0_44, %c0_45] : memref<1x44x11x64xbf16, #tpu.memory_space<vmem>>, vector<1x1x10x64xbf16>
    %33 = vector.shape_cast %32 : vector<1x1x10x64xbf16> to vector<10x64xbf16>
    %c0_46 = arith.constant 0 : index
    %c25 = arith.constant 25 : index
    %c0_47 = arith.constant 0 : index
    %c0_48 = arith.constant 0 : index
    %34 = vector.load %arg1[%c0_46, %c25, %c0_47, %c0_48] : memref<1x44x11x64xbf16, #tpu.memory_space<vmem>>, vector<1x1x10x64xbf16>
    %35 = vector.shape_cast %34 : vector<1x1x10x64xbf16> to vector<10x64xbf16>
    %c0_49 = arith.constant 0 : index
    %c36 = arith.constant 36 : index
    %c0_50 = arith.constant 0 : index
    %c0_51 = arith.constant 0 : index
    %36 = vector.load %arg1[%c0_49, %c36, %c0_50, %c0_51] : memref<1x44x11x64xbf16, #tpu.memory_space<vmem>>, vector<1x1x10x64xbf16>
    %37 = vector.shape_cast %36 : vector<1x1x10x64xbf16> to vector<10x64xbf16>
    %38 = tpu.concatenate %31, %33, %35, %37 in 1 : vector<10x64xbf16>, vector<10x64xbf16>, vector<10x64xbf16>, vector<10x64xbf16> -> vector<10x256xbf16>
    %c30 = arith.constant 30 : index
    %c0_52 = arith.constant 0 : index
    %39 = vector.load %arg7[%c30, %c0_52] : memref<100x256xbf16, #tpu.memory_space<vmem>>, vector<10x256xbf16>
    tpu.vector_store %arg7[%c30, %c0_52], %38 {strides = array<i32>} : memref<100x256xbf16, #tpu.memory_space<vmem>>, vector<10x256xbf16>,
    %c0_53 = arith.constant 0 : index
    %c4 = arith.constant 4 : index
    %c0_54 = arith.constant 0 : index
    %c0_55 = arith.constant 0 : index
    %40 = vector.load %arg1[%c0_53, %c4, %c0_54, %c0_55] : memref<1x44x11x64xbf16, #tpu.memory_space<vmem>>, vector<1x1x10x64xbf16>
    %41 = vector.shape_cast %40 : vector<1x1x10x64xbf16> to vector<10x64xbf16>
    %c0_56 = arith.constant 0 : index
    %c15 = arith.constant 15 : index
    %c0_57 = arith.constant 0 : index
    %c0_58 = arith.constant 0 : index
    %42 = vector.load %arg1[%c0_56, %c15, %c0_57, %c0_58] : memref<1x44x11x64xbf16, #tpu.memory_space<vmem>>, vector<1x1x10x64xbf16>
    %43 = vector.shape_cast %42 : vector<1x1x10x64xbf16> to vector<10x64xbf16>
    %c0_59 = arith.constant 0 : index
    %c26 = arith.constant 26 : index
    %c0_60 = arith.constant 0 : index
    %c0_61 = arith.constant 0 : index
    %44 = vector.load %arg1[%c0_59, %c26, %c0_60, %c0_61] : memref<1x44x11x64xbf16, #tpu.memory_space<vmem>>, vector<1x1x10x64xbf16>
    %45 = vector.shape_cast %44 : vector<1x1x10x64xbf16> to vector<10x64xbf16>
    %c0_62 = arith.constant 0 : index
    %c37 = arith.constant 37 : index
    %c0_63 = arith.constant 0 : index
    %c0_64 = arith.constant 0 : index
    %46 = vector.load %arg1[%c0_62, %c37, %c0_63, %c0_64] : memref<1x44x11x64xbf16, #tpu.memory_space<vmem>>, vector<1x1x10x64xbf16>
    %47 = vector.shape_cast %46 : vector<1x1x10x64xbf16> to vector<10x64xbf16>
    %48 = tpu.concatenate %41, %43, %45, %47 in 1 : vector<10x64xbf16>, vector<10x64xbf16>, vector<10x64xbf16>, vector<10x64xbf16> -> vector<10x256xbf16>
    %c40 = arith.constant 40 : index
    %c0_65 = arith.constant 0 : index
    %49 = vector.load %arg7[%c40, %c0_65] : memref<100x256xbf16, #tpu.memory_space<vmem>>, vector<10x256xbf16>
    tpu.vector_store %arg7[%c40, %c0_65], %48 {strides = array<i32>} : memref<100x256xbf16, #tpu.memory_space<vmem>>, vector<10x256xbf16>,
    %c0_66 = arith.constant 0 : index
    %c5 = arith.constant 5 : index
    %c0_67 = arith.constant 0 : index
    %c0_68 = arith.constant 0 : index
    %50 = vector.load %arg1[%c0_66, %c5, %c0_67, %c0_68] : memref<1x44x11x64xbf16, #tpu.memory_space<vmem>>, vector<1x1x10x64xbf16>
    %51 = vector.shape_cast %50 : vector<1x1x10x64xbf16> to vector<10x64xbf16>
    %c0_69 = arith.constant 0 : index
    %c16 = arith.constant 16 : index
    %c0_70 = arith.constant 0 : index
    %c0_71 = arith.constant 0 : index
    %52 = vector.load %arg1[%c0_69, %c16, %c0_70, %c0_71] : memref<1x44x11x64xbf16, #tpu.memory_space<vmem>>, vector<1x1x10x64xbf16>
    %53 = vector.shape_cast %52 : vector<1x1x10x64xbf16> to vector<10x64xbf16>
    %c0_72 = arith.constant 0 : index
    %c27 = arith.constant 27 : index
    %c0_73 = arith.constant 0 : index
    %c0_74 = arith.constant 0 : index
    %54 = vector.load %arg1[%c0_72, %c27, %c0_73, %c0_74] : memref<1x44x11x64xbf16, #tpu.memory_space<vmem>>, vector<1x1x10x64xbf16>
    %55 = vector.shape_cast %54 : vector<1x1x10x64xbf16> to vector<10x64xbf16>
    %c0_75 = arith.constant 0 : index
    %c38 = arith.constant 38 : index
    %c0_76 = arith.constant 0 : index
    %c0_77 = arith.constant 0 : index
    %56 = vector.load %arg1[%c0_75, %c38, %c0_76, %c0_77] : memref<1x44x11x64xbf16, #tpu.memory_space<vmem>>, vector<1x1x10x64xbf16>
    %57 = vector.shape_cast %56 : vector<1x1x10x64xbf16> to vector<10x64xbf16>
    %58 = tpu.concatenate %51, %53, %55, %57 in 1 : vector<10x64xbf16>, vector<10x64xbf16>, vector<10x64xbf16>, vector<10x64xbf16> -> vector<10x256xbf16>
    %c50 = arith.constant 50 : index
    %c0_78 = arith.constant 0 : index
    %59 = vector.load %arg7[%c50, %c0_78] : memref<100x256xbf16, #tpu.memory_space<vmem>>, vector<10x256xbf16>
    tpu.vector_store %arg7[%c50, %c0_78], %58 {strides = array<i32>} : memref<100x256xbf16, #tpu.memory_space<vmem>>, vector<10x256xbf16>,
    %c0_79 = arith.constant 0 : index
    %c6 = arith.constant 6 : index
    %c0_80 = arith.constant 0 : index
    %c0_81 = arith.constant 0 : index
    %60 = vector.load %arg1[%c0_79, %c6, %c0_80, %c0_81] : memref<1x44x11x64xbf16, #tpu.memory_space<vmem>>, vector<1x1x10x64xbf16>
    %61 = vector.shape_cast %60 : vector<1x1x10x64xbf16> to vector<10x64xbf16>
    %c0_82 = arith.constant 0 : index
    %c17 = arith.constant 17 : index
    %c0_83 = arith.constant 0 : index
    %c0_84 = arith.constant 0 : index
    %62 = vector.load %arg1[%c0_82, %c17, %c0_83, %c0_84] : memref<1x44x11x64xbf16, #tpu.memory_space<vmem>>, vector<1x1x10x64xbf16>
    %63 = vector.shape_cast %62 : vector<1x1x10x64xbf16> to vector<10x64xbf16>
    %c0_85 = arith.constant 0 : index
    %c28 = arith.constant 28 : index
    %c0_86 = arith.constant 0 : index
    %c0_87 = arith.constant 0 : index
    %64 = vector.load %arg1[%c0_85, %c28, %c0_86, %c0_87] : memref<1x44x11x64xbf16, #tpu.memory_space<vmem>>, vector<1x1x10x64xbf16>
    %65 = vector.shape_cast %64 : vector<1x1x10x64xbf16> to vector<10x64xbf16>
    %c0_88 = arith.constant 0 : index
    %c39 = arith.constant 39 : index
    %c0_89 = arith.constant 0 : index
    %c0_90 = arith.constant 0 : index
    %66 = vector.load %arg1[%c0_88, %c39, %c0_89, %c0_90] : memref<1x44x11x64xbf16, #tpu.memory_space<vmem>>, vector<1x1x10x64xbf16>
    %67 = vector.shape_cast %66 : vector<1x1x10x64xbf16> to vector<10x64xbf16>
    %68 = tpu.concatenate %61, %63, %65, %67 in 1 : vector<10x64xbf16>, vector<10x64xbf16>, vector<10x64xbf16>, vector<10x64xbf16> -> vector<10x256xbf16>
    %c60 = arith.constant 60 : index
    %c0_91 = arith.constant 0 : index
    %69 = vector.load %arg7[%c60, %c0_91] : memref<100x256xbf16, #tpu.memory_space<vmem>>, vector<10x256xbf16>
    tpu.vector_store %arg7[%c60, %c0_91], %68 {strides = array<i32>} : memref<100x256xbf16, #tpu.memory_space<vmem>>, vector<10x256xbf16>,
    %c0_92 = arith.constant 0 : index
    %c7 = arith.constant 7 : index
    %c0_93 = arith.constant 0 : index
    %c0_94 = arith.constant 0 : index
    %70 = vector.load %arg1[%c0_92, %c7, %c0_93, %c0_94] : memref<1x44x11x64xbf16, #tpu.memory_space<vmem>>, vector<1x1x10x64xbf16>
    %71 = vector.shape_cast %70 : vector<1x1x10x64xbf16> to vector<10x64xbf16>
    %c0_95 = arith.constant 0 : index
    %c18 = arith.constant 18 : index
    %c0_96 = arith.constant 0 : index
    %c0_97 = arith.constant 0 : index
    %72 = vector.load %arg1[%c0_95, %c18, %c0_96, %c0_97] : memref<1x44x11x64xbf16, #tpu.memory_space<vmem>>, vector<1x1x10x64xbf16>
    %73 = vector.shape_cast %72 : vector<1x1x10x64xbf16> to vector<10x64xbf16>
    %c0_98 = arith.constant 0 : index
    %c29 = arith.constant 29 : index
    %c0_99 = arith.constant 0 : index
    %c0_100 = arith.constant 0 : index
    %74 = vector.load %arg1[%c0_98, %c29, %c0_99, %c0_100] : memref<1x44x11x64xbf16, #tpu.memory_space<vmem>>, vector<1x1x10x64xbf16>
    %75 = vector.shape_cast %74 : vector<1x1x10x64xbf16> to vector<10x64xbf16>
    %c0_101 = arith.constant 0 : index
    %c40_102 = arith.constant 40 : index
    %c0_103 = arith.constant 0 : index
    %c0_104 = arith.constant 0 : index
    %76 = vector.load %arg1[%c0_101, %c40_102, %c0_103, %c0_104] : memref<1x44x11x64xbf16, #tpu.memory_space<vmem>>, vector<1x1x10x64xbf16>
    %77 = vector.shape_cast %76 : vector<1x1x10x64xbf16> to vector<10x64xbf16>
    %78 = tpu.concatenate %71, %73, %75, %77 in 1 : vector<10x64xbf16>, vector<10x64xbf16>, vector<10x64xbf16>, vector<10x64xbf16> -> vector<10x256xbf16>
    %c70 = arith.constant 70 : index
    %c0_105 = arith.constant 0 : index
    %79 = vector.load %arg7[%c70, %c0_105] : memref<100x256xbf16, #tpu.memory_space<vmem>>, vector<10x256xbf16>
    tpu.vector_store %arg7[%c70, %c0_105], %78 {strides = array<i32>} : memref<100x256xbf16, #tpu.memory_space<vmem>>, vector<10x256xbf16>,
    %c0_106 = arith.constant 0 : index
    %c8 = arith.constant 8 : index
    %c0_107 = arith.constant 0 : index
    %c0_108 = arith.constant 0 : index
    %80 = vector.load %arg1[%c0_106, %c8, %c0_107, %c0_108] : memref<1x44x11x64xbf16, #tpu.memory_space<vmem>>, vector<1x1x10x64xbf16>
    %81 = vector.shape_cast %80 : vector<1x1x10x64xbf16> to vector<10x64xbf16>
    %c0_109 = arith.constant 0 : index
    %c19 = arith.constant 19 : index
    %c0_110 = arith.constant 0 : index
    %c0_111 = arith.constant 0 : index
    %82 = vector.load %arg1[%c0_109, %c19, %c0_110, %c0_111] : memref<1x44x11x64xbf16, #tpu.memory_space<vmem>>, vector<1x1x10x64xbf16>
    %83 = vector.shape_cast %82 : vector<1x1x10x64xbf16> to vector<10x64xbf16>
    %c0_112 = arith.constant 0 : index
    %c30_113 = arith.constant 30 : index
    %c0_114 = arith.constant 0 : index
    %c0_115 = arith.constant 0 : index
    %84 = vector.load %arg1[%c0_112, %c30_113, %c0_114, %c0_115] : memref<1x44x11x64xbf16, #tpu.memory_space<vmem>>, vector<1x1x10x64xbf16>
    %85 = vector.shape_cast %84 : vector<1x1x10x64xbf16> to vector<10x64xbf16>
    %c0_116 = arith.constant 0 : index
    %c41 = arith.constant 41 : index
    %c0_117 = arith.constant 0 : index
    %c0_118 = arith.constant 0 : index
    %86 = vector.load %arg1[%c0_116, %c41, %c0_117, %c0_118] : memref<1x44x11x64xbf16, #tpu.memory_space<vmem>>, vector<1x1x10x64xbf16>
    %87 = vector.shape_cast %86 : vector<1x1x10x64xbf16> to vector<10x64xbf16>
    %88 = tpu.concatenate %81, %83, %85, %87 in 1 : vector<10x64xbf16>, vector<10x64xbf16>, vector<10x64xbf16>, vector<10x64xbf16> -> vector<10x256xbf16>
    %c80 = arith.constant 80 : index
    %c0_119 = arith.constant 0 : index
    %89 = vector.load %arg7[%c80, %c0_119] : memref<100x256xbf16, #tpu.memory_space<vmem>>, vector<10x256xbf16>
    tpu.vector_store %arg7[%c80, %c0_119], %88 {strides = array<i32>} : memref<100x256xbf16, #tpu.memory_space<vmem>>, vector<10x256xbf16>,
    %c0_120 = arith.constant 0 : index
    %c9 = arith.constant 9 : index
    %c0_121 = arith.constant 0 : index
    %c0_122 = arith.constant 0 : index
    %90 = vector.load %arg1[%c0_120, %c9, %c0_121, %c0_122] : memref<1x44x11x64xbf16, #tpu.memory_space<vmem>>, vector<1x1x10x64xbf16>
    %91 = vector.shape_cast %90 : vector<1x1x10x64xbf16> to vector<10x64xbf16>
    %c0_123 = arith.constant 0 : index
    %c20_124 = arith.constant 20 : index
    %c0_125 = arith.constant 0 : index
    %c0_126 = arith.constant 0 : index
    %92 = vector.load %arg1[%c0_123, %c20_124, %c0_125, %c0_126] : memref<1x44x11x64xbf16, #tpu.memory_space<vmem>>, vector<1x1x10x64xbf16>
    %93 = vector.shape_cast %92 : vector<1x1x10x64xbf16> to vector<10x64xbf16>
    %c0_127 = arith.constant 0 : index
    %c31 = arith.constant 31 : index
    %c0_128 = arith.constant 0 : index
    %c0_129 = arith.constant 0 : index
    %94 = vector.load %arg1[%c0_127, %c31, %c0_128, %c0_129] : memref<1x44x11x64xbf16, #tpu.memory_space<vmem>>, vector<1x1x10x64xbf16>
    %95 = vector.shape_cast %94 : vector<1x1x10x64xbf16> to vector<10x64xbf16>
    %c0_130 = arith.constant 0 : index
    %c42 = arith.constant 42 : index
    %c0_131 = arith.constant 0 : index
    %c0_132 = arith.constant 0 : index
    %96 = vector.load %arg1[%c0_130, %c42, %c0_131, %c0_132] : memref<1x44x11x64xbf16, #tpu.memory_space<vmem>>, vector<1x1x10x64xbf16>
    %97 = vector.shape_cast %96 : vector<1x1x10x64xbf16> to vector<10x64xbf16>
    %98 = tpu.concatenate %91, %93, %95, %97 in 1 : vector<10x64xbf16>, vector<10x64xbf16>, vector<10x64xbf16>, vector<10x64xbf16> -> vector<10x256xbf16>
    %c90 = arith.constant 90 : index
    %c0_133 = arith.constant 0 : index
    %99 = vector.load %arg7[%c90, %c0_133] : memref<100x256xbf16, #tpu.memory_space<vmem>>, vector<10x256xbf16>
    tpu.vector_store %arg7[%c90, %c0_133], %98 {strides = array<i32>} : memref<100x256xbf16, #tpu.memory_space<vmem>>, vector<10x256xbf16>,
    %c0_134 = arith.constant 0 : index
    %c0_135 = arith.constant 0 : index
    %100 = vector.load %arg7[%c0_134, %c0_135] : memref<100x256xbf16, #tpu.memory_space<vmem>>, vector<100x256xbf16>
    %c0_136 = arith.constant 0 : index
    %c0_137 = arith.constant 0 : index
    %101 = vector.load %arg2[%c0_136, %c0_137] : memref<256x16xbf16, #tpu.memory_space<vmem>>, vector<256x16xbf16>
    %cst = arith.constant dense<0.000000e+00> : vector<100x16xf32>
    %102 = tpu.matmul %100, %101, %cst {dimension_numbers = #tpu.dot_dimension_numbers<[1], [0], [0], [1], [0, 0, 1, 1], [], []>} : vector<100x256xbf16>, vector<256x16xbf16>, vector<100x16xf32> -> vector<100x16xf32>
    %c0_138 = arith.constant 0 : index
    %c0_139 = arith.constant 0 : index
    %103 = vector.load %arg3[%c0_138, %c0_139] : memref<1x16xf32, #tpu.memory_space<vmem>>, vector<1x16xf32>
    %104 = vector.broadcast %103 : vector<1x16xf32> to vector<100x16xf32>
    %105 = arith.addf %102, %104 : vector<100x16xf32>
    %cst_140 = arith.constant 0.000000e+00 : f32
    %106 = vector.broadcast %cst_140 : f32 to vector<100x16xf32>
    %107 = arith.maximumf %105, %106 : vector<100x16xf32>
    %108 = arith.truncf %107 : vector<100x16xf32> to vector<100x16xbf16>
    %c0_141 = arith.constant 0 : index
    %c0_142 = arith.constant 0 : index
    %109 = vector.load %arg8[%c0_141, %c0_142] : memref<100x64xbf16, #tpu.memory_space<vmem>>, vector<100x16xbf16>
    tpu.vector_store %arg8[%c0_141, %c0_142], %108 {strides = array<i32>} : memref<100x64xbf16, #tpu.memory_space<vmem>>, vector<100x16xbf16>,
    %c0_143 = arith.constant 0 : index
    %c11_144 = arith.constant 11 : index
    %c0_145 = arith.constant 0 : index
    %c0_146 = arith.constant 0 : index
    %110 = vector.load %arg1[%c0_143, %c11_144, %c0_145, %c0_146] : memref<1x44x11x64xbf16, #tpu.memory_space<vmem>>, vector<1x1x10x64xbf16>
    %111 = vector.shape_cast %110 : vector<1x1x10x64xbf16> to vector<10x64xbf16>
    %c0_147 = arith.constant 0 : index
    %c0_148 = arith.constant 0 : index
    %c1_149 = arith.constant 1 : index
    %c0_150 = arith.constant 0 : index
    %112 = vector.load %arg1[%c0_147, %c0_148, %c1_149, %c0_150] : memref<1x44x11x64xbf16, #tpu.memory_space<vmem>>, vector<1x1x10x64xbf16>
    %113 = vector.shape_cast %112 : vector<1x1x10x64xbf16> to vector<10x64xbf16>
    %c0_151 = arith.constant 0 : index
    %c33_152 = arith.constant 33 : index
    %c0_153 = arith.constant 0 : index
    %c0_154 = arith.constant 0 : index
    %114 = vector.load %arg1[%c0_151, %c33_152, %c0_153, %c0_154] : memref<1x44x11x64xbf16, #tpu.memory_space<vmem>>, vector<1x1x10x64xbf16>
    %115 = vector.shape_cast %114 : vector<1x1x10x64xbf16> to vector<10x64xbf16>
    %c0_155 = arith.constant 0 : index
    %c22_156 = arith.constant 22 : index
    %c1_157 = arith.constant 1 : index
    %c0_158 = arith.constant 0 : index
    %116 = vector.load %arg1[%c0_155, %c22_156, %c1_157, %c0_158] : memref<1x44x11x64xbf16, #tpu.memory_space<vmem>>, vector<1x1x10x64xbf16>
    %117 = vector.shape_cast %116 : vector<1x1x10x64xbf16> to vector<10x64xbf16>
    %118 = tpu.concatenate %111, %113, %115, %117 in 1 : vector<10x64xbf16>, vector<10x64xbf16>, vector<10x64xbf16>, vector<10x64xbf16> -> vector<10x256xbf16>
    %c0_159 = arith.constant 0 : index
    %c0_160 = arith.constant 0 : index
    %119 = vector.load %arg7[%c0_159, %c0_160] : memref<100x256xbf16, #tpu.memory_space<vmem>>, vector<10x256xbf16>
    tpu.vector_store %arg7[%c0_159, %c0_160], %118 {strides = array<i32>} : memref<100x256xbf16, #tpu.memory_space<vmem>>, vector<10x256xbf16>,
    %c0_161 = arith.constant 0 : index
    %c12_162 = arith.constant 12 : index
    %c0_163 = arith.constant 0 : index
    %c0_164 = arith.constant 0 : index
    %120 = vector.load %arg1[%c0_161, %c12_162, %c0_163, %c0_164] : memref<1x44x11x64xbf16, #tpu.memory_space<vmem>>, vector<1x1x10x64xbf16>
    %121 = vector.shape_cast %120 : vector<1x1x10x64xbf16> to vector<10x64xbf16>
    %c0_165 = arith.constant 0 : index
    %c1_166 = arith.constant 1 : index
    %c1_167 = arith.constant 1 : index
    %c0_168 = arith.constant 0 : index
    %122 = vector.load %arg1[%c0_165, %c1_166, %c1_167, %c0_168] : memref<1x44x11x64xbf16, #tpu.memory_space<vmem>>, vector<1x1x10x64xbf16>
    %123 = vector.shape_cast %122 : vector<1x1x10x64xbf16> to vector<10x64xbf16>
    %c0_169 = arith.constant 0 : index
    %c34_170 = arith.constant 34 : index
    %c0_171 = arith.constant 0 : index
    %c0_172 = arith.constant 0 : index
    %124 = vector.load %arg1[%c0_169, %c34_170, %c0_171, %c0_172] : memref<1x44x11x64xbf16, #tpu.memory_space<vmem>>, vector<1x1x10x64xbf16>
    %125 = vector.shape_cast %124 : vector<1x1x10x64xbf16> to vector<10x64xbf16>
    %c0_173 = arith.constant 0 : index
    %c23_174 = arith.constant 23 : index
    %c1_175 = arith.constant 1 : index
    %c0_176 = arith.constant 0 : index
    %126 = vector.load %arg1[%c0_173, %c23_174, %c1_175, %c0_176] : memref<1x44x11x64xbf16, #tpu.memory_space<vmem>>, vector<1x1x10x64xbf16>
    %127 = vector.shape_cast %126 : vector<1x1x10x64xbf16> to vector<10x64xbf16>
    %128 = tpu.concatenate %121, %123, %125, %127 in 1 : vector<10x64xbf16>, vector<10x64xbf16>, vector<10x64xbf16>, vector<10x64xbf16> -> vector<10x256xbf16>
    %c10_177 = arith.constant 10 : index
    %c0_178 = arith.constant 0 : index
    %129 = vector.load %arg7[%c10_177, %c0_178] : memref<100x256xbf16, #tpu.memory_space<vmem>>, vector<10x256xbf16>
    tpu.vector_store %arg7[%c10_177, %c0_178], %128 {strides = array<i32>} : memref<100x256xbf16, #tpu.memory_space<vmem>>, vector<10x256xbf16>,
    %c0_179 = arith.constant 0 : index
    %c13_180 = arith.constant 13 : index
    %c0_181 = arith.constant 0 : index
    %c0_182 = arith.constant 0 : index
    %130 = vector.load %arg1[%c0_179, %c13_180, %c0_181, %c0_182] : memref<1x44x11x64xbf16, #tpu.memory_space<vmem>>, vector<1x1x10x64xbf16>
    %131 = vector.shape_cast %130 : vector<1x1x10x64xbf16> to vector<10x64xbf16>
    %c0_183 = arith.constant 0 : index
    %c2_184 = arith.constant 2 : index
    %c1_185 = arith.constant 1 : index
    %c0_186 = arith.constant 0 : index
    %132 = vector.load %arg1[%c0_183, %c2_184, %c1_185, %c0_186] : memref<1x44x11x64xbf16, #tpu.memory_space<vmem>>, vector<1x1x10x64xbf16>
    %133 = vector.shape_cast %132 : vector<1x1x10x64xbf16> to vector<10x64xbf16>
    %c0_187 = arith.constant 0 : index
    %c35_188 = arith.constant 35 : index
    %c0_189 = arith.constant 0 : index
    %c0_190 = arith.constant 0 : index
    %134 = vector.load %arg1[%c0_187, %c35_188, %c0_189, %c0_190] : memref<1x44x11x64xbf16, #tpu.memory_space<vmem>>, vector<1x1x10x64xbf16>
    %135 = vector.shape_cast %134 : vector<1x1x10x64xbf16> to vector<10x64xbf16>
    %c0_191 = arith.constant 0 : index
    %c24_192 = arith.constant 24 : index
    %c1_193 = arith.constant 1 : index
    %c0_194 = arith.constant 0 : index
    %136 = vector.load %arg1[%c0_191, %c24_192, %c1_193, %c0_194] : memref<1x44x11x64xbf16, #tpu.memory_space<vmem>>, vector<1x1x10x64xbf16>
    %137 = vector.shape_cast %136 : vector<1x1x10x64xbf16> to vector<10x64xbf16>
    %138 = tpu.concatenate %131, %133, %135, %137 in 1 : vector<10x64xbf16>, vector<10x64xbf16>, vector<10x64xbf16>, vector<10x64xbf16> -> vector<10x256xbf16>
    %c20_195 = arith.constant 20 : index
    %c0_196 = arith.constant 0 : index
    %139 = vector.load %arg7[%c20_195, %c0_196] : memref<100x256xbf16, #tpu.memory_space<vmem>>, vector<10x256xbf16>
    tpu.vector_store %arg7[%c20_195, %c0_196], %138 {strides = array<i32>} : memref<100x256xbf16, #tpu.memory_space<vmem>>, vector<10x256xbf16>,
    %c0_197 = arith.constant 0 : index
    %c14_198 = arith.constant 14 : index
    %c0_199 = arith.constant 0 : index
    %c0_200 = arith.constant 0 : index
    %140 = vector.load %arg1[%c0_197, %c14_198, %c0_199, %c0_200] : memref<1x44x11x64xbf16, #tpu.memory_space<vmem>>, vector<1x1x10x64xbf16>
    %141 = vector.shape_cast %140 : vector<1x1x10x64xbf16> to vector<10x64xbf16>
    %c0_201 = arith.constant 0 : index
    %c3_202 = arith.constant 3 : index
    %c1_203 = arith.constant 1 : index
    %c0_204 = arith.constant 0 : index
    %142 = vector.load %arg1[%c0_201, %c3_202, %c1_203, %c0_204] : memref<1x44x11x64xbf16, #tpu.memory_space<vmem>>, vector<1x1x10x64xbf16>
    %143 = vector.shape_cast %142 : vector<1x1x10x64xbf16> to vector<10x64xbf16>
    %c0_205 = arith.constant 0 : index
    %c36_206 = arith.constant 36 : index
    %c0_207 = arith.constant 0 : index
    %c0_208 = arith.constant 0 : index
    %144 = vector.load %arg1[%c0_205, %c36_206, %c0_207, %c0_208] : memref<1x44x11x64xbf16, #tpu.memory_space<vmem>>, vector<1x1x10x64xbf16>
    %145 = vector.shape_cast %144 : vector<1x1x10x64xbf16> to vector<10x64xbf16>
    %c0_209 = arith.constant 0 : index
    %c25_210 = arith.constant 25 : index
    %c1_211 = arith.constant 1 : index
    %c0_212 = arith.constant 0 : index
    %146 = vector.load %arg1[%c0_209, %c25_210, %c1_211, %c0_212] : memref<1x44x11x64xbf16, #tpu.memory_space<vmem>>, vector<1x1x10x64xbf16>
    %147 = vector.shape_cast %146 : vector<1x1x10x64xbf16> to vector<10x64xbf16>
    %148 = tpu.concatenate %141, %143, %145, %147 in 1 : vector<10x64xbf16>, vector<10x64xbf16>, vector<10x64xbf16>, vector<10x64xbf16> -> vector<10x256xbf16>
    %c30_213 = arith.constant 30 : index
    %c0_214 = arith.constant 0 : index
    %149 = vector.load %arg7[%c30_213, %c0_214] : memref<100x256xbf16, #tpu.memory_space<vmem>>, vector<10x256xbf16>
    tpu.vector_store %arg7[%c30_213, %c0_214], %148 {strides = array<i32>} : memref<100x256xbf16, #tpu.memory_space<vmem>>, vector<10x256xbf16>,
    %c0_215 = arith.constant 0 : index
    %c15_216 = arith.constant 15 : index
    %c0_217 = arith.constant 0 : index
    %c0_218 = arith.constant 0 : index
    %150 = vector.load %arg1[%c0_215, %c15_216, %c0_217, %c0_218] : memref<1x44x11x64xbf16, #tpu.memory_space<vmem>>, vector<1x1x10x64xbf16>
    %151 = vector.shape_cast %150 : vector<1x1x10x64xbf16> to vector<10x64xbf16>
    %c0_219 = arith.constant 0 : index
    %c4_220 = arith.constant 4 : index
    %c1_221 = arith.constant 1 : index
    %c0_222 = arith.constant 0 : index
    %152 = vector.load %arg1[%c0_219, %c4_220, %c1_221, %c0_222] : memref<1x44x11x64xbf16, #tpu.memory_space<vmem>>, vector<1x1x10x64xbf16>
    %153 = vector.shape_cast %152 : vector<1x1x10x64xbf16> to vector<10x64xbf16>
    %c0_223 = arith.constant 0 : index
    %c37_224 = arith.constant 37 : index
    %c0_225 = arith.constant 0 : index
    %c0_226 = arith.constant 0 : index
    %154 = vector.load %arg1[%c0_223, %c37_224, %c0_225, %c0_226] : memref<1x44x11x64xbf16, #tpu.memory_space<vmem>>, vector<1x1x10x64xbf16>
    %155 = vector.shape_cast %154 : vector<1x1x10x64xbf16> to vector<10x64xbf16>
    %c0_227 = arith.constant 0 : index
    %c26_228 = arith.constant 26 : index
    %c1_229 = arith.constant 1 : index
    %c0_230 = arith.constant 0 : index
    %156 = vector.load %arg1[%c0_227, %c26_228, %c1_229, %c0_230] : memref<1x44x11x64xbf16, #tpu.memory_space<vmem>>, vector<1x1x10x64xbf16>
    %157 = vector.shape_cast %156 : vector<1x1x10x64xbf16> to vector<10x64xbf16>
    %158 = tpu.concatenate %151, %153, %155, %157 in 1 : vector<10x64xbf16>, vector<10x64xbf16>, vector<10x64xbf16>, vector<10x64xbf16> -> vector<10x256xbf16>
    %c40_231 = arith.constant 40 : index
    %c0_232 = arith.constant 0 : index
    %159 = vector.load %arg7[%c40_231, %c0_232] : memref<100x256xbf16, #tpu.memory_space<vmem>>, vector<10x256xbf16>
    tpu.vector_store %arg7[%c40_231, %c0_232], %158 {strides = array<i32>} : memref<100x256xbf16, #tpu.memory_space<vmem>>, vector<10x256xbf16>,
    %c0_233 = arith.constant 0 : index
    %c16_234 = arith.constant 16 : index
    %c0_235 = arith.constant 0 : index
    %c0_236 = arith.constant 0 : index
    %160 = vector.load %arg1[%c0_233, %c16_234, %c0_235, %c0_236] : memref<1x44x11x64xbf16, #tpu.memory_space<vmem>>, vector<1x1x10x64xbf16>
    %161 = vector.shape_cast %160 : vector<1x1x10x64xbf16> to vector<10x64xbf16>
    %c0_237 = arith.constant 0 : index
    %c5_238 = arith.constant 5 : index
    %c1_239 = arith.constant 1 : index
    %c0_240 = arith.constant 0 : index
    %162 = vector.load %arg1[%c0_237, %c5_238, %c1_239, %c0_240] : memref<1x44x11x64xbf16, #tpu.memory_space<vmem>>, vector<1x1x10x64xbf16>
    %163 = vector.shape_cast %162 : vector<1x1x10x64xbf16> to vector<10x64xbf16>
    %c0_241 = arith.constant 0 : index
    %c38_242 = arith.constant 38 : index
    %c0_243 = arith.constant 0 : index
    %c0_244 = arith.constant 0 : index
    %164 = vector.load %arg1[%c0_241, %c38_242, %c0_243, %c0_244] : memref<1x44x11x64xbf16, #tpu.memory_space<vmem>>, vector<1x1x10x64xbf16>
    %165 = vector.shape_cast %164 : vector<1x1x10x64xbf16> to vector<10x64xbf16>
    %c0_245 = arith.constant 0 : index
    %c27_246 = arith.constant 27 : index
    %c1_247 = arith.constant 1 : index
    %c0_248 = arith.constant 0 : index
    %166 = vector.load %arg1[%c0_245, %c27_246, %c1_247, %c0_248] : memref<1x44x11x64xbf16, #tpu.memory_space<vmem>>, vector<1x1x10x64xbf16>
    %167 = vector.shape_cast %166 : vector<1x1x10x64xbf16> to vector<10x64xbf16>
    %168 = tpu.concatenate %161, %163, %165, %167 in 1 : vector<10x64xbf16>, vector<10x64xbf16>, vector<10x64xbf16>, vector<10x64xbf16> -> vector<10x256xbf16>
    %c50_249 = arith.constant 50 : index
    %c0_250 = arith.constant 0 : index
    %169 = vector.load %arg7[%c50_249, %c0_250] : memref<100x256xbf16, #tpu.memory_space<vmem>>, vector<10x256xbf16>
    tpu.vector_store %arg7[%c50_249, %c0_250], %168 {strides = array<i32>} : memref<100x256xbf16, #tpu.memory_space<vmem>>, vector<10x256xbf16>,
    %c0_251 = arith.constant 0 : index
    %c17_252 = arith.constant 17 : index
    %c0_253 = arith.constant 0 : index
    %c0_254 = arith.constant 0 : index
    %170 = vector.load %arg1[%c0_251, %c17_252, %c0_253, %c0_254] : memref<1x44x11x64xbf16, #tpu.memory_space<vmem>>, vector<1x1x10x64xbf16>
    %171 = vector.shape_cast %170 : vector<1x1x10x64xbf16> to vector<10x64xbf16>
    %c0_255 = arith.constant 0 : index
    %c6_256 = arith.constant 6 : index
    %c1_257 = arith.constant 1 : index
    %c0_258 = arith.constant 0 : index
    %172 = vector.load %arg1[%c0_255, %c6_256, %c1_257, %c0_258] : memref<1x44x11x64xbf16, #tpu.memory_space<vmem>>, vector<1x1x10x64xbf16>
    %173 = vector.shape_cast %172 : vector<1x1x10x64xbf16> to vector<10x64xbf16>
    %c0_259 = arith.constant 0 : index
    %c39_260 = arith.constant 39 : index
    %c0_261 = arith.constant 0 : index
    %c0_262 = arith.constant 0 : index
    %174 = vector.load %arg1[%c0_259, %c39_260, %c0_261, %c0_262] : memref<1x44x11x64xbf16, #tpu.memory_space<vmem>>, vector<1x1x10x64xbf16>
    %175 = vector.shape_cast %174 : vector<1x1x10x64xbf16> to vector<10x64xbf16>
    %c0_263 = arith.constant 0 : index
    %c28_264 = arith.constant 28 : index
    %c1_265 = arith.constant 1 : index
    %c0_266 = arith.constant 0 : index
    %176 = vector.load %arg1[%c0_263, %c28_264, %c1_265, %c0_266] : memref<1x44x11x64xbf16, #tpu.memory_space<vmem>>, vector<1x1x10x64xbf16>
    %177 = vector.shape_cast %176 : vector<1x1x10x64xbf16> to vector<10x64xbf16>
    %178 = tpu.concatenate %171, %173, %175, %177 in 1 : vector<10x64xbf16>, vector<10x64xbf16>, vector<10x64xbf16>, vector<10x64xbf16> -> vector<10x256xbf16>
    %c60_267 = arith.constant 60 : index
    %c0_268 = arith.constant 0 : index
    %179 = vector.load %arg7[%c60_267, %c0_268] : memref<100x256xbf16, #tpu.memory_space<vmem>>, vector<10x256xbf16>
    tpu.vector_store %arg7[%c60_267, %c0_268], %178 {strides = array<i32>} : memref<100x256xbf16, #tpu.memory_space<vmem>>, vector<10x256xbf16>,
    %c0_269 = arith.constant 0 : index
    %c18_270 = arith.constant 18 : index
    %c0_271 = arith.constant 0 : index
    %c0_272 = arith.constant 0 : index
    %180 = vector.load %arg1[%c0_269, %c18_270, %c0_271, %c0_272] : memref<1x44x11x64xbf16, #tpu.memory_space<vmem>>, vector<1x1x10x64xbf16>
    %181 = vector.shape_cast %180 : vector<1x1x10x64xbf16> to vector<10x64xbf16>
    %c0_273 = arith.constant 0 : index
    %c7_274 = arith.constant 7 : index
    %c1_275 = arith.constant 1 : index
    %c0_276 = arith.constant 0 : index
    %182 = vector.load %arg1[%c0_273, %c7_274, %c1_275, %c0_276] : memref<1x44x11x64xbf16, #tpu.memory_space<vmem>>, vector<1x1x10x64xbf16>
    %183 = vector.shape_cast %182 : vector<1x1x10x64xbf16> to vector<10x64xbf16>
    %c0_277 = arith.constant 0 : index
    %c40_278 = arith.constant 40 : index
    %c0_279 = arith.constant 0 : index
    %c0_280 = arith.constant 0 : index
    %184 = vector.load %arg1[%c0_277, %c40_278, %c0_279, %c0_280] : memref<1x44x11x64xbf16, #tpu.memory_space<vmem>>, vector<1x1x10x64xbf16>
    %185 = vector.shape_cast %184 : vector<1x1x10x64xbf16> to vector<10x64xbf16>
    %c0_281 = arith.constant 0 : index
    %c29_282 = arith.constant 29 : index
    %c1_283 = arith.constant 1 : index
    %c0_284 = arith.constant 0 : index
    %186 = vector.load %arg1[%c0_281, %c29_282, %c1_283, %c0_284] : memref<1x44x11x64xbf16, #tpu.memory_space<vmem>>, vector<1x1x10x64xbf16>
    %187 = vector.shape_cast %186 : vector<1x1x10x64xbf16> to vector<10x64xbf16>
    %188 = tpu.concatenate %181, %183, %185, %187 in 1 : vector<10x64xbf16>, vector<10x64xbf16>, vector<10x64xbf16>, vector<10x64xbf16> -> vector<10x256xbf16>
    %c70_285 = arith.constant 70 : index
    %c0_286 = arith.constant 0 : index
    %189 = vector.load %arg7[%c70_285, %c0_286] : memref<100x256xbf16, #tpu.memory_space<vmem>>, vector<10x256xbf16>
    tpu.vector_store %arg7[%c70_285, %c0_286], %188 {strides = array<i32>} : memref<100x256xbf16, #tpu.memory_space<vmem>>, vector<10x256xbf16>,
    %c0_287 = arith.constant 0 : index
    %c19_288 = arith.constant 19 : index
    %c0_289 = arith.constant 0 : index
    %c0_290 = arith.constant 0 : index
    %190 = vector.load %arg1[%c0_287, %c19_288, %c0_289, %c0_290] : memref<1x44x11x64xbf16, #tpu.memory_space<vmem>>, vector<1x1x10x64xbf16>
    %191 = vector.shape_cast %190 : vector<1x1x10x64xbf16> to vector<10x64xbf16>
    %c0_291 = arith.constant 0 : index
    %c8_292 = arith.constant 8 : index
    %c1_293 = arith.constant 1 : index
    %c0_294 = arith.constant 0 : index
    %192 = vector.load %arg1[%c0_291, %c8_292, %c1_293, %c0_294] : memref<1x44x11x64xbf16, #tpu.memory_space<vmem>>, vector<1x1x10x64xbf16>
    %193 = vector.shape_cast %192 : vector<1x1x10x64xbf16> to vector<10x64xbf16>
    %c0_295 = arith.constant 0 : index
    %c41_296 = arith.constant 41 : index
    %c0_297 = arith.constant 0 : index
    %c0_298 = arith.constant 0 : index
    %194 = vector.load %arg1[%c0_295, %c41_296, %c0_297, %c0_298] : memref<1x44x11x64xbf16, #tpu.memory_space<vmem>>, vector<1x1x10x64xbf16>
    %195 = vector.shape_cast %194 : vector<1x1x10x64xbf16> to vector<10x64xbf16>
    %c0_299 = arith.constant 0 : index
    %c30_300 = arith.constant 30 : index
    %c1_301 = arith.constant 1 : index
    %c0_302 = arith.constant 0 : index
    %196 = vector.load %arg1[%c0_299, %c30_300, %c1_301, %c0_302] : memref<1x44x11x64xbf16, #tpu.memory_space<vmem>>, vector<1x1x10x64xbf16>
    %197 = vector.shape_cast %196 : vector<1x1x10x64xbf16> to vector<10x64xbf16>
    %198 = tpu.concatenate %191, %193, %195, %197 in 1 : vector<10x64xbf16>, vector<10x64xbf16>, vector<10x64xbf16>, vector<10x64xbf16> -> vector<10x256xbf16>
    %c80_303 = arith.constant 80 : index
    %c0_304 = arith.constant 0 : index
    %199 = vector.load %arg7[%c80_303, %c0_304] : memref<100x256xbf16, #tpu.memory_space<vmem>>, vector<10x256xbf16>
    tpu.vector_store %arg7[%c80_303, %c0_304], %198 {strides = array<i32>} : memref<100x256xbf16, #tpu.memory_space<vmem>>, vector<10x256xbf16>,
    %c0_305 = arith.constant 0 : index
    %c20_306 = arith.constant 20 : index
    %c0_307 = arith.constant 0 : index
    %c0_308 = arith.constant 0 : index
    %200 = vector.load %arg1[%c0_305, %c20_306, %c0_307, %c0_308] : memref<1x44x11x64xbf16, #tpu.memory_space<vmem>>, vector<1x1x10x64xbf16>
    %201 = vector.shape_cast %200 : vector<1x1x10x64xbf16> to vector<10x64xbf16>
    %c0_309 = arith.constant 0 : index
    %c9_310 = arith.constant 9 : index
    %c1_311 = arith.constant 1 : index
    %c0_312 = arith.constant 0 : index
    %202 = vector.load %arg1[%c0_309, %c9_310, %c1_311, %c0_312] : memref<1x44x11x64xbf16, #tpu.memory_space<vmem>>, vector<1x1x10x64xbf16>
    %203 = vector.shape_cast %202 : vector<1x1x10x64xbf16> to vector<10x64xbf16>
    %c0_313 = arith.constant 0 : index
    %c42_314 = arith.constant 42 : index
    %c0_315 = arith.constant 0 : index
    %c0_316 = arith.constant 0 : index
    %204 = vector.load %arg1[%c0_313, %c42_314, %c0_315, %c0_316] : memref<1x44x11x64xbf16, #tpu.memory_space<vmem>>, vector<1x1x10x64xbf16>
    %205 = vector.shape_cast %204 : vector<1x1x10x64xbf16> to vector<10x64xbf16>
    %c0_317 = arith.constant 0 : index
    %c31_318 = arith.constant 31 : index
    %c1_319 = arith.constant 1 : index
    %c0_320 = arith.constant 0 : index
    %206 = vector.load %arg1[%c0_317, %c31_318, %c1_319, %c0_320] : memref<1x44x11x64xbf16, #tpu.memory_space<vmem>>, vector<1x1x10x64xbf16>
    %207 = vector.shape_cast %206 : vector<1x1x10x64xbf16> to vector<10x64xbf16>
    %208 = tpu.concatenate %201, %203, %205, %207 in 1 : vector<10x64xbf16>, vector<10x64xbf16>, vector<10x64xbf16>, vector<10x64xbf16> -> vector<10x256xbf16>
    %c90_321 = arith.constant 90 : index
    %c0_322 = arith.constant 0 : index
    %209 = vector.load %arg7[%c90_321, %c0_322] : memref<100x256xbf16, #tpu.memory_space<vmem>>, vector<10x256xbf16>
    tpu.vector_store %arg7[%c90_321, %c0_322], %208 {strides = array<i32>} : memref<100x256xbf16, #tpu.memory_space<vmem>>, vector<10x256xbf16>,
    %c0_323 = arith.constant 0 : index
    %c0_324 = arith.constant 0 : index
    %210 = vector.load %arg7[%c0_323, %c0_324] : memref<100x256xbf16, #tpu.memory_space<vmem>>, vector<100x256xbf16>
    %c0_325 = arith.constant 0 : index
    %c0_326 = arith.constant 0 : index
    %211 = vector.load %arg2[%c0_325, %c0_326] : memref<256x16xbf16, #tpu.memory_space<vmem>>, vector<256x16xbf16>
    %cst_327 = arith.constant dense<0.000000e+00> : vector<100x16xf32>
    %212 = tpu.matmul %210, %211, %cst_327 {dimension_numbers = #tpu.dot_dimension_numbers<[1], [0], [0], [1], [0, 0, 1, 1], [], []>} : vector<100x256xbf16>, vector<256x16xbf16>, vector<100x16xf32> -> vector<100x16xf32>
    %c0_328 = arith.constant 0 : index
    %c0_329 = arith.constant 0 : index
    %213 = vector.load %arg3[%c0_328, %c0_329] : memref<1x16xf32, #tpu.memory_space<vmem>>, vector<1x16xf32>
    %214 = vector.broadcast %213 : vector<1x16xf32> to vector<100x16xf32>
    %215 = arith.addf %212, %214 : vector<100x16xf32>
    %cst_330 = arith.constant 0.000000e+00 : f32
    %216 = vector.broadcast %cst_330 : f32 to vector<100x16xf32>
    %217 = arith.maximumf %215, %216 : vector<100x16xf32>
    %218 = arith.truncf %217 : vector<100x16xf32> to vector<100x16xbf16>
    %c0_331 = arith.constant 0 : index
    %c16_332 = arith.constant 16 : index
    %219 = vector.load %arg8[%c0_331, %c16_332] : memref<100x64xbf16, #tpu.memory_space<vmem>>, vector<100x16xbf16>
    tpu.vector_store %arg8[%c0_331, %c16_332], %218 {strides = array<i32>} : memref<100x64xbf16, #tpu.memory_space<vmem>>, vector<100x16xbf16>,
    %c0_333 = arith.constant 0 : index
    %c22_334 = arith.constant 22 : index
    %c0_335 = arith.constant 0 : index
    %c0_336 = arith.constant 0 : index
    %220 = vector.load %arg1[%c0_333, %c22_334, %c0_335, %c0_336] : memref<1x44x11x64xbf16, #tpu.memory_space<vmem>>, vector<1x1x10x64xbf16>
    %221 = vector.shape_cast %220 : vector<1x1x10x64xbf16> to vector<10x64xbf16>
    %c0_337 = arith.constant 0 : index
    %c33_338 = arith.constant 33 : index
    %c0_339 = arith.constant 0 : index
    %c0_340 = arith.constant 0 : index
    %222 = vector.load %arg1[%c0_337, %c33_338, %c0_339, %c0_340] : memref<1x44x11x64xbf16, #tpu.memory_space<vmem>>, vector<1x1x10x64xbf16>
    %223 = vector.shape_cast %222 : vector<1x1x10x64xbf16> to vector<10x64xbf16>
    %c0_341 = arith.constant 0 : index
    %c1_342 = arith.constant 1 : index
    %c0_343 = arith.constant 0 : index
    %c0_344 = arith.constant 0 : index
    %224 = vector.load %arg1[%c0_341, %c1_342, %c0_343, %c0_344] : memref<1x44x11x64xbf16, #tpu.memory_space<vmem>>, vector<1x1x10x64xbf16>
    %225 = vector.shape_cast %224 : vector<1x1x10x64xbf16> to vector<10x64xbf16>
    %c0_345 = arith.constant 0 : index
    %c12_346 = arith.constant 12 : index
    %c0_347 = arith.constant 0 : index
    %c0_348 = arith.constant 0 : index
    %226 = vector.load %arg1[%c0_345, %c12_346, %c0_347, %c0_348] : memref<1x44x11x64xbf16, #tpu.memory_space<vmem>>, vector<1x1x10x64xbf16>
    %227 = vector.shape_cast %226 : vector<1x1x10x64xbf16> to vector<10x64xbf16>
    %228 = tpu.concatenate %221, %223, %225, %227 in 1 : vector<10x64xbf16>, vector<10x64xbf16>, vector<10x64xbf16>, vector<10x64xbf16> -> vector<10x256xbf16>
    %c0_349 = arith.constant 0 : index
    %c0_350 = arith.constant 0 : index
    %229 = vector.load %arg7[%c0_349, %c0_350] : memref<100x256xbf16, #tpu.memory_space<vmem>>, vector<10x256xbf16>
    tpu.vector_store %arg7[%c0_349, %c0_350], %228 {strides = array<i32>} : memref<100x256xbf16, #tpu.memory_space<vmem>>, vector<10x256xbf16>,
    %c0_351 = arith.constant 0 : index
    %c23_352 = arith.constant 23 : index
    %c0_353 = arith.constant 0 : index
    %c0_354 = arith.constant 0 : index
    %230 = vector.load %arg1[%c0_351, %c23_352, %c0_353, %c0_354] : memref<1x44x11x64xbf16, #tpu.memory_space<vmem>>, vector<1x1x10x64xbf16>
    %231 = vector.shape_cast %230 : vector<1x1x10x64xbf16> to vector<10x64xbf16>
    %c0_355 = arith.constant 0 : index
    %c34_356 = arith.constant 34 : index
    %c0_357 = arith.constant 0 : index
    %c0_358 = arith.constant 0 : index
    %232 = vector.load %arg1[%c0_355, %c34_356, %c0_357, %c0_358] : memref<1x44x11x64xbf16, #tpu.memory_space<vmem>>, vector<1x1x10x64xbf16>
    %233 = vector.shape_cast %232 : vector<1x1x10x64xbf16> to vector<10x64xbf16>
    %c0_359 = arith.constant 0 : index
    %c2_360 = arith.constant 2 : index
    %c0_361 = arith.constant 0 : index
    %c0_362 = arith.constant 0 : index
    %234 = vector.load %arg1[%c0_359, %c2_360, %c0_361, %c0_362] : memref<1x44x11x64xbf16, #tpu.memory_space<vmem>>, vector<1x1x10x64xbf16>
    %235 = vector.shape_cast %234 : vector<1x1x10x64xbf16> to vector<10x64xbf16>
    %c0_363 = arith.constant 0 : index
    %c13_364 = arith.constant 13 : index
    %c0_365 = arith.constant 0 : index
    %c0_366 = arith.constant 0 : index
    %236 = vector.load %arg1[%c0_363, %c13_364, %c0_365, %c0_366] : memref<1x44x11x64xbf16, #tpu.memory_space<vmem>>, vector<1x1x10x64xbf16>
    %237 = vector.shape_cast %236 : vector<1x1x10x64xbf16> to vector<10x64xbf16>
    %238 = tpu.concatenate %231, %233, %235, %237 in 1 : vector<10x64xbf16>, vector<10x64xbf16>, vector<10x64xbf16>, vector<10x64xbf16> -> vector<10x256xbf16>
    %c10_367 = arith.constant 10 : index
    %c0_368 = arith.constant 0 : index
    %239 = vector.load %arg7[%c10_367, %c0_368] : memref<100x256xbf16, #tpu.memory_space<vmem>>, vector<10x256xbf16>
    tpu.vector_store %arg7[%c10_367, %c0_368], %238 {strides = array<i32>} : memref<100x256xbf16, #tpu.memory_space<vmem>>, vector<10x256xbf16>,
    %c0_369 = arith.constant 0 : index
    %c24_370 = arith.constant 24 : index
    %c0_371 = arith.constant 0 : index
    %c0_372 = arith.constant 0 : index
    %240 = vector.load %arg1[%c0_369, %c24_370, %c0_371, %c0_372] : memref<1x44x11x64xbf16, #tpu.memory_space<vmem>>, vector<1x1x10x64xbf16>
    %241 = vector.shape_cast %240 : vector<1x1x10x64xbf16> to vector<10x64xbf16>
    %c0_373 = arith.constant 0 : index
    %c35_374 = arith.constant 35 : index
    %c0_375 = arith.constant 0 : index
    %c0_376 = arith.constant 0 : index
    %242 = vector.load %arg1[%c0_373, %c35_374, %c0_375, %c0_376] : memref<1x44x11x64xbf16, #tpu.memory_space<vmem>>, vector<1x1x10x64xbf16>
    %243 = vector.shape_cast %242 : vector<1x1x10x64xbf16> to vector<10x64xbf16>
    %c0_377 = arith.constant 0 : index
    %c3_378 = arith.constant 3 : index
    %c0_379 = arith.constant 0 : index
    %c0_380 = arith.constant 0 : index
    %244 = vector.load %arg1[%c0_377, %c3_378, %c0_379, %c0_380] : memref<1x44x11x64xbf16, #tpu.memory_space<vmem>>, vector<1x1x10x64xbf16>
    %245 = vector.shape_cast %244 : vector<1x1x10x64xbf16> to vector<10x64xbf16>
    %c0_381 = arith.constant 0 : index
    %c14_382 = arith.constant 14 : index
    %c0_383 = arith.constant 0 : index
    %c0_384 = arith.constant 0 : index
    %246 = vector.load %arg1[%c0_381, %c14_382, %c0_383, %c0_384] : memref<1x44x11x64xbf16, #tpu.memory_space<vmem>>, vector<1x1x10x64xbf16>
    %247 = vector.shape_cast %246 : vector<1x1x10x64xbf16> to vector<10x64xbf16>
    %248 = tpu.concatenate %241, %243, %245, %247 in 1 : vector<10x64xbf16>, vector<10x64xbf16>, vector<10x64xbf16>, vector<10x64xbf16> -> vector<10x256xbf16>
    %c20_385 = arith.constant 20 : index
    %c0_386 = arith.constant 0 : index
    %249 = vector.load %arg7[%c20_385, %c0_386] : memref<100x256xbf16, #tpu.memory_space<vmem>>, vector<10x256xbf16>
    tpu.vector_store %arg7[%c20_385, %c0_386], %248 {strides = array<i32>} : memref<100x256xbf16, #tpu.memory_space<vmem>>, vector<10x256xbf16>,
    %c0_387 = arith.constant 0 : index
    %c25_388 = arith.constant 25 : index
    %c0_389 = arith.constant 0 : index
    %c0_390 = arith.constant 0 : index
    %250 = vector.load %arg1[%c0_387, %c25_388, %c0_389, %c0_390] : memref<1x44x11x64xbf16, #tpu.memory_space<vmem>>, vector<1x1x10x64xbf16>
    %251 = vector.shape_cast %250 : vector<1x1x10x64xbf16> to vector<10x64xbf16>
    %c0_391 = arith.constant 0 : index
    %c36_392 = arith.constant 36 : index
    %c0_393 = arith.constant 0 : index
    %c0_394 = arith.constant 0 : index
    %252 = vector.load %arg1[%c0_391, %c36_392, %c0_393, %c0_394] : memref<1x44x11x64xbf16, #tpu.memory_space<vmem>>, vector<1x1x10x64xbf16>
    %253 = vector.shape_cast %252 : vector<1x1x10x64xbf16> to vector<10x64xbf16>
    %c0_395 = arith.constant 0 : index
    %c4_396 = arith.constant 4 : index
    %c0_397 = arith.constant 0 : index
    %c0_398 = arith.constant 0 : index
    %254 = vector.load %arg1[%c0_395, %c4_396, %c0_397, %c0_398] : memref<1x44x11x64xbf16, #tpu.memory_space<vmem>>, vector<1x1x10x64xbf16>
    %255 = vector.shape_cast %254 : vector<1x1x10x64xbf16> to vector<10x64xbf16>
    %c0_399 = arith.constant 0 : index
    %c15_400 = arith.constant 15 : index
    %c0_401 = arith.constant 0 : index
    %c0_402 = arith.constant 0 : index
    %256 = vector.load %arg1[%c0_399, %c15_400, %c0_401, %c0_402] : memref<1x44x11x64xbf16, #tpu.memory_space<vmem>>, vector<1x1x10x64xbf16>
    %257 = vector.shape_cast %256 : vector<1x1x10x64xbf16> to vector<10x64xbf16>
    %258 = tpu.concatenate %251, %253, %255, %257 in 1 : vector<10x64xbf16>, vector<10x64xbf16>, vector<10x64xbf16>, vector<10x64xbf16> -> vector<10x256xbf16>
    %c30_403 = arith.constant 30 : index
    %c0_404 = arith.constant 0 : index
    %259 = vector.load %arg7[%c30_403, %c0_404] : memref<100x256xbf16, #tpu.memory_space<vmem>>, vector<10x256xbf16>
    tpu.vector_store %arg7[%c30_403, %c0_404], %258 {strides = array<i32>} : memref<100x256xbf16, #tpu.memory_space<vmem>>, vector<10x256xbf16>,
    %c0_405 = arith.constant 0 : index
    %c26_406 = arith.constant 26 : index
    %c0_407 = arith.constant 0 : index
    %c0_408 = arith.constant 0 : index
    %260 = vector.load %arg1[%c0_405, %c26_406, %c0_407, %c0_408] : memref<1x44x11x64xbf16, #tpu.memory_space<vmem>>, vector<1x1x10x64xbf16>
    %261 = vector.shape_cast %260 : vector<1x1x10x64xbf16> to vector<10x64xbf16>
    %c0_409 = arith.constant 0 : index
    %c37_410 = arith.constant 37 : index
    %c0_411 = arith.constant 0 : index
    %c0_412 = arith.constant 0 : index
    %262 = vector.load %arg1[%c0_409, %c37_410, %c0_411, %c0_412] : memref<1x44x11x64xbf16, #tpu.memory_space<vmem>>, vector<1x1x10x64xbf16>
    %263 = vector.shape_cast %262 : vector<1x1x10x64xbf16> to vector<10x64xbf16>
    %c0_413 = arith.constant 0 : index
    %c5_414 = arith.constant 5 : index
    %c0_415 = arith.constant 0 : index
    %c0_416 = arith.constant 0 : index
    %264 = vector.load %arg1[%c0_413, %c5_414, %c0_415, %c0_416] : memref<1x44x11x64xbf16, #tpu.memory_space<vmem>>, vector<1x1x10x64xbf16>
    %265 = vector.shape_cast %264 : vector<1x1x10x64xbf16> to vector<10x64xbf16>
    %c0_417 = arith.constant 0 : index
    %c16_418 = arith.constant 16 : index
    %c0_419 = arith.constant 0 : index
    %c0_420 = arith.constant 0 : index
    %266 = vector.load %arg1[%c0_417, %c16_418, %c0_419, %c0_420] : memref<1x44x11x64xbf16, #tpu.memory_space<vmem>>, vector<1x1x10x64xbf16>
    %267 = vector.shape_cast %266 : vector<1x1x10x64xbf16> to vector<10x64xbf16>
    %268 = tpu.concatenate %261, %263, %265, %267 in 1 : vector<10x64xbf16>, vector<10x64xbf16>, vector<10x64xbf16>, vector<10x64xbf16> -> vector<10x256xbf16>
    %c40_421 = arith.constant 40 : index
    %c0_422 = arith.constant 0 : index
    %269 = vector.load %arg7[%c40_421, %c0_422] : memref<100x256xbf16, #tpu.memory_space<vmem>>, vector<10x256xbf16>
    tpu.vector_store %arg7[%c40_421, %c0_422], %268 {strides = array<i32>} : memref<100x256xbf16, #tpu.memory_space<vmem>>, vector<10x256xbf16>,
    %c0_423 = arith.constant 0 : index
    %c27_424 = arith.constant 27 : index
    %c0_425 = arith.constant 0 : index
    %c0_426 = arith.constant 0 : index
    %270 = vector.load %arg1[%c0_423, %c27_424, %c0_425, %c0_426] : memref<1x44x11x64xbf16, #tpu.memory_space<vmem>>, vector<1x1x10x64xbf16>
    %271 = vector.shape_cast %270 : vector<1x1x10x64xbf16> to vector<10x64xbf16>
    %c0_427 = arith.constant 0 : index
    %c38_428 = arith.constant 38 : index
    %c0_429 = arith.constant 0 : index
    %c0_430 = arith.constant 0 : index
    %272 = vector.load %arg1[%c0_427, %c38_428, %c0_429, %c0_430] : memref<1x44x11x64xbf16, #tpu.memory_space<vmem>>, vector<1x1x10x64xbf16>
    %273 = vector.shape_cast %272 : vector<1x1x10x64xbf16> to vector<10x64xbf16>
    %c0_431 = arith.constant 0 : index
    %c6_432 = arith.constant 6 : index
    %c0_433 = arith.constant 0 : index
    %c0_434 = arith.constant 0 : index
    %274 = vector.load %arg1[%c0_431, %c6_432, %c0_433, %c0_434] : memref<1x44x11x64xbf16, #tpu.memory_space<vmem>>, vector<1x1x10x64xbf16>
    %275 = vector.shape_cast %274 : vector<1x1x10x64xbf16> to vector<10x64xbf16>
    %c0_435 = arith.constant 0 : index
    %c17_436 = arith.constant 17 : index
    %c0_437 = arith.constant 0 : index
    %c0_438 = arith.constant 0 : index
    %276 = vector.load %arg1[%c0_435, %c17_436, %c0_437, %c0_438] : memref<1x44x11x64xbf16, #tpu.memory_space<vmem>>, vector<1x1x10x64xbf16>
    %277 = vector.shape_cast %276 : vector<1x1x10x64xbf16> to vector<10x64xbf16>
    %278 = tpu.concatenate %271, %273, %275, %277 in 1 : vector<10x64xbf16>, vector<10x64xbf16>, vector<10x64xbf16>, vector<10x64xbf16> -> vector<10x256xbf16>
    %c50_439 = arith.constant 50 : index
    %c0_440 = arith.constant 0 : index
    %279 = vector.load %arg7[%c50_439, %c0_440] : memref<100x256xbf16, #tpu.memory_space<vmem>>, vector<10x256xbf16>
    tpu.vector_store %arg7[%c50_439, %c0_440], %278 {strides = array<i32>} : memref<100x256xbf16, #tpu.memory_space<vmem>>, vector<10x256xbf16>,
    %c0_441 = arith.constant 0 : index
    %c28_442 = arith.constant 28 : index
    %c0_443 = arith.constant 0 : index
    %c0_444 = arith.constant 0 : index
    %280 = vector.load %arg1[%c0_441, %c28_442, %c0_443, %c0_444] : memref<1x44x11x64xbf16, #tpu.memory_space<vmem>>, vector<1x1x10x64xbf16>
    %281 = vector.shape_cast %280 : vector<1x1x10x64xbf16> to vector<10x64xbf16>
    %c0_445 = arith.constant 0 : index
    %c39_446 = arith.constant 39 : index
    %c0_447 = arith.constant 0 : index
    %c0_448 = arith.constant 0 : index
    %282 = vector.load %arg1[%c0_445, %c39_446, %c0_447, %c0_448] : memref<1x44x11x64xbf16, #tpu.memory_space<vmem>>, vector<1x1x10x64xbf16>
    %283 = vector.shape_cast %282 : vector<1x1x10x64xbf16> to vector<10x64xbf16>
    %c0_449 = arith.constant 0 : index
    %c7_450 = arith.constant 7 : index
    %c0_451 = arith.constant 0 : index
    %c0_452 = arith.constant 0 : index
    %284 = vector.load %arg1[%c0_449, %c7_450, %c0_451, %c0_452] : memref<1x44x11x64xbf16, #tpu.memory_space<vmem>>, vector<1x1x10x64xbf16>
    %285 = vector.shape_cast %284 : vector<1x1x10x64xbf16> to vector<10x64xbf16>
    %c0_453 = arith.constant 0 : index
    %c18_454 = arith.constant 18 : index
    %c0_455 = arith.constant 0 : index
    %c0_456 = arith.constant 0 : index
    %286 = vector.load %arg1[%c0_453, %c18_454, %c0_455, %c0_456] : memref<1x44x11x64xbf16, #tpu.memory_space<vmem>>, vector<1x1x10x64xbf16>
    %287 = vector.shape_cast %286 : vector<1x1x10x64xbf16> to vector<10x64xbf16>
    %288 = tpu.concatenate %281, %283, %285, %287 in 1 : vector<10x64xbf16>, vector<10x64xbf16>, vector<10x64xbf16>, vector<10x64xbf16> -> vector<10x256xbf16>
    %c60_457 = arith.constant 60 : index
    %c0_458 = arith.constant 0 : index
    %289 = vector.load %arg7[%c60_457, %c0_458] : memref<100x256xbf16, #tpu.memory_space<vmem>>, vector<10x256xbf16>
    tpu.vector_store %arg7[%c60_457, %c0_458], %288 {strides = array<i32>} : memref<100x256xbf16, #tpu.memory_space<vmem>>, vector<10x256xbf16>,
    %c0_459 = arith.constant 0 : index
    %c29_460 = arith.constant 29 : index
    %c0_461 = arith.constant 0 : index
    %c0_462 = arith.constant 0 : index
    %290 = vector.load %arg1[%c0_459, %c29_460, %c0_461, %c0_462] : memref<1x44x11x64xbf16, #tpu.memory_space<vmem>>, vector<1x1x10x64xbf16>
    %291 = vector.shape_cast %290 : vector<1x1x10x64xbf16> to vector<10x64xbf16>
    %c0_463 = arith.constant 0 : index
    %c40_464 = arith.constant 40 : index
    %c0_465 = arith.constant 0 : index
    %c0_466 = arith.constant 0 : index
    %292 = vector.load %arg1[%c0_463, %c40_464, %c0_465, %c0_466] : memref<1x44x11x64xbf16, #tpu.memory_space<vmem>>, vector<1x1x10x64xbf16>
    %293 = vector.shape_cast %292 : vector<1x1x10x64xbf16> to vector<10x64xbf16>
    %c0_467 = arith.constant 0 : index
    %c8_468 = arith.constant 8 : index
    %c0_469 = arith.constant 0 : index
    %c0_470 = arith.constant 0 : index
    %294 = vector.load %arg1[%c0_467, %c8_468, %c0_469, %c0_470] : memref<1x44x11x64xbf16, #tpu.memory_space<vmem>>, vector<1x1x10x64xbf16>
    %295 = vector.shape_cast %294 : vector<1x1x10x64xbf16> to vector<10x64xbf16>
    %c0_471 = arith.constant 0 : index
    %c19_472 = arith.constant 19 : index
    %c0_473 = arith.constant 0 : index
    %c0_474 = arith.constant 0 : index
    %296 = vector.load %arg1[%c0_471, %c19_472, %c0_473, %c0_474] : memref<1x44x11x64xbf16, #tpu.memory_space<vmem>>, vector<1x1x10x64xbf16>
    %297 = vector.shape_cast %296 : vector<1x1x10x64xbf16> to vector<10x64xbf16>
    %298 = tpu.concatenate %291, %293, %295, %297 in 1 : vector<10x64xbf16>, vector<10x64xbf16>, vector<10x64xbf16>, vector<10x64xbf16> -> vector<10x256xbf16>
    %c70_475 = arith.constant 70 : index
    %c0_476 = arith.constant 0 : index
    %299 = vector.load %arg7[%c70_475, %c0_476] : memref<100x256xbf16, #tpu.memory_space<vmem>>, vector<10x256xbf16>
    tpu.vector_store %arg7[%c70_475, %c0_476], %298 {strides = array<i32>} : memref<100x256xbf16, #tpu.memory_space<vmem>>, vector<10x256xbf16>,
    %c0_477 = arith.constant 0 : index
    %c30_478 = arith.constant 30 : index
    %c0_479 = arith.constant 0 : index
    %c0_480 = arith.constant 0 : index
    %300 = vector.load %arg1[%c0_477, %c30_478, %c0_479, %c0_480] : memref<1x44x11x64xbf16, #tpu.memory_space<vmem>>, vector<1x1x10x64xbf16>
    %301 = vector.shape_cast %300 : vector<1x1x10x64xbf16> to vector<10x64xbf16>
    %c0_481 = arith.constant 0 : index
    %c41_482 = arith.constant 41 : index
    %c0_483 = arith.constant 0 : index
    %c0_484 = arith.constant 0 : index
    %302 = vector.load %arg1[%c0_481, %c41_482, %c0_483, %c0_484] : memref<1x44x11x64xbf16, #tpu.memory_space<vmem>>, vector<1x1x10x64xbf16>
    %303 = vector.shape_cast %302 : vector<1x1x10x64xbf16> to vector<10x64xbf16>
    %c0_485 = arith.constant 0 : index
    %c9_486 = arith.constant 9 : index
    %c0_487 = arith.constant 0 : index
    %c0_488 = arith.constant 0 : index
    %304 = vector.load %arg1[%c0_485, %c9_486, %c0_487, %c0_488] : memref<1x44x11x64xbf16, #tpu.memory_space<vmem>>, vector<1x1x10x64xbf16>
    %305 = vector.shape_cast %304 : vector<1x1x10x64xbf16> to vector<10x64xbf16>
    %c0_489 = arith.constant 0 : index
    %c20_490 = arith.constant 20 : index
    %c0_491 = arith.constant 0 : index
    %c0_492 = arith.constant 0 : index
    %306 = vector.load %arg1[%c0_489, %c20_490, %c0_491, %c0_492] : memref<1x44x11x64xbf16, #tpu.memory_space<vmem>>, vector<1x1x10x64xbf16>
    %307 = vector.shape_cast %306 : vector<1x1x10x64xbf16> to vector<10x64xbf16>
    %308 = tpu.concatenate %301, %303, %305, %307 in 1 : vector<10x64xbf16>, vector<10x64xbf16>, vector<10x64xbf16>, vector<10x64xbf16> -> vector<10x256xbf16>
    %c80_493 = arith.constant 80 : index
    %c0_494 = arith.constant 0 : index
    %309 = vector.load %arg7[%c80_493, %c0_494] : memref<100x256xbf16, #tpu.memory_space<vmem>>, vector<10x256xbf16>
    tpu.vector_store %arg7[%c80_493, %c0_494], %308 {strides = array<i32>} : memref<100x256xbf16, #tpu.memory_space<vmem>>, vector<10x256xbf16>,
    %c0_495 = arith.constant 0 : index
    %c31_496 = arith.constant 31 : index
    %c0_497 = arith.constant 0 : index
    %c0_498 = arith.constant 0 : index
    %310 = vector.load %arg1[%c0_495, %c31_496, %c0_497, %c0_498] : memref<1x44x11x64xbf16, #tpu.memory_space<vmem>>, vector<1x1x10x64xbf16>
    %311 = vector.shape_cast %310 : vector<1x1x10x64xbf16> to vector<10x64xbf16>
    %c0_499 = arith.constant 0 : index
    %c42_500 = arith.constant 42 : index
    %c0_501 = arith.constant 0 : index
    %c0_502 = arith.constant 0 : index
    %312 = vector.load %arg1[%c0_499, %c42_500, %c0_501, %c0_502] : memref<1x44x11x64xbf16, #tpu.memory_space<vmem>>, vector<1x1x10x64xbf16>
    %313 = vector.shape_cast %312 : vector<1x1x10x64xbf16> to vector<10x64xbf16>
    %c0_503 = arith.constant 0 : index
    %c10_504 = arith.constant 10 : index
    %c0_505 = arith.constant 0 : index
    %c0_506 = arith.constant 0 : index
    %314 = vector.load %arg1[%c0_503, %c10_504, %c0_505, %c0_506] : memref<1x44x11x64xbf16, #tpu.memory_space<vmem>>, vector<1x1x10x64xbf16>
    %315 = vector.shape_cast %314 : vector<1x1x10x64xbf16> to vector<10x64xbf16>
    %c0_507 = arith.constant 0 : index
    %c21 = arith.constant 21 : index
    %c0_508 = arith.constant 0 : index
    %c0_509 = arith.constant 0 : index
    %316 = vector.load %arg1[%c0_507, %c21, %c0_508, %c0_509] : memref<1x44x11x64xbf16, #tpu.memory_space<vmem>>, vector<1x1x10x64xbf16>
    %317 = vector.shape_cast %316 : vector<1x1x10x64xbf16> to vector<10x64xbf16>
    %318 = tpu.concatenate %311, %313, %315, %317 in 1 : vector<10x64xbf16>, vector<10x64xbf16>, vector<10x64xbf16>, vector<10x64xbf16> -> vector<10x256xbf16>
    %c90_510 = arith.constant 90 : index
    %c0_511 = arith.constant 0 : index
    %319 = vector.load %arg7[%c90_510, %c0_511] : memref<100x256xbf16, #tpu.memory_space<vmem>>, vector<10x256xbf16>
    tpu.vector_store %arg7[%c90_510, %c0_511], %318 {strides = array<i32>} : memref<100x256xbf16, #tpu.memory_space<vmem>>, vector<10x256xbf16>,
    %c0_512 = arith.constant 0 : index
    %c0_513 = arith.constant 0 : index
    %320 = vector.load %arg7[%c0_512, %c0_513] : memref<100x256xbf16, #tpu.memory_space<vmem>>, vector<100x256xbf16>
    %c0_514 = arith.constant 0 : index
    %c0_515 = arith.constant 0 : index
    %321 = vector.load %arg2[%c0_514, %c0_515] : memref<256x16xbf16, #tpu.memory_space<vmem>>, vector<256x16xbf16>
    %cst_516 = arith.constant dense<0.000000e+00> : vector<100x16xf32>
    %322 = tpu.matmul %320, %321, %cst_516 {dimension_numbers = #tpu.dot_dimension_numbers<[1], [0], [0], [1], [0, 0, 1, 1], [], []>} : vector<100x256xbf16>, vector<256x16xbf16>, vector<100x16xf32> -> vector<100x16xf32>
    %c0_517 = arith.constant 0 : index
    %c0_518 = arith.constant 0 : index
    %323 = vector.load %arg3[%c0_517, %c0_518] : memref<1x16xf32, #tpu.memory_space<vmem>>, vector<1x16xf32>
    %324 = vector.broadcast %323 : vector<1x16xf32> to vector<100x16xf32>
    %325 = arith.addf %322, %324 : vector<100x16xf32>
    %cst_519 = arith.constant 0.000000e+00 : f32
    %326 = vector.broadcast %cst_519 : f32 to vector<100x16xf32>
    %327 = arith.maximumf %325, %326 : vector<100x16xf32>
    %328 = arith.truncf %327 : vector<100x16xf32> to vector<100x16xbf16>
    %c0_520 = arith.constant 0 : index
    %c32 = arith.constant 32 : index
    %329 = vector.load %arg8[%c0_520, %c32] : memref<100x64xbf16, #tpu.memory_space<vmem>>, vector<100x16xbf16>
    tpu.vector_store %arg8[%c0_520, %c32], %328 {strides = array<i32>} : memref<100x64xbf16, #tpu.memory_space<vmem>>, vector<100x16xbf16>,
    %c0_521 = arith.constant 0 : index
    %c33_522 = arith.constant 33 : index
    %c0_523 = arith.constant 0 : index
    %c0_524 = arith.constant 0 : index
    %330 = vector.load %arg1[%c0_521, %c33_522, %c0_523, %c0_524] : memref<1x44x11x64xbf16, #tpu.memory_space<vmem>>, vector<1x1x10x64xbf16>
    %331 = vector.shape_cast %330 : vector<1x1x10x64xbf16> to vector<10x64xbf16>
    %c0_525 = arith.constant 0 : index
    %c22_526 = arith.constant 22 : index
    %c1_527 = arith.constant 1 : index
    %c0_528 = arith.constant 0 : index
    %332 = vector.load %arg1[%c0_525, %c22_526, %c1_527, %c0_528] : memref<1x44x11x64xbf16, #tpu.memory_space<vmem>>, vector<1x1x10x64xbf16>
    %333 = vector.shape_cast %332 : vector<1x1x10x64xbf16> to vector<10x64xbf16>
    %c0_529 = arith.constant 0 : index
    %c12_530 = arith.constant 12 : index
    %c0_531 = arith.constant 0 : index
    %c0_532 = arith.constant 0 : index
    %334 = vector.load %arg1[%c0_529, %c12_530, %c0_531, %c0_532] : memref<1x44x11x64xbf16, #tpu.memory_space<vmem>>, vector<1x1x10x64xbf16>
    %335 = vector.shape_cast %334 : vector<1x1x10x64xbf16> to vector<10x64xbf16>
    %c0_533 = arith.constant 0 : index
    %c1_534 = arith.constant 1 : index
    %c1_535 = arith.constant 1 : index
    %c0_536 = arith.constant 0 : index
    %336 = vector.load %arg1[%c0_533, %c1_534, %c1_535, %c0_536] : memref<1x44x11x64xbf16, #tpu.memory_space<vmem>>, vector<1x1x10x64xbf16>
    %337 = vector.shape_cast %336 : vector<1x1x10x64xbf16> to vector<10x64xbf16>
    %338 = tpu.concatenate %331, %333, %335, %337 in 1 : vector<10x64xbf16>, vector<10x64xbf16>, vector<10x64xbf16>, vector<10x64xbf16> -> vector<10x256xbf16>
    %c0_537 = arith.constant 0 : index
    %c0_538 = arith.constant 0 : index
    %339 = vector.load %arg7[%c0_537, %c0_538] : memref<100x256xbf16, #tpu.memory_space<vmem>>, vector<10x256xbf16>
    tpu.vector_store %arg7[%c0_537, %c0_538], %338 {strides = array<i32>} : memref<100x256xbf16, #tpu.memory_space<vmem>>, vector<10x256xbf16>,
    %c0_539 = arith.constant 0 : index
    %c34_540 = arith.constant 34 : index
    %c0_541 = arith.constant 0 : index
    %c0_542 = arith.constant 0 : index
    %340 = vector.load %arg1[%c0_539, %c34_540, %c0_541, %c0_542] : memref<1x44x11x64xbf16, #tpu.memory_space<vmem>>, vector<1x1x10x64xbf16>
    %341 = vector.shape_cast %340 : vector<1x1x10x64xbf16> to vector<10x64xbf16>
    %c0_543 = arith.constant 0 : index
    %c23_544 = arith.constant 23 : index
    %c1_545 = arith.constant 1 : index
    %c0_546 = arith.constant 0 : index
    %342 = vector.load %arg1[%c0_543, %c23_544, %c1_545, %c0_546] : memref<1x44x11x64xbf16, #tpu.memory_space<vmem>>, vector<1x1x10x64xbf16>
    %343 = vector.shape_cast %342 : vector<1x1x10x64xbf16> to vector<10x64xbf16>
    %c0_547 = arith.constant 0 : index
    %c13_548 = arith.constant 13 : index
    %c0_549 = arith.constant 0 : index
    %c0_550 = arith.constant 0 : index
    %344 = vector.load %arg1[%c0_547, %c13_548, %c0_549, %c0_550] : memref<1x44x11x64xbf16, #tpu.memory_space<vmem>>, vector<1x1x10x64xbf16>
    %345 = vector.shape_cast %344 : vector<1x1x10x64xbf16> to vector<10x64xbf16>
    %c0_551 = arith.constant 0 : index
    %c2_552 = arith.constant 2 : index
    %c1_553 = arith.constant 1 : index
    %c0_554 = arith.constant 0 : index
    %346 = vector.load %arg1[%c0_551, %c2_552, %c1_553, %c0_554] : memref<1x44x11x64xbf16, #tpu.memory_space<vmem>>, vector<1x1x10x64xbf16>
    %347 = vector.shape_cast %346 : vector<1x1x10x64xbf16> to vector<10x64xbf16>
    %348 = tpu.concatenate %341, %343, %345, %347 in 1 : vector<10x64xbf16>, vector<10x64xbf16>, vector<10x64xbf16>, vector<10x64xbf16> -> vector<10x256xbf16>
    %c10_555 = arith.constant 10 : index
    %c0_556 = arith.constant 0 : index
    %349 = vector.load %arg7[%c10_555, %c0_556] : memref<100x256xbf16, #tpu.memory_space<vmem>>, vector<10x256xbf16>
    tpu.vector_store %arg7[%c10_555, %c0_556], %348 {strides = array<i32>} : memref<100x256xbf16, #tpu.memory_space<vmem>>, vector<10x256xbf16>,
    %c0_557 = arith.constant 0 : index
    %c35_558 = arith.constant 35 : index
    %c0_559 = arith.constant 0 : index
    %c0_560 = arith.constant 0 : index
    %350 = vector.load %arg1[%c0_557, %c35_558, %c0_559, %c0_560] : memref<1x44x11x64xbf16, #tpu.memory_space<vmem>>, vector<1x1x10x64xbf16>
    %351 = vector.shape_cast %350 : vector<1x1x10x64xbf16> to vector<10x64xbf16>
    %c0_561 = arith.constant 0 : index
    %c24_562 = arith.constant 24 : index
    %c1_563 = arith.constant 1 : index
    %c0_564 = arith.constant 0 : index
    %352 = vector.load %arg1[%c0_561, %c24_562, %c1_563, %c0_564] : memref<1x44x11x64xbf16, #tpu.memory_space<vmem>>, vector<1x1x10x64xbf16>
    %353 = vector.shape_cast %352 : vector<1x1x10x64xbf16> to vector<10x64xbf16>
    %c0_565 = arith.constant 0 : index
    %c14_566 = arith.constant 14 : index
    %c0_567 = arith.constant 0 : index
    %c0_568 = arith.constant 0 : index
    %354 = vector.load %arg1[%c0_565, %c14_566, %c0_567, %c0_568] : memref<1x44x11x64xbf16, #tpu.memory_space<vmem>>, vector<1x1x10x64xbf16>
    %355 = vector.shape_cast %354 : vector<1x1x10x64xbf16> to vector<10x64xbf16>
    %c0_569 = arith.constant 0 : index
    %c3_570 = arith.constant 3 : index
    %c1_571 = arith.constant 1 : index
    %c0_572 = arith.constant 0 : index
    %356 = vector.load %arg1[%c0_569, %c3_570, %c1_571, %c0_572] : memref<1x44x11x64xbf16, #tpu.memory_space<vmem>>, vector<1x1x10x64xbf16>
    %357 = vector.shape_cast %356 : vector<1x1x10x64xbf16> to vector<10x64xbf16>
    %358 = tpu.concatenate %351, %353, %355, %357 in 1 : vector<10x64xbf16>, vector<10x64xbf16>, vector<10x64xbf16>, vector<10x64xbf16> -> vector<10x256xbf16>
    %c20_573 = arith.constant 20 : index
    %c0_574 = arith.constant 0 : index
    %359 = vector.load %arg7[%c20_573, %c0_574] : memref<100x256xbf16, #tpu.memory_space<vmem>>, vector<10x256xbf16>
    tpu.vector_store %arg7[%c20_573, %c0_574], %358 {strides = array<i32>} : memref<100x256xbf16, #tpu.memory_space<vmem>>, vector<10x256xbf16>,
    %c0_575 = arith.constant 0 : index
    %c36_576 = arith.constant 36 : index
    %c0_577 = arith.constant 0 : index
    %c0_578 = arith.constant 0 : index
    %360 = vector.load %arg1[%c0_575, %c36_576, %c0_577, %c0_578] : memref<1x44x11x64xbf16, #tpu.memory_space<vmem>>, vector<1x1x10x64xbf16>
    %361 = vector.shape_cast %360 : vector<1x1x10x64xbf16> to vector<10x64xbf16>
    %c0_579 = arith.constant 0 : index
    %c25_580 = arith.constant 25 : index
    %c1_581 = arith.constant 1 : index
    %c0_582 = arith.constant 0 : index
    %362 = vector.load %arg1[%c0_579, %c25_580, %c1_581, %c0_582] : memref<1x44x11x64xbf16, #tpu.memory_space<vmem>>, vector<1x1x10x64xbf16>
    %363 = vector.shape_cast %362 : vector<1x1x10x64xbf16> to vector<10x64xbf16>
    %c0_583 = arith.constant 0 : index
    %c15_584 = arith.constant 15 : index
    %c0_585 = arith.constant 0 : index
    %c0_586 = arith.constant 0 : index
    %364 = vector.load %arg1[%c0_583, %c15_584, %c0_585, %c0_586] : memref<1x44x11x64xbf16, #tpu.memory_space<vmem>>, vector<1x1x10x64xbf16>
    %365 = vector.shape_cast %364 : vector<1x1x10x64xbf16> to vector<10x64xbf16>
    %c0_587 = arith.constant 0 : index
    %c4_588 = arith.constant 4 : index
    %c1_589 = arith.constant 1 : index
    %c0_590 = arith.constant 0 : index
    %366 = vector.load %arg1[%c0_587, %c4_588, %c1_589, %c0_590] : memref<1x44x11x64xbf16, #tpu.memory_space<vmem>>, vector<1x1x10x64xbf16>
    %367 = vector.shape_cast %366 : vector<1x1x10x64xbf16> to vector<10x64xbf16>
    %368 = tpu.concatenate %361, %363, %365, %367 in 1 : vector<10x64xbf16>, vector<10x64xbf16>, vector<10x64xbf16>, vector<10x64xbf16> -> vector<10x256xbf16>
    %c30_591 = arith.constant 30 : index
    %c0_592 = arith.constant 0 : index
    %369 = vector.load %arg7[%c30_591, %c0_592] : memref<100x256xbf16, #tpu.memory_space<vmem>>, vector<10x256xbf16>
    tpu.vector_store %arg7[%c30_591, %c0_592], %368 {strides = array<i32>} : memref<100x256xbf16, #tpu.memory_space<vmem>>, vector<10x256xbf16>,
    %c0_593 = arith.constant 0 : index
    %c37_594 = arith.constant 37 : index
    %c0_595 = arith.constant 0 : index
    %c0_596 = arith.constant 0 : index
    %370 = vector.load %arg1[%c0_593, %c37_594, %c0_595, %c0_596] : memref<1x44x11x64xbf16, #tpu.memory_space<vmem>>, vector<1x1x10x64xbf16>
    %371 = vector.shape_cast %370 : vector<1x1x10x64xbf16> to vector<10x64xbf16>
    %c0_597 = arith.constant 0 : index
    %c26_598 = arith.constant 26 : index
    %c1_599 = arith.constant 1 : index
    %c0_600 = arith.constant 0 : index
    %372 = vector.load %arg1[%c0_597, %c26_598, %c1_599, %c0_600] : memref<1x44x11x64xbf16, #tpu.memory_space<vmem>>, vector<1x1x10x64xbf16>
    %373 = vector.shape_cast %372 : vector<1x1x10x64xbf16> to vector<10x64xbf16>
    %c0_601 = arith.constant 0 : index
    %c16_602 = arith.constant 16 : index
    %c0_603 = arith.constant 0 : index
    %c0_604 = arith.constant 0 : index
    %374 = vector.load %arg1[%c0_601, %c16_602, %c0_603, %c0_604] : memref<1x44x11x64xbf16, #tpu.memory_space<vmem>>, vector<1x1x10x64xbf16>
    %375 = vector.shape_cast %374 : vector<1x1x10x64xbf16> to vector<10x64xbf16>
    %c0_605 = arith.constant 0 : index
    %c5_606 = arith.constant 5 : index
    %c1_607 = arith.constant 1 : index
    %c0_608 = arith.constant 0 : index
    %376 = vector.load %arg1[%c0_605, %c5_606, %c1_607, %c0_608] : memref<1x44x11x64xbf16, #tpu.memory_space<vmem>>, vector<1x1x10x64xbf16>
    %377 = vector.shape_cast %376 : vector<1x1x10x64xbf16> to vector<10x64xbf16>
    %378 = tpu.concatenate %371, %373, %375, %377 in 1 : vector<10x64xbf16>, vector<10x64xbf16>, vector<10x64xbf16>, vector<10x64xbf16> -> vector<10x256xbf16>
    %c40_609 = arith.constant 40 : index
    %c0_610 = arith.constant 0 : index
    %379 = vector.load %arg7[%c40_609, %c0_610] : memref<100x256xbf16, #tpu.memory_space<vmem>>, vector<10x256xbf16>
    tpu.vector_store %arg7[%c40_609, %c0_610], %378 {strides = array<i32>} : memref<100x256xbf16, #tpu.memory_space<vmem>>, vector<10x256xbf16>,
    %c0_611 = arith.constant 0 : index
    %c38_612 = arith.constant 38 : index
    %c0_613 = arith.constant 0 : index
    %c0_614 = arith.constant 0 : index
    %380 = vector.load %arg1[%c0_611, %c38_612, %c0_613, %c0_614] : memref<1x44x11x64xbf16, #tpu.memory_space<vmem>>, vector<1x1x10x64xbf16>
    %381 = vector.shape_cast %380 : vector<1x1x10x64xbf16> to vector<10x64xbf16>
    %c0_615 = arith.constant 0 : index
    %c27_616 = arith.constant 27 : index
    %c1_617 = arith.constant 1 : index
    %c0_618 = arith.constant 0 : index
    %382 = vector.load %arg1[%c0_615, %c27_616, %c1_617, %c0_618] : memref<1x44x11x64xbf16, #tpu.memory_space<vmem>>, vector<1x1x10x64xbf16>
    %383 = vector.shape_cast %382 : vector<1x1x10x64xbf16> to vector<10x64xbf16>
    %c0_619 = arith.constant 0 : index
    %c17_620 = arith.constant 17 : index
    %c0_621 = arith.constant 0 : index
    %c0_622 = arith.constant 0 : index
    %384 = vector.load %arg1[%c0_619, %c17_620, %c0_621, %c0_622] : memref<1x44x11x64xbf16, #tpu.memory_space<vmem>>, vector<1x1x10x64xbf16>
    %385 = vector.shape_cast %384 : vector<1x1x10x64xbf16> to vector<10x64xbf16>
    %c0_623 = arith.constant 0 : index
    %c6_624 = arith.constant 6 : index
    %c1_625 = arith.constant 1 : index
    %c0_626 = arith.constant 0 : index
    %386 = vector.load %arg1[%c0_623, %c6_624, %c1_625, %c0_626] : memref<1x44x11x64xbf16, #tpu.memory_space<vmem>>, vector<1x1x10x64xbf16>
    %387 = vector.shape_cast %386 : vector<1x1x10x64xbf16> to vector<10x64xbf16>
    %388 = tpu.concatenate %381, %383, %385, %387 in 1 : vector<10x64xbf16>, vector<10x64xbf16>, vector<10x64xbf16>, vector<10x64xbf16> -> vector<10x256xbf16>
    %c50_627 = arith.constant 50 : index
    %c0_628 = arith.constant 0 : index
    %389 = vector.load %arg7[%c50_627, %c0_628] : memref<100x256xbf16, #tpu.memory_space<vmem>>, vector<10x256xbf16>
    tpu.vector_store %arg7[%c50_627, %c0_628], %388 {strides = array<i32>} : memref<100x256xbf16, #tpu.memory_space<vmem>>, vector<10x256xbf16>,
    %c0_629 = arith.constant 0 : index
    %c39_630 = arith.constant 39 : index
    %c0_631 = arith.constant 0 : index
    %c0_632 = arith.constant 0 : index
    %390 = vector.load %arg1[%c0_629, %c39_630, %c0_631, %c0_632] : memref<1x44x11x64xbf16, #tpu.memory_space<vmem>>, vector<1x1x10x64xbf16>
    %391 = vector.shape_cast %390 : vector<1x1x10x64xbf16> to vector<10x64xbf16>
    %c0_633 = arith.constant 0 : index
    %c28_634 = arith.constant 28 : index
    %c1_635 = arith.constant 1 : index
    %c0_636 = arith.constant 0 : index
    %392 = vector.load %arg1[%c0_633, %c28_634, %c1_635, %c0_636] : memref<1x44x11x64xbf16, #tpu.memory_space<vmem>>, vector<1x1x10x64xbf16>
    %393 = vector.shape_cast %392 : vector<1x1x10x64xbf16> to vector<10x64xbf16>
    %c0_637 = arith.constant 0 : index
    %c18_638 = arith.constant 18 : index
    %c0_639 = arith.constant 0 : index
    %c0_640 = arith.constant 0 : index
    %394 = vector.load %arg1[%c0_637, %c18_638, %c0_639, %c0_640] : memref<1x44x11x64xbf16, #tpu.memory_space<vmem>>, vector<1x1x10x64xbf16>
    %395 = vector.shape_cast %394 : vector<1x1x10x64xbf16> to vector<10x64xbf16>
    %c0_641 = arith.constant 0 : index
    %c7_642 = arith.constant 7 : index
    %c1_643 = arith.constant 1 : index
    %c0_644 = arith.constant 0 : index
    %396 = vector.load %arg1[%c0_641, %c7_642, %c1_643, %c0_644] : memref<1x44x11x64xbf16, #tpu.memory_space<vmem>>, vector<1x1x10x64xbf16>
    %397 = vector.shape_cast %396 : vector<1x1x10x64xbf16> to vector<10x64xbf16>
    %398 = tpu.concatenate %391, %393, %395, %397 in 1 : vector<10x64xbf16>, vector<10x64xbf16>, vector<10x64xbf16>, vector<10x64xbf16> -> vector<10x256xbf16>
    %c60_645 = arith.constant 60 : index
    %c0_646 = arith.constant 0 : index
    %399 = vector.load %arg7[%c60_645, %c0_646] : memref<100x256xbf16, #tpu.memory_space<vmem>>, vector<10x256xbf16>
    tpu.vector_store %arg7[%c60_645, %c0_646], %398 {strides = array<i32>} : memref<100x256xbf16, #tpu.memory_space<vmem>>, vector<10x256xbf16>,
    %c0_647 = arith.constant 0 : index
    %c40_648 = arith.constant 40 : index
    %c0_649 = arith.constant 0 : index
    %c0_650 = arith.constant 0 : index
    %400 = vector.load %arg1[%c0_647, %c40_648, %c0_649, %c0_650] : memref<1x44x11x64xbf16, #tpu.memory_space<vmem>>, vector<1x1x10x64xbf16>
    %401 = vector.shape_cast %400 : vector<1x1x10x64xbf16> to vector<10x64xbf16>
    %c0_651 = arith.constant 0 : index
    %c29_652 = arith.constant 29 : index
    %c1_653 = arith.constant 1 : index
    %c0_654 = arith.constant 0 : index
    %402 = vector.load %arg1[%c0_651, %c29_652, %c1_653, %c0_654] : memref<1x44x11x64xbf16, #tpu.memory_space<vmem>>, vector<1x1x10x64xbf16>
    %403 = vector.shape_cast %402 : vector<1x1x10x64xbf16> to vector<10x64xbf16>
    %c0_655 = arith.constant 0 : index
    %c19_656 = arith.constant 19 : index
    %c0_657 = arith.constant 0 : index
    %c0_658 = arith.constant 0 : index
    %404 = vector.load %arg1[%c0_655, %c19_656, %c0_657, %c0_658] : memref<1x44x11x64xbf16, #tpu.memory_space<vmem>>, vector<1x1x10x64xbf16>
    %405 = vector.shape_cast %404 : vector<1x1x10x64xbf16> to vector<10x64xbf16>
    %c0_659 = arith.constant 0 : index
    %c8_660 = arith.constant 8 : index
    %c1_661 = arith.constant 1 : index
    %c0_662 = arith.constant 0 : index
    %406 = vector.load %arg1[%c0_659, %c8_660, %c1_661, %c0_662] : memref<1x44x11x64xbf16, #tpu.memory_space<vmem>>, vector<1x1x10x64xbf16>
    %407 = vector.shape_cast %406 : vector<1x1x10x64xbf16> to vector<10x64xbf16>
    %408 = tpu.concatenate %401, %403, %405, %407 in 1 : vector<10x64xbf16>, vector<10x64xbf16>, vector<10x64xbf16>, vector<10x64xbf16> -> vector<10x256xbf16>
    %c70_663 = arith.constant 70 : index
    %c0_664 = arith.constant 0 : index
    %409 = vector.load %arg7[%c70_663, %c0_664] : memref<100x256xbf16, #tpu.memory_space<vmem>>, vector<10x256xbf16>
    tpu.vector_store %arg7[%c70_663, %c0_664], %408 {strides = array<i32>} : memref<100x256xbf16, #tpu.memory_space<vmem>>, vector<10x256xbf16>,
    %c0_665 = arith.constant 0 : index
    %c41_666 = arith.constant 41 : index
    %c0_667 = arith.constant 0 : index
    %c0_668 = arith.constant 0 : index
    %410 = vector.load %arg1[%c0_665, %c41_666, %c0_667, %c0_668] : memref<1x44x11x64xbf16, #tpu.memory_space<vmem>>, vector<1x1x10x64xbf16>
    %411 = vector.shape_cast %410 : vector<1x1x10x64xbf16> to vector<10x64xbf16>
    %c0_669 = arith.constant 0 : index
    %c30_670 = arith.constant 30 : index
    %c1_671 = arith.constant 1 : index
    %c0_672 = arith.constant 0 : index
    %412 = vector.load %arg1[%c0_669, %c30_670, %c1_671, %c0_672] : memref<1x44x11x64xbf16, #tpu.memory_space<vmem>>, vector<1x1x10x64xbf16>
    %413 = vector.shape_cast %412 : vector<1x1x10x64xbf16> to vector<10x64xbf16>
    %c0_673 = arith.constant 0 : index
    %c20_674 = arith.constant 20 : index
    %c0_675 = arith.constant 0 : index
    %c0_676 = arith.constant 0 : index
    %414 = vector.load %arg1[%c0_673, %c20_674, %c0_675, %c0_676] : memref<1x44x11x64xbf16, #tpu.memory_space<vmem>>, vector<1x1x10x64xbf16>
    %415 = vector.shape_cast %414 : vector<1x1x10x64xbf16> to vector<10x64xbf16>
    %c0_677 = arith.constant 0 : index
    %c9_678 = arith.constant 9 : index
    %c1_679 = arith.constant 1 : index
    %c0_680 = arith.constant 0 : index
    %416 = vector.load %arg1[%c0_677, %c9_678, %c1_679, %c0_680] : memref<1x44x11x64xbf16, #tpu.memory_space<vmem>>, vector<1x1x10x64xbf16>
    %417 = vector.shape_cast %416 : vector<1x1x10x64xbf16> to vector<10x64xbf16>
    %418 = tpu.concatenate %411, %413, %415, %417 in 1 : vector<10x64xbf16>, vector<10x64xbf16>, vector<10x64xbf16>, vector<10x64xbf16> -> vector<10x256xbf16>
    %c80_681 = arith.constant 80 : index
    %c0_682 = arith.constant 0 : index
    %419 = vector.load %arg7[%c80_681, %c0_682] : memref<100x256xbf16, #tpu.memory_space<vmem>>, vector<10x256xbf16>
    tpu.vector_store %arg7[%c80_681, %c0_682], %418 {strides = array<i32>} : memref<100x256xbf16, #tpu.memory_space<vmem>>, vector<10x256xbf16>,
    %c0_683 = arith.constant 0 : index
    %c42_684 = arith.constant 42 : index
    %c0_685 = arith.constant 0 : index
    %c0_686 = arith.constant 0 : index
    %420 = vector.load %arg1[%c0_683, %c42_684, %c0_685, %c0_686] : memref<1x44x11x64xbf16, #tpu.memory_space<vmem>>, vector<1x1x10x64xbf16>
    %421 = vector.shape_cast %420 : vector<1x1x10x64xbf16> to vector<10x64xbf16>
    %c0_687 = arith.constant 0 : index
    %c31_688 = arith.constant 31 : index
    %c1_689 = arith.constant 1 : index
    %c0_690 = arith.constant 0 : index
    %422 = vector.load %arg1[%c0_687, %c31_688, %c1_689, %c0_690] : memref<1x44x11x64xbf16, #tpu.memory_space<vmem>>, vector<1x1x10x64xbf16>
    %423 = vector.shape_cast %422 : vector<1x1x10x64xbf16> to vector<10x64xbf16>
    %c0_691 = arith.constant 0 : index
    %c21_692 = arith.constant 21 : index
    %c0_693 = arith.constant 0 : index
    %c0_694 = arith.constant 0 : index
    %424 = vector.load %arg1[%c0_691, %c21_692, %c0_693, %c0_694] : memref<1x44x11x64xbf16, #tpu.memory_space<vmem>>, vector<1x1x10x64xbf16>
    %425 = vector.shape_cast %424 : vector<1x1x10x64xbf16> to vector<10x64xbf16>
    %c0_695 = arith.constant 0 : index
    %c10_696 = arith.constant 10 : index
    %c1_697 = arith.constant 1 : index
    %c0_698 = arith.constant 0 : index
    %426 = vector.load %arg1[%c0_695, %c10_696, %c1_697, %c0_698] : memref<1x44x11x64xbf16, #tpu.memory_space<vmem>>, vector<1x1x10x64xbf16>
    %427 = vector.shape_cast %426 : vector<1x1x10x64xbf16> to vector<10x64xbf16>
    %428 = tpu.concatenate %421, %423, %425, %427 in 1 : vector<10x64xbf16>, vector<10x64xbf16>, vector<10x64xbf16>, vector<10x64xbf16> -> vector<10x256xbf16>
    %c90_699 = arith.constant 90 : index
    %c0_700 = arith.constant 0 : index
    %429 = vector.load %arg7[%c90_699, %c0_700] : memref<100x256xbf16, #tpu.memory_space<vmem>>, vector<10x256xbf16>
    tpu.vector_store %arg7[%c90_699, %c0_700], %428 {strides = array<i32>} : memref<100x256xbf16, #tpu.memory_space<vmem>>, vector<10x256xbf16>,
    %c0_701 = arith.constant 0 : index
    %c0_702 = arith.constant 0 : index
    %430 = vector.load %arg7[%c0_701, %c0_702] : memref<100x256xbf16, #tpu.memory_space<vmem>>, vector<100x256xbf16>
    %c0_703 = arith.constant 0 : index
    %c0_704 = arith.constant 0 : index
    %431 = vector.load %arg2[%c0_703, %c0_704] : memref<256x16xbf16, #tpu.memory_space<vmem>>, vector<256x16xbf16>
    %cst_705 = arith.constant dense<0.000000e+00> : vector<100x16xf32>
    %432 = tpu.matmul %430, %431, %cst_705 {dimension_numbers = #tpu.dot_dimension_numbers<[1], [0], [0], [1], [0, 0, 1, 1], [], []>} : vector<100x256xbf16>, vector<256x16xbf16>, vector<100x16xf32> -> vector<100x16xf32>
    %c0_706 = arith.constant 0 : index
    %c0_707 = arith.constant 0 : index
    %433 = vector.load %arg3[%c0_706, %c0_707] : memref<1x16xf32, #tpu.memory_space<vmem>>, vector<1x16xf32>
    %434 = vector.broadcast %433 : vector<1x16xf32> to vector<100x16xf32>
    %435 = arith.addf %432, %434 : vector<100x16xf32>
    %cst_708 = arith.constant 0.000000e+00 : f32
    %436 = vector.broadcast %cst_708 : f32 to vector<100x16xf32>
    %437 = arith.maximumf %435, %436 : vector<100x16xf32>
    %438 = arith.truncf %437 : vector<100x16xf32> to vector<100x16xbf16>
    %c0_709 = arith.constant 0 : index
    %c48 = arith.constant 48 : index
    %439 = vector.load %arg8[%c0_709, %c48] : memref<100x64xbf16, #tpu.memory_space<vmem>>, vector<100x16xbf16>
    tpu.vector_store %arg8[%c0_709, %c48], %438 {strides = array<i32>} : memref<100x64xbf16, #tpu.memory_space<vmem>>, vector<100x16xbf16>,
    %c0_710 = arith.constant 0 : index
    %c0_711 = arith.constant 0 : index
    %440 = vector.load %arg8[%c0_710, %c0_711] : memref<100x64xbf16, #tpu.memory_space<vmem>>, vector<9x64xbf16>
    %c1_712 = arith.constant 1 : index
    %c0_713 = arith.constant 0 : index
    %441 = vector.load %arg8[%c1_712, %c0_713] : memref<100x64xbf16, #tpu.memory_space<vmem>>, vector<9x64xbf16>
    %c10_714 = arith.constant 10 : index
    %c0_715 = arith.constant 0 : index
    %442 = vector.load %arg8[%c10_714, %c0_715] : memref<100x64xbf16, #tpu.memory_space<vmem>>, vector<9x64xbf16>
    %c11_716 = arith.constant 11 : index
    %c0_717 = arith.constant 0 : index
    %443 = vector.load %arg8[%c11_716, %c0_717] : memref<100x64xbf16, #tpu.memory_space<vmem>>, vector<9x64xbf16>
    %444 = tpu.concatenate %440, %441, %442, %443 in 1 : vector<9x64xbf16>, vector<9x64xbf16>, vector<9x64xbf16>, vector<9x64xbf16> -> vector<9x256xbf16>
    %c0_718 = arith.constant 0 : index
    %c0_719 = arith.constant 0 : index
    %445 = vector.load %arg9[%c0_718, %c0_719] : memref<81x256xbf16, #tpu.memory_space<vmem>>, vector<9x256xbf16>
    tpu.vector_store %arg9[%c0_718, %c0_719], %444 {strides = array<i32>} : memref<81x256xbf16, #tpu.memory_space<vmem>>, vector<9x256xbf16>,
    %c10_720 = arith.constant 10 : index
    %c0_721 = arith.constant 0 : index
    %446 = vector.load %arg8[%c10_720, %c0_721] : memref<100x64xbf16, #tpu.memory_space<vmem>>, vector<9x64xbf16>
    %c11_722 = arith.constant 11 : index
    %c0_723 = arith.constant 0 : index
    %447 = vector.load %arg8[%c11_722, %c0_723] : memref<100x64xbf16, #tpu.memory_space<vmem>>, vector<9x64xbf16>
    %c20_724 = arith.constant 20 : index
    %c0_725 = arith.constant 0 : index
    %448 = vector.load %arg8[%c20_724, %c0_725] : memref<100x64xbf16, #tpu.memory_space<vmem>>, vector<9x64xbf16>
    %c21_726 = arith.constant 21 : index
    %c0_727 = arith.constant 0 : index
    %449 = vector.load %arg8[%c21_726, %c0_727] : memref<100x64xbf16, #tpu.memory_space<vmem>>, vector<9x64xbf16>
    %450 = tpu.concatenate %446, %447, %448, %449 in 1 : vector<9x64xbf16>, vector<9x64xbf16>, vector<9x64xbf16>, vector<9x64xbf16> -> vector<9x256xbf16>
    %c9_728 = arith.constant 9 : index
    %c0_729 = arith.constant 0 : index
    %451 = vector.load %arg9[%c9_728, %c0_729] : memref<81x256xbf16, #tpu.memory_space<vmem>>, vector<9x256xbf16>
    tpu.vector_store %arg9[%c9_728, %c0_729], %450 {strides = array<i32>} : memref<81x256xbf16, #tpu.memory_space<vmem>>, vector<9x256xbf16>,
    %c20_730 = arith.constant 20 : index
    %c0_731 = arith.constant 0 : index
    %452 = vector.load %arg8[%c20_730, %c0_731] : memref<100x64xbf16, #tpu.memory_space<vmem>>, vector<9x64xbf16>
    %c21_732 = arith.constant 21 : index
    %c0_733 = arith.constant 0 : index
    %453 = vector.load %arg8[%c21_732, %c0_733] : memref<100x64xbf16, #tpu.memory_space<vmem>>, vector<9x64xbf16>
    %c30_734 = arith.constant 30 : index
    %c0_735 = arith.constant 0 : index
    %454 = vector.load %arg8[%c30_734, %c0_735] : memref<100x64xbf16, #tpu.memory_space<vmem>>, vector<9x64xbf16>
    %c31_736 = arith.constant 31 : index
    %c0_737 = arith.constant 0 : index
    %455 = vector.load %arg8[%c31_736, %c0_737] : memref<100x64xbf16, #tpu.memory_space<vmem>>, vector<9x64xbf16>
    %456 = tpu.concatenate %452, %453, %454, %455 in 1 : vector<9x64xbf16>, vector<9x64xbf16>, vector<9x64xbf16>, vector<9x64xbf16> -> vector<9x256xbf16>
    %c18_738 = arith.constant 18 : index
    %c0_739 = arith.constant 0 : index
    %457 = vector.load %arg9[%c18_738, %c0_739] : memref<81x256xbf16, #tpu.memory_space<vmem>>, vector<9x256xbf16>
    tpu.vector_store %arg9[%c18_738, %c0_739], %456 {strides = array<i32>} : memref<81x256xbf16, #tpu.memory_space<vmem>>, vector<9x256xbf16>,
    %c30_740 = arith.constant 30 : index
    %c0_741 = arith.constant 0 : index
    %458 = vector.load %arg8[%c30_740, %c0_741] : memref<100x64xbf16, #tpu.memory_space<vmem>>, vector<9x64xbf16>
    %c31_742 = arith.constant 31 : index
    %c0_743 = arith.constant 0 : index
    %459 = vector.load %arg8[%c31_742, %c0_743] : memref<100x64xbf16, #tpu.memory_space<vmem>>, vector<9x64xbf16>
    %c40_744 = arith.constant 40 : index
    %c0_745 = arith.constant 0 : index
    %460 = vector.load %arg8[%c40_744, %c0_745] : memref<100x64xbf16, #tpu.memory_space<vmem>>, vector<9x64xbf16>
    %c41_746 = arith.constant 41 : index
    %c0_747 = arith.constant 0 : index
    %461 = vector.load %arg8[%c41_746, %c0_747] : memref<100x64xbf16, #tpu.memory_space<vmem>>, vector<9x64xbf16>
    %462 = tpu.concatenate %458, %459, %460, %461 in 1 : vector<9x64xbf16>, vector<9x64xbf16>, vector<9x64xbf16>, vector<9x64xbf16> -> vector<9x256xbf16>
    %c27_748 = arith.constant 27 : index
    %c0_749 = arith.constant 0 : index
    %463 = vector.load %arg9[%c27_748, %c0_749] : memref<81x256xbf16, #tpu.memory_space<vmem>>, vector<9x256xbf16>
    tpu.vector_store %arg9[%c27_748, %c0_749], %462 {strides = array<i32>} : memref<81x256xbf16, #tpu.memory_space<vmem>>, vector<9x256xbf16>,
    %c40_750 = arith.constant 40 : index
    %c0_751 = arith.constant 0 : index
    %464 = vector.load %arg8[%c40_750, %c0_751] : memref<100x64xbf16, #tpu.memory_space<vmem>>, vector<9x64xbf16>
    %c41_752 = arith.constant 41 : index
    %c0_753 = arith.constant 0 : index
    %465 = vector.load %arg8[%c41_752, %c0_753] : memref<100x64xbf16, #tpu.memory_space<vmem>>, vector<9x64xbf16>
    %c50_754 = arith.constant 50 : index
    %c0_755 = arith.constant 0 : index
    %466 = vector.load %arg8[%c50_754, %c0_755] : memref<100x64xbf16, #tpu.memory_space<vmem>>, vector<9x64xbf16>
    %c51 = arith.constant 51 : index
    %c0_756 = arith.constant 0 : index
    %467 = vector.load %arg8[%c51, %c0_756] : memref<100x64xbf16, #tpu.memory_space<vmem>>, vector<9x64xbf16>
    %468 = tpu.concatenate %464, %465, %466, %467 in 1 : vector<9x64xbf16>, vector<9x64xbf16>, vector<9x64xbf16>, vector<9x64xbf16> -> vector<9x256xbf16>
    %c36_757 = arith.constant 36 : index
    %c0_758 = arith.constant 0 : index
    %469 = vector.load %arg9[%c36_757, %c0_758] : memref<81x256xbf16, #tpu.memory_space<vmem>>, vector<9x256xbf16>
    tpu.vector_store %arg9[%c36_757, %c0_758], %468 {strides = array<i32>} : memref<81x256xbf16, #tpu.memory_space<vmem>>, vector<9x256xbf16>,
    %c50_759 = arith.constant 50 : index
    %c0_760 = arith.constant 0 : index
    %470 = vector.load %arg8[%c50_759, %c0_760] : memref<100x64xbf16, #tpu.memory_space<vmem>>, vector<9x64xbf16>
    %c51_761 = arith.constant 51 : index
    %c0_762 = arith.constant 0 : index
    %471 = vector.load %arg8[%c51_761, %c0_762] : memref<100x64xbf16, #tpu.memory_space<vmem>>, vector<9x64xbf16>
    %c60_763 = arith.constant 60 : index
    %c0_764 = arith.constant 0 : index
    %472 = vector.load %arg8[%c60_763, %c0_764] : memref<100x64xbf16, #tpu.memory_space<vmem>>, vector<9x64xbf16>
    %c61 = arith.constant 61 : index
    %c0_765 = arith.constant 0 : index
    %473 = vector.load %arg8[%c61, %c0_765] : memref<100x64xbf16, #tpu.memory_space<vmem>>, vector<9x64xbf16>
    %474 = tpu.concatenate %470, %471, %472, %473 in 1 : vector<9x64xbf16>, vector<9x64xbf16>, vector<9x64xbf16>, vector<9x64xbf16> -> vector<9x256xbf16>
    %c45 = arith.constant 45 : index
    %c0_766 = arith.constant 0 : index
    %475 = vector.load %arg9[%c45, %c0_766] : memref<81x256xbf16, #tpu.memory_space<vmem>>, vector<9x256xbf16>
    tpu.vector_store %arg9[%c45, %c0_766], %474 {strides = array<i32>} : memref<81x256xbf16, #tpu.memory_space<vmem>>, vector<9x256xbf16>,
    %c60_767 = arith.constant 60 : index
    %c0_768 = arith.constant 0 : index
    %476 = vector.load %arg8[%c60_767, %c0_768] : memref<100x64xbf16, #tpu.memory_space<vmem>>, vector<9x64xbf16>
    %c61_769 = arith.constant 61 : index
    %c0_770 = arith.constant 0 : index
    %477 = vector.load %arg8[%c61_769, %c0_770] : memref<100x64xbf16, #tpu.memory_space<vmem>>, vector<9x64xbf16>
    %c70_771 = arith.constant 70 : index
    %c0_772 = arith.constant 0 : index
    %478 = vector.load %arg8[%c70_771, %c0_772] : memref<100x64xbf16, #tpu.memory_space<vmem>>, vector<9x64xbf16>
    %c71 = arith.constant 71 : index
    %c0_773 = arith.constant 0 : index
    %479 = vector.load %arg8[%c71, %c0_773] : memref<100x64xbf16, #tpu.memory_space<vmem>>, vector<9x64xbf16>
    %480 = tpu.concatenate %476, %477, %478, %479 in 1 : vector<9x64xbf16>, vector<9x64xbf16>, vector<9x64xbf16>, vector<9x64xbf16> -> vector<9x256xbf16>
    %c54 = arith.constant 54 : index
    %c0_774 = arith.constant 0 : index
    %481 = vector.load %arg9[%c54, %c0_774] : memref<81x256xbf16, #tpu.memory_space<vmem>>, vector<9x256xbf16>
    tpu.vector_store %arg9[%c54, %c0_774], %480 {strides = array<i32>} : memref<81x256xbf16, #tpu.memory_space<vmem>>, vector<9x256xbf16>,
    %c70_775 = arith.constant 70 : index
    %c0_776 = arith.constant 0 : index
    %482 = vector.load %arg8[%c70_775, %c0_776] : memref<100x64xbf16, #tpu.memory_space<vmem>>, vector<9x64xbf16>
    %c71_777 = arith.constant 71 : index
    %c0_778 = arith.constant 0 : index
    %483 = vector.load %arg8[%c71_777, %c0_778] : memref<100x64xbf16, #tpu.memory_space<vmem>>, vector<9x64xbf16>
    %c80_779 = arith.constant 80 : index
    %c0_780 = arith.constant 0 : index
    %484 = vector.load %arg8[%c80_779, %c0_780] : memref<100x64xbf16, #tpu.memory_space<vmem>>, vector<9x64xbf16>
    %c81 = arith.constant 81 : index
    %c0_781 = arith.constant 0 : index
    %485 = vector.load %arg8[%c81, %c0_781] : memref<100x64xbf16, #tpu.memory_space<vmem>>, vector<9x64xbf16>
    %486 = tpu.concatenate %482, %483, %484, %485 in 1 : vector<9x64xbf16>, vector<9x64xbf16>, vector<9x64xbf16>, vector<9x64xbf16> -> vector<9x256xbf16>
    %c63 = arith.constant 63 : index
    %c0_782 = arith.constant 0 : index
    %487 = vector.load %arg9[%c63, %c0_782] : memref<81x256xbf16, #tpu.memory_space<vmem>>, vector<9x256xbf16>
    tpu.vector_store %arg9[%c63, %c0_782], %486 {strides = array<i32>} : memref<81x256xbf16, #tpu.memory_space<vmem>>, vector<9x256xbf16>,
    %c80_783 = arith.constant 80 : index
    %c0_784 = arith.constant 0 : index
    %488 = vector.load %arg8[%c80_783, %c0_784] : memref<100x64xbf16, #tpu.memory_space<vmem>>, vector<9x64xbf16>
    %c81_785 = arith.constant 81 : index
    %c0_786 = arith.constant 0 : index
    %489 = vector.load %arg8[%c81_785, %c0_786] : memref<100x64xbf16, #tpu.memory_space<vmem>>, vector<9x64xbf16>
    %c90_787 = arith.constant 90 : index
    %c0_788 = arith.constant 0 : index
    %490 = vector.load %arg8[%c90_787, %c0_788] : memref<100x64xbf16, #tpu.memory_space<vmem>>, vector<9x64xbf16>
    %c91 = arith.constant 91 : index
    %c0_789 = arith.constant 0 : index
    %491 = vector.load %arg8[%c91, %c0_789] : memref<100x64xbf16, #tpu.memory_space<vmem>>, vector<9x64xbf16>
    %492 = tpu.concatenate %488, %489, %490, %491 in 1 : vector<9x64xbf16>, vector<9x64xbf16>, vector<9x64xbf16>, vector<9x64xbf16> -> vector<9x256xbf16>
    %c72 = arith.constant 72 : index
    %c0_790 = arith.constant 0 : index
    %493 = vector.load %arg9[%c72, %c0_790] : memref<81x256xbf16, #tpu.memory_space<vmem>>, vector<9x256xbf16>
    tpu.vector_store %arg9[%c72, %c0_790], %492 {strides = array<i32>} : memref<81x256xbf16, #tpu.memory_space<vmem>>, vector<9x256xbf16>,
    %c0_791 = arith.constant 0 : index
    %c0_792 = arith.constant 0 : index
    %494 = vector.load %arg9[%c0_791, %c0_792] : memref<81x256xbf16, #tpu.memory_space<vmem>>, vector<81x256xbf16>
    %c0_793 = arith.constant 0 : index
    %c0_794 = arith.constant 0 : index
    %495 = vector.load %arg4[%c0_793, %c0_794] : memref<256x32xbf16, #tpu.memory_space<vmem>>, vector<256x32xbf16>
    %cst_795 = arith.constant dense<0.000000e+00> : vector<81x32xf32>
    %496 = tpu.matmul %494, %495, %cst_795 {dimension_numbers = #tpu.dot_dimension_numbers<[1], [0], [0], [1], [0, 0, 1, 1], [], []>} : vector<81x256xbf16>, vector<256x32xbf16>, vector<81x32xf32> -> vector<81x32xf32>
    %c0_796 = arith.constant 0 : index
    %c0_797 = arith.constant 0 : index
    %497 = vector.load %arg5[%c0_796, %c0_797] : memref<1x32xf32, #tpu.memory_space<vmem>>, vector<1x32xf32>
    %498 = vector.broadcast %497 : vector<1x32xf32> to vector<81x32xf32>
    %499 = arith.addf %496, %498 : vector<81x32xf32>
    %cst_798 = arith.constant 0.000000e+00 : f32
    %500 = vector.broadcast %cst_798 : f32 to vector<81x32xf32>
    %501 = arith.maximumf %499, %500 : vector<81x32xf32>
    %502 = arith.truncf %501 : vector<81x32xf32> to vector<81x32xbf16>
    %c0_799 = arith.constant 0 : index
    %c0_800 = arith.constant 0 : index
    %c0_801 = arith.constant 0 : index
    %503 = vector.load %arg6[%c0_799, %c0_800, %c0_801] : memref<1x81x32xbf16, #tpu.memory_space<vmem>>, vector<1x81x32xbf16>
    %504 = vector.shape_cast %503 : vector<1x81x32xbf16> to vector<81x32xbf16>
    %505 = vector.shape_cast %502 : vector<81x32xbf16> to vector<1x81x32xbf16>
    tpu.vector_store %arg6[%c0_799, %c0_800, %c0_801], %505 {strides = array<i32>} : memref<1x81x32xbf16, #tpu.memory_space<vmem>>, vector<1x81x32xbf16>,
    return
  }
  func.func @transform_0(%arg0: i32) -> (i32, i32, i32, i32) {
    %c0_i32 = arith.constant 0 : i32
    %c0_i32_0 = arith.constant 0 : i32
    %c0_i32_1 = arith.constant 0 : i32
    %c0_i32_2 = arith.constant 0 : i32
    return %arg0, %c0_i32, %c0_i32_0, %c0_i32_1 : i32, i32, i32, i32
  }
  func.func @transform_1(%arg0: i32) -> (i32, i32) {
    %c0_i32 = arith.constant 0 : i32
    %c0_i32_0 = arith.constant 0 : i32
    %c0_i32_1 = arith.constant 0 : i32
    return %c0_i32, %c0_i32_0 : i32, i32
  }
  func.func @transform_2(%arg0: i32) -> (i32, i32) {
    %c0_i32 = arith.constant 0 : i32
    %c0_i32_0 = arith.constant 0 : i32
    %c0_i32_1 = arith.constant 0 : i32
    return %c0_i32, %c0_i32_0 : i32, i32
  }
  func.func @transform_3(%arg0: i32) -> (i32, i32) {
    %c0_i32 = arith.constant 0 : i32
    %c0_i32_0 = arith.constant 0 : i32
    %c0_i32_1 = arith.constant 0 : i32
    return %c0_i32, %c0_i32_0 : i32, i32
  }
  func.func @transform_4(%arg0: i32) -> (i32, i32) {
    %c0_i32 = arith.constant 0 : i32
    %c0_i32_0 = arith.constant 0 : i32
    %c0_i32_1 = arith.constant 0 : i32
    return %c0_i32, %c0_i32_0 : i32, i32
  }
  func.func @transform_5(%arg0: i32) -> (i32, i32, i32) {
    %c0_i32 = arith.constant 0 : i32
    %c0_i32_0 = arith.constant 0 : i32
    %c0_i32_1 = arith.constant 0 : i32
    return %arg0, %c0_i32, %c0_i32_0 : i32, i32, i32
  }
}

module attributes {stable_mosaic.version = 11 : i64} {
  func.func @_mlp_kernel(%arg0: i32, %arg1: memref<8x2688xbf16, #tpu.memory_space<vmem>>, %arg2: memref<2688x256xbf16, #tpu.memory_space<vmem>>, %arg3: memref<1x256xf32, #tpu.memory_space<vmem>>, %arg4: memref<256x128xbf16, #tpu.memory_space<vmem>>, %arg5: memref<1x128xf32, #tpu.memory_space<vmem>>, %arg6: memref<8x128xf32, #tpu.memory_space<vmem>>) attributes {dimension_semantics = [#tpu.dimension_semantics<parallel>], iteration_bounds = array<i64: 1>, scalar_prefetch = 0 : i64, scratch_operands = 0 : i64, tpu.core_type = #tpu.core_type<tc>, window_params = [{transform_indices = @transform_0, window_bounds = array<i64: 8, 2688>}, {pipeline_mode = #tpu.pipeline_mode<synchronous>, transform_indices = @transform_1, window_bounds = array<i64: 2688, 256>}, {pipeline_mode = #tpu.pipeline_mode<synchronous>, transform_indices = @transform_2, window_bounds = array<i64: 1, 256>}, {pipeline_mode = #tpu.pipeline_mode<synchronous>, transform_indices = @transform_3, window_bounds = array<i64: 256, 128>}, {pipeline_mode = #tpu.pipeline_mode<synchronous>, transform_indices = @transform_4, window_bounds = array<i64: 1, 128>}, {transform_indices = @transform_5, window_bounds = array<i64: 8, 128>}]} {
    %c0 = arith.constant 0 : index
    %c0_0 = arith.constant 0 : index
    %0 = vector.load %arg1[%c0, %c0_0] : memref<8x2688xbf16, #tpu.memory_space<vmem>>, vector<8x2688xbf16>
    %c0_1 = arith.constant 0 : index
    %c0_2 = arith.constant 0 : index
    %1 = vector.load %arg2[%c0_1, %c0_2] : memref<2688x256xbf16, #tpu.memory_space<vmem>>, vector<2688x256xbf16>
    %cst = arith.constant dense<0.000000e+00> : vector<8x256xf32>
    %2 = tpu.matmul %0, %1, %cst {dimension_numbers = #tpu.dot_dimension_numbers<[1], [0], [0], [1], [0, 0, 1, 1], [], []>} : vector<8x2688xbf16>, vector<2688x256xbf16>, vector<8x256xf32> -> vector<8x256xf32>
    %c0_3 = arith.constant 0 : index
    %c0_4 = arith.constant 0 : index
    %3 = vector.load %arg3[%c0_3, %c0_4] : memref<1x256xf32, #tpu.memory_space<vmem>>, vector<1x256xf32>
    %4 = vector.broadcast %3 : vector<1x256xf32> to vector<8x256xf32>
    %5 = arith.addf %2, %4 : vector<8x256xf32>
    %cst_5 = arith.constant 0.000000e+00 : f32
    %6 = vector.broadcast %cst_5 : f32 to vector<8x256xf32>
    %7 = arith.maximumf %5, %6 : vector<8x256xf32>
    %8 = arith.truncf %7 : vector<8x256xf32> to vector<8x256xbf16>
    %c0_6 = arith.constant 0 : index
    %c0_7 = arith.constant 0 : index
    %9 = vector.load %arg4[%c0_6, %c0_7] : memref<256x128xbf16, #tpu.memory_space<vmem>>, vector<256x128xbf16>
    %cst_8 = arith.constant dense<0.000000e+00> : vector<8x128xf32>
    %10 = tpu.matmul %8, %9, %cst_8 {dimension_numbers = #tpu.dot_dimension_numbers<[1], [0], [0], [1], [0, 0, 1, 1], [], []>} : vector<8x256xbf16>, vector<256x128xbf16>, vector<8x128xf32> -> vector<8x128xf32>
    %c0_9 = arith.constant 0 : index
    %c0_10 = arith.constant 0 : index
    %11 = vector.load %arg5[%c0_9, %c0_10] : memref<1x128xf32, #tpu.memory_space<vmem>>, vector<1x128xf32>
    %12 = vector.broadcast %11 : vector<1x128xf32> to vector<8x128xf32>
    %13 = arith.addf %10, %12 : vector<8x128xf32>
    %c0_11 = arith.constant 0 : index
    %c0_12 = arith.constant 0 : index
    %14 = vector.load %arg6[%c0_11, %c0_12] : memref<8x128xf32, #tpu.memory_space<vmem>>, vector<8x128xf32>
    tpu.vector_store %arg6[%c0_11, %c0_12], %13 {strides = array<i32>} : memref<8x128xf32, #tpu.memory_space<vmem>>, vector<8x128xf32>,
    return
  }
  func.func @transform_0(%arg0: i32) -> (i32, i32) {
    %c0_i32 = arith.constant 0 : i32
    %c0_i32_0 = arith.constant 0 : i32
    return %arg0, %c0_i32 : i32, i32
  }
  func.func @transform_1(%arg0: i32) -> (i32, i32) {
    %c0_i32 = arith.constant 0 : i32
    %c0_i32_0 = arith.constant 0 : i32
    %c0_i32_1 = arith.constant 0 : i32
    return %c0_i32, %c0_i32_0 : i32, i32
  }
  func.func @transform_2(%arg0: i32) -> (i32, i32) {
    %c0_i32 = arith.constant 0 : i32
    %c0_i32_0 = arith.constant 0 : i32
    %c0_i32_1 = arith.constant 0 : i32
    return %c0_i32, %c0_i32_0 : i32, i32
  }
  func.func @transform_3(%arg0: i32) -> (i32, i32) {
    %c0_i32 = arith.constant 0 : i32
    %c0_i32_0 = arith.constant 0 : i32
    %c0_i32_1 = arith.constant 0 : i32
    return %c0_i32, %c0_i32_0 : i32, i32
  }
  func.func @transform_4(%arg0: i32) -> (i32, i32) {
    %c0_i32 = arith.constant 0 : i32
    %c0_i32_0 = arith.constant 0 : i32
    %c0_i32_1 = arith.constant 0 : i32
    return %c0_i32, %c0_i32_0 : i32, i32
  }
  func.func @transform_5(%arg0: i32) -> (i32, i32) {
    %c0_i32 = arith.constant 0 : i32
    %c0_i32_0 = arith.constant 0 : i32
    return %arg0, %c0_i32 : i32, i32
  }
}

</mosaic_0001>

<llo_original>
// kernel: dqn_forward.3
$region0: #{dqn_forward.3}
  #allocation0 [shape = 'u32[]', space=smem, size = 0x4, offset = 0x4, fixed_abs, tag = 'smem constant byte address 0x4 - core index']
  #allocation1 [shape = 'u32[144,128]{1,0:T(1,128)}', space=vmem, size = 0x12000, scoped, tag = 'internal scratch']
  %s0 = inlined_call_operand.vmem [shape: bf16[8,2688], index: 0, kind: input, shape index: {}]
  %s1 = inlined_call_operand.vmem [shape: bf16[2688,256], index: 1, kind: input, shape index: {}]
  %s2 = inlined_call_operand.vmem [shape: f32[1,256], index: 2, kind: input, shape index: {}]
  %s3 = inlined_call_operand.vmem [shape: bf16[256,128], index: 3, kind: input, shape index: {}]
  %s4 = inlined_call_operand.vmem [shape: f32[1,128], index: 4, kind: input, shape index: {}]
  %s5 = inlined_call_operand.vmem [shape: f32[8,128], index: 5, kind: output, shape index: {}]
  %s6 = sld [smem:[#allocation0]]
  $region30: #{dqn_forward.3} parent=0
    _
  %s8 = ssub.s32 1, %s6
  %s9 = scalar_select 0, %s8, %s6
  // Predicated region
  $region2: #{dqn_forward.3} parent=0 // pred_check
    _
  $region3: #{dqn_forward.3} parent=0 // pred_check_branch
    %11 = sbr.rel (0) target = $region5
  $region4: #{dqn_forward.3} parent=0 // pred_region
    _
  $region5: #{dqn_forward.3} parent=0 // pred_fallthru
    _
  // Predicated region
  $region6: #{dqn_forward.3} parent=0 // pred_check
    _
  $region7: #{dqn_forward.3} parent=0 // pred_check_branch
    %13 = sbr.rel (0) target = $region9
  $region8: #{dqn_forward.3} parent=0 // pred_region
    _
  $region9: #{dqn_forward.3} parent=0 // pred_fallthru
    _
  // Predicated region
  $region10: #{dqn_forward.3} parent=0 // pred_check
    _
  $region11: #{dqn_forward.3} parent=0 // pred_check_branch
    %15 = sbr.rel (0) target = $region13
  $region12: #{dqn_forward.3} parent=0 // pred_region
    _
  $region13: #{dqn_forward.3} parent=0 // pred_fallthru
    _
  // Predicated region
  $region14: #{dqn_forward.3} parent=0 // pred_check
    _
  $region15: #{dqn_forward.3} parent=0 // pred_check_branch
    %17 = sbr.rel (0) target = $region17
  $region16: #{dqn_forward.3} parent=0 // pred_region
    _
  $region17: #{dqn_forward.3} parent=0 // pred_fallthru
    _
  // Predicated region
  $region18: #{dqn_forward.3} parent=0 // pred_check
    _
  $region19: #{dqn_forward.3} parent=0 // pred_check_branch
    %19 = sbr.rel (0) target = $region21
  $region20: #{dqn_forward.3} parent=0 // pred_region
    _
  $region21: #{dqn_forward.3} parent=0 // pred_fallthru
    _
  %v21 = vld [vmem:[%s0] sm:$0xff]
  %v22 = vld [vmem:[%s0 + $0x8] sm:$0xff]
  %v23 = vld [vmem:[%s0 + $0x10] sm:$0xff]
  %v24 = vld [vmem:[%s0 + $0x18] sm:$0xff]
  %v25 = vld [vmem:[%s0 + $0x20] sm:$0xff]
  %v26 = vld [vmem:[%s0 + $0x28] sm:$0xff]
  %v27 = vld [vmem:[%s0 + $0x30] sm:$0xff]
  %v28 = vld [vmem:[%s0 + $0x38] sm:$0xff]
  %v29 = vld [vmem:[%s0 + $0x40] sm:$0xff]
  %v30 = vld [vmem:[%s0 + $0x48] sm:$0xff]
  %v31 = vld [vmem:[%s0 + $0x50] sm:$0xf]
  %v32 = vld [vmem:[%s1] sm:$0xff]
  %v33 = vld [vmem:[%s1 + $0x8] sm:$0xff]
  %v34 = vld [vmem:[%s1 + $0x10] sm:$0xff]
  %v35 = vld [vmem:[%s1 + $0x18] sm:$0xff]
  %v36 = vld [vmem:[%s1 + $0x20] sm:$0xff]
  %v37 = vld [vmem:[%s1 + $0x28] sm:$0xff]
  %v38 = vld [vmem:[%s1 + $0x30] sm:$0xff]
  %v39 = vld [vmem:[%s1 + $0x38] sm:$0xff]
  %v40 = vld [vmem:[%s1 + $0x40] sm:$0xff]
  %v41 = vld [vmem:[%s1 + $0x48] sm:$0xff]
  %v42 = vld [vmem:[%s1 + $0x50] sm:$0xff]
  %v43 = vld [vmem:[%s1 + $0x58] sm:$0xff]
  %v44 = vld [vmem:[%s1 + $0x60] sm:$0xff]
  %v45 = vld [vmem:[%s1 + $0x68] sm:$0xff]
  %v46 = vld [vmem:[%s1 + $0x70] sm:$0xff]
  %v47 = vld [vmem:[%s1 + $0x78] sm:$0xff]
  %v48 = vld [vmem:[%s1 + $0x80] sm:$0xff]
  %v49 = vld [vmem:[%s1 + $0x88] sm:$0xff]
  %v50 = vld [vmem:[%s1 + $0x90] sm:$0xff]
  %v51 = vld [vmem:[%s1 + $0x98] sm:$0xff]
  %v52 = vld [vmem:[%s1 + $0xa0] sm:$0xff]
  %v53 = vld [vmem:[%s1 + $0xa8] sm:$0xff]
  %v54 = vld [vmem:[%s1 + $0xb0] sm:$0xff]
  %v55 = vld [vmem:[%s1 + $0xb8] sm:$0xff]
  %v56 = vld [vmem:[%s1 + $0xc0] sm:$0xff]
  %v57 = vld [vmem:[%s1 + $0xc8] sm:$0xff]
  %v58 = vld [vmem:[%s1 + $0xd0] sm:$0xff]
  %v59 = vld [vmem:[%s1 + $0xd8] sm:$0xff]
  %v60 = vld [vmem:[%s1 + $0xe0] sm:$0xff]
  %v61 = vld [vmem:[%s1 + $0xe8] sm:$0xff]
  %v62 = vld [vmem:[%s1 + $0xf0] sm:$0xff]
  %v63 = vld [vmem:[%s1 + $0xf8] sm:$0xff]
  %v64 = vld [vmem:[%s1 + $0x100] sm:$0xff]
  %v65 = vld [vmem:[%s1 + $0x108] sm:$0xff]
  %v66 = vld [vmem:[%s1 + $0x110] sm:$0xff]
  %v67 = vld [vmem:[%s1 + $0x118] sm:$0xff]
  %v68 = vld [vmem:[%s1 + $0x120] sm:$0xff]
  %v69 = vld [vmem:[%s1 + $0x128] sm:$0xff]
  %v70 = vld [vmem:[%s1 + $0x130] sm:$0xff]
  %v71 = vld [vmem:[%s1 + $0x138] sm:$0xff]
  %v72 = vld [vmem:[%s1 + $0x140] sm:$0xff]
  %v73 = vld [vmem:[%s1 + $0x148] sm:$0xff]
  %v74 = vld [vmem:[%s1 + $0x150] sm:$0xff]
  %v75 = vld [vmem:[%s1 + $0x158] sm:$0xff]
  %v76 = vld [vmem:[%s1 + $0x160] sm:$0xff]
  %v77 = vld [vmem:[%s1 + $0x168] sm:$0xff]
  %v78 = vld [vmem:[%s1 + $0x170] sm:$0xff]
  %v79 = vld [vmem:[%s1 + $0x178] sm:$0xff]
  %v80 = vld [vmem:[%s1 + $0x180] sm:$0xff]
  %v81 = vld [vmem:[%s1 + $0x188] sm:$0xff]
  %v82 = vld [vmem:[%s1 + $0x190] sm:$0xff]
  %v83 = vld [vmem:[%s1 + $0x198] sm:$0xff]
  %v84 = vld [vmem:[%s1 + $0x1a0] sm:$0xff]
  %v85 = vld [vmem:[%s1 + $0x1a8] sm:$0xff]
  %v86 = vld [vmem:[%s1 + $0x1b0] sm:$0xff]
  %v87 = vld [vmem:[%s1 + $0x1b8] sm:$0xff]
  %v88 = vld [vmem:[%s1 + $0x1c0] sm:$0xff]
  %v89 = vld [vmem:[%s1 + $0x1c8] sm:$0xff]
  %v90 = vld [vmem:[%s1 + $0x1d0] sm:$0xff]
  %v91 = vld [vmem:[%s1 + $0x1d8] sm:$0xff]
  %v92 = vld [vmem:[%s1 + $0x1e0] sm:$0xff]
  %v93 = vld [vmem:[%s1 + $0x1e8] sm:$0xff]
  %v94 = vld [vmem:[%s1 + $0x1f0] sm:$0xff]
  %v95 = vld [vmem:[%s1 + $0x1f8] sm:$0xff]
  %v96 = vld [vmem:[%s1 + $0x200] sm:$0xff]
  %v97 = vld [vmem:[%s1 + $0x208] sm:$0xff]
  %v98 = vld [vmem:[%s1 + $0x210] sm:$0xff]
  %v99 = vld [vmem:[%s1 + $0x218] sm:$0xff]
  %v100 = vld [vmem:[%s1 + $0x220] sm:$0xff]
  %v101 = vld [vmem:[%s1 + $0x228] sm:$0xff]
  %v102 = vld [vmem:[%s1 + $0x230] sm:$0xff]
  %v103 = vld [vmem:[%s1 + $0x238] sm:$0xff]
  %v104 = vld [vmem:[%s1 + $0x240] sm:$0xff]
  %v105 = vld [vmem:[%s1 + $0x248] sm:$0xff]
  %v106 = vld [vmem:[%s1 + $0x250] sm:$0xff]
  %v107 = vld [vmem:[%s1 + $0x258] sm:$0xff]
  %v108 = vld [vmem:[%s1 + $0x260] sm:$0xff]
  %v109 = vld [vmem:[%s1 + $0x268] sm:$0xff]
  %v110 = vld [vmem:[%s1 + $0x270] sm:$0xff]
  %v111 = vld [vmem:[%s1 + $0x278] sm:$0xff]
  %v112 = vld [vmem:[%s1 + $0x280] sm:$0xff]
  %v113 = vld [vmem:[%s1 + $0x288] sm:$0xff]
  %v114 = vld [vmem:[%s1 + $0x290] sm:$0xff]
  %v115 = vld [vmem:[%s1 + $0x298] sm:$0xff]
  %v116 = vld [vmem:[%s1 + $0x2a0] sm:$0xff]
  %v117 = vld [vmem:[%s1 + $0x2a8] sm:$0xff]
  %v118 = vld [vmem:[%s1 + $0x2b0] sm:$0xff]
  %v119 = vld [vmem:[%s1 + $0x2b8] sm:$0xff]
  %v120 = vld [vmem:[%s1 + $0x2c0] sm:$0xff]
  %v121 = vld [vmem:[%s1 + $0x2c8] sm:$0xff]
  %v122 = vld [vmem:[%s1 + $0x2d0] sm:$0xff]
  %v123 = vld [vmem:[%s1 + $0x2d8] sm:$0xff]
  %v124 = vld [vmem:[%s1 + $0x2e0] sm:$0xff]
  %v125 = vld [vmem:[%s1 + $0x2e8] sm:$0xff]
  %v126 = vld [vmem:[%s1 + $0x2f0] sm:$0xff]
  %v127 = vld [vmem:[%s1 + $0x2f8] sm:$0xff]
  %v128 = vld [vmem:[%s1 + $0x300] sm:$0xff]
  %v129 = vld [vmem:[%s1 + $0x308] sm:$0xff]
  %v130 = vld [vmem:[%s1 + $0x310] sm:$0xff]
  %v131 = vld [vmem:[%s1 + $0x318] sm:$0xff]
  %v132 = vld [vmem:[%s1 + $0x320] sm:$0xff]
  %v133 = vld [vmem:[%s1 + $0x328] sm:$0xff]
  %v134 = vld [vmem:[%s1 + $0x330] sm:$0xff]
  %v135 = vld [vmem:[%s1 + $0x338] sm:$0xff]
  %v136 = vld [vmem:[%s1 + $0x340] sm:$0xff]
  %v137 = vld [vmem:[%s1 + $0x348] sm:$0xff]
  %v138 = vld [vmem:[%s1 + $0x350] sm:$0xff]
  %v139 = vld [vmem:[%s1 + $0x358] sm:$0xff]
  %v140 = vld [vmem:[%s1 + $0x360] sm:$0xff]
  %v141 = vld [vmem:[%s1 + $0x368] sm:$0xff]
  %v142 = vld [vmem:[%s1 + $0x370] sm:$0xff]
  %v143 = vld [vmem:[%s1 + $0x378] sm:$0xff]
  %v144 = vld [vmem:[%s1 + $0x380] sm:$0xff]
  %v145 = vld [vmem:[%s1 + $0x388] sm:$0xff]
  %v146 = vld [vmem:[%s1 + $0x390] sm:$0xff]
  %v147 = vld [vmem:[%s1 + $0x398] sm:$0xff]
  %v148 = vld [vmem:[%s1 + $0x3a0] sm:$0xff]
  %v149 = vld [vmem:[%s1 + $0x3a8] sm:$0xff]
  %v150 = vld [vmem:[%s1 + $0x3b0] sm:$0xff]
  %v151 = vld [vmem:[%s1 + $0x3b8] sm:$0xff]
  %v152 = vld [vmem:[%s1 + $0x3c0] sm:$0xff]
  %v153 = vld [vmem:[%s1 + $0x3c8] sm:$0xff]
  %v154 = vld [vmem:[%s1 + $0x3d0] sm:$0xff]
  %v155 = vld [vmem:[%s1 + $0x3d8] sm:$0xff]
  %v156 = vld [vmem:[%s1 + $0x3e0] sm:$0xff]
  %v157 = vld [vmem:[%s1 + $0x3e8] sm:$0xff]
  %v158 = vld [vmem:[%s1 + $0x3f0] sm:$0xff]
  %v159 = vld [vmem:[%s1 + $0x3f8] sm:$0xff]
  %v160 = vld [vmem:[%s1 + $0x400] sm:$0xff]
  %v161 = vld [vmem:[%s1 + $0x408] sm:$0xff]
  %v162 = vld [vmem:[%s1 + $0x410] sm:$0xff]
  %v163 = vld [vmem:[%s1 + $0x418] sm:$0xff]
  %v164 = vld [vmem:[%s1 + $0x420] sm:$0xff]
  %v165 = vld [vmem:[%s1 + $0x428] sm:$0xff]
  %v166 = vld [vmem:[%s1 + $0x430] sm:$0xff]
  %v167 = vld [vmem:[%s1 + $0x438] sm:$0xff]
  %v168 = vld [vmem:[%s1 + $0x440] sm:$0xff]
  %v169 = vld [vmem:[%s1 + $0x448] sm:$0xff]
  %v170 = vld [vmem:[%s1 + $0x450] sm:$0xff]
  %v171 = vld [vmem:[%s1 + $0x458] sm:$0xff]
  %v172 = vld [vmem:[%s1 + $0x460] sm:$0xff]
  %v173 = vld [vmem:[%s1 + $0x468] sm:$0xff]
  %v174 = vld [vmem:[%s1 + $0x470] sm:$0xff]
  %v175 = vld [vmem:[%s1 + $0x478] sm:$0xff]
  %v176 = vld [vmem:[%s1 + $0x480] sm:$0xff]
  %v177 = vld [vmem:[%s1 + $0x488] sm:$0xff]
  %v178 = vld [vmem:[%s1 + $0x490] sm:$0xff]
  %v179 = vld [vmem:[%s1 + $0x498] sm:$0xff]
  %v180 = vld [vmem:[%s1 + $0x4a0] sm:$0xff]
  %v181 = vld [vmem:[%s1 + $0x4a8] sm:$0xff]
  %v182 = vld [vmem:[%s1 + $0x4b0] sm:$0xff]
  %v183 = vld [vmem:[%s1 + $0x4b8] sm:$0xff]
  %v184 = vld [vmem:[%s1 + $0x4c0] sm:$0xff]
  %v185 = vld [vmem:[%s1 + $0x4c8] sm:$0xff]
  %v186 = vld [vmem:[%s1 + $0x4d0] sm:$0xff]
  %v187 = vld [vmem:[%s1 + $0x4d8] sm:$0xff]
  %v188 = vld [vmem:[%s1 + $0x4e0] sm:$0xff]
  %v189 = vld [vmem:[%s1 + $0x4e8] sm:$0xff]
  %v190 = vld [vmem:[%s1 + $0x4f0] sm:$0xff]
  %v191 = vld [vmem:[%s1 + $0x4f8] sm:$0xff]
  %v192 = vld [vmem:[%s1 + $0x500] sm:$0xff]
  %v193 = vld [vmem:[%s1 + $0x508] sm:$0xff]
  %v194 = vld [vmem:[%s1 + $0x510] sm:$0xff]
  %v195 = vld [vmem:[%s1 + $0x518] sm:$0xff]
  %v196 = vld [vmem:[%s1 + $0x520] sm:$0xff]
  %v197 = vld [vmem:[%s1 + $0x528] sm:$0xff]
  %v198 = vld [vmem:[%s1 + $0x530] sm:$0xff]
  %v199 = vld [vmem:[%s1 + $0x538] sm:$0xff]
  %v200 = vld [vmem:[%s1 + $0x540] sm:$0xff]
  %v201 = vld [vmem:[%s1 + $0x548] sm:$0xff]
  %v202 = vld [vmem:[%s1 + $0x550] sm:$0xff]
  %v203 = vld [vmem:[%s1 + $0x558] sm:$0xff]
  %v204 = vld [vmem:[%s1 + $0x560] sm:$0xff]
  %v205 = vld [vmem:[%s1 + $0x568] sm:$0xff]
  %v206 = vld [vmem:[%s1 + $0x570] sm:$0xff]
  %v207 = vld [vmem:[%s1 + $0x578] sm:$0xff]
  %v208 = vld [vmem:[%s1 + $0x580] sm:$0xff]
  %v209 = vld [vmem:[%s1 + $0x588] sm:$0xff]
  %v210 = vld [vmem:[%s1 + $0x590] sm:$0xff]
  %v211 = vld [vmem:[%s1 + $0x598] sm:$0xff]
  %v212 = vld [vmem:[%s1 + $0x5a0] sm:$0xff]
  %v213 = vld [vmem:[%s1 + $0x5a8] sm:$0xff]
  %v214 = vld [vmem:[%s1 + $0x5b0] sm:$0xff]
  %v215 = vld [vmem:[%s1 + $0x5b8] sm:$0xff]
  %v216 = vld [vmem:[%s1 + $0x5c0] sm:$0xff]
  %v217 = vld [vmem:[%s1 + $0x5c8] sm:$0xff]
  %v218 = vld [vmem:[%s1 + $0x5d0] sm:$0xff]
  %v219 = vld [vmem:[%s1 + $0x5d8] sm:$0xff]
  %v220 = vld [vmem:[%s1 + $0x5e0] sm:$0xff]
  %v221 = vld [vmem:[%s1 + $0x5e8] sm:$0xff]
  %v222 = vld [vmem:[%s1 + $0x5f0] sm:$0xff]
  %v223 = vld [vmem:[%s1 + $0x5f8] sm:$0xff]
  %v224 = vld [vmem:[%s1 + $0x600] sm:$0xff]
  %v225 = vld [vmem:[%s1 + $0x608] sm:$0xff]
  %v226 = vld [vmem:[%s1 + $0x610] sm:$0xff]
  %v227 = vld [vmem:[%s1 + $0x618] sm:$0xff]
  %v228 = vld [vmem:[%s1 + $0x620] sm:$0xff]
  %v229 = vld [vmem:[%s1 + $0x628] sm:$0xff]
  %v230 = vld [vmem:[%s1 + $0x630] sm:$0xff]
  %v231 = vld [vmem:[%s1 + $0x638] sm:$0xff]
  %v232 = vld [vmem:[%s1 + $0x640] sm:$0xff]
  %v233 = vld [vmem:[%s1 + $0x648] sm:$0xff]
  %v234 = vld [vmem:[%s1 + $0x650] sm:$0xff]
  %v235 = vld [vmem:[%s1 + $0x658] sm:$0xff]
  %v236 = vld [vmem:[%s1 + $0x660] sm:$0xff]
  %v237 = vld [vmem:[%s1 + $0x668] sm:$0xff]
  %v238 = vld [vmem:[%s1 + $0x670] sm:$0xff]
  %v239 = vld [vmem:[%s1 + $0x678] sm:$0xff]
  %v240 = vld [vmem:[%s1 + $0x680] sm:$0xff]
  %v241 = vld [vmem:[%s1 + $0x688] sm:$0xff]
  %v242 = vld [vmem:[%s1 + $0x690] sm:$0xff]
  %v243 = vld [vmem:[%s1 + $0x698] sm:$0xff]
  %v244 = vld [vmem:[%s1 + $0x6a0] sm:$0xff]
  %v245 = vld [vmem:[%s1 + $0x6a8] sm:$0xff]
  %v246 = vld [vmem:[%s1 + $0x6b0] sm:$0xff]
  %v247 = vld [vmem:[%s1 + $0x6b8] sm:$0xff]
  %v248 = vld [vmem:[%s1 + $0x6c0] sm:$0xff]
  %v249 = vld [vmem:[%s1 + $0x6c8] sm:$0xff]
  %v250 = vld [vmem:[%s1 + $0x6d0] sm:$0xff]
  %v251 = vld [vmem:[%s1 + $0x6d8] sm:$0xff]
  %v252 = vld [vmem:[%s1 + $0x6e0] sm:$0xff]
  %v253 = vld [vmem:[%s1 + $0x6e8] sm:$0xff]
  %v254 = vld [vmem:[%s1 + $0x6f0] sm:$0xff]
  %v255 = vld [vmem:[%s1 + $0x6f8] sm:$0xff]
  %v256 = vld [vmem:[%s1 + $0x700] sm:$0xff]
  %v257 = vld [vmem:[%s1 + $0x708] sm:$0xff]
  %v258 = vld [vmem:[%s1 + $0x710] sm:$0xff]
  %v259 = vld [vmem:[%s1 + $0x718] sm:$0xff]
  %v260 = vld [vmem:[%s1 + $0x720] sm:$0xff]
  %v261 = vld [vmem:[%s1 + $0x728] sm:$0xff]
  %v262 = vld [vmem:[%s1 + $0x730] sm:$0xff]
  %v263 = vld [vmem:[%s1 + $0x738] sm:$0xff]
  %v264 = vld [vmem:[%s1 + $0x740] sm:$0xff]
  %v265 = vld [vmem:[%s1 + $0x748] sm:$0xff]
  %v266 = vld [vmem:[%s1 + $0x750] sm:$0xff]
  %v267 = vld [vmem:[%s1 + $0x758] sm:$0xff]
  %v268 = vld [vmem:[%s1 + $0x760] sm:$0xff]
  %v269 = vld [vmem:[%s1 + $0x768] sm:$0xff]
  %v270 = vld [vmem:[%s1 + $0x770] sm:$0xff]
  %v271 = vld [vmem:[%s1 + $0x778] sm:$0xff]
  %v272 = vld [vmem:[%s1 + $0x780] sm:$0xff]
  %v273 = vld [vmem:[%s1 + $0x788] sm:$0xff]
  %v274 = vld [vmem:[%s1 + $0x790] sm:$0xff]
  %v275 = vld [vmem:[%s1 + $0x798] sm:$0xff]
  %v276 = vld [vmem:[%s1 + $0x7a0] sm:$0xff]
  %v277 = vld [vmem:[%s1 + $0x7a8] sm:$0xff]
  %v278 = vld [vmem:[%s1 + $0x7b0] sm:$0xff]
  %v279 = vld [vmem:[%s1 + $0x7b8] sm:$0xff]
  %v280 = vld [vmem:[%s1 + $0x7c0] sm:$0xff]
  %v281 = vld [vmem:[%s1 + $0x7c8] sm:$0xff]
  %v282 = vld [vmem:[%s1 + $0x7d0] sm:$0xff]
  %v283 = vld [vmem:[%s1 + $0x7d8] sm:$0xff]
  %v284 = vld [vmem:[%s1 + $0x7e0] sm:$0xff]
  %v285 = vld [vmem:[%s1 + $0x7e8] sm:$0xff]
  %v286 = vld [vmem:[%s1 + $0x7f0] sm:$0xff]
  %v287 = vld [vmem:[%s1 + $0x7f8] sm:$0xff]
  %v288 = vld [vmem:[%s1 + $0x800] sm:$0xff]
  %v289 = vld [vmem:[%s1 + $0x808] sm:$0xff]
  %v290 = vld [vmem:[%s1 + $0x810] sm:$0xff]
  %v291 = vld [vmem:[%s1 + $0x818] sm:$0xff]
  %v292 = vld [vmem:[%s1 + $0x820] sm:$0xff]
  %v293 = vld [vmem:[%s1 + $0x828] sm:$0xff]
  %v294 = vld [vmem:[%s1 + $0x830] sm:$0xff]
  %v295 = vld [vmem:[%s1 + $0x838] sm:$0xff]
  %v296 = vld [vmem:[%s1 + $0x840] sm:$0xff]
  %v297 = vld [vmem:[%s1 + $0x848] sm:$0xff]
  %v298 = vld [vmem:[%s1 + $0x850] sm:$0xff]
  %v299 = vld [vmem:[%s1 + $0x858] sm:$0xff]
  %v300 = vld [vmem:[%s1 + $0x860] sm:$0xff]
  %v301 = vld [vmem:[%s1 + $0x868] sm:$0xff]
  %v302 = vld [vmem:[%s1 + $0x870] sm:$0xff]
  %v303 = vld [vmem:[%s1 + $0x878] sm:$0xff]
  %v304 = vld [vmem:[%s1 + $0x880] sm:$0xff]
  %v305 = vld [vmem:[%s1 + $0x888] sm:$0xff]
  %v306 = vld [vmem:[%s1 + $0x890] sm:$0xff]
  %v307 = vld [vmem:[%s1 + $0x898] sm:$0xff]
  %v308 = vld [vmem:[%s1 + $0x8a0] sm:$0xff]
  %v309 = vld [vmem:[%s1 + $0x8a8] sm:$0xff]
  %v310 = vld [vmem:[%s1 + $0x8b0] sm:$0xff]
  %v311 = vld [vmem:[%s1 + $0x8b8] sm:$0xff]
  %v312 = vld [vmem:[%s1 + $0x8c0] sm:$0xff]
  %v313 = vld [vmem:[%s1 + $0x8c8] sm:$0xff]
  %v314 = vld [vmem:[%s1 + $0x8d0] sm:$0xff]
  %v315 = vld [vmem:[%s1 + $0x8d8] sm:$0xff]
  %v316 = vld [vmem:[%s1 + $0x8e0] sm:$0xff]
  %v317 = vld [vmem:[%s1 + $0x8e8] sm:$0xff]
  %v318 = vld [vmem:[%s1 + $0x8f0] sm:$0xff]
  %v319 = vld [vmem:[%s1 + $0x8f8] sm:$0xff]
  %v320 = vld [vmem:[%s1 + $0x900] sm:$0xff]
  %v321 = vld [vmem:[%s1 + $0x908] sm:$0xff]
  %v322 = vld [vmem:[%s1 + $0x910] sm:$0xff]
  %v323 = vld [vmem:[%s1 + $0x918] sm:$0xff]
  %v324 = vld [vmem:[%s1 + $0x920] sm:$0xff]
  %v325 = vld [vmem:[%s1 + $0x928] sm:$0xff]
  %v326 = vld [vmem:[%s1 + $0x930] sm:$0xff]
  %v327 = vld [vmem:[%s1 + $0x938] sm:$0xff]
  %v328 = vld [vmem:[%s1 + $0x940] sm:$0xff]
  %v329 = vld [vmem:[%s1 + $0x948] sm:$0xff]
  %v330 = vld [vmem:[%s1 + $0x950] sm:$0xff]
  %v331 = vld [vmem:[%s1 + $0x958] sm:$0xff]
  %v332 = vld [vmem:[%s1 + $0x960] sm:$0xff]
  %v333 = vld [vmem:[%s1 + $0x968] sm:$0xff]
  %v334 = vld [vmem:[%s1 + $0x970] sm:$0xff]
  %v335 = vld [vmem:[%s1 + $0x978] sm:$0xff]
  %v336 = vld [vmem:[%s1 + $0x980] sm:$0xff]
  %v337 = vld [vmem:[%s1 + $0x988] sm:$0xff]
  %v338 = vld [vmem:[%s1 + $0x990] sm:$0xff]
  %v339 = vld [vmem:[%s1 + $0x998] sm:$0xff]
  %v340 = vld [vmem:[%s1 + $0x9a0] sm:$0xff]
  %v341 = vld [vmem:[%s1 + $0x9a8] sm:$0xff]
  %v342 = vld [vmem:[%s1 + $0x9b0] sm:$0xff]
  %v343 = vld [vmem:[%s1 + $0x9b8] sm:$0xff]
  %v344 = vld [vmem:[%s1 + $0x9c0] sm:$0xff]
  %v345 = vld [vmem:[%s1 + $0x9c8] sm:$0xff]
  %v346 = vld [vmem:[%s1 + $0x9d0] sm:$0xff]
  %v347 = vld [vmem:[%s1 + $0x9d8] sm:$0xff]
  %v348 = vld [vmem:[%s1 + $0x9e0] sm:$0xff]
  %v349 = vld [vmem:[%s1 + $0x9e8] sm:$0xff]
  %v350 = vld [vmem:[%s1 + $0x9f0] sm:$0xff]
  %v351 = vld [vmem:[%s1 + $0x9f8] sm:$0xff]
  %v352 = vld [vmem:[%s1 + $0xa00] sm:$0xff]
  %v353 = vld [vmem:[%s1 + $0xa08] sm:$0xff]
  %v354 = vld [vmem:[%s1 + $0xa10] sm:$0xff]
  %v355 = vld [vmem:[%s1 + $0xa18] sm:$0xff]
  %v356 = vld [vmem:[%s1 + $0xa20] sm:$0xff]
  %v357 = vld [vmem:[%s1 + $0xa28] sm:$0xff]
  %v358 = vld [vmem:[%s1 + $0xa30] sm:$0xff]
  %v359 = vld [vmem:[%s1 + $0xa38] sm:$0xff]
  %v360 = vld [vmem:[%s1 + $0xa40] sm:$0xff]
  %v361 = vld [vmem:[%s1 + $0xa48] sm:$0xff]
  %v362 = vld [vmem:[%s1 + $0xa50] sm:$0xff]
  %v363 = vld [vmem:[%s1 + $0xa58] sm:$0xff]
  %v364 = vld [vmem:[%s1 + $0xa60] sm:$0xff]
  %v365 = vld [vmem:[%s1 + $0xa68] sm:$0xff]
  %v366 = vld [vmem:[%s1 + $0xa70] sm:$0xff]
  %v367 = vld [vmem:[%s1 + $0xa78] sm:$0xff]
  %v368 = vld [vmem:[%s2] sm:$0x3]
  %v370 = vlaneseq
  %v371 = vshrl.u32 %v370, 7
  %v372 = vsub.s32 0, %v371
  %v373 = vrot.slane %v368, %v372
  %v374 = vlaneseq
  %v375 = vshrl.u32 %v374, 7
  %v376 = vsub.s32 1, %v375
  %v377 = vrot.slane %v368, %v376
  %v391 = vunpack.c.l.b16 %v21
  %v392 = vunpack.c.h.b16 %v21
  %v393 = vunpack.c.l.b16 %v22
  %v394 = vunpack.c.h.b16 %v22
  %v395 = vunpack.c.l.b16 %v23
  %v396 = vunpack.c.h.b16 %v23
  %v397 = vunpack.c.l.b16 %v24
  %v398 = vunpack.c.h.b16 %v24
  %v399 = vunpack.c.l.b16 %v25
  %v400 = vunpack.c.h.b16 %v25
  %v401 = vunpack.c.l.b16 %v26
  %v402 = vunpack.c.h.b16 %v26
  %v403 = vunpack.c.l.b16 %v27
  %v404 = vunpack.c.h.b16 %v27
  %v405 = vunpack.c.l.b16 %v28
  %v406 = vunpack.c.h.b16 %v28
  %v407 = vunpack.c.l.b16 %v29
  %v408 = vunpack.c.h.b16 %v29
  %v409 = vunpack.c.l.b16 %v30
  %v410 = vunpack.c.h.b16 %v30
  %v411 = vunpack.c.l.b16 %v31
  %v412 = vpack.c.b16 %v391, %v391
  %v413 = vpack.c.b16 %v392, %v392
  %v414 = vpack.c.b16 %v393, %v393
  %v415 = vpack.c.b16 %v394, %v394
  %v416 = vpack.c.b16 %v395, %v395
  %v417 = vpack.c.b16 %v396, %v396
  %v418 = vpack.c.b16 %v397, %v397
  %v419 = vpack.c.b16 %v398, %v398
  %v420 = vpack.c.b16 %v399, %v399
  %v421 = vpack.c.b16 %v400, %v400
  %v422 = vpack.c.b16 %v401, %v401
  %v423 = vpack.c.b16 %v402, %v402
  %v424 = vpack.c.b16 %v403, %v403
  %v425 = vpack.c.b16 %v404, %v404
  %v426 = vpack.c.b16 %v405, %v405
  %v427 = vpack.c.b16 %v406, %v406
  %v428 = vpack.c.b16 %v407, %v407
  %v429 = vpack.c.b16 %v408, %v408
  %v430 = vpack.c.b16 %v409, %v409
  %v431 = vpack.c.b16 %v410, %v410
  %v432 = vpack.c.b16 %v411, %v411
  %v790 = vunpack.c.l.b16 %v32
  %v791 = vunpack.c.h.b16 %v32
  %v792 = vunpack.c.l.b16 %v33
  %v793 = vunpack.c.h.b16 %v33
  %v794 = vunpack.c.l.b16 %v34
  %v795 = vunpack.c.h.b16 %v34
  %v796 = vunpack.c.l.b16 %v35
  %v797 = vunpack.c.h.b16 %v35
  %v798 = vunpack.c.l.b16 %v36
  %v799 = vunpack.c.h.b16 %v36
  %v800 = vunpack.c.l.b16 %v37
  %v801 = vunpack.c.h.b16 %v37
  %v802 = vunpack.c.l.b16 %v38
  %v803 = vunpack.c.h.b16 %v38
  %v804 = vunpack.c.l.b16 %v39
  %v805 = vunpack.c.h.b16 %v39
  %v806 = vunpack.c.l.b16 %v40
  %v807 = vunpack.c.h.b16 %v40
  %v808 = vunpack.c.l.b16 %v41
  %v809 = vunpack.c.h.b16 %v41
  %v810 = vunpack.c.l.b16 %v42
  %v811 = vunpack.c.h.b16 %v42
  %v812 = vunpack.c.l.b16 %v43
  %v813 = vunpack.c.h.b16 %v43
  %v814 = vunpack.c.l.b16 %v44
  %v815 = vunpack.c.h.b16 %v44
  %v816 = vunpack.c.l.b16 %v45
  %v817 = vunpack.c.h.b16 %v45
  %v818 = vunpack.c.l.b16 %v46
  %v819 = vunpack.c.h.b16 %v46
  %v820 = vunpack.c.l.b16 %v47
  %v821 = vunpack.c.h.b16 %v47
  %v822 = vunpack.c.l.b16 %v48
  %v823 = vunpack.c.h.b16 %v48
  %v824 = vunpack.c.l.b16 %v49
  %v825 = vunpack.c.h.b16 %v49
  %v826 = vunpack.c.l.b16 %v50
  %v827 = vunpack.c.h.b16 %v50
  %v828 = vunpack.c.l.b16 %v51
  %v829 = vunpack.c.h.b16 %v51
  %v830 = vunpack.c.l.b16 %v52
  %v831 = vunpack.c.h.b16 %v52
  %v832 = vunpack.c.l.b16 %v53
  %v833 = vunpack.c.h.b16 %v53
  %v834 = vunpack.c.l.b16 %v54
  %v835 = vunpack.c.h.b16 %v54
  %v836 = vunpack.c.l.b16 %v55
  %v837 = vunpack.c.h.b16 %v55
  %v838 = vunpack.c.l.b16 %v56
  %v839 = vunpack.c.h.b16 %v56
  %v840 = vunpack.c.l.b16 %v57
  %v841 = vunpack.c.h.b16 %v57
  %v842 = vunpack.c.l.b16 %v58
  %v843 = vunpack.c.h.b16 %v58
  %v844 = vunpack.c.l.b16 %v59
  %v845 = vunpack.c.h.b16 %v59
  %v846 = vunpack.c.l.b16 %v60
  %v847 = vunpack.c.h.b16 %v60
  %v848 = vunpack.c.l.b16 %v61
  %v849 = vunpack.c.h.b16 %v61
  %v850 = vunpack.c.l.b16 %v62
  %v851 = vunpack.c.h.b16 %v62
  %v852 = vunpack.c.l.b16 %v63
  %v853 = vunpack.c.h.b16 %v63
  %v854 = vunpack.c.l.b16 %v64
  %v855 = vunpack.c.h.b16 %v64
  %v856 = vunpack.c.l.b16 %v65
  %v857 = vunpack.c.h.b16 %v65
  %v858 = vunpack.c.l.b16 %v66
  %v859 = vunpack.c.h.b16 %v66
  %v860 = vunpack.c.l.b16 %v67
  %v861 = vunpack.c.h.b16 %v67
  %v862 = vunpack.c.l.b16 %v68
  %v863 = vunpack.c.h.b16 %v68
  %v864 = vunpack.c.l.b16 %v69
  %v865 = vunpack.c.h.b16 %v69
  %v866 = vunpack.c.l.b16 %v70
  %v867 = vunpack.c.h.b16 %v70
  %v868 = vunpack.c.l.b16 %v71
  %v869 = vunpack.c.h.b16 %v71
  %v870 = vunpack.c.l.b16 %v72
  %v871 = vunpack.c.h.b16 %v72
  %v872 = vunpack.c.l.b16 %v73
  %v873 = vunpack.c.h.b16 %v73
  %v874 = vunpack.c.l.b16 %v74
  %v875 = vunpack.c.h.b16 %v74
  %v876 = vunpack.c.l.b16 %v75
  %v877 = vunpack.c.h.b16 %v75
  %v878 = vunpack.c.l.b16 %v76
  %v879 = vunpack.c.h.b16 %v76
  %v880 = vunpack.c.l.b16 %v77
  %v881 = vunpack.c.h.b16 %v77
  %v882 = vunpack.c.l.b16 %v78
  %v883 = vunpack.c.h.b16 %v78
  %v884 = vunpack.c.l.b16 %v79
  %v885 = vunpack.c.h.b16 %v79
  %v886 = vunpack.c.l.b16 %v80
  %v887 = vunpack.c.h.b16 %v80
  %v888 = vunpack.c.l.b16 %v81
  %v889 = vunpack.c.h.b16 %v81
  %v890 = vunpack.c.l.b16 %v82
  %v891 = vunpack.c.h.b16 %v82
  %v892 = vunpack.c.l.b16 %v83
  %v893 = vunpack.c.h.b16 %v83
  %v894 = vunpack.c.l.b16 %v84
  %v895 = vunpack.c.h.b16 %v84
  %v896 = vunpack.c.l.b16 %v85
  %v897 = vunpack.c.h.b16 %v85
  %v898 = vunpack.c.l.b16 %v86
  %v899 = vunpack.c.h.b16 %v86
  %v900 = vunpack.c.l.b16 %v87
  %v901 = vunpack.c.h.b16 %v87
  %v902 = vunpack.c.l.b16 %v88
  %v903 = vunpack.c.h.b16 %v88
  %v904 = vunpack.c.l.b16 %v89
  %v905 = vunpack.c.h.b16 %v89
  %v906 = vunpack.c.l.b16 %v90
  %v907 = vunpack.c.h.b16 %v90
  %v908 = vunpack.c.l.b16 %v91
  %v909 = vunpack.c.h.b16 %v91
  %v910 = vunpack.c.l.b16 %v92
  %v911 = vunpack.c.h.b16 %v92
  %v912 = vunpack.c.l.b16 %v93
  %v913 = vunpack.c.h.b16 %v93
  %v914 = vunpack.c.l.b16 %v94
  %v915 = vunpack.c.h.b16 %v94
  %v916 = vunpack.c.l.b16 %v95
  %v917 = vunpack.c.h.b16 %v95
  %v918 = vunpack.c.l.b16 %v96
  %v919 = vunpack.c.h.b16 %v96
  %v920 = vunpack.c.l.b16 %v97
  %v921 = vunpack.c.h.b16 %v97
  %v922 = vunpack.c.l.b16 %v98
  %v923 = vunpack.c.h.b16 %v98
  %v924 = vunpack.c.l.b16 %v99
  %v925 = vunpack.c.h.b16 %v99
  %v926 = vunpack.c.l.b16 %v100
  %v927 = vunpack.c.h.b16 %v100
  %v928 = vunpack.c.l.b16 %v101
  %v929 = vunpack.c.h.b16 %v101
  %v930 = vunpack.c.l.b16 %v102
  %v931 = vunpack.c.h.b16 %v102
  %v932 = vunpack.c.l.b16 %v103
  %v933 = vunpack.c.h.b16 %v103
  %v934 = vunpack.c.l.b16 %v104
  %v935 = vunpack.c.h.b16 %v104
  %v936 = vunpack.c.l.b16 %v105
  %v937 = vunpack.c.h.b16 %v105
  %v938 = vunpack.c.l.b16 %v106
  %v939 = vunpack.c.h.b16 %v106
  %v940 = vunpack.c.l.b16 %v107
  %v941 = vunpack.c.h.b16 %v107
  %v942 = vunpack.c.l.b16 %v108
  %v943 = vunpack.c.h.b16 %v108
  %v944 = vunpack.c.l.b16 %v109
  %v945 = vunpack.c.h.b16 %v109
  %v946 = vunpack.c.l.b16 %v110
  %v947 = vunpack.c.h.b16 %v110
  %v948 = vunpack.c.l.b16 %v111
  %v949 = vunpack.c.h.b16 %v111
  %v950 = vunpack.c.l.b16 %v112
  %v951 = vunpack.c.h.b16 %v112
  %v952 = vunpack.c.l.b16 %v113
  %v953 = vunpack.c.h.b16 %v113
  %v954 = vunpack.c.l.b16 %v114
  %v955 = vunpack.c.h.b16 %v114
  %v956 = vunpack.c.l.b16 %v115
  %v957 = vunpack.c.h.b16 %v115
  %v958 = vunpack.c.l.b16 %v116
  %v959 = vunpack.c.h.b16 %v116
  %v960 = vunpack.c.l.b16 %v117
  %v961 = vunpack.c.h.b16 %v117
  %v962 = vunpack.c.l.b16 %v118
  %v963 = vunpack.c.h.b16 %v118
  %v964 = vunpack.c.l.b16 %v119
  %v965 = vunpack.c.h.b16 %v119
  %v966 = vunpack.c.l.b16 %v120
  %v967 = vunpack.c.h.b16 %v120
  %v968 = vunpack.c.l.b16 %v121
  %v969 = vunpack.c.h.b16 %v121
  %v970 = vunpack.c.l.b16 %v122
  %v971 = vunpack.c.h.b16 %v122
  %v972 = vunpack.c.l.b16 %v123
  %v973 = vunpack.c.h.b16 %v123
  %v974 = vunpack.c.l.b16 %v124
  %v975 = vunpack.c.h.b16 %v124
  %v976 = vunpack.c.l.b16 %v125
  %v977 = vunpack.c.h.b16 %v125
  %v978 = vunpack.c.l.b16 %v126
  %v979 = vunpack.c.h.b16 %v126
  %v980 = vunpack.c.l.b16 %v127
  %v981 = vunpack.c.h.b16 %v127
  %v982 = vunpack.c.l.b16 %v128
  %v983 = vunpack.c.h.b16 %v128
  %v984 = vunpack.c.l.b16 %v129
  %v985 = vunpack.c.h.b16 %v129
  %v986 = vunpack.c.l.b16 %v130
  %v987 = vunpack.c.h.b16 %v130
  %v988 = vunpack.c.l.b16 %v131
  %v989 = vunpack.c.h.b16 %v131
  %v990 = vunpack.c.l.b16 %v132
  %v991 = vunpack.c.h.b16 %v132
  %v992 = vunpack.c.l.b16 %v133
  %v993 = vunpack.c.h.b16 %v133
  %v994 = vunpack.c.l.b16 %v134
  %v995 = vunpack.c.h.b16 %v134
  %v996 = vunpack.c.l.b16 %v135
  %v997 = vunpack.c.h.b16 %v135
  %v998 = vunpack.c.l.b16 %v136
  %v999 = vunpack.c.h.b16 %v136
  %v1000 = vunpack.c.l.b16 %v137
  %v1001 = vunpack.c.h.b16 %v137
  %v1002 = vunpack.c.l.b16 %v138
  %v1003 = vunpack.c.h.b16 %v138
  %v1004 = vunpack.c.l.b16 %v139
  %v1005 = vunpack.c.h.b16 %v139
  %v1006 = vunpack.c.l.b16 %v140
  %v1007 = vunpack.c.h.b16 %v140
  %v1008 = vunpack.c.l.b16 %v141
  %v1009 = vunpack.c.h.b16 %v141
  %v1010 = vunpack.c.l.b16 %v142
  %v1011 = vunpack.c.h.b16 %v142
  %v1012 = vunpack.c.l.b16 %v143
  %v1013 = vunpack.c.h.b16 %v143
  %v1014 = vunpack.c.l.b16 %v144
  %v1015 = vunpack.c.h.b16 %v144
  %v1016 = vunpack.c.l.b16 %v145
  %v1017 = vunpack.c.h.b16 %v145
  %v1018 = vunpack.c.l.b16 %v146
  %v1019 = vunpack.c.h.b16 %v146
  %v1020 = vunpack.c.l.b16 %v147
  %v1021 = vunpack.c.h.b16 %v147
  %v1022 = vunpack.c.l.b16 %v148
  %v1023 = vunpack.c.h.b16 %v148
  %v1024 = vunpack.c.l.b16 %v149
  %v1025 = vunpack.c.h.b16 %v149
  %v1026 = vunpack.c.l.b16 %v150
  %v1027 = vunpack.c.h.b16 %v150
  %v1028 = vunpack.c.l.b16 %v151
  %v1029 = vunpack.c.h.b16 %v151
  %v1030 = vunpack.c.l.b16 %v152
  %v1031 = vunpack.c.h.b16 %v152
  %v1032 = vunpack.c.l.b16 %v153
  %v1033 = vunpack.c.h.b16 %v153
  %v1034 = vunpack.c.l.b16 %v154
  %v1035 = vunpack.c.h.b16 %v154
  %v1036 = vunpack.c.l.b16 %v155
  %v1037 = vunpack.c.h.b16 %v155
  %v1038 = vunpack.c.l.b16 %v156
  %v1039 = vunpack.c.h.b16 %v156
  %v1040 = vunpack.c.l.b16 %v157
  %v1041 = vunpack.c.h.b16 %v157
  %v1042 = vunpack.c.l.b16 %v158
  %v1043 = vunpack.c.h.b16 %v158
  %v1044 = vunpack.c.l.b16 %v159
  %v1045 = vunpack.c.h.b16 %v159
  %v1046 = vunpack.c.l.b16 %v160
  %v1047 = vunpack.c.h.b16 %v160
  %v1048 = vunpack.c.l.b16 %v161
  %v1049 = vunpack.c.h.b16 %v161
  %v1050 = vunpack.c.l.b16 %v162
  %v1051 = vunpack.c.h.b16 %v162
  %v1052 = vunpack.c.l.b16 %v163
  %v1053 = vunpack.c.h.b16 %v163
  %v1054 = vunpack.c.l.b16 %v164
  %v1055 = vunpack.c.h.b16 %v164
  %v1056 = vunpack.c.l.b16 %v165
  %v1057 = vunpack.c.h.b16 %v165
  %v1058 = vunpack.c.l.b16 %v166
  %v1059 = vunpack.c.h.b16 %v166
  %v1060 = vunpack.c.l.b16 %v167
  %v1061 = vunpack.c.h.b16 %v167
  %v1062 = vunpack.c.l.b16 %v168
  %v1063 = vunpack.c.h.b16 %v168
  %v1064 = vunpack.c.l.b16 %v169
  %v1065 = vunpack.c.h.b16 %v169
  %v1066 = vunpack.c.l.b16 %v170
  %v1067 = vunpack.c.h.b16 %v170
  %v1068 = vunpack.c.l.b16 %v171
  %v1069 = vunpack.c.h.b16 %v171
  %v1070 = vunpack.c.l.b16 %v172
  %v1071 = vunpack.c.h.b16 %v172
  %v1072 = vunpack.c.l.b16 %v173
  %v1073 = vunpack.c.h.b16 %v173
  %v1074 = vunpack.c.l.b16 %v174
  %v1075 = vunpack.c.h.b16 %v174
  %v1076 = vunpack.c.l.b16 %v175
  %v1077 = vunpack.c.h.b16 %v175
  %v1078 = vunpack.c.l.b16 %v176
  %v1079 = vunpack.c.h.b16 %v176
  %v1080 = vunpack.c.l.b16 %v177
  %v1081 = vunpack.c.h.b16 %v177
  %v1082 = vunpack.c.l.b16 %v178
  %v1083 = vunpack.c.h.b16 %v178
  %v1084 = vunpack.c.l.b16 %v179
  %v1085 = vunpack.c.h.b16 %v179
  %v1086 = vunpack.c.l.b16 %v180
  %v1087 = vunpack.c.h.b16 %v180
  %v1088 = vunpack.c.l.b16 %v181
  %v1089 = vunpack.c.h.b16 %v181
  %v1090 = vunpack.c.l.b16 %v182
  %v1091 = vunpack.c.h.b16 %v182
  %v1092 = vunpack.c.l.b16 %v183
  %v1093 = vunpack.c.h.b16 %v183
  %v1094 = vunpack.c.l.b16 %v184
  %v1095 = vunpack.c.h.b16 %v184
  %v1096 = vunpack.c.l.b16 %v185
  %v1097 = vunpack.c.h.b16 %v185
  %v1098 = vunpack.c.l.b16 %v186
  %v1099 = vunpack.c.h.b16 %v186
  %v1100 = vunpack.c.l.b16 %v187
  %v1101 = vunpack.c.h.b16 %v187
  %v1102 = vunpack.c.l.b16 %v188
  %v1103 = vunpack.c.h.b16 %v188
  %v1104 = vunpack.c.l.b16 %v189
  %v1105 = vunpack.c.h.b16 %v189
  %v1106 = vunpack.c.l.b16 %v190
  %v1107 = vunpack.c.h.b16 %v190
  %v1108 = vunpack.c.l.b16 %v191
  %v1109 = vunpack.c.h.b16 %v191
  %v1110 = vunpack.c.l.b16 %v192
  %v1111 = vunpack.c.h.b16 %v192
  %v1112 = vunpack.c.l.b16 %v193
  %v1113 = vunpack.c.h.b16 %v193
  %v1114 = vunpack.c.l.b16 %v194
  %v1115 = vunpack.c.h.b16 %v194
  %v1116 = vunpack.c.l.b16 %v195
  %v1117 = vunpack.c.h.b16 %v195
  %v1118 = vunpack.c.l.b16 %v196
  %v1119 = vunpack.c.h.b16 %v196
  %v1120 = vunpack.c.l.b16 %v197
  %v1121 = vunpack.c.h.b16 %v197
  %v1122 = vunpack.c.l.b16 %v198
  %v1123 = vunpack.c.h.b16 %v198
  %v1124 = vunpack.c.l.b16 %v199
  %v1125 = vunpack.c.h.b16 %v199
  %v1126 = vunpack.c.l.b16 %v200
  %v1127 = vunpack.c.h.b16 %v200
  %v1128 = vunpack.c.l.b16 %v201
  %v1129 = vunpack.c.h.b16 %v201
  %v1130 = vunpack.c.l.b16 %v202
  %v1131 = vunpack.c.h.b16 %v202
  %v1132 = vunpack.c.l.b16 %v203
  %v1133 = vunpack.c.h.b16 %v203
  %v1134 = vunpack.c.l.b16 %v204
  %v1135 = vunpack.c.h.b16 %v204
  %v1136 = vunpack.c.l.b16 %v205
  %v1137 = vunpack.c.h.b16 %v205
  %v1138 = vunpack.c.l.b16 %v206
  %v1139 = vunpack.c.h.b16 %v206
  %v1140 = vunpack.c.l.b16 %v207
  %v1141 = vunpack.c.h.b16 %v207
  %v1142 = vunpack.c.l.b16 %v208
  %v1143 = vunpack.c.h.b16 %v208
  %v1144 = vunpack.c.l.b16 %v209
  %v1145 = vunpack.c.h.b16 %v209
  %v1146 = vunpack.c.l.b16 %v210
  %v1147 = vunpack.c.h.b16 %v210
  %v1148 = vunpack.c.l.b16 %v211
  %v1149 = vunpack.c.h.b16 %v211
  %v1150 = vunpack.c.l.b16 %v212
  %v1151 = vunpack.c.h.b16 %v212
  %v1152 = vunpack.c.l.b16 %v213
  %v1153 = vunpack.c.h.b16 %v213
  %v1154 = vunpack.c.l.b16 %v214
  %v1155 = vunpack.c.h.b16 %v214
  %v1156 = vunpack.c.l.b16 %v215
  %v1157 = vunpack.c.h.b16 %v215
  %v1158 = vunpack.c.l.b16 %v216
  %v1159 = vunpack.c.h.b16 %v216
  %v1160 = vunpack.c.l.b16 %v217
  %v1161 = vunpack.c.h.b16 %v217
  %v1162 = vunpack.c.l.b16 %v218
  %v1163 = vunpack.c.h.b16 %v218
  %v1164 = vunpack.c.l.b16 %v219
  %v1165 = vunpack.c.h.b16 %v219
  %v1166 = vunpack.c.l.b16 %v220
  %v1167 = vunpack.c.h.b16 %v220
  %v1168 = vunpack.c.l.b16 %v221
  %v1169 = vunpack.c.h.b16 %v221
  %v1170 = vunpack.c.l.b16 %v222
  %v1171 = vunpack.c.h.b16 %v222
  %v1172 = vunpack.c.l.b16 %v223
  %v1173 = vunpack.c.h.b16 %v223
  %v1174 = vunpack.c.l.b16 %v224
  %v1175 = vunpack.c.h.b16 %v224
  %v1176 = vunpack.c.l.b16 %v225
  %v1177 = vunpack.c.h.b16 %v225
  %v1178 = vunpack.c.l.b16 %v226
  %v1179 = vunpack.c.h.b16 %v226
  %v1180 = vunpack.c.l.b16 %v227
  %v1181 = vunpack.c.h.b16 %v227
  %v1182 = vunpack.c.l.b16 %v228
  %v1183 = vunpack.c.h.b16 %v228
  %v1184 = vunpack.c.l.b16 %v229
  %v1185 = vunpack.c.h.b16 %v229
  %v1186 = vunpack.c.l.b16 %v230
  %v1187 = vunpack.c.h.b16 %v230
  %v1188 = vunpack.c.l.b16 %v231
  %v1189 = vunpack.c.h.b16 %v231
  %v1190 = vunpack.c.l.b16 %v232
  %v1191 = vunpack.c.h.b16 %v232
  %v1192 = vunpack.c.l.b16 %v233
  %v1193 = vunpack.c.h.b16 %v233
  %v1194 = vunpack.c.l.b16 %v234
  %v1195 = vunpack.c.h.b16 %v234
  %v1196 = vunpack.c.l.b16 %v235
  %v1197 = vunpack.c.h.b16 %v235
  %v1198 = vunpack.c.l.b16 %v236
  %v1199 = vunpack.c.h.b16 %v236
  %v1200 = vunpack.c.l.b16 %v237
  %v1201 = vunpack.c.h.b16 %v237
  %v1202 = vunpack.c.l.b16 %v238
  %v1203 = vunpack.c.h.b16 %v238
  %v1204 = vunpack.c.l.b16 %v239
  %v1205 = vunpack.c.h.b16 %v239
  %v1206 = vunpack.c.l.b16 %v240
  %v1207 = vunpack.c.h.b16 %v240
  %v1208 = vunpack.c.l.b16 %v241
  %v1209 = vunpack.c.h.b16 %v241
  %v1210 = vunpack.c.l.b16 %v242
  %v1211 = vunpack.c.h.b16 %v242
  %v1212 = vunpack.c.l.b16 %v243
  %v1213 = vunpack.c.h.b16 %v243
  %v1214 = vunpack.c.l.b16 %v244
  %v1215 = vunpack.c.h.b16 %v244
  %v1216 = vunpack.c.l.b16 %v245
  %v1217 = vunpack.c.h.b16 %v245
  %v1218 = vunpack.c.l.b16 %v246
  %v1219 = vunpack.c.h.b16 %v246
  %v1220 = vunpack.c.l.b16 %v247
  %v1221 = vunpack.c.h.b16 %v247
  %v1222 = vunpack.c.l.b16 %v248
  %v1223 = vunpack.c.h.b16 %v248
  %v1224 = vunpack.c.l.b16 %v249
  %v1225 = vunpack.c.h.b16 %v249
  %v1226 = vunpack.c.l.b16 %v250
  %v1227 = vunpack.c.h.b16 %v250
  %v1228 = vunpack.c.l.b16 %v251
  %v1229 = vunpack.c.h.b16 %v251
  %v1230 = vunpack.c.l.b16 %v252
  %v1231 = vunpack.c.h.b16 %v252
  %v1232 = vunpack.c.l.b16 %v253
  %v1233 = vunpack.c.h.b16 %v253
  %v1234 = vunpack.c.l.b16 %v254
  %v1235 = vunpack.c.h.b16 %v254
  %v1236 = vunpack.c.l.b16 %v255
  %v1237 = vunpack.c.h.b16 %v255
  %v1238 = vunpack.c.l.b16 %v256
  %v1239 = vunpack.c.h.b16 %v256
  %v1240 = vunpack.c.l.b16 %v257
  %v1241 = vunpack.c.h.b16 %v257
  %v1242 = vunpack.c.l.b16 %v258
  %v1243 = vunpack.c.h.b16 %v258
  %v1244 = vunpack.c.l.b16 %v259
  %v1245 = vunpack.c.h.b16 %v259
  %v1246 = vunpack.c.l.b16 %v260
  %v1247 = vunpack.c.h.b16 %v260
  %v1248 = vunpack.c.l.b16 %v261
  %v1249 = vunpack.c.h.b16 %v261
  %v1250 = vunpack.c.l.b16 %v262
  %v1251 = vunpack.c.h.b16 %v262
  %v1252 = vunpack.c.l.b16 %v263
  %v1253 = vunpack.c.h.b16 %v263
  %v1254 = vunpack.c.l.b16 %v264
  %v1255 = vunpack.c.h.b16 %v264
  %v1256 = vunpack.c.l.b16 %v265
  %v1257 = vunpack.c.h.b16 %v265
  %v1258 = vunpack.c.l.b16 %v266
  %v1259 = vunpack.c.h.b16 %v266
  %v1260 = vunpack.c.l.b16 %v267
  %v1261 = vunpack.c.h.b16 %v267
  %v1262 = vunpack.c.l.b16 %v268
  %v1263 = vunpack.c.h.b16 %v268
  %v1264 = vunpack.c.l.b16 %v269
  %v1265 = vunpack.c.h.b16 %v269
  %v1266 = vunpack.c.l.b16 %v270
  %v1267 = vunpack.c.h.b16 %v270
  %v1268 = vunpack.c.l.b16 %v271
  %v1269 = vunpack.c.h.b16 %v271
  %v1270 = vunpack.c.l.b16 %v272
  %v1271 = vunpack.c.h.b16 %v272
  %v1272 = vunpack.c.l.b16 %v273
  %v1273 = vunpack.c.h.b16 %v273
  %v1274 = vunpack.c.l.b16 %v274
  %v1275 = vunpack.c.h.b16 %v274
  %v1276 = vunpack.c.l.b16 %v275
  %v1277 = vunpack.c.h.b16 %v275
  %v1278 = vunpack.c.l.b16 %v276
  %v1279 = vunpack.c.h.b16 %v276
  %v1280 = vunpack.c.l.b16 %v277
  %v1281 = vunpack.c.h.b16 %v277
  %v1282 = vunpack.c.l.b16 %v278
  %v1283 = vunpack.c.h.b16 %v278
  %v1284 = vunpack.c.l.b16 %v279
  %v1285 = vunpack.c.h.b16 %v279
  %v1286 = vunpack.c.l.b16 %v280
  %v1287 = vunpack.c.h.b16 %v280
  %v1288 = vunpack.c.l.b16 %v281
  %v1289 = vunpack.c.h.b16 %v281
  %v1290 = vunpack.c.l.b16 %v282
  %v1291 = vunpack.c.h.b16 %v282
  %v1292 = vunpack.c.l.b16 %v283
  %v1293 = vunpack.c.h.b16 %v283
  %v1294 = vunpack.c.l.b16 %v284
  %v1295 = vunpack.c.h.b16 %v284
  %v1296 = vunpack.c.l.b16 %v285
  %v1297 = vunpack.c.h.b16 %v285
  %v1298 = vunpack.c.l.b16 %v286
  %v1299 = vunpack.c.h.b16 %v286
  %v1300 = vunpack.c.l.b16 %v287
  %v1301 = vunpack.c.h.b16 %v287
  %v1302 = vunpack.c.l.b16 %v288
  %v1303 = vunpack.c.h.b16 %v288
  %v1304 = vunpack.c.l.b16 %v289
  %v1305 = vunpack.c.h.b16 %v289
  %v1306 = vunpack.c.l.b16 %v290
  %v1307 = vunpack.c.h.b16 %v290
  %v1308 = vunpack.c.l.b16 %v291
  %v1309 = vunpack.c.h.b16 %v291
  %v1310 = vunpack.c.l.b16 %v292
  %v1311 = vunpack.c.h.b16 %v292
  %v1312 = vunpack.c.l.b16 %v293
  %v1313 = vunpack.c.h.b16 %v293
  %v1314 = vunpack.c.l.b16 %v294
  %v1315 = vunpack.c.h.b16 %v294
  %v1316 = vunpack.c.l.b16 %v295
  %v1317 = vunpack.c.h.b16 %v295
  %v1318 = vunpack.c.l.b16 %v296
  %v1319 = vunpack.c.h.b16 %v296
  %v1320 = vunpack.c.l.b16 %v297
  %v1321 = vunpack.c.h.b16 %v297
  %v1322 = vunpack.c.l.b16 %v298
  %v1323 = vunpack.c.h.b16 %v298
  %v1324 = vunpack.c.l.b16 %v299
  %v1325 = vunpack.c.h.b16 %v299
  %v1326 = vunpack.c.l.b16 %v300
  %v1327 = vunpack.c.h.b16 %v300
  %v1328 = vunpack.c.l.b16 %v301
  %v1329 = vunpack.c.h.b16 %v301
  %v1330 = vunpack.c.l.b16 %v302
  %v1331 = vunpack.c.h.b16 %v302
  %v1332 = vunpack.c.l.b16 %v303
  %v1333 = vunpack.c.h.b16 %v303
  %v1334 = vunpack.c.l.b16 %v304
  %v1335 = vunpack.c.h.b16 %v304
  %v1336 = vunpack.c.l.b16 %v305
  %v1337 = vunpack.c.h.b16 %v305
  %v1338 = vunpack.c.l.b16 %v306
  %v1339 = vunpack.c.h.b16 %v306
  %v1340 = vunpack.c.l.b16 %v307
  %v1341 = vunpack.c.h.b16 %v307
  %v1342 = vunpack.c.l.b16 %v308
  %v1343 = vunpack.c.h.b16 %v308
  %v1344 = vunpack.c.l.b16 %v309
  %v1345 = vunpack.c.h.b16 %v309
  %v1346 = vunpack.c.l.b16 %v310
  %v1347 = vunpack.c.h.b16 %v310
  %v1348 = vunpack.c.l.b16 %v311
  %v1349 = vunpack.c.h.b16 %v311
  %v1350 = vunpack.c.l.b16 %v312
  %v1351 = vunpack.c.h.b16 %v312
  %v1352 = vunpack.c.l.b16 %v313
  %v1353 = vunpack.c.h.b16 %v313
  %v1354 = vunpack.c.l.b16 %v314
  %v1355 = vunpack.c.h.b16 %v314
  %v1356 = vunpack.c.l.b16 %v315
  %v1357 = vunpack.c.h.b16 %v315
  %v1358 = vunpack.c.l.b16 %v316
  %v1359 = vunpack.c.h.b16 %v316
  %v1360 = vunpack.c.l.b16 %v317
  %v1361 = vunpack.c.h.b16 %v317
  %v1362 = vunpack.c.l.b16 %v318
  %v1363 = vunpack.c.h.b16 %v318
  %v1364 = vunpack.c.l.b16 %v319
  %v1365 = vunpack.c.h.b16 %v319
  %v1366 = vunpack.c.l.b16 %v320
  %v1367 = vunpack.c.h.b16 %v320
  %v1368 = vunpack.c.l.b16 %v321
  %v1369 = vunpack.c.h.b16 %v321
  %v1370 = vunpack.c.l.b16 %v322
  %v1371 = vunpack.c.h.b16 %v322
  %v1372 = vunpack.c.l.b16 %v323
  %v1373 = vunpack.c.h.b16 %v323
  %v1374 = vunpack.c.l.b16 %v324
  %v1375 = vunpack.c.h.b16 %v324
  %v1376 = vunpack.c.l.b16 %v325
  %v1377 = vunpack.c.h.b16 %v325
  %v1378 = vunpack.c.l.b16 %v326
  %v1379 = vunpack.c.h.b16 %v326
  %v1380 = vunpack.c.l.b16 %v327
  %v1381 = vunpack.c.h.b16 %v327
  %v1382 = vunpack.c.l.b16 %v328
  %v1383 = vunpack.c.h.b16 %v328
  %v1384 = vunpack.c.l.b16 %v329
  %v1385 = vunpack.c.h.b16 %v329
  %v1386 = vunpack.c.l.b16 %v330
  %v1387 = vunpack.c.h.b16 %v330
  %v1388 = vunpack.c.l.b16 %v331
  %v1389 = vunpack.c.h.b16 %v331
  %v1390 = vunpack.c.l.b16 %v332
  %v1391 = vunpack.c.h.b16 %v332
  %v1392 = vunpack.c.l.b16 %v333
  %v1393 = vunpack.c.h.b16 %v333
  %v1394 = vunpack.c.l.b16 %v334
  %v1395 = vunpack.c.h.b16 %v334
  %v1396 = vunpack.c.l.b16 %v335
  %v1397 = vunpack.c.h.b16 %v335
  %v1398 = vunpack.c.l.b16 %v336
  %v1399 = vunpack.c.h.b16 %v336
  %v1400 = vunpack.c.l.b16 %v337
  %v1401 = vunpack.c.h.b16 %v337
  %v1402 = vunpack.c.l.b16 %v338
  %v1403 = vunpack.c.h.b16 %v338
  %v1404 = vunpack.c.l.b16 %v339
  %v1405 = vunpack.c.h.b16 %v339
  %v1406 = vunpack.c.l.b16 %v340
  %v1407 = vunpack.c.h.b16 %v340
  %v1408 = vunpack.c.l.b16 %v341
  %v1409 = vunpack.c.h.b16 %v341
  %v1410 = vunpack.c.l.b16 %v342
  %v1411 = vunpack.c.h.b16 %v342
  %v1412 = vunpack.c.l.b16 %v343
  %v1413 = vunpack.c.h.b16 %v343
  %v1414 = vunpack.c.l.b16 %v344
  %v1415 = vunpack.c.h.b16 %v344
  %v1416 = vunpack.c.l.b16 %v345
  %v1417 = vunpack.c.h.b16 %v345
  %v1418 = vunpack.c.l.b16 %v346
  %v1419 = vunpack.c.h.b16 %v346
  %v1420 = vunpack.c.l.b16 %v347
  %v1421 = vunpack.c.h.b16 %v347
  %v1422 = vunpack.c.l.b16 %v348
  %v1423 = vunpack.c.h.b16 %v348
  %v1424 = vunpack.c.l.b16 %v349
  %v1425 = vunpack.c.h.b16 %v349
  %v1426 = vunpack.c.l.b16 %v350
  %v1427 = vunpack.c.h.b16 %v350
  %v1428 = vunpack.c.l.b16 %v351
  %v1429 = vunpack.c.h.b16 %v351
  %v1430 = vunpack.c.l.b16 %v352
  %v1431 = vunpack.c.h.b16 %v352
  %v1432 = vunpack.c.l.b16 %v353
  %v1433 = vunpack.c.h.b16 %v353
  %v1434 = vunpack.c.l.b16 %v354
  %v1435 = vunpack.c.h.b16 %v354
  %v1436 = vunpack.c.l.b16 %v355
  %v1437 = vunpack.c.h.b16 %v355
  %v1438 = vunpack.c.l.b16 %v356
  %v1439 = vunpack.c.h.b16 %v356
  %v1440 = vunpack.c.l.b16 %v357
  %v1441 = vunpack.c.h.b16 %v357
  %v1442 = vunpack.c.l.b16 %v358
  %v1443 = vunpack.c.h.b16 %v358
  %v1444 = vunpack.c.l.b16 %v359
  %v1445 = vunpack.c.h.b16 %v359
  %v1446 = vunpack.c.l.b16 %v360
  %v1447 = vunpack.c.h.b16 %v360
  %v1448 = vunpack.c.l.b16 %v361
  %v1449 = vunpack.c.h.b16 %v361
  %v1450 = vunpack.c.l.b16 %v362
  %v1451 = vunpack.c.h.b16 %v362
  %v1452 = vunpack.c.l.b16 %v363
  %v1453 = vunpack.c.h.b16 %v363
  %v1454 = vunpack.c.l.b16 %v364
  %v1455 = vunpack.c.h.b16 %v364
  %v1456 = vunpack.c.l.b16 %v365
  %v1457 = vunpack.c.h.b16 %v365
  %v1458 = vunpack.c.l.b16 %v366
  %v1459 = vunpack.c.h.b16 %v366
  %v1460 = vunpack.c.l.b16 %v367
  %v1461 = vunpack.c.h.b16 %v367
  %v1462 = vpack.c.b16 %v792, %v790
  %v1463 = vpack.c.b16 %v793, %v791
  %v1464 = vpack.c.b16 %v796, %v794
  %v1465 = vpack.c.b16 %v797, %v795
  %v1466 = vpack.c.b16 %v800, %v798
  %v1467 = vpack.c.b16 %v801, %v799
  %v1468 = vpack.c.b16 %v804, %v802
  %v1469 = vpack.c.b16 %v805, %v803
  %v1470 = vpack.c.b16 %v808, %v806
  %v1471 = vpack.c.b16 %v809, %v807
  %v1472 = vpack.c.b16 %v812, %v810
  %v1473 = vpack.c.b16 %v813, %v811
  %v1474 = vpack.c.b16 %v816, %v814
  %v1475 = vpack.c.b16 %v817, %v815
  %v1476 = vpack.c.b16 %v820, %v818
  %v1477 = vpack.c.b16 %v821, %v819
  %v1478 = vpack.c.b16 %v824, %v822
  %v1479 = vpack.c.b16 %v825, %v823
  %v1480 = vpack.c.b16 %v828, %v826
  %v1481 = vpack.c.b16 %v829, %v827
  %v1482 = vpack.c.b16 %v832, %v830
  %v1483 = vpack.c.b16 %v833, %v831
  %v1484 = vpack.c.b16 %v836, %v834
  %v1485 = vpack.c.b16 %v837, %v835
  %v1486 = vpack.c.b16 %v840, %v838
  %v1487 = vpack.c.b16 %v841, %v839
  %v1488 = vpack.c.b16 %v844, %v842
  %v1489 = vpack.c.b16 %v845, %v843
  %v1490 = vpack.c.b16 %v848, %v846
  %v1491 = vpack.c.b16 %v849, %v847
  %v1492 = vpack.c.b16 %v852, %v850
  %v1493 = vpack.c.b16 %v853, %v851
  %v1494 = vpack.c.b16 %v856, %v854
  %v1495 = vpack.c.b16 %v857, %v855
  %v1496 = vpack.c.b16 %v860, %v858
  %v1497 = vpack.c.b16 %v861, %v859
  %v1498 = vpack.c.b16 %v864, %v862
  %v1499 = vpack.c.b16 %v865, %v863
  %v1500 = vpack.c.b16 %v868, %v866
  %v1501 = vpack.c.b16 %v869, %v867
  %v1502 = vpack.c.b16 %v872, %v870
  %v1503 = vpack.c.b16 %v873, %v871
  %v1504 = vpack.c.b16 %v876, %v874
  %v1505 = vpack.c.b16 %v877, %v875
  %v1506 = vpack.c.b16 %v880, %v878
  %v1507 = vpack.c.b16 %v881, %v879
  %v1508 = vpack.c.b16 %v884, %v882
  %v1509 = vpack.c.b16 %v885, %v883
  %v1510 = vpack.c.b16 %v888, %v886
  %v1511 = vpack.c.b16 %v889, %v887
  %v1512 = vpack.c.b16 %v892, %v890
  %v1513 = vpack.c.b16 %v893, %v891
  %v1514 = vpack.c.b16 %v896, %v894
  %v1515 = vpack.c.b16 %v897, %v895
  %v1516 = vpack.c.b16 %v900, %v898
  %v1517 = vpack.c.b16 %v901, %v899
  %v1518 = vpack.c.b16 %v904, %v902
  %v1519 = vpack.c.b16 %v905, %v903
  %v1520 = vpack.c.b16 %v908, %v906
  %v1521 = vpack.c.b16 %v909, %v907
  %v1522 = vpack.c.b16 %v912, %v910
  %v1523 = vpack.c.b16 %v913, %v911
  %v1524 = vpack.c.b16 %v916, %v914
  %v1525 = vpack.c.b16 %v917, %v915
  %v1526 = vpack.c.b16 %v920, %v918
  %v1527 = vpack.c.b16 %v921, %v919
  %v1528 = vpack.c.b16 %v924, %v922
  %v1529 = vpack.c.b16 %v925, %v923
  %v1530 = vpack.c.b16 %v928, %v926
  %v1531 = vpack.c.b16 %v929, %v927
  %v1532 = vpack.c.b16 %v932, %v930
  %v1533 = vpack.c.b16 %v933, %v931
  %v1534 = vpack.c.b16 %v936, %v934
  %v1535 = vpack.c.b16 %v937, %v935
  %v1536 = vpack.c.b16 %v940, %v938
  %v1537 = vpack.c.b16 %v941, %v939
  %v1538 = vpack.c.b16 %v944, %v942
  %v1539 = vpack.c.b16 %v945, %v943
  %v1540 = vpack.c.b16 %v948, %v946
  %v1541 = vpack.c.b16 %v949, %v947
  %v1542 = vpack.c.b16 %v952, %v950
  %v1543 = vpack.c.b16 %v953, %v951
  %v1544 = vpack.c.b16 %v956, %v954
  %v1545 = vpack.c.b16 %v957, %v955
  %v1546 = vpack.c.b16 %v960, %v958
  %v1547 = vpack.c.b16 %v961, %v959
  %v1548 = vpack.c.b16 %v964, %v962
  %v1549 = vpack.c.b16 %v965, %v963
  %v1550 = vpack.c.b16 %v968, %v966
  %v1551 = vpack.c.b16 %v969, %v967
  %v1552 = vpack.c.b16 %v972, %v970
  %v1553 = vpack.c.b16 %v973, %v971
  %v1554 = vpack.c.b16 %v976, %v974
  %v1555 = vpack.c.b16 %v977, %v975
  %v1556 = vpack.c.b16 %v980, %v978
  %v1557 = vpack.c.b16 %v981, %v979
  %v1558 = vpack.c.b16 %v984, %v982
  %v1559 = vpack.c.b16 %v985, %v983
  %v1560 = vpack.c.b16 %v988, %v986
  %v1561 = vpack.c.b16 %v989, %v987
  %v1562 = vpack.c.b16 %v992, %v990
  %v1563 = vpack.c.b16 %v993, %v991
  %v1564 = vpack.c.b16 %v996, %v994
  %v1565 = vpack.c.b16 %v997, %v995
  %v1566 = vpack.c.b16 %v1000, %v998
  %v1567 = vpack.c.b16 %v1001, %v999
  %v1568 = vpack.c.b16 %v1004, %v1002
  %v1569 = vpack.c.b16 %v1005, %v1003
  %v1570 = vpack.c.b16 %v1008, %v1006
  %v1571 = vpack.c.b16 %v1009, %v1007
  %v1572 = vpack.c.b16 %v1012, %v1010
  %v1573 = vpack.c.b16 %v1013, %v1011
  %v1574 = vpack.c.b16 %v1016, %v1014
  %v1575 = vpack.c.b16 %v1017, %v1015
  %v1576 = vpack.c.b16 %v1020, %v1018
  %v1577 = vpack.c.b16 %v1021, %v1019
  %v1578 = vpack.c.b16 %v1024, %v1022
  %v1579 = vpack.c.b16 %v1025, %v1023
  %v1580 = vpack.c.b16 %v1028, %v1026
  %v1581 = vpack.c.b16 %v1029, %v1027
  %v1582 = vpack.c.b16 %v1032, %v1030
  %v1583 = vpack.c.b16 %v1033, %v1031
  %v1584 = vpack.c.b16 %v1036, %v1034
  %v1585 = vpack.c.b16 %v1037, %v1035
  %v1586 = vpack.c.b16 %v1040, %v1038
  %v1587 = vpack.c.b16 %v1041, %v1039
  %v1588 = vpack.c.b16 %v1044, %v1042
  %v1589 = vpack.c.b16 %v1045, %v1043
  %v1590 = vpack.c.b16 %v1048, %v1046
  %v1591 = vpack.c.b16 %v1049, %v1047
  %v1592 = vpack.c.b16 %v1052, %v1050
  %v1593 = vpack.c.b16 %v1053, %v1051
  %v1594 = vpack.c.b16 %v1056, %v1054
  %v1595 = vpack.c.b16 %v1057, %v1055
  %v1596 = vpack.c.b16 %v1060, %v1058
  %v1597 = vpack.c.b16 %v1061, %v1059
  %v1598 = vpack.c.b16 %v1064, %v1062
  %v1599 = vpack.c.b16 %v1065, %v1063
  %v1600 = vpack.c.b16 %v1068, %v1066
  %v1601 = vpack.c.b16 %v1069, %v1067
  %v1602 = vpack.c.b16 %v1072, %v1070
  %v1603 = vpack.c.b16 %v1073, %v1071
  %v1604 = vpack.c.b16 %v1076, %v1074
  %v1605 = vpack.c.b16 %v1077, %v1075
  %v1606 = vpack.c.b16 %v1080, %v1078
  %v1607 = vpack.c.b16 %v1081, %v1079
  %v1608 = vpack.c.b16 %v1084, %v1082
  %v1609 = vpack.c.b16 %v1085, %v1083
  %v1610 = vpack.c.b16 %v1088, %v1086
  %v1611 = vpack.c.b16 %v1089, %v1087
  %v1612 = vpack.c.b16 %v1092, %v1090
  %v1613 = vpack.c.b16 %v1093, %v1091
  %v1614 = vpack.c.b16 %v1096, %v1094
  %v1615 = vpack.c.b16 %v1097, %v1095
  %v1616 = vpack.c.b16 %v1100, %v1098
  %v1617 = vpack.c.b16 %v1101, %v1099
  %v1618 = vpack.c.b16 %v1104, %v1102
  %v1619 = vpack.c.b16 %v1105, %v1103
  %v1620 = vpack.c.b16 %v1108, %v1106
  %v1621 = vpack.c.b16 %v1109, %v1107
  %v1622 = vpack.c.b16 %v1112, %v1110
  %v1623 = vpack.c.b16 %v1113, %v1111
  %v1624 = vpack.c.b16 %v1116, %v1114
  %v1625 = vpack.c.b16 %v1117, %v1115
  %v1626 = vpack.c.b16 %v1120, %v1118
  %v1627 = vpack.c.b16 %v1121, %v1119
  %v1628 = vpack.c.b16 %v1124, %v1122
  %v1629 = vpack.c.b16 %v1125, %v1123
  %v1630 = vpack.c.b16 %v1128, %v1126
  %v1631 = vpack.c.b16 %v1129, %v1127
  %v1632 = vpack.c.b16 %v1132, %v1130
  %v1633 = vpack.c.b16 %v1133, %v1131
  %v1634 = vpack.c.b16 %v1136, %v1134
  %v1635 = vpack.c.b16 %v1137, %v1135
  %v1636 = vpack.c.b16 %v1140, %v1138
  %v1637 = vpack.c.b16 %v1141, %v1139
  %v1638 = vpack.c.b16 %v1144, %v1142
  %v1639 = vpack.c.b16 %v1145, %v1143
  %v1640 = vpack.c.b16 %v1148, %v1146
  %v1641 = vpack.c.b16 %v1149, %v1147
  %v1642 = vpack.c.b16 %v1152, %v1150
  %v1643 = vpack.c.b16 %v1153, %v1151
  %v1644 = vpack.c.b16 %v1156, %v1154
  %v1645 = vpack.c.b16 %v1157, %v1155
  %v1646 = vpack.c.b16 %v1160, %v1158
  %v1647 = vpack.c.b16 %v1161, %v1159
  %v1648 = vpack.c.b16 %v1164, %v1162
  %v1649 = vpack.c.b16 %v1165, %v1163
  %v1650 = vpack.c.b16 %v1168, %v1166
  %v1651 = vpack.c.b16 %v1169, %v1167
  %v1652 = vpack.c.b16 %v1172, %v1170
  %v1653 = vpack.c.b16 %v1173, %v1171
  %v1654 = vpack.c.b16 %v1176, %v1174
  %v1655 = vpack.c.b16 %v1177, %v1175
  %v1656 = vpack.c.b16 %v1180, %v1178
  %v1657 = vpack.c.b16 %v1181, %v1179
  %v1658 = vpack.c.b16 %v1184, %v1182
  %v1659 = vpack.c.b16 %v1185, %v1183
  %v1660 = vpack.c.b16 %v1188, %v1186
  %v1661 = vpack.c.b16 %v1189, %v1187
  %v1662 = vpack.c.b16 %v1192, %v1190
  %v1663 = vpack.c.b16 %v1193, %v1191
  %v1664 = vpack.c.b16 %v1196, %v1194
  %v1665 = vpack.c.b16 %v1197, %v1195
  %v1666 = vpack.c.b16 %v1200, %v1198
  %v1667 = vpack.c.b16 %v1201, %v1199
  %v1668 = vpack.c.b16 %v1204, %v1202
  %v1669 = vpack.c.b16 %v1205, %v1203
  %v1670 = vpack.c.b16 %v1208, %v1206
  %v1671 = vpack.c.b16 %v1209, %v1207
  %v1672 = vpack.c.b16 %v1212, %v1210
  %v1673 = vpack.c.b16 %v1213, %v1211
  %v1674 = vpack.c.b16 %v1216, %v1214
  %v1675 = vpack.c.b16 %v1217, %v1215
  %v1676 = vpack.c.b16 %v1220, %v1218
  %v1677 = vpack.c.b16 %v1221, %v1219
  %v1678 = vpack.c.b16 %v1224, %v1222
  %v1679 = vpack.c.b16 %v1225, %v1223
  %v1680 = vpack.c.b16 %v1228, %v1226
  %v1681 = vpack.c.b16 %v1229, %v1227
  %v1682 = vpack.c.b16 %v1232, %v1230
  %v1683 = vpack.c.b16 %v1233, %v1231
  %v1684 = vpack.c.b16 %v1236, %v1234
  %v1685 = vpack.c.b16 %v1237, %v1235
  %v1686 = vpack.c.b16 %v1240, %v1238
  %v1687 = vpack.c.b16 %v1241, %v1239
  %v1688 = vpack.c.b16 %v1244, %v1242
  %v1689 = vpack.c.b16 %v1245, %v1243
  %v1690 = vpack.c.b16 %v1248, %v1246
  %v1691 = vpack.c.b16 %v1249, %v1247
  %v1692 = vpack.c.b16 %v1252, %v1250
  %v1693 = vpack.c.b16 %v1253, %v1251
  %v1694 = vpack.c.b16 %v1256, %v1254
  %v1695 = vpack.c.b16 %v1257, %v1255
  %v1696 = vpack.c.b16 %v1260, %v1258
  %v1697 = vpack.c.b16 %v1261, %v1259
  %v1698 = vpack.c.b16 %v1264, %v1262
  %v1699 = vpack.c.b16 %v1265, %v1263
  %v1700 = vpack.c.b16 %v1268, %v1266
  %v1701 = vpack.c.b16 %v1269, %v1267
  %v1702 = vpack.c.b16 %v1272, %v1270
  %v1703 = vpack.c.b16 %v1273, %v1271
  %v1704 = vpack.c.b16 %v1276, %v1274
  %v1705 = vpack.c.b16 %v1277, %v1275
  %v1706 = vpack.c.b16 %v1280, %v1278
  %v1707 = vpack.c.b16 %v1281, %v1279
  %v1708 = vpack.c.b16 %v1284, %v1282
  %v1709 = vpack.c.b16 %v1285, %v1283
  %v1710 = vpack.c.b16 %v1288, %v1286
  %v1711 = vpack.c.b16 %v1289, %v1287
  %v1712 = vpack.c.b16 %v1292, %v1290
  %v1713 = vpack.c.b16 %v1293, %v1291
  %v1714 = vpack.c.b16 %v1296, %v1294
  %v1715 = vpack.c.b16 %v1297, %v1295
  %v1716 = vpack.c.b16 %v1300, %v1298
  %v1717 = vpack.c.b16 %v1301, %v1299
  %v1718 = vpack.c.b16 %v1304, %v1302
  %v1719 = vpack.c.b16 %v1305, %v1303
  %v1720 = vpack.c.b16 %v1308, %v1306
  %v1721 = vpack.c.b16 %v1309, %v1307
  %v1722 = vpack.c.b16 %v1312, %v1310
  %v1723 = vpack.c.b16 %v1313, %v1311
  %v1724 = vpack.c.b16 %v1316, %v1314
  %v1725 = vpack.c.b16 %v1317, %v1315
  %v1726 = vpack.c.b16 %v1320, %v1318
  %v1727 = vpack.c.b16 %v1321, %v1319
  %v1728 = vpack.c.b16 %v1324, %v1322
  %v1729 = vpack.c.b16 %v1325, %v1323
  %v1730 = vpack.c.b16 %v1328, %v1326
  %v1731 = vpack.c.b16 %v1329, %v1327
  %v1732 = vpack.c.b16 %v1332, %v1330
  %v1733 = vpack.c.b16 %v1333, %v1331
  %v1734 = vpack.c.b16 %v1336, %v1334
  %v1735 = vpack.c.b16 %v1337, %v1335
  %v1736 = vpack.c.b16 %v1340, %v1338
  %v1737 = vpack.c.b16 %v1341, %v1339
  %v1738 = vpack.c.b16 %v1344, %v1342
  %v1739 = vpack.c.b16 %v1345, %v1343
  %v1740 = vpack.c.b16 %v1348, %v1346
  %v1741 = vpack.c.b16 %v1349, %v1347
  %v1742 = vpack.c.b16 %v1352, %v1350
  %v1743 = vpack.c.b16 %v1353, %v1351
  %v1744 = vpack.c.b16 %v1356, %v1354
  %v1745 = vpack.c.b16 %v1357, %v1355
  %v1746 = vpack.c.b16 %v1360, %v1358
  %v1747 = vpack.c.b16 %v1361, %v1359
  %v1748 = vpack.c.b16 %v1364, %v1362
  %v1749 = vpack.c.b16 %v1365, %v1363
  %v1750 = vpack.c.b16 %v1368, %v1366
  %v1751 = vpack.c.b16 %v1369, %v1367
  %v1752 = vpack.c.b16 %v1372, %v1370
  %v1753 = vpack.c.b16 %v1373, %v1371
  %v1754 = vpack.c.b16 %v1376, %v1374
  %v1755 = vpack.c.b16 %v1377, %v1375
  %v1756 = vpack.c.b16 %v1380, %v1378
  %v1757 = vpack.c.b16 %v1381, %v1379
  %v1758 = vpack.c.b16 %v1384, %v1382
  %v1759 = vpack.c.b16 %v1385, %v1383
  %v1760 = vpack.c.b16 %v1388, %v1386
  %v1761 = vpack.c.b16 %v1389, %v1387
  %v1762 = vpack.c.b16 %v1392, %v1390
  %v1763 = vpack.c.b16 %v1393, %v1391
  %v1764 = vpack.c.b16 %v1396, %v1394
  %v1765 = vpack.c.b16 %v1397, %v1395
  %v1766 = vpack.c.b16 %v1400, %v1398
  %v1767 = vpack.c.b16 %v1401, %v1399
  %v1768 = vpack.c.b16 %v1404, %v1402
  %v1769 = vpack.c.b16 %v1405, %v1403
  %v1770 = vpack.c.b16 %v1408, %v1406
  %v1771 = vpack.c.b16 %v1409, %v1407
  %v1772 = vpack.c.b16 %v1412, %v1410
  %v1773 = vpack.c.b16 %v1413, %v1411
  %v1774 = vpack.c.b16 %v1416, %v1414
  %v1775 = vpack.c.b16 %v1417, %v1415
  %v1776 = vpack.c.b16 %v1420, %v1418
  %v1777 = vpack.c.b16 %v1421, %v1419
  %v1778 = vpack.c.b16 %v1424, %v1422
  %v1779 = vpack.c.b16 %v1425, %v1423
  %v1780 = vpack.c.b16 %v1428, %v1426
  %v1781 = vpack.c.b16 %v1429, %v1427
  %v1782 = vpack.c.b16 %v1432, %v1430
  %v1783 = vpack.c.b16 %v1433, %v1431
  %v1784 = vpack.c.b16 %v1436, %v1434
  %v1785 = vpack.c.b16 %v1437, %v1435
  %v1786 = vpack.c.b16 %v1440, %v1438
  %v1787 = vpack.c.b16 %v1441, %v1439
  %v1788 = vpack.c.b16 %v1444, %v1442
  %v1789 = vpack.c.b16 %v1445, %v1443
  %v1790 = vpack.c.b16 %v1448, %v1446
  %v1791 = vpack.c.b16 %v1449, %v1447
  %v1792 = vpack.c.b16 %v1452, %v1450
  %v1793 = vpack.c.b16 %v1453, %v1451
  %v1794 = vpack.c.b16 %v1456, %v1454
  %v1795 = vpack.c.b16 %v1457, %v1455
  %v1796 = vpack.c.b16 %v1460, %v1458
  %v1797 = vpack.c.b16 %v1461, %v1459
  %2134 = vmatprep.subr.bf16.mxu0 %v1463
  %2135 = vmatpush1.bf16.msra.mxu0 %v1462
  %2136 = vmatprep.subr.bf16.mxu0 %v1465
  %2137 = vmatpush1.bf16.msra.mxu0 %v1464
  %2138 = vmatprep.subr.bf16.mxu0 %v1467
  %2139 = vmatpush1.bf16.msra.mxu0 %v1466
  %2140 = vmatprep.subr.bf16.mxu0 %v1469
  %2141 = vmatpush1.bf16.msra.mxu0 %v1468
  %2142 = vmatprep.subr.bf16.mxu0 %v1471
  %2143 = vmatpush1.bf16.msra.mxu0 %v1470
  %2144 = vmatprep.subr.bf16.mxu0 %v1473
  %2145 = vmatpush1.bf16.msra.mxu0 %v1472
  %2146 = vmatprep.subr.bf16.mxu0 %v1475
  %2147 = vmatpush1.bf16.msra.mxu0 %v1474
  %2148 = vmatprep.subr.bf16.mxu0 %v1477
  %2149 = vmatpush1.bf16.msra.mxu0 %v1476
  %2150 = vmatprep.subr.bf16.mxu0 %v1479
  %2151 = vmatpush1.bf16.msra.mxu0 %v1478
  %2152 = vmatprep.subr.bf16.mxu0 %v1481
  %2153 = vmatpush1.bf16.msra.mxu0 %v1480
  %2154 = vmatprep.subr.bf16.mxu0 %v1483
  %2155 = vmatpush1.bf16.msra.mxu0 %v1482
  %2156 = vmatprep.subr.bf16.mxu0 %v1485
  %2157 = vmatpush1.bf16.msra.mxu0 %v1484
  %2158 = vmatprep.subr.bf16.mxu0 %v1487
  %2159 = vmatpush1.bf16.msra.mxu0 %v1486
  %2160 = vmatprep.subr.bf16.mxu0 %v1489
  %2161 = vmatpush1.bf16.msra.mxu0 %v1488
  %2162 = vmatprep.subr.bf16.mxu0 %v1491
  %2163 = vmatpush1.bf16.msra.mxu0 %v1490
  %2164 = vmatprep.subr.bf16.mxu0 %v1493
  %2165 = vmatpush1.bf16.msra.mxu0 %v1492
  %2166 = vmatprep.mubr.bf16.mxu0 %v413
  %2167 = vmatmul.mubr.bf16.gmra.mrb[0].mxu0 %v412
  %v2168 = vpop.f32.mrb[0].mxu0
  %v2169 = vadd.f32 %v373, %v2168
  %v2170 = vpop.f32.mrb[0].mxu0
  %v2171 = vadd.f32 %v377, %v2170
  %v2172 = vpop.f32.mrb[0].mxu0
  %v2173 = vpop.f32.mrb[0].mxu0
  %2174 = vdwg.mxu0
  %2175 = vmatprep.subr.bf16.mxu0 %v1495
  %2176 = vmatpush1.bf16.msra.mxu0 %v1494
  %2177 = vmatprep.subr.bf16.mxu0 %v1497
  %2178 = vmatpush1.bf16.msra.mxu0 %v1496
  %2179 = vmatprep.subr.bf16.mxu0 %v1499
  %2180 = vmatpush1.bf16.msra.mxu0 %v1498
  %2181 = vmatprep.subr.bf16.mxu0 %v1501
  %2182 = vmatpush1.bf16.msra.mxu0 %v1500
  %2183 = vmatprep.subr.bf16.mxu0 %v1503
  %2184 = vmatpush1.bf16.msra.mxu0 %v1502
  %2185 = vmatprep.subr.bf16.mxu0 %v1505
  %2186 = vmatpush1.bf16.msra.mxu0 %v1504
  %2187 = vmatprep.subr.bf16.mxu0 %v1507
  %2188 = vmatpush1.bf16.msra.mxu0 %v1506
  %2189 = vmatprep.subr.bf16.mxu0 %v1509
  %2190 = vmatpush1.bf16.msra.mxu0 %v1508
  %2191 = vmatprep.subr.bf16.mxu0 %v1511
  %2192 = vmatpush1.bf16.msra.mxu0 %v1510
  %2193 = vmatprep.subr.bf16.mxu0 %v1513
  %2194 = vmatpush1.bf16.msra.mxu0 %v1512
  %2195 = vmatprep.subr.bf16.mxu0 %v1515
  %2196 = vmatpush1.bf16.msra.mxu0 %v1514
  %2197 = vmatprep.subr.bf16.mxu0 %v1517
  %2198 = vmatpush1.bf16.msra.mxu0 %v1516
  %2199 = vmatprep.subr.bf16.mxu0 %v1519
  %2200 = vmatpush1.bf16.msra.mxu0 %v1518
  %2201 = vmatprep.subr.bf16.mxu0 %v1521
  %2202 = vmatpush1.bf16.msra.mxu0 %v1520
  %2203 = vmatprep.subr.bf16.mxu0 %v1523
  %2204 = vmatpush1.bf16.msra.mxu0 %v1522
  %2205 = vmatprep.subr.bf16.mxu0 %v1525
  %2206 = vmatpush1.bf16.msra.mxu0 %v1524
  %2207 = vmatprep.mubr.bf16.mxu0 %v415
  %2208 = vmatmul.mubr.bf16.gmra.mrb[0].mxu0 %v414
  %v2209 = vpop.f32.mrb[0].mxu0
  %v2210 = vadd.f32 %v2169, %v2209
  %v2211 = vpop.f32.mrb[0].mxu0
  %v2212 = vadd.f32 %v2171, %v2211
  %v2213 = vpop.f32.mrb[0].mxu0
  %v2214 = vpop.f32.mrb[0].mxu0
  %2215 = vdwg.mxu0
  %2216 = vmatprep.subr.bf16.mxu0 %v1527
  %2217 = vmatpush1.bf16.msra.mxu0 %v1526
  %2218 = vmatprep.subr.bf16.mxu0 %v1529
  %2219 = vmatpush1.bf16.msra.mxu0 %v1528
  %2220 = vmatprep.subr.bf16.mxu0 %v1531
  %2221 = vmatpush1.bf16.msra.mxu0 %v1530
  %2222 = vmatprep.subr.bf16.mxu0 %v1533
  %2223 = vmatpush1.bf16.msra.mxu0 %v1532
  %2224 = vmatprep.subr.bf16.mxu0 %v1535
  %2225 = vmatpush1.bf16.msra.mxu0 %v1534
  %2226 = vmatprep.subr.bf16.mxu0 %v1537
  %2227 = vmatpush1.bf16.msra.mxu0 %v1536
  %2228 = vmatprep.subr.bf16.mxu0 %v1539
  %2229 = vmatpush1.bf16.msra.mxu0 %v1538
  %2230 = vmatprep.subr.bf16.mxu0 %v1541
  %2231 = vmatpush1.bf16.msra.mxu0 %v1540
  %2232 = vmatprep.subr.bf16.mxu0 %v1543
  %2233 = vmatpush1.bf16.msra.mxu0 %v1542
  %2234 = vmatprep.subr.bf16.mxu0 %v1545
  %2235 = vmatpush1.bf16.msra.mxu0 %v1544
  %2236 = vmatprep.subr.bf16.mxu0 %v1547
  %2237 = vmatpush1.bf16.msra.mxu0 %v1546
  %2238 = vmatprep.subr.bf16.mxu0 %v1549
  %2239 = vmatpush1.bf16.msra.mxu0 %v1548
  %2240 = vmatprep.subr.bf16.mxu0 %v1551
  %2241 = vmatpush1.bf16.msra.mxu0 %v1550
  %2242 = vmatprep.subr.bf16.mxu0 %v1553
  %2243 = vmatpush1.bf16.msra.mxu0 %v1552
  %2244 = vmatprep.subr.bf16.mxu0 %v1555
  %2245 = vmatpush1.bf16.msra.mxu0 %v1554
  %2246 = vmatprep.subr.bf16.mxu0 %v1557
  %2247 = vmatpush1.bf16.msra.mxu0 %v1556
  %2248 = vmatprep.mubr.bf16.mxu0 %v417
  %2249 = vmatmul.mubr.bf16.gmra.mrb[0].mxu0 %v416
  %v2250 = vpop.f32.mrb[0].mxu0
  %v2251 = vadd.f32 %v2210, %v2250
  %v2252 = vpop.f32.mrb[0].mxu0
  %v2253 = vadd.f32 %v2212, %v2252
  %v2254 = vpop.f32.mrb[0].mxu0
  %v2255 = vpop.f32.mrb[0].mxu0
  %2256 = vdwg.mxu0
  %2257 = vmatprep.subr.bf16.mxu0 %v1559
  %2258 = vmatpush1.bf16.msra.mxu0 %v1558
  %2259 = vmatprep.subr.bf16.mxu0 %v1561
  %2260 = vmatpush1.bf16.msra.mxu0 %v1560
  %2261 = vmatprep.subr.bf16.mxu0 %v1563
  %2262 = vmatpush1.bf16.msra.mxu0 %v1562
  %2263 = vmatprep.subr.bf16.mxu0 %v1565
  %2264 = vmatpush1.bf16.msra.mxu0 %v1564
  %2265 = vmatprep.subr.bf16.mxu0 %v1567
  %2266 = vmatpush1.bf16.msra.mxu0 %v1566
  %2267 = vmatprep.subr.bf16.mxu0 %v1569
  %2268 = vmatpush1.bf16.msra.mxu0 %v1568
  %2269 = vmatprep.subr.bf16.mxu0 %v1571
  %2270 = vmatpush1.bf16.msra.mxu0 %v1570
  %2271 = vmatprep.subr.bf16.mxu0 %v1573
  %2272 = vmatpush1.bf16.msra.mxu0 %v1572
  %2273 = vmatprep.subr.bf16.mxu0 %v1575
  %2274 = vmatpush1.bf16.msra.mxu0 %v1574
  %2275 = vmatprep.subr.bf16.mxu0 %v1577
  %2276 = vmatpush1.bf16.msra.mxu0 %v1576
  %2277 = vmatprep.subr.bf16.mxu0 %v1579
  %2278 = vmatpush1.bf16.msra.mxu0 %v1578
  %2279 = vmatprep.subr.bf16.mxu0 %v1581
  %2280 = vmatpush1.bf16.msra.mxu0 %v1580
  %2281 = vmatprep.subr.bf16.mxu0 %v1583
  %2282 = vmatpush1.bf16.msra.mxu0 %v1582
  %2283 = vmatprep.subr.bf16.mxu0 %v1585
  %2284 = vmatpush1.bf16.msra.mxu0 %v1584
  %2285 = vmatprep.subr.bf16.mxu0 %v1587
  %2286 = vmatpush1.bf16.msra.mxu0 %v1586
  %2287 = vmatprep.subr.bf16.mxu0 %v1589
  %2288 = vmatpush1.bf16.msra.mxu0 %v1588
  %2289 = vmatprep.mubr.bf16.mxu0 %v419
  %2290 = vmatmul.mubr.bf16.gmra.mrb[0].mxu0 %v418
  %v2291 = vpop.f32.mrb[0].mxu0
  %v2292 = vadd.f32 %v2251, %v2291
  %v2293 = vpop.f32.mrb[0].mxu0
  %v2294 = vadd.f32 %v2253, %v2293
  %v2295 = vpop.f32.mrb[0].mxu0
  %v2296 = vpop.f32.mrb[0].mxu0
  %2297 = vdwg.mxu0
  %2298 = vmatprep.subr.bf16.mxu0 %v1591
  %2299 = vmatpush1.bf16.msra.mxu0 %v1590
  %2300 = vmatprep.subr.bf16.mxu0 %v1593
  %2301 = vmatpush1.bf16.msra.mxu0 %v1592
  %2302 = vmatprep.subr.bf16.mxu0 %v1595
  %2303 = vmatpush1.bf16.msra.mxu0 %v1594
  %2304 = vmatprep.subr.bf16.mxu0 %v1597
  %2305 = vmatpush1.bf16.msra.mxu0 %v1596
  %2306 = vmatprep.subr.bf16.mxu0 %v1599
  %2307 = vmatpush1.bf16.msra.mxu0 %v1598
  %2308 = vmatprep.subr.bf16.mxu0 %v1601
  %2309 = vmatpush1.bf16.msra.mxu0 %v1600
  %2310 = vmatprep.subr.bf16.mxu0 %v1603
  %2311 = vmatpush1.bf16.msra.mxu0 %v1602
  %2312 = vmatprep.subr.bf16.mxu0 %v1605
  %2313 = vmatpush1.bf16.msra.mxu0 %v1604
  %2314 = vmatprep.subr.bf16.mxu0 %v1607
  %2315 = vmatpush1.bf16.msra.mxu0 %v1606
  %2316 = vmatprep.subr.bf16.mxu0 %v1609
  %2317 = vmatpush1.bf16.msra.mxu0 %v1608
  %2318 = vmatprep.subr.bf16.mxu0 %v1611
  %2319 = vmatpush1.bf16.msra.mxu0 %v1610
  %2320 = vmatprep.subr.bf16.mxu0 %v1613
  %2321 = vmatpush1.bf16.msra.mxu0 %v1612
  %2322 = vmatprep.subr.bf16.mxu0 %v1615
  %2323 = vmatpush1.bf16.msra.mxu0 %v1614
  %2324 = vmatprep.subr.bf16.mxu0 %v1617
  %2325 = vmatpush1.bf16.msra.mxu0 %v1616
  %2326 = vmatprep.subr.bf16.mxu0 %v1619
  %2327 = vmatpush1.bf16.msra.mxu0 %v1618
  %2328 = vmatprep.subr.bf16.mxu0 %v1621
  %2329 = vmatpush1.bf16.msra.mxu0 %v1620
  %2330 = vmatprep.mubr.bf16.mxu0 %v421
  %2331 = vmatmul.mubr.bf16.gmra.mrb[0].mxu0 %v420
  %v2332 = vpop.f32.mrb[0].mxu0
  %v2333 = vadd.f32 %v2292, %v2332
  %v2334 = vpop.f32.mrb[0].mxu0
  %v2335 = vadd.f32 %v2294, %v2334
  %v2336 = vpop.f32.mrb[0].mxu0
  %v2337 = vpop.f32.mrb[0].mxu0
  %2338 = vdwg.mxu0
  %2339 = vmatprep.subr.bf16.mxu0 %v1623
  %2340 = vmatpush1.bf16.msra.mxu0 %v1622
  %2341 = vmatprep.subr.bf16.mxu0 %v1625
  %2342 = vmatpush1.bf16.msra.mxu0 %v1624
  %2343 = vmatprep.subr.bf16.mxu0 %v1627
  %2344 = vmatpush1.bf16.msra.mxu0 %v1626
  %2345 = vmatprep.subr.bf16.mxu0 %v1629
  %2346 = vmatpush1.bf16.msra.mxu0 %v1628
  %2347 = vmatprep.subr.bf16.mxu0 %v1631
  %2348 = vmatpush1.bf16.msra.mxu0 %v1630
  %2349 = vmatprep.subr.bf16.mxu0 %v1633
  %2350 = vmatpush1.bf16.msra.mxu0 %v1632
  %2351 = vmatprep.subr.bf16.mxu0 %v1635
  %2352 = vmatpush1.bf16.msra.mxu0 %v1634
  %2353 = vmatprep.subr.bf16.mxu0 %v1637
  %2354 = vmatpush1.bf16.msra.mxu0 %v1636
  %2355 = vmatprep.subr.bf16.mxu0 %v1639
  %2356 = vmatpush1.bf16.msra.mxu0 %v1638
  %2357 = vmatprep.subr.bf16.mxu0 %v1641
  %2358 = vmatpush1.bf16.msra.mxu0 %v1640
  %2359 = vmatprep.subr.bf16.mxu0 %v1643
  %2360 = vmatpush1.bf16.msra.mxu0 %v1642
  %2361 = vmatprep.subr.bf16.mxu0 %v1645
  %2362 = vmatpush1.bf16.msra.mxu0 %v1644
  %2363 = vmatprep.subr.bf16.mxu0 %v1647
  %2364 = vmatpush1.bf16.msra.mxu0 %v1646
  %2365 = vmatprep.subr.bf16.mxu0 %v1649
  %2366 = vmatpush1.bf16.msra.mxu0 %v1648
  %2367 = vmatprep.subr.bf16.mxu0 %v1651
  %2368 = vmatpush1.bf16.msra.mxu0 %v1650
  %2369 = vmatprep.subr.bf16.mxu0 %v1653
  %2370 = vmatpush1.bf16.msra.mxu0 %v1652
  %2371 = vmatprep.mubr.bf16.mxu0 %v423
  %2372 = vmatmul.mubr.bf16.gmra.mrb[0].mxu0 %v422
  %v2373 = vpop.f32.mrb[0].mxu0
  %v2374 = vadd.f32 %v2333, %v2373
  %v2375 = vpop.f32.mrb[0].mxu0
  %v2376 = vadd.f32 %v2335, %v2375
  %v2377 = vpop.f32.mrb[0].mxu0
  %v2378 = vpop.f32.mrb[0].mxu0
  %2379 = vdwg.mxu0
  %2380 = vmatprep.subr.bf16.mxu0 %v1655
  %2381 = vmatpush1.bf16.msra.mxu0 %v1654
  %2382 = vmatprep.subr.bf16.mxu0 %v1657
  %2383 = vmatpush1.bf16.msra.mxu0 %v1656
  %2384 = vmatprep.subr.bf16.mxu0 %v1659
  %2385 = vmatpush1.bf16.msra.mxu0 %v1658
  %2386 = vmatprep.subr.bf16.mxu0 %v1661
  %2387 = vmatpush1.bf16.msra.mxu0 %v1660
  %2388 = vmatprep.subr.bf16.mxu0 %v1663
  %2389 = vmatpush1.bf16.msra.mxu0 %v1662
  %2390 = vmatprep.subr.bf16.mxu0 %v1665
  %2391 = vmatpush1.bf16.msra.mxu0 %v1664
  %2392 = vmatprep.subr.bf16.mxu0 %v1667
  %2393 = vmatpush1.bf16.msra.mxu0 %v1666
  %2394 = vmatprep.subr.bf16.mxu0 %v1669
  %2395 = vmatpush1.bf16.msra.mxu0 %v1668
  %2396 = vmatprep.subr.bf16.mxu0 %v1671
  %2397 = vmatpush1.bf16.msra.mxu0 %v1670
  %2398 = vmatprep.subr.bf16.mxu0 %v1673
  %2399 = vmatpush1.bf16.msra.mxu0 %v1672
  %2400 = vmatprep.subr.bf16.mxu0 %v1675
  %2401 = vmatpush1.bf16.msra.mxu0 %v1674
  %2402 = vmatprep.subr.bf16.mxu0 %v1677
  %2403 = vmatpush1.bf16.msra.mxu0 %v1676
  %2404 = vmatprep.subr.bf16.mxu0 %v1679
  %2405 = vmatpush1.bf16.msra.mxu0 %v1678
  %2406 = vmatprep.subr.bf16.mxu0 %v1681
  %2407 = vmatpush1.bf16.msra.mxu0 %v1680
  %2408 = vmatprep.subr.bf16.mxu0 %v1683
  %2409 = vmatpush1.bf16.msra.mxu0 %v1682
  %2410 = vmatprep.subr.bf16.mxu0 %v1685
  %2411 = vmatpush1.bf16.msra.mxu0 %v1684
  %2412 = vmatprep.mubr.bf16.mxu0 %v425
  %2413 = vmatmul.mubr.bf16.gmra.mrb[0].mxu0 %v424
  %v2414 = vpop.f32.mrb[0].mxu0
  %v2415 = vadd.f32 %v2374, %v2414
  %v2416 = vpop.f32.mrb[0].mxu0
  %v2417 = vadd.f32 %v2376, %v2416
  %v2418 = vpop.f32.mrb[0].mxu0
  %v2419 = vpop.f32.mrb[0].mxu0
  %2420 = vdwg.mxu0
  %2421 = vmatprep.subr.bf16.mxu0 %v1687
  %2422 = vmatpush1.bf16.msra.mxu0 %v1686
  %2423 = vmatprep.subr.bf16.mxu0 %v1689
  %2424 = vmatpush1.bf16.msra.mxu0 %v1688
  %2425 = vmatprep.subr.bf16.mxu0 %v1691
  %2426 = vmatpush1.bf16.msra.mxu0 %v1690
  %2427 = vmatprep.subr.bf16.mxu0 %v1693
  %2428 = vmatpush1.bf16.msra.mxu0 %v1692
  %2429 = vmatprep.subr.bf16.mxu0 %v1695
  %2430 = vmatpush1.bf16.msra.mxu0 %v1694
  %2431 = vmatprep.subr.bf16.mxu0 %v1697
  %2432 = vmatpush1.bf16.msra.mxu0 %v1696
  %2433 = vmatprep.subr.bf16.mxu0 %v1699
  %2434 = vmatpush1.bf16.msra.mxu0 %v1698
  %2435 = vmatprep.subr.bf16.mxu0 %v1701
  %2436 = vmatpush1.bf16.msra.mxu0 %v1700
  %2437 = vmatprep.subr.bf16.mxu0 %v1703
  %2438 = vmatpush1.bf16.msra.mxu0 %v1702
  %2439 = vmatprep.subr.bf16.mxu0 %v1705
  %2440 = vmatpush1.bf16.msra.mxu0 %v1704
  %2441 = vmatprep.subr.bf16.mxu0 %v1707
  %2442 = vmatpush1.bf16.msra.mxu0 %v1706
  %2443 = vmatprep.subr.bf16.mxu0 %v1709
  %2444 = vmatpush1.bf16.msra.mxu0 %v1708
  %2445 = vmatprep.subr.bf16.mxu0 %v1711
  %2446 = vmatpush1.bf16.msra.mxu0 %v1710
  %2447 = vmatprep.subr.bf16.mxu0 %v1713
  %2448 = vmatpush1.bf16.msra.mxu0 %v1712
  %2449 = vmatprep.subr.bf16.mxu0 %v1715
  %2450 = vmatpush1.bf16.msra.mxu0 %v1714
  %2451 = vmatprep.subr.bf16.mxu0 %v1717
  %2452 = vmatpush1.bf16.msra.mxu0 %v1716
  %2453 = vmatprep.mubr.bf16.mxu0 %v427
  %2454 = vmatmul.mubr.bf16.gmra.mrb[0].mxu0 %v426
  %v2455 = vpop.f32.mrb[0].mxu0
  %v2456 = vadd.f32 %v2415, %v2455
  %v2457 = vpop.f32.mrb[0].mxu0
  %v2458 = vadd.f32 %v2417, %v2457
  %v2459 = vpop.f32.mrb[0].mxu0
  %v2460 = vpop.f32.mrb[0].mxu0
  %2461 = vdwg.mxu0
  %2462 = vmatprep.subr.bf16.mxu0 %v1719
  %2463 = vmatpush1.bf16.msra.mxu0 %v1718
  %2464 = vmatprep.subr.bf16.mxu0 %v1721
  %2465 = vmatpush1.bf16.msra.mxu0 %v1720
  %2466 = vmatprep.subr.bf16.mxu0 %v1723
  %2467 = vmatpush1.bf16.msra.mxu0 %v1722
  %2468 = vmatprep.subr.bf16.mxu0 %v1725
  %2469 = vmatpush1.bf16.msra.mxu0 %v1724
  %2470 = vmatprep.subr.bf16.mxu0 %v1727
  %2471 = vmatpush1.bf16.msra.mxu0 %v1726
  %2472 = vmatprep.subr.bf16.mxu0 %v1729
  %2473 = vmatpush1.bf16.msra.mxu0 %v1728
  %2474 = vmatprep.subr.bf16.mxu0 %v1731
  %2475 = vmatpush1.bf16.msra.mxu0 %v1730
  %2476 = vmatprep.subr.bf16.mxu0 %v1733
  %2477 = vmatpush1.bf16.msra.mxu0 %v1732
  %2478 = vmatprep.subr.bf16.mxu0 %v1735
  %2479 = vmatpush1.bf16.msra.mxu0 %v1734
  %2480 = vmatprep.subr.bf16.mxu0 %v1737
  %2481 = vmatpush1.bf16.msra.mxu0 %v1736
  %2482 = vmatprep.subr.bf16.mxu0 %v1739
  %2483 = vmatpush1.bf16.msra.mxu0 %v1738
  %2484 = vmatprep.subr.bf16.mxu0 %v1741
  %2485 = vmatpush1.bf16.msra.mxu0 %v1740
  %2486 = vmatprep.subr.bf16.mxu0 %v1743
  %2487 = vmatpush1.bf16.msra.mxu0 %v1742
  %2488 = vmatprep.subr.bf16.mxu0 %v1745
  %2489 = vmatpush1.bf16.msra.mxu0 %v1744
  %2490 = vmatprep.subr.bf16.mxu0 %v1747
  %2491 = vmatpush1.bf16.msra.mxu0 %v1746
  %2492 = vmatprep.subr.bf16.mxu0 %v1749
  %2493 = vmatpush1.bf16.msra.mxu0 %v1748
  %2494 = vmatprep.mubr.bf16.mxu0 %v429
  %2495 = vmatmul.mubr.bf16.gmra.mrb[0].mxu0 %v428
  %v2496 = vpop.f32.mrb[0].mxu0
  %v2497 = vadd.f32 %v2456, %v2496
  %v2498 = vpop.f32.mrb[0].mxu0
  %v2499 = vadd.f32 %v2458, %v2498
  %v2500 = vpop.f32.mrb[0].mxu0
  %v2501 = vpop.f32.mrb[0].mxu0
  %2502 = vdwg.mxu0
  %2503 = vmatprep.subr.bf16.mxu0 %v1751
  %2504 = vmatpush1.bf16.msra.mxu0 %v1750
  %2505 = vmatprep.subr.bf16.mxu0 %v1753
  %2506 = vmatpush1.bf16.msra.mxu0 %v1752
  %2507 = vmatprep.subr.bf16.mxu0 %v1755
  %2508 = vmatpush1.bf16.msra.mxu0 %v1754
  %2509 = vmatprep.subr.bf16.mxu0 %v1757
  %2510 = vmatpush1.bf16.msra.mxu0 %v1756
  %2511 = vmatprep.subr.bf16.mxu0 %v1759
  %2512 = vmatpush1.bf16.msra.mxu0 %v1758
  %2513 = vmatprep.subr.bf16.mxu0 %v1761
  %2514 = vmatpush1.bf16.msra.mxu0 %v1760
  %2515 = vmatprep.subr.bf16.mxu0 %v1763
  %2516 = vmatpush1.bf16.msra.mxu0 %v1762
  %2517 = vmatprep.subr.bf16.mxu0 %v1765
  %2518 = vmatpush1.bf16.msra.mxu0 %v1764
  %2519 = vmatprep.subr.bf16.mxu0 %v1767
  %2520 = vmatpush1.bf16.msra.mxu0 %v1766
  %2521 = vmatprep.subr.bf16.mxu0 %v1769
  %2522 = vmatpush1.bf16.msra.mxu0 %v1768
  %2523 = vmatprep.subr.bf16.mxu0 %v1771
  %2524 = vmatpush1.bf16.msra.mxu0 %v1770
  %2525 = vmatprep.subr.bf16.mxu0 %v1773
  %2526 = vmatpush1.bf16.msra.mxu0 %v1772
  %2527 = vmatprep.subr.bf16.mxu0 %v1775
  %2528 = vmatpush1.bf16.msra.mxu0 %v1774
  %2529 = vmatprep.subr.bf16.mxu0 %v1777
  %2530 = vmatpush1.bf16.msra.mxu0 %v1776
  %2531 = vmatprep.subr.bf16.mxu0 %v1779
  %2532 = vmatpush1.bf16.msra.mxu0 %v1778
  %2533 = vmatprep.subr.bf16.mxu0 %v1781
  %2534 = vmatpush1.bf16.msra.mxu0 %v1780
  %2535 = vmatprep.mubr.bf16.mxu0 %v431
  %2536 = vmatmul.mubr.bf16.gmra.mrb[0].mxu0 %v430
  %v2537 = vpop.f32.mrb[0].mxu0
  %v2538 = vadd.f32 %v2497, %v2537
  %v2539 = vpop.f32.mrb[0].mxu0
  %v2540 = vadd.f32 %v2499, %v2539
  %v2541 = vpop.f32.mrb[0].mxu0
  %v2542 = vpop.f32.mrb[0].mxu0
  %2543 = vdwg.mxu0
  %2544 = vmatprep.subr.bf16.mxu0 %v1783
  %2545 = vmatpush1.bf16.msra.mxu0 %v1782
  %2546 = vmatprep.subr.bf16.mxu0 %v1785
  %2547 = vmatpush1.bf16.msra.mxu0 %v1784
  %2548 = vmatprep.subr.bf16.mxu0 %v1787
  %2549 = vmatpush1.bf16.msra.mxu0 %v1786
  %2550 = vmatprep.subr.bf16.mxu0 %v1789
  %2551 = vmatpush1.bf16.msra.mxu0 %v1788
  %2552 = vmatprep.subr.bf16.mxu0 %v1791
  %2553 = vmatpush1.bf16.msra.mxu0 %v1790
  %2554 = vmatprep.subr.bf16.mxu0 %v1793
  %2555 = vmatpush1.bf16.msra.mxu0 %v1792
  %2556 = vmatprep.subr.bf16.mxu0 %v1795
  %2557 = vmatpush1.bf16.msra.mxu0 %v1794
  %2558 = vmatprep.subr.bf16.mxu0 %v1797
  %2559 = vmatpush1.bf16.msra.mxu0 %v1796
  %2560 = vmatprep.subr.bf16.mxu0 0
  %2561 = vmatpush1.bf16.msra.mxu0 0
  %2562 = vmatprep.subr.bf16.mxu0 0
  %2563 = vmatpush1.bf16.msra.mxu0 0
  %2564 = vmatprep.subr.bf16.mxu0 0
  %2565 = vmatpush1.bf16.msra.mxu0 0
  %2566 = vmatprep.subr.bf16.mxu0 0
  %2567 = vmatpush1.bf16.msra.mxu0 0
  %2568 = vmatprep.subr.bf16.mxu0 0
  %2569 = vmatpush1.bf16.msra.mxu0 0
  %2570 = vmatprep.subr.bf16.mxu0 0
  %2571 = vmatpush1.bf16.msra.mxu0 0
  %2572 = vmatprep.subr.bf16.mxu0 0
  %2573 = vmatpush1.bf16.msra.mxu0 0
  %2574 = vmatprep.subr.bf16.mxu0 0
  %2575 = vmatpush1.bf16.msra.mxu0 0
  %2576 = vmatprep.mubr.bf16.mxu0 0
  %2577 = vmatmul.mubr.bf16.gmra.mrb[0].mxu0 %v432
  %v2578 = vpop.f32.mrb[0].mxu0
  %v2579 = vadd.f32 %v2538, %v2578
  %v2580 = vpop.f32.mrb[0].mxu0
  %v2581 = vadd.f32 %v2540, %v2580
  %v2582 = vpop.f32.mrb[0].mxu0
  %v2583 = vpop.f32.mrb[0].mxu0
  %2584 = vdwg.mxu0
  %v2585 = vmax.f32 %v2579, 0.0
  %v2586 = vmax.f32 %v2581, 0.0
  %v2587 = vpack.c.bf16 %v2585, %v2585
  %v2588 = vpack.c.bf16 %v2586, %v2586
  %v2589 = vld [vmem:[%s3] sm:$0xf]
  %v2590 = vld [vmem:[%s3 + $0x4] sm:$0xf]
  %v2591 = vld [vmem:[%s3 + $0x8] sm:$0xf]
  %v2592 = vld [vmem:[%s3 + $0xc] sm:$0xf]
  %v2593 = vld [vmem:[%s3 + $0x10] sm:$0xf]
  %v2594 = vld [vmem:[%s3 + $0x14] sm:$0xf]
  %v2595 = vld [vmem:[%s3 + $0x18] sm:$0xf]
  %v2596 = vld [vmem:[%s3 + $0x1c] sm:$0xf]
  %v2597 = vld [vmem:[%s3 + $0x20] sm:$0xf]
  %v2598 = vld [vmem:[%s3 + $0x24] sm:$0xf]
  %v2599 = vld [vmem:[%s3 + $0x28] sm:$0xf]
  %v2600 = vld [vmem:[%s3 + $0x2c] sm:$0xf]
  %v2601 = vld [vmem:[%s3 + $0x30] sm:$0xf]
  %v2602 = vld [vmem:[%s3 + $0x34] sm:$0xf]
  %v2603 = vld [vmem:[%s3 + $0x38] sm:$0xf]
  %v2604 = vld [vmem:[%s3 + $0x3c] sm:$0xf]
  %v2605 = vld [vmem:[%s3 + $0x40] sm:$0xf]
  %v2606 = vld [vmem:[%s3 + $0x44] sm:$0xf]
  %v2607 = vld [vmem:[%s3 + $0x48] sm:$0xf]
  %v2608 = vld [vmem:[%s3 + $0x4c] sm:$0xf]
  %v2609 = vld [vmem:[%s3 + $0x50] sm:$0xf]
  %v2610 = vld [vmem:[%s3 + $0x54] sm:$0xf]
  %v2611 = vld [vmem:[%s3 + $0x58] sm:$0xf]
  %v2612 = vld [vmem:[%s3 + $0x5c] sm:$0xf]
  %v2613 = vld [vmem:[%s3 + $0x60] sm:$0xf]
  %v2614 = vld [vmem:[%s3 + $0x64] sm:$0xf]
  %v2615 = vld [vmem:[%s3 + $0x68] sm:$0xf]
  %v2616 = vld [vmem:[%s3 + $0x6c] sm:$0xf]
  %v2617 = vld [vmem:[%s3 + $0x70] sm:$0xf]
  %v2618 = vld [vmem:[%s3 + $0x74] sm:$0xf]
  %v2619 = vld [vmem:[%s3 + $0x78] sm:$0xf]
  %v2620 = vld [vmem:[%s3 + $0x7c] sm:$0xf]
  %v2621 = vld [vmem:[%s4] sm:$0x1]
  %v2623 = vlaneseq
  %v2624 = vshrl.u32 %v2623, 7
  %v2625 = vsub.s32 0, %v2624
  %v2626 = vrot.slane %v2621, %v2625
  %v2660 = vunpack.c.l.b16 %v2589
  %v2661 = vunpack.c.l.b16 %v2590
  %v2662 = vunpack.c.l.b16 %v2591
  %v2663 = vunpack.c.l.b16 %v2592
  %v2664 = vunpack.c.l.b16 %v2593
  %v2665 = vunpack.c.l.b16 %v2594
  %v2666 = vunpack.c.l.b16 %v2595
  %v2667 = vunpack.c.l.b16 %v2596
  %v2668 = vunpack.c.l.b16 %v2597
  %v2669 = vunpack.c.l.b16 %v2598
  %v2670 = vunpack.c.l.b16 %v2599
  %v2671 = vunpack.c.l.b16 %v2600
  %v2672 = vunpack.c.l.b16 %v2601
  %v2673 = vunpack.c.l.b16 %v2602
  %v2674 = vunpack.c.l.b16 %v2603
  %v2675 = vunpack.c.l.b16 %v2604
  %v2676 = vunpack.c.l.b16 %v2605
  %v2677 = vunpack.c.l.b16 %v2606
  %v2678 = vunpack.c.l.b16 %v2607
  %v2679 = vunpack.c.l.b16 %v2608
  %v2680 = vunpack.c.l.b16 %v2609
  %v2681 = vunpack.c.l.b16 %v2610
  %v2682 = vunpack.c.l.b16 %v2611
  %v2683 = vunpack.c.l.b16 %v2612
  %v2684 = vunpack.c.l.b16 %v2613
  %v2685 = vunpack.c.l.b16 %v2614
  %v2686 = vunpack.c.l.b16 %v2615
  %v2687 = vunpack.c.l.b16 %v2616
  %v2688 = vunpack.c.l.b16 %v2617
  %v2689 = vunpack.c.l.b16 %v2618
  %v2690 = vunpack.c.l.b16 %v2619
  %v2691 = vunpack.c.l.b16 %v2620
  %v2692 = vpack.c.b16 %v2661, %v2660
  %v2693 = vpack.c.b16 %v2663, %v2662
  %v2694 = vpack.c.b16 %v2665, %v2664
  %v2695 = vpack.c.b16 %v2667, %v2666
  %v2696 = vpack.c.b16 %v2669, %v2668
  %v2697 = vpack.c.b16 %v2671, %v2670
  %v2698 = vpack.c.b16 %v2673, %v2672
  %v2699 = vpack.c.b16 %v2675, %v2674
  %v2700 = vpack.c.b16 %v2677, %v2676
  %v2701 = vpack.c.b16 %v2679, %v2678
  %v2702 = vpack.c.b16 %v2681, %v2680
  %v2703 = vpack.c.b16 %v2683, %v2682
  %v2704 = vpack.c.b16 %v2685, %v2684
  %v2705 = vpack.c.b16 %v2687, %v2686
  %v2706 = vpack.c.b16 %v2689, %v2688
  %v2707 = vpack.c.b16 %v2691, %v2690
  %2724 = vmatprep.subr.bf16.mxu0 0
  %2725 = vmatpush1.bf16.msra.mxu0 %v2692
  %2726 = vmatprep.subr.bf16.mxu0 0
  %2727 = vmatpush1.bf16.msra.mxu0 %v2693
  %2728 = vmatprep.subr.bf16.mxu0 0
  %2729 = vmatpush1.bf16.msra.mxu0 %v2694
  %2730 = vmatprep.subr.bf16.mxu0 0
  %2731 = vmatpush1.bf16.msra.mxu0 %v2695
  %2732 = vmatprep.subr.bf16.mxu0 0
  %2733 = vmatpush1.bf16.msra.mxu0 %v2696
  %2734 = vmatprep.subr.bf16.mxu0 0
  %2735 = vmatpush1.bf16.msra.mxu0 %v2697
  %2736 = vmatprep.subr.bf16.mxu0 0
  %2737 = vmatpush1.bf16.msra.mxu0 %v2698
  %2738 = vmatprep.subr.bf16.mxu0 0
  %2739 = vmatpush1.bf16.msra.mxu0 %v2699
  %2740 = vmatprep.subr.bf16.mxu0 0
  %2741 = vmatpush1.bf16.msra.mxu0 %v2700
  %2742 = vmatprep.subr.bf16.mxu0 0
  %2743 = vmatpush1.bf16.msra.mxu0 %v2701
  %2744 = vmatprep.subr.bf16.mxu0 0
  %2745 = vmatpush1.bf16.msra.mxu0 %v2702
  %2746 = vmatprep.subr.bf16.mxu0 0
  %2747 = vmatpush1.bf16.msra.mxu0 %v2703
  %2748 = vmatprep.subr.bf16.mxu0 0
  %2749 = vmatpush1.bf16.msra.mxu0 %v2704
  %2750 = vmatprep.subr.bf16.mxu0 0
  %2751 = vmatpush1.bf16.msra.mxu0 %v2705
  %2752 = vmatprep.subr.bf16.mxu0 0
  %2753 = vmatpush1.bf16.msra.mxu0 %v2706
  %2754 = vmatprep.subr.bf16.mxu0 0
  %2755 = vmatpush1.bf16.msra.mxu0 %v2707
  %2756 = vmatprep.mubr.bf16.mxu0 %v2588
  %2757 = vmatmul.mubr.bf16.gmra.mrb[0].mxu0 %v2587
  %v2758 = vpop.f32.mrb[0].mxu0
  %v2759 = vadd.f32 %v2626, %v2758
  %v2760 = vpop.f32.mrb[0].mxu0
  %v2761 = vpop.f32.mrb[0].mxu0
  %v2762 = vpop.f32.mrb[0].mxu0
  %2763 = vdwg.mxu0
  %2764 = vst [vmem:[%s5] sm:$0xff] %v2759
  // Predicated region
  $region22: #{dqn_forward.3} parent=0 // pred_check
    _
  $region23: #{dqn_forward.3} parent=0 // pred_check_branch
    %2766 = sbr.rel (0) target = $region25
  $region24: #{dqn_forward.3} parent=0 // pred_region
    _
  $region25: #{dqn_forward.3} parent=0 // pred_fallthru
    _
  // Predicated region
  $region26: #{dqn_forward.3} parent=0 // pred_check
    _
  $region27: #{dqn_forward.3} parent=0 // pred_check_branch
    %2768 = sbr.rel (0) target = $region29
  $region28: #{dqn_forward.3} parent=0 // pred_region
    _
  $region29: #{dqn_forward.3} parent=0 // pred_fallthru
    _

// kernel: dqn_forward.2
$region0: #{dqn_forward.2}
  #allocation0 [shape = 'u32[]', space=smem, size = 0x4, offset = 0x4, fixed_abs, tag = 'smem constant byte address 0x4 - core index']
  #allocation1 [shape = 'u32[144,128]{1,0:T(1,128)}', space=vmem, size = 0x12000, scoped, tag = 'internal scratch']
  #allocation2 [shape = 'bf16[100,256]{1,0:T(8,128)(2,1)}', space=vmem, size = 0xd000, scoped, tag = 'scratch operand']
  #allocation3 [shape = 'bf16[100,64]{1,0:T(8,128)(2,1)}', space=vmem, size = 0x6800, scoped, tag = 'scratch operand']
  #allocation4 [shape = 'bf16[81,256]{1,0:T(8,128)(2,1)}', space=vmem, size = 0xb000, scoped, tag = 'scratch operand']
  %s0 = inlined_call_operand.vmem [shape: bf16[2,44,11,64], index: 0, kind: input, shape index: {}]
  %s1 = inlined_call_operand.vmem [shape: bf16[256,16], index: 1, kind: input, shape index: {}]
  %s2 = inlined_call_operand.vmem [shape: f32[1,16], index: 2, kind: input, shape index: {}]
  %s3 = inlined_call_operand.vmem [shape: bf16[256,32], index: 3, kind: input, shape index: {}]
  %s4 = inlined_call_operand.vmem [shape: f32[1,32], index: 4, kind: input, shape index: {}]
  %s5 = inlined_call_operand.vmem [shape: bf16[2,81,32], index: 5, kind: output, shape index: {}]
  %s6 = sld [smem:[#allocation0]]
  $region53: #{dqn_forward.2} parent=0
    _
  %s8 = ssub.s32 1, %s6
  %s9 = scalar_select 0, %s8, %s6
  loop: start=0, step=1, limit=4
  $region2: #{dqn_forward.2} parent=0 // loop_pre_header
    _
  $region3: #{dqn_forward.2} parent=0 // loop_header
    %s11 = sphi 0, %s15
    %p12 = scmp.ge.s32.totalorder %s11, 4
    %s21 = sphi 0, %s23
    %s24 = sphi 0, %s21
    %s25 = sphi 0, %s24
    %s41 = sphi 0, %s25
    %s45 = sphi 0, %s45
    %s47 = sphi 0, %s45
    %s48 = sphi 0, %s47
    %s62 = sphi 0, %s48
    %s66 = sphi 0, %s66
    %s68 = sphi 0, %s66
    %s69 = sphi 0, %s68
    %s83 = sphi 0, %s69
    %s87 = sphi 0, %s87
    %s89 = sphi 0, %s87
    %s90 = sphi 0, %s89
    %s104 = sphi 0, %s90
    %s108 = sphi 0, %s108
    %s110 = sphi 0, %s108
    %s111 = sphi 0, %s110
    %s125 = sphi 0, %s111
    %s131 = sphi 0, %s133
    %s134 = sphi 0, %s131
    %s135 = sphi 0, %s134
    %s151 = sphi 0, %s135
  $region4: #{dqn_forward.2} parent=0 // loop_header_branch
    %14 = sbr.rel (%p12) target = $region8
  $region5: #{dqn_forward.2} parent=0 // loop_body
    %s16 = ssub.s32 %s11, 1
    %s17 = ssub.s32 %s11, 2
    %s18 = sadd.s32 %s11, 1
    %s19 = ssub.s32 %s11, %s18
    %p20 = scmp.eq.s32.totalorder %s19, 0
    %s22 = sadd.s32 %s21, 1
    %s23 = scalar_select %p20, %s21, %s22
    %p26 = pneg %p20
    %p27 = scmp.eq.s32.totalorder %s11, 1
    %p28 = por %p26, %p27
    %p29 = scmp.ne.s32.totalorder %s21, %s24
    %p30 = scmp.eq.s32.totalorder %s11, 0
    %p31 = por %p29, %p30
    %p32 = scmp.ne.s32.totalorder %s21, %s24
    %p33 = scmp.eq.s32.totalorder %s16, 1
    %p34 = por %p32, %p33
    %p35 = scmp.ne.s32.totalorder %s24, %s25
    %p36 = scmp.eq.s32.totalorder %s16, 0
    %p37 = por %p35, %p36
    %p38 = scmp.ne.s32.totalorder %s24, %s25
    %p39 = scmp.eq.s32.totalorder %s17, 1
    %p40 = por %p38, %p39
    %p42 = scmp.ne.s32.totalorder %s25, %s41
    %p43 = scmp.eq.s32.totalorder %s17, 0
    %p44 = por %p42, %p43
    %s46 = sadd.s32 %s45, 1
    %p49 = scmp.eq.s32.totalorder %s11, 1
    %p50 = scmp.ne.s32.totalorder %s45, %s47
    %p51 = scmp.eq.s32.totalorder %s11, 0
    %p52 = por %p50, %p51
    %p53 = scmp.ne.s32.totalorder %s45, %s47
    %p54 = scmp.eq.s32.totalorder %s16, 1
    %p55 = por %p53, %p54
    %p56 = scmp.ne.s32.totalorder %s47, %s48
    %p57 = scmp.eq.s32.totalorder %s16, 0
    %p58 = por %p56, %p57
    %p59 = scmp.ne.s32.totalorder %s47, %s48
    %p60 = scmp.eq.s32.totalorder %s17, 1
    %p61 = por %p59, %p60
    %p63 = scmp.ne.s32.totalorder %s48, %s62
    %p64 = scmp.eq.s32.totalorder %s17, 0
    %p65 = por %p63, %p64
    %s67 = sadd.s32 %s66, 1
    %p70 = scmp.eq.s32.totalorder %s11, 1
    %p71 = scmp.ne.s32.totalorder %s66, %s68
    %p72 = scmp.eq.s32.totalorder %s11, 0
    %p73 = por %p71, %p72
    %p74 = scmp.ne.s32.totalorder %s66, %s68
    %p75 = scmp.eq.s32.totalorder %s16, 1
    %p76 = por %p74, %p75
    %p77 = scmp.ne.s32.totalorder %s68, %s69
    %p78 = scmp.eq.s32.totalorder %s16, 0
    %p79 = por %p77, %p78
    %p80 = scmp.ne.s32.totalorder %s68, %s69
    %p81 = scmp.eq.s32.totalorder %s17, 1
    %p82 = por %p80, %p81
    %p84 = scmp.ne.s32.totalorder %s69, %s83
    %p85 = scmp.eq.s32.totalorder %s17, 0
    %p86 = por %p84, %p85
    %s88 = sadd.s32 %s87, 1
    %p91 = scmp.eq.s32.totalorder %s11, 1
    %p92 = scmp.ne.s32.totalorder %s87, %s89
    %p93 = scmp.eq.s32.totalorder %s11, 0
    %p94 = por %p92, %p93
    %p95 = scmp.ne.s32.totalorder %s87, %s89
    %p96 = scmp.eq.s32.totalorder %s16, 1
    %p97 = por %p95, %p96
    %p98 = scmp.ne.s32.totalorder %s89, %s90
    %p99 = scmp.eq.s32.totalorder %s16, 0
    %p100 = por %p98, %p99
    %p101 = scmp.ne.s32.totalorder %s89, %s90
    %p102 = scmp.eq.s32.totalorder %s17, 1
    %p103 = por %p101, %p102
    %p105 = scmp.ne.s32.totalorder %s90, %s104
    %p106 = scmp.eq.s32.totalorder %s17, 0
    %p107 = por %p105, %p106
    %s109 = sadd.s32 %s108, 1
    %p112 = scmp.eq.s32.totalorder %s11, 1
    %p113 = scmp.ne.s32.totalorder %s108, %s110
    %p114 = scmp.eq.s32.totalorder %s11, 0
    %p115 = por %p113, %p114
    %p116 = scmp.ne.s32.totalorder %s108, %s110
    %p117 = scmp.eq.s32.totalorder %s16, 1
    %p118 = por %p116, %p117
    %p119 = scmp.ne.s32.totalorder %s110, %s111
    %p120 = scmp.eq.s32.totalorder %s16, 0
    %p121 = por %p119, %p120
    %p122 = scmp.ne.s32.totalorder %s110, %s111
    %p123 = scmp.eq.s32.totalorder %s17, 1
    %p124 = por %p122, %p123
    %p126 = scmp.ne.s32.totalorder %s111, %s125
    %p127 = scmp.eq.s32.totalorder %s17, 0
    %p128 = por %p126, %p127
    %s129 = ssub.s32 %s11, %s18
    %p130 = scmp.eq.s32.totalorder %s129, 0
    %s132 = sadd.s32 %s131, 1
    %s133 = scalar_select %p130, %s131, %s132
    %p136 = pneg %p130
    %p137 = scmp.eq.s32.totalorder %s11, 1
    %p138 = por %p136, %p137
    %p139 = scmp.ne.s32.totalorder %s131, %s134
    %p140 = scmp.eq.s32.totalorder %s11, 0
    %p141 = por %p139, %p140
    %p142 = scmp.ne.s32.totalorder %s131, %s134
    %p143 = scmp.eq.s32.totalorder %s16, 1
    %p144 = por %p142, %p143
    %p145 = scmp.ne.s32.totalorder %s134, %s135
    %p146 = scmp.eq.s32.totalorder %s16, 0
    %p147 = por %p145, %p146
    %p148 = scmp.ne.s32.totalorder %s134, %s135
    %p149 = scmp.eq.s32.totalorder %s17, 1
    %p150 = por %p148, %p149
    %p152 = scmp.ne.s32.totalorder %s135, %s151
    %p153 = scmp.eq.s32.totalorder %s17, 0
    %p154 = por %p152, %p153
    %p155 = scmp.le.s32.totalorder 1, %s11
    %p156 = scmp.lt.s32.totalorder %s11, 3
    %p157 = pnand %p155, %p156
    %p158 = pneg %p157
    // Predicated region
    $region9: #{dqn_forward.2} parent=5 // pred_check
      _
    $region10: #{dqn_forward.2} parent=5 // pred_check_branch
      %160 = sbr.rel (%p157) target = $region12
    $region11: #{dqn_forward.2} parent=5 // pred_region
      %s161 = ssub.s32 %s11, 1
      // Predicated region
      $region13: #{dqn_forward.2} parent=11 // pred_check
        %p162 = pneg %p58
      $region14: #{dqn_forward.2} parent=11 // pred_check_branch
        %164 = sbr.rel (%p162) target = $region16
      $region15: #{dqn_forward.2} parent=11 // pred_region
        _
      $region16: #{dqn_forward.2} parent=11 // pred_fallthru
        _
      // Predicated region
      $region17: #{dqn_forward.2} parent=11 // pred_check
        %p165 = pneg %p79
      $region18: #{dqn_forward.2} parent=11 // pred_check_branch
        %167 = sbr.rel (%p165) target = $region20
      $region19: #{dqn_forward.2} parent=11 // pred_region
        _
      $region20: #{dqn_forward.2} parent=11 // pred_fallthru
        _
      // Predicated region
      $region21: #{dqn_forward.2} parent=11 // pred_check
        %p168 = pneg %p100
      $region22: #{dqn_forward.2} parent=11 // pred_check_branch
        %170 = sbr.rel (%p168) target = $region24
      $region23: #{dqn_forward.2} parent=11 // pred_region
        _
      $region24: #{dqn_forward.2} parent=11 // pred_fallthru
        _
      // Predicated region
      $region25: #{dqn_forward.2} parent=11 // pred_check
        %p171 = pneg %p121
      $region26: #{dqn_forward.2} parent=11 // pred_check_branch
        %173 = sbr.rel (%p171) target = $region28
      $region27: #{dqn_forward.2} parent=11 // pred_region
        _
      $region28: #{dqn_forward.2} parent=11 // pred_fallthru
        _
    $region12: #{dqn_forward.2} parent=5 // pred_fallthru
      _
    %p174 = scmp.lt.s32.totalorder %s11, 2
    // Predicated region
    $region29: #{dqn_forward.2} parent=5 // pred_check
      %p175 = pneg %p174
    $region30: #{dqn_forward.2} parent=5 // pred_check_branch
      %177 = sbr.rel (%p175) target = $region32
    $region31: #{dqn_forward.2} parent=5 // pred_region
      // Predicated region
      $region33: #{dqn_forward.2} parent=31 // pred_check
        %p178 = pneg %p31
      $region34: #{dqn_forward.2} parent=31 // pred_check_branch
        %180 = sbr.rel (%p178) target = $region36
      $region35: #{dqn_forward.2} parent=31 // pred_region
        %p181 = scmp.lt.s32.totalorder %s11, 1
        %s182 = scalar_select %p181, %s11, 1
        %s183 = smul.addr %s182, 88
        %s184 = smul.addr %s183, 4
        %s185 = scalar_lea.vmem %s0, %s184
      $region36: #{dqn_forward.2} parent=31 // pred_fallthru
        _
    $region32: #{dqn_forward.2} parent=5 // pred_fallthru
      _
    %p186 = scmp.le.s32.totalorder 1, %s11
    %p187 = scmp.lt.s32.totalorder %s11, 3
    %p188 = pnand %p186, %p187
    %p189 = pneg %p188
    // Predicated region
    $region37: #{dqn_forward.2} parent=5 // pred_check
      _
    $region38: #{dqn_forward.2} parent=5 // pred_check_branch
      %191 = sbr.rel (%p188) target = $region40
    $region39: #{dqn_forward.2} parent=5 // pred_region
      %s192 = ssub.s32 %s11, 1
      %p193 = scmp.lt.s32.totalorder %s16, 1
      %s194 = scalar_select %p193, %s16, 1
      %s195 = smul.addr %s194, 88
      %s196 = smul.addr %s195, 4
      %s197 = scalar_lea.vmem %s0, %s196
      %p198 = pneg %p37
      %p199 = pneg %p34
      %p200 = pneg %p58
      %p201 = pneg %p55
      %p202 = pneg %p79
      %p203 = pneg %p76
      %p204 = pneg %p100
      %p205 = pneg %p97
      %p206 = pneg %p121
      %p207 = pneg %p118
      %p208 = pneg %p147
      %p209 = pneg %p144
      %p210 = scmp.lt.s32.totalorder %s16, 1
      %s211 = scalar_select %p210, %s16, 1
      %s212 = smul.addr %s211, 11
      %s213 = smul.addr %s212, 4
      %s214 = scalar_lea.vmem %s5, %s213
      %p215 = scmp.lt.s32.totalorder %s16, 1
      %s216 = scalar_select %p215, %s16, 1
      %s217 = smul.addr %s216, 88
      %s218 = smul.addr %s217, 4
      %s219 = scalar_lea.vmem %s0, %s218
      %p220 = scmp.lt.s32.totalorder %s16, 1
      %s221 = scalar_select %p220, %s16, 1
      %s222 = smul.addr %s221, 11
      %s223 = smul.addr %s222, 4
      %s224 = scalar_lea.vmem %s5, %s223
      %v226 = vld [vmem:[%s219] sm:$0xf]
      %v227 = vld [vmem:[%s219 + $0x4] sm:$0x1]
      %s228 = scalar_lea.vmem %s219, 88
      %v229 = vld [vmem:[%s228] sm:$0xf]
      %v230 = vld [vmem:[%s228 + $0x4] sm:$0x1]
      %s231 = scalar_lea.vmem %s219, 176
      %v232 = vld [vmem:[%s231] sm:$0xf]
      %v233 = vld [vmem:[%s231 + $0x4] sm:$0x1]
      %s234 = scalar_lea.vmem %s219, 264
      %v235 = vld [vmem:[%s234] sm:$0xf]
      %v236 = vld [vmem:[%s234 + $0x4] sm:$0x1]
      %v239 = vunpack.c.l.b16 %v226
      %v240 = vunpack.c.l.b16 %v227
      %v241 = vpack.c.b16 %v240, %v239
      %v244 = vunpack.c.l.b16 %v229
      %v245 = vunpack.c.l.b16 %v230
      %v246 = vpack.c.b16 %v245, %v244
      %247 = vrot.lane.b32.xlu0 %v246, 64
      %v248 = vpop.permute.xlu0 %247
      %v251 = vunpack.c.l.b16 %v232
      %v252 = vunpack.c.l.b16 %v233
      %v253 = vpack.c.b16 %v252, %v251
      %v256 = vunpack.c.l.b16 %v235
      %v257 = vunpack.c.l.b16 %v236
      %v258 = vpack.c.b16 %v257, %v256
      %259 = vrot.lane.b32.xlu0 %v258, 64
      %v260 = vpop.permute.xlu0 %259
      %vm261 = vcmask 523264
      %v264 = vsel %vm261, %v241, %v248
      %v267 = vsel %vm261, %v253, %v260
      %v270 = vunpack.c.l.b16 %v264
      %v271 = vunpack.c.l.b16 %v267
      %v272 = vunpack.c.h.b16 %v264
      %v273 = vunpack.c.h.b16 %v267
      %v274 = vpack.c.b16 %v271, %v270
      %v275 = vpack.c.b16 %v273, %v272
      %278 = vst [vmem:[#allocation2] sm:$0xff] %v274
      %279 = vst [vmem:[#allocation2 + $0x8] sm:$0x11] %v275
      %s280 = scalar_lea.vmem %s219, 8
      %v281 = vld [vmem:[%s280] sm:$0xf]
      %v282 = vld [vmem:[%s280 + $0x4] sm:$0x1]
      %s283 = scalar_lea.vmem %s219, 96
      %v284 = vld [vmem:[%s283] sm:$0xf]
      %v285 = vld [vmem:[%s283 + $0x4] sm:$0x1]
      %s286 = scalar_lea.vmem %s219, 184
      %v287 = vld [vmem:[%s286] sm:$0xf]
      %v288 = vld [vmem:[%s286 + $0x4] sm:$0x1]
      %s289 = scalar_lea.vmem %s219, 272
      %v290 = vld [vmem:[%s289] sm:$0xf]
      %v291 = vld [vmem:[%s289 + $0x4] sm:$0x1]
      %v294 = vunpack.c.l.b16 %v281
      %v295 = vunpack.c.l.b16 %v282
      %v296 = vpack.c.b16 %v295, %v294
      %v299 = vunpack.c.l.b16 %v284
      %v300 = vunpack.c.l.b16 %v285
      %v301 = vpack.c.b16 %v300, %v299
      %302 = vrot.lane.b32.xlu0 %v301, 64
      %v303 = vpop.permute.xlu0 %302
      %v306 = vunpack.c.l.b16 %v287
      %v307 = vunpack.c.l.b16 %v288
      %v308 = vpack.c.b16 %v307, %v306
      %v311 = vunpack.c.l.b16 %v290
      %v312 = vunpack.c.l.b16 %v291
      %v313 = vpack.c.b16 %v312, %v311
      %314 = vrot.lane.b32.xlu0 %v313, 64
      %v315 = vpop.permute.xlu0 %314
      %v318 = vsel %vm261, %v296, %v303
      %v321 = vsel %vm261, %v308, %v315
      %v324 = vunpack.c.l.b16 %v318
      %v325 = vunpack.c.l.b16 %v321
      %v326 = vunpack.c.h.b16 %v318
      %v327 = vunpack.c.h.b16 %v321
      %v328 = vpack.c.b16 %v325, %v324
      %v329 = vpack.c.b16 %v327, %v326
      %vm330 = vcmask 1040384
      %vm331 = vcmask 1044484
      %vm332 = vmor %vm330, %vm331
      %v333 = vrot.slane %v328, 7
      %v334 = vrot.slane %v333, 4
      %v335 = vrot.slane %v329, 7
      %v336 = vsel %vm332, %v334, %v335
      %339 = vst [vmem:[#allocation2 + $0x8] sm:$0xee] %v333
      %340 = vst [vmem:[#allocation2 + $0x10] sm:$0x33] %v336
      %s341 = scalar_lea.vmem %s219, 16
      %v342 = vld [vmem:[%s341] sm:$0xf]
      %v343 = vld [vmem:[%s341 + $0x4] sm:$0x1]
      %s344 = scalar_lea.vmem %s219, 104
      %v345 = vld [vmem:[%s344] sm:$0xf]
      %v346 = vld [vmem:[%s344 + $0x4] sm:$0x1]
      %s347 = scalar_lea.vmem %s219, 192
      %v348 = vld [vmem:[%s347] sm:$0xf]
      %v349 = vld [vmem:[%s347 + $0x4] sm:$0x1]
      %s350 = scalar_lea.vmem %s219, 280
      %v351 = vld [vmem:[%s350] sm:$0xf]
      %v352 = vld [vmem:[%s350 + $0x4] sm:$0x1]
      %v355 = vunpack.c.l.b16 %v342
      %v356 = vunpack.c.l.b16 %v343
      %v357 = vpack.c.b16 %v356, %v355
      %v360 = vunpack.c.l.b16 %v345
      %v361 = vunpack.c.l.b16 %v346
      %v362 = vpack.c.b16 %v361, %v360
      %363 = vrot.lane.b32.xlu0 %v362, 64
      %v364 = vpop.permute.xlu0 %363
      %v367 = vunpack.c.l.b16 %v348
      %v368 = vunpack.c.l.b16 %v349
      %v369 = vpack.c.b16 %v368, %v367
      %v372 = vunpack.c.l.b16 %v351
      %v373 = vunpack.c.l.b16 %v352
      %v374 = vpack.c.b16 %v373, %v372
      %375 = vrot.lane.b32.xlu0 %v374, 64
      %v376 = vpop.permute.xlu0 %375
      %v379 = vsel %vm261, %v357, %v364
      %v382 = vsel %vm261, %v369, %v376
      %v385 = vunpack.c.l.b16 %v379
      %v386 = vunpack.c.l.b16 %v382
      %v387 = vunpack.c.h.b16 %v379
      %v388 = vunpack.c.h.b16 %v382
      %v389 = vpack.c.b16 %v386, %v385
      %v390 = vpack.c.b16 %v388, %v387
      %vm391 = vcmask 1041408
      %vm392 = vcmask 1045508
      %vm393 = vmor %vm391, %vm392
      %v394 = vrot.slane %v389, 6
      %v395 = vrot.slane %v394, 4
      %v396 = vrot.slane %v390, 6
      %v397 = vsel %vm393, %v395, %v396
      %400 = vst [vmem:[#allocation2 + $0x10] sm:$0xcc] %v394
      %401 = vst [vmem:[#allocation2 + $0x18] sm:$0x77] %v397
      %s402 = scalar_lea.vmem %s219, 24
      %v403 = vld [vmem:[%s402] sm:$0xf]
      %v404 = vld [vmem:[%s402 + $0x4] sm:$0x1]
      %s405 = scalar_lea.vmem %s219, 112
      %v406 = vld [vmem:[%s405] sm:$0xf]
      %v407 = vld [vmem:[%s405 + $0x4] sm:$0x1]
      %s408 = scalar_lea.vmem %s219, 200
      %v409 = vld [vmem:[%s408] sm:$0xf]
      %v410 = vld [vmem:[%s408 + $0x4] sm:$0x1]
      %s411 = scalar_lea.vmem %s219, 288
      %v412 = vld [vmem:[%s411] sm:$0xf]
      %v413 = vld [vmem:[%s411 + $0x4] sm:$0x1]
      %v416 = vunpack.c.l.b16 %v403
      %v417 = vunpack.c.l.b16 %v404
      %v418 = vpack.c.b16 %v417, %v416
      %v421 = vunpack.c.l.b16 %v406
      %v422 = vunpack.c.l.b16 %v407
      %v423 = vpack.c.b16 %v422, %v421
      %424 = vrot.lane.b32.xlu0 %v423, 64
      %v425 = vpop.permute.xlu0 %424
      %v428 = vunpack.c.l.b16 %v409
      %v429 = vunpack.c.l.b16 %v410
      %v430 = vpack.c.b16 %v429, %v428
      %v433 = vunpack.c.l.b16 %v412
      %v434 = vunpack.c.l.b16 %v413
      %v435 = vpack.c.b16 %v434, %v433
      %436 = vrot.lane.b32.xlu0 %v435, 64
      %v437 = vpop.permute.xlu0 %436
      %v440 = vsel %vm261, %v418, %v425
      %v443 = vsel %vm261, %v430, %v437
      %v446 = vunpack.c.l.b16 %v440
      %v447 = vunpack.c.l.b16 %v443
      %v448 = vunpack.c.h.b16 %v440
      %v449 = vunpack.c.h.b16 %v443
      %v450 = vpack.c.b16 %v447, %v446
      %v451 = vpack.c.b16 %v449, %v448
      %vm452 = vcmask 1042432
      %vm453 = vcmask 1046532
      %vm454 = vmor %vm452, %vm453
      %v455 = vrot.slane %v450, 5
      %v456 = vrot.slane %v455, 4
      %v457 = vrot.slane %v451, 5
      %v458 = vsel %vm454, %v456, %v457
      %461 = vst [vmem:[#allocation2 + $0x18] sm:$0x88] %v455
      %462 = vst [vmem:[#allocation2 + $0x20] sm:$0xff] %v458
      %s463 = scalar_lea.vmem %s219, 32
      %v464 = vld [vmem:[%s463] sm:$0xf]
      %v465 = vld [vmem:[%s463 + $0x4] sm:$0x1]
      %s466 = scalar_lea.vmem %s219, 120
      %v467 = vld [vmem:[%s466] sm:$0xf]
      %v468 = vld [vmem:[%s466 + $0x4] sm:$0x1]
      %s469 = scalar_lea.vmem %s219, 208
      %v470 = vld [vmem:[%s469] sm:$0xf]
      %v471 = vld [vmem:[%s469 + $0x4] sm:$0x1]
      %s472 = scalar_lea.vmem %s219, 296
      %v473 = vld [vmem:[%s472] sm:$0xf]
      %v474 = vld [vmem:[%s472 + $0x4] sm:$0x1]
      %v477 = vunpack.c.l.b16 %v464
      %v478 = vunpack.c.l.b16 %v465
      %v479 = vpack.c.b16 %v478, %v477
      %v482 = vunpack.c.l.b16 %v467
      %v483 = vunpack.c.l.b16 %v468
      %v484 = vpack.c.b16 %v483, %v482
      %485 = vrot.lane.b32.xlu0 %v484, 64
      %v486 = vpop.permute.xlu0 %485
      %v489 = vunpack.c.l.b16 %v470
      %v490 = vunpack.c.l.b16 %v471
      %v491 = vpack.c.b16 %v490, %v489
      %v494 = vunpack.c.l.b16 %v473
      %v495 = vunpack.c.l.b16 %v474
      %v496 = vpack.c.b16 %v495, %v494
      %497 = vrot.lane.b32.xlu0 %v496, 64
      %v498 = vpop.permute.xlu0 %497
      %v501 = vsel %vm261, %v479, %v486
      %v504 = vsel %vm261, %v491, %v498
      %v507 = vunpack.c.l.b16 %v501
      %v508 = vunpack.c.l.b16 %v504
      %v509 = vunpack.c.h.b16 %v501
      %v510 = vunpack.c.h.b16 %v504
      %v511 = vpack.c.b16 %v508, %v507
      %v512 = vpack.c.b16 %v510, %v509
      %515 = vst [vmem:[#allocation2 + $0x28] sm:$0xff] %v511
      %516 = vst [vmem:[#allocation2 + $0x30] sm:$0x11] %v512
      %s517 = scalar_lea.vmem %s219, 40
      %v518 = vld [vmem:[%s517] sm:$0xf]
      %v519 = vld [vmem:[%s517 + $0x4] sm:$0x1]
      %s520 = scalar_lea.vmem %s219, 128
      %v521 = vld [vmem:[%s520] sm:$0xf]
      %v522 = vld [vmem:[%s520 + $0x4] sm:$0x1]
      %s523 = scalar_lea.vmem %s219, 216
      %v524 = vld [vmem:[%s523] sm:$0xf]
      %v525 = vld [vmem:[%s523 + $0x4] sm:$0x1]
      %s526 = scalar_lea.vmem %s219, 304
      %v527 = vld [vmem:[%s526] sm:$0xf]
      %v528 = vld [vmem:[%s526 + $0x4] sm:$0x1]
      %v531 = vunpack.c.l.b16 %v518
      %v532 = vunpack.c.l.b16 %v519
      %v533 = vpack.c.b16 %v532, %v531
      %v536 = vunpack.c.l.b16 %v521
      %v537 = vunpack.c.l.b16 %v522
      %v538 = vpack.c.b16 %v537, %v536
      %539 = vrot.lane.b32.xlu0 %v538, 64
      %v540 = vpop.permute.xlu0 %539
      %v543 = vunpack.c.l.b16 %v524
      %v544 = vunpack.c.l.b16 %v525
      %v545 = vpack.c.b16 %v544, %v543
      %v548 = vunpack.c.l.b16 %v527
      %v549 = vunpack.c.l.b16 %v528
      %v550 = vpack.c.b16 %v549, %v548
      %551 = vrot.lane.b32.xlu0 %v550, 64
      %v552 = vpop.permute.xlu0 %551
      %v555 = vsel %vm261, %v533, %v540
      %v558 = vsel %vm261, %v545, %v552
      %v561 = vunpack.c.l.b16 %v555
      %v562 = vunpack.c.l.b16 %v558
      %v563 = vunpack.c.h.b16 %v555
      %v564 = vunpack.c.h.b16 %v558
      %v565 = vpack.c.b16 %v562, %v561
      %v566 = vpack.c.b16 %v564, %v563
      %v567 = vrot.slane %v565, 7
      %v568 = vrot.slane %v567, 4
      %v569 = vrot.slane %v566, 7
      %v570 = vsel %vm332, %v568, %v569
      %573 = vst [vmem:[#allocation2 + $0x30] sm:$0xee] %v567
      %574 = vst [vmem:[#allocation2 + $0x38] sm:$0x33] %v570
      %s575 = scalar_lea.vmem %s219, 48
      %v576 = vld [vmem:[%s575] sm:$0xf]
      %v577 = vld [vmem:[%s575 + $0x4] sm:$0x1]
      %s578 = scalar_lea.vmem %s219, 136
      %v579 = vld [vmem:[%s578] sm:$0xf]
      %v580 = vld [vmem:[%s578 + $0x4] sm:$0x1]
      %s581 = scalar_lea.vmem %s219, 224
      %v582 = vld [vmem:[%s581] sm:$0xf]
      %v583 = vld [vmem:[%s581 + $0x4] sm:$0x1]
      %s584 = scalar_lea.vmem %s219, 312
      %v585 = vld [vmem:[%s584] sm:$0xf]
      %v586 = vld [vmem:[%s584 + $0x4] sm:$0x1]
      %v589 = vunpack.c.l.b16 %v576
      %v590 = vunpack.c.l.b16 %v577
      %v591 = vpack.c.b16 %v590, %v589
      %v594 = vunpack.c.l.b16 %v579
      %v595 = vunpack.c.l.b16 %v580
      %v596 = vpack.c.b16 %v595, %v594
      %597 = vrot.lane.b32.xlu0 %v596, 64
      %v598 = vpop.permute.xlu0 %597
      %v601 = vunpack.c.l.b16 %v582
      %v602 = vunpack.c.l.b16 %v583
      %v603 = vpack.c.b16 %v602, %v601
      %v606 = vunpack.c.l.b16 %v585
      %v607 = vunpack.c.l.b16 %v586
      %v608 = vpack.c.b16 %v607, %v606
      %609 = vrot.lane.b32.xlu0 %v608, 64
      %v610 = vpop.permute.xlu0 %609
      %v613 = vsel %vm261, %v591, %v598
      %v616 = vsel %vm261, %v603, %v610
      %v619 = vunpack.c.l.b16 %v613
      %v620 = vunpack.c.l.b16 %v616
      %v621 = vunpack.c.h.b16 %v613
      %v622 = vunpack.c.h.b16 %v616
      %v623 = vpack.c.b16 %v620, %v619
      %v624 = vpack.c.b16 %v622, %v621
      %v625 = vrot.slane %v623, 6
      %v626 = vrot.slane %v625, 4
      %v627 = vrot.slane %v624, 6
      %v628 = vsel %vm393, %v626, %v627
      %631 = vst [vmem:[#allocation2 + $0x38] sm:$0xcc] %v625
      %632 = vst [vmem:[#allocation2 + $0x40] sm:$0x77] %v628
      %s633 = scalar_lea.vmem %s219, 56
      %v634 = vld [vmem:[%s633] sm:$0xf]
      %v635 = vld [vmem:[%s633 + $0x4] sm:$0x1]
      %s636 = scalar_lea.vmem %s219, 144
      %v637 = vld [vmem:[%s636] sm:$0xf]
      %v638 = vld [vmem:[%s636 + $0x4] sm:$0x1]
      %s639 = scalar_lea.vmem %s219, 232
      %v640 = vld [vmem:[%s639] sm:$0xf]
      %v641 = vld [vmem:[%s639 + $0x4] sm:$0x1]
      %s642 = scalar_lea.vmem %s219, 320
      %v643 = vld [vmem:[%s642] sm:$0xf]
      %v644 = vld [vmem:[%s642 + $0x4] sm:$0x1]
      %v647 = vunpack.c.l.b16 %v634
      %v648 = vunpack.c.l.b16 %v635
      %v649 = vpack.c.b16 %v648, %v647
      %v652 = vunpack.c.l.b16 %v637
      %v653 = vunpack.c.l.b16 %v638
      %v654 = vpack.c.b16 %v653, %v652
      %655 = vrot.lane.b32.xlu0 %v654, 64
      %v656 = vpop.permute.xlu0 %655
      %v659 = vunpack.c.l.b16 %v640
      %v660 = vunpack.c.l.b16 %v641
      %v661 = vpack.c.b16 %v660, %v659
      %v664 = vunpack.c.l.b16 %v643
      %v665 = vunpack.c.l.b16 %v644
      %v666 = vpack.c.b16 %v665, %v664
      %667 = vrot.lane.b32.xlu0 %v666, 64
      %v668 = vpop.permute.xlu0 %667
      %v671 = vsel %vm261, %v649, %v656
      %v674 = vsel %vm261, %v661, %v668
      %v677 = vunpack.c.l.b16 %v671
      %v678 = vunpack.c.l.b16 %v674
      %v679 = vunpack.c.h.b16 %v671
      %v680 = vunpack.c.h.b16 %v674
      %v681 = vpack.c.b16 %v678, %v677
      %v682 = vpack.c.b16 %v680, %v679
      %v683 = vrot.slane %v681, 5
      %v684 = vrot.slane %v683, 4
      %v685 = vrot.slane %v682, 5
      %v686 = vsel %vm454, %v684, %v685
      %689 = vst [vmem:[#allocation2 + $0x40] sm:$0x88] %v683
      %690 = vst [vmem:[#allocation2 + $0x48] sm:$0xff] %v686
      %s691 = scalar_lea.vmem %s219, 64
      %v692 = vld [vmem:[%s691] sm:$0xf]
      %v693 = vld [vmem:[%s691 + $0x4] sm:$0x1]
      %s694 = scalar_lea.vmem %s219, 152
      %v695 = vld [vmem:[%s694] sm:$0xf]
      %v696 = vld [vmem:[%s694 + $0x4] sm:$0x1]
      %s697 = scalar_lea.vmem %s219, 240
      %v698 = vld [vmem:[%s697] sm:$0xf]
      %v699 = vld [vmem:[%s697 + $0x4] sm:$0x1]
      %s700 = scalar_lea.vmem %s219, 328
      %v701 = vld [vmem:[%s700] sm:$0xf]
      %v702 = vld [vmem:[%s700 + $0x4] sm:$0x1]
      %v705 = vunpack.c.l.b16 %v692
      %v706 = vunpack.c.l.b16 %v693
      %v707 = vpack.c.b16 %v706, %v705
      %v710 = vunpack.c.l.b16 %v695
      %v711 = vunpack.c.l.b16 %v696
      %v712 = vpack.c.b16 %v711, %v710
      %713 = vrot.lane.b32.xlu0 %v712, 64
      %v714 = vpop.permute.xlu0 %713
      %v717 = vunpack.c.l.b16 %v698
      %v718 = vunpack.c.l.b16 %v699
      %v719 = vpack.c.b16 %v718, %v717
      %v722 = vunpack.c.l.b16 %v701
      %v723 = vunpack.c.l.b16 %v702
      %v724 = vpack.c.b16 %v723, %v722
      %725 = vrot.lane.b32.xlu0 %v724, 64
      %v726 = vpop.permute.xlu0 %725
      %v729 = vsel %vm261, %v707, %v714
      %v732 = vsel %vm261, %v719, %v726
      %v735 = vunpack.c.l.b16 %v729
      %v736 = vunpack.c.l.b16 %v732
      %v737 = vunpack.c.h.b16 %v729
      %v738 = vunpack.c.h.b16 %v732
      %v739 = vpack.c.b16 %v736, %v735
      %v740 = vpack.c.b16 %v738, %v737
      %743 = vst [vmem:[#allocation2 + $0x50] sm:$0xff] %v739
      %744 = vst [vmem:[#allocation2 + $0x58] sm:$0x11] %v740
      %s745 = scalar_lea.vmem %s219, 72
      %v746 = vld [vmem:[%s745] sm:$0xf]
      %v747 = vld [vmem:[%s745 + $0x4] sm:$0x1]
      %s748 = scalar_lea.vmem %s219, 160
      %v749 = vld [vmem:[%s748] sm:$0xf]
      %v750 = vld [vmem:[%s748 + $0x4] sm:$0x1]
      %s751 = scalar_lea.vmem %s219, 248
      %v752 = vld [vmem:[%s751] sm:$0xf]
      %v753 = vld [vmem:[%s751 + $0x4] sm:$0x1]
      %s754 = scalar_lea.vmem %s219, 336
      %v755 = vld [vmem:[%s754] sm:$0xf]
      %v756 = vld [vmem:[%s754 + $0x4] sm:$0x1]
      %v759 = vunpack.c.l.b16 %v746
      %v760 = vunpack.c.l.b16 %v747
      %v761 = vpack.c.b16 %v760, %v759
      %v764 = vunpack.c.l.b16 %v749
      %v765 = vunpack.c.l.b16 %v750
      %v766 = vpack.c.b16 %v765, %v764
      %767 = vrot.lane.b32.xlu0 %v766, 64
      %v768 = vpop.permute.xlu0 %767
      %v771 = vunpack.c.l.b16 %v752
      %v772 = vunpack.c.l.b16 %v753
      %v773 = vpack.c.b16 %v772, %v771
      %v776 = vunpack.c.l.b16 %v755
      %v777 = vunpack.c.l.b16 %v756
      %v778 = vpack.c.b16 %v777, %v776
      %779 = vrot.lane.b32.xlu0 %v778, 64
      %v780 = vpop.permute.xlu0 %779
      %v783 = vsel %vm261, %v761, %v768
      %v786 = vsel %vm261, %v773, %v780
      %v789 = vunpack.c.l.b16 %v783
      %v790 = vunpack.c.l.b16 %v786
      %v791 = vunpack.c.h.b16 %v783
      %v792 = vunpack.c.h.b16 %v786
      %v793 = vpack.c.b16 %v790, %v789
      %v794 = vpack.c.b16 %v792, %v791
      %v795 = vrot.slane %v793, 7
      %v796 = vrot.slane %v795, 4
      %v797 = vrot.slane %v794, 7
      %v798 = vsel %vm332, %v796, %v797
      %801 = vst [vmem:[#allocation2 + $0x58] sm:$0xee] %v795
      %802 = vst [vmem:[#allocation2 + $0x60] sm:$0x33] %v798
      %v803 = vld [vmem:[#allocation2] sm:$0xff]
      %v804 = vld [vmem:[#allocation2 + $0x8] sm:$0xff]
      %v805 = vld [vmem:[#allocation2 + $0x10] sm:$0xff]
      %v806 = vld [vmem:[#allocation2 + $0x18] sm:$0xff]
      %v807 = vld [vmem:[#allocation2 + $0x20] sm:$0xff]
      %v808 = vld [vmem:[#allocation2 + $0x28] sm:$0xff]
      %v809 = vld [vmem:[#allocation2 + $0x30] sm:$0xff]
      %v810 = vld [vmem:[#allocation2 + $0x38] sm:$0xff]
      %v811 = vld [vmem:[#allocation2 + $0x40] sm:$0xff]
      %v812 = vld [vmem:[#allocation2 + $0x48] sm:$0xff]
      %v813 = vld [vmem:[#allocation2 + $0x50] sm:$0xff]
      %v814 = vld [vmem:[#allocation2 + $0x58] sm:$0xff]
      %v815 = vld [vmem:[#allocation2 + $0x60] sm:$0x33]
      %v816 = vld [vmem:[%s1] sm:$0xf]
      %v817 = vld [vmem:[%s1 + $0x4] sm:$0xf]
      %v818 = vld [vmem:[%s1 + $0x8] sm:$0xf]
      %v819 = vld [vmem:[%s1 + $0xc] sm:$0xf]
      %v820 = vld [vmem:[%s1 + $0x10] sm:$0xf]
      %v821 = vld [vmem:[%s1 + $0x14] sm:$0xf]
      %v822 = vld [vmem:[%s1 + $0x18] sm:$0xf]
      %v823 = vld [vmem:[%s1 + $0x1c] sm:$0xf]
      %v824 = vld [vmem:[%s1 + $0x20] sm:$0xf]
      %v825 = vld [vmem:[%s1 + $0x24] sm:$0xf]
      %v826 = vld [vmem:[%s1 + $0x28] sm:$0xf]
      %v827 = vld [vmem:[%s1 + $0x2c] sm:$0xf]
      %v828 = vld [vmem:[%s1 + $0x30] sm:$0xf]
      %v829 = vld [vmem:[%s1 + $0x34] sm:$0xf]
      %v830 = vld [vmem:[%s1 + $0x38] sm:$0xf]
      %v831 = vld [vmem:[%s1 + $0x3c] sm:$0xf]
      %v832 = vld [vmem:[%s1 + $0x40] sm:$0xf]
      %v833 = vld [vmem:[%s1 + $0x44] sm:$0xf]
      %v834 = vld [vmem:[%s1 + $0x48] sm:$0xf]
      %v835 = vld [vmem:[%s1 + $0x4c] sm:$0xf]
      %v836 = vld [vmem:[%s1 + $0x50] sm:$0xf]
      %v837 = vld [vmem:[%s1 + $0x54] sm:$0xf]
      %v838 = vld [vmem:[%s1 + $0x58] sm:$0xf]
      %v839 = vld [vmem:[%s1 + $0x5c] sm:$0xf]
      %v840 = vld [vmem:[%s1 + $0x60] sm:$0xf]
      %v841 = vld [vmem:[%s1 + $0x64] sm:$0xf]
      %v842 = vld [vmem:[%s1 + $0x68] sm:$0xf]
      %v843 = vld [vmem:[%s1 + $0x6c] sm:$0xf]
      %v844 = vld [vmem:[%s1 + $0x70] sm:$0xf]
      %v845 = vld [vmem:[%s1 + $0x74] sm:$0xf]
      %v846 = vld [vmem:[%s1 + $0x78] sm:$0xf]
      %v847 = vld [vmem:[%s1 + $0x7c] sm:$0xf]
      %v848 = vld [vmem:[%s2] sm:$0x1]
      %v850 = vlaneseq
      %v851 = vshrl.u32 %v850, 7
      %v852 = vsub.s32 0, %v851
      %v853 = vrot.slane %v848, %v852
      %v868 = vunpack.c.l.b16 %v803
      %v869 = vunpack.c.h.b16 %v803
      %v870 = vunpack.c.l.b16 %v804
      %v871 = vunpack.c.h.b16 %v804
      %v872 = vunpack.c.l.b16 %v805
      %v873 = vunpack.c.h.b16 %v805
      %v874 = vunpack.c.l.b16 %v806
      %v875 = vunpack.c.h.b16 %v806
      %v876 = vunpack.c.l.b16 %v807
      %v877 = vunpack.c.h.b16 %v807
      %v878 = vunpack.c.l.b16 %v808
      %v879 = vunpack.c.h.b16 %v808
      %v880 = vunpack.c.l.b16 %v809
      %v881 = vunpack.c.h.b16 %v809
      %v882 = vunpack.c.l.b16 %v810
      %v883 = vunpack.c.h.b16 %v810
      %v884 = vunpack.c.l.b16 %v811
      %v885 = vunpack.c.h.b16 %v811
      %v886 = vunpack.c.l.b16 %v812
      %v887 = vunpack.c.h.b16 %v812
      %v888 = vunpack.c.l.b16 %v813
      %v889 = vunpack.c.h.b16 %v813
      %v890 = vunpack.c.l.b16 %v814
      %v891 = vunpack.c.h.b16 %v814
      %v892 = vunpack.c.l.b16 %v815
      %v893 = vunpack.c.h.b16 %v815
      %v894 = vpack.c.b16 %v870, %v868
      %v895 = vpack.c.b16 %v871, %v869
      %v896 = vpack.c.b16 %v874, %v872
      %v897 = vpack.c.b16 %v875, %v873
      %v898 = vpack.c.b16 %v878, %v876
      %v899 = vpack.c.b16 %v879, %v877
      %v900 = vpack.c.b16 %v882, %v880
      %v901 = vpack.c.b16 %v883, %v881
      %v902 = vpack.c.b16 %v886, %v884
      %v903 = vpack.c.b16 %v887, %v885
      %v904 = vpack.c.b16 %v890, %v888
      %v905 = vpack.c.b16 %v891, %v889
      %v906 = vpack.c.b16 %v892, %v892
      %v907 = vpack.c.b16 %v893, %v893
      %v954 = vunpack.c.l.b16 %v816
      %v955 = vunpack.c.l.b16 %v817
      %v956 = vunpack.c.l.b16 %v818
      %v957 = vunpack.c.l.b16 %v819
      %v958 = vunpack.c.l.b16 %v820
      %v959 = vunpack.c.l.b16 %v821
      %v960 = vunpack.c.l.b16 %v822
      %v961 = vunpack.c.l.b16 %v823
      %v962 = vunpack.c.l.b16 %v824
      %v963 = vunpack.c.l.b16 %v825
      %v964 = vunpack.c.l.b16 %v826
      %v965 = vunpack.c.l.b16 %v827
      %v966 = vunpack.c.l.b16 %v828
      %v967 = vunpack.c.l.b16 %v829
      %v968 = vunpack.c.l.b16 %v830
      %v969 = vunpack.c.l.b16 %v831
      %v970 = vunpack.c.l.b16 %v832
      %v971 = vunpack.c.l.b16 %v833
      %v972 = vunpack.c.l.b16 %v834
      %v973 = vunpack.c.l.b16 %v835
      %v974 = vunpack.c.l.b16 %v836
      %v975 = vunpack.c.l.b16 %v837
      %v976 = vunpack.c.l.b16 %v838
      %v977 = vunpack.c.l.b16 %v839
      %v978 = vunpack.c.l.b16 %v840
      %v979 = vunpack.c.l.b16 %v841
      %v980 = vunpack.c.l.b16 %v842
      %v981 = vunpack.c.l.b16 %v843
      %v982 = vunpack.c.l.b16 %v844
      %v983 = vunpack.c.l.b16 %v845
      %v984 = vunpack.c.l.b16 %v846
      %v985 = vunpack.c.l.b16 %v847
      %v986 = vpack.c.b16 %v955, %v954
      %v987 = vpack.c.b16 %v957, %v956
      %v988 = vpack.c.b16 %v959, %v958
      %v989 = vpack.c.b16 %v961, %v960
      %v990 = vpack.c.b16 %v963, %v962
      %v991 = vpack.c.b16 %v965, %v964
      %v992 = vpack.c.b16 %v967, %v966
      %v993 = vpack.c.b16 %v969, %v968
      %v994 = vpack.c.b16 %v971, %v970
      %v995 = vpack.c.b16 %v973, %v972
      %v996 = vpack.c.b16 %v975, %v974
      %v997 = vpack.c.b16 %v977, %v976
      %v998 = vpack.c.b16 %v979, %v978
      %v999 = vpack.c.b16 %v981, %v980
      %v1000 = vpack.c.b16 %v983, %v982
      %v1001 = vpack.c.b16 %v985, %v984
      %1018 = vmatprep.subr.bf16.mxu0 0
      %1019 = vmatpush1.bf16.msra.mxu0 %v986
      %1020 = vmatprep.subr.bf16.mxu0 0
      %1021 = vmatpush1.bf16.msra.mxu0 %v987
      %1022 = vmatprep.subr.bf16.mxu0 0
      %1023 = vmatpush1.bf16.msra.mxu0 %v988
      %1024 = vmatprep.subr.bf16.mxu0 0
      %1025 = vmatpush1.bf16.msra.mxu0 %v989
      %1026 = vmatprep.subr.bf16.mxu0 0
      %1027 = vmatpush1.bf16.msra.mxu0 %v990
      %1028 = vmatprep.subr.bf16.mxu0 0
      %1029 = vmatpush1.bf16.msra.mxu0 %v991
      %1030 = vmatprep.subr.bf16.mxu0 0
      %1031 = vmatpush1.bf16.msra.mxu0 %v992
      %1032 = vmatprep.subr.bf16.mxu0 0
      %1033 = vmatpush1.bf16.msra.mxu0 %v993
      %1034 = vmatprep.subr.bf16.mxu0 0
      %1035 = vmatpush1.bf16.msra.mxu0 %v994
      %1036 = vmatprep.subr.bf16.mxu0 0
      %1037 = vmatpush1.bf16.msra.mxu0 %v995
      %1038 = vmatprep.subr.bf16.mxu0 0
      %1039 = vmatpush1.bf16.msra.mxu0 %v996
      %1040 = vmatprep.subr.bf16.mxu0 0
      %1041 = vmatpush1.bf16.msra.mxu0 %v997
      %1042 = vmatprep.subr.bf16.mxu0 0
      %1043 = vmatpush1.bf16.msra.mxu0 %v998
      %1044 = vmatprep.subr.bf16.mxu0 0
      %1045 = vmatpush1.bf16.msra.mxu0 %v999
      %1046 = vmatprep.subr.bf16.mxu0 0
      %1047 = vmatpush1.bf16.msra.mxu0 %v1000
      %1048 = vmatprep.subr.bf16.mxu0 0
      %1049 = vmatpush1.bf16.msra.mxu0 %v1001
      %1050 = vmatprep.mubr.bf16.mxu0 %v895
      %1051 = vmatmul.mubr.bf16.gmra.mrb[0].mxu0 %v894
      %v1052 = vpop.f32.mrb[0].mxu0
      %v1053 = vadd.f32 %v853, %v1052
      %v1054 = vpop.f32.mrb[0].mxu0
      %v1055 = vpop.f32.mrb[0].mxu0
      %v1056 = vadd.f32 %v853, %v1055
      %v1057 = vpop.f32.mrb[0].mxu0
      %1058 = vmatprep.mubr.bf16.mxu0 %v897
      %1059 = vmatmul.mubr.bf16.gmra.mrb[0].mxu0 %v896
      %v1060 = vpop.f32.mrb[0].mxu0
      %v1061 = vadd.f32 %v853, %v1060
      %v1062 = vpop.f32.mrb[0].mxu0
      %v1063 = vpop.f32.mrb[0].mxu0
      %v1064 = vadd.f32 %v853, %v1063
      %v1065 = vpop.f32.mrb[0].mxu0
      %1066 = vmatprep.mubr.bf16.mxu0 %v899
      %1067 = vmatmul.mubr.bf16.gmra.mrb[0].mxu0 %v898
      %v1068 = vpop.f32.mrb[0].mxu0
      %v1069 = vadd.f32 %v853, %v1068
      %v1070 = vpop.f32.mrb[0].mxu0
      %v1071 = vpop.f32.mrb[0].mxu0
      %v1072 = vadd.f32 %v853, %v1071
      %v1073 = vpop.f32.mrb[0].mxu0
      %1074 = vmatprep.mubr.bf16.mxu0 %v901
      %1075 = vmatmul.mubr.bf16.gmra.mrb[0].mxu0 %v900
      %v1076 = vpop.f32.mrb[0].mxu0
      %v1077 = vadd.f32 %v853, %v1076
      %v1078 = vpop.f32.mrb[0].mxu0
      %v1079 = vpop.f32.mrb[0].mxu0
      %v1080 = vadd.f32 %v853, %v1079
      %v1081 = vpop.f32.mrb[0].mxu0
      %1082 = vmatprep.mubr.bf16.mxu0 %v903
      %1083 = vmatmul.mubr.bf16.gmra.mrb[0].mxu0 %v902
      %v1084 = vpop.f32.mrb[0].mxu0
      %v1085 = vadd.f32 %v853, %v1084
      %v1086 = vpop.f32.mrb[0].mxu0
      %v1087 = vpop.f32.mrb[0].mxu0
      %v1088 = vadd.f32 %v853, %v1087
      %v1089 = vpop.f32.mrb[0].mxu0
      %1090 = vmatprep.mubr.bf16.mxu0 %v905
      %1091 = vmatmul.mubr.bf16.gmra.mrb[0].mxu0 %v904
      %v1092 = vpop.f32.mrb[0].mxu0
      %v1093 = vadd.f32 %v853, %v1092
      %v1094 = vpop.f32.mrb[0].mxu0
      %v1095 = vpop.f32.mrb[0].mxu0
      %v1096 = vadd.f32 %v853, %v1095
      %v1097 = vpop.f32.mrb[0].mxu0
      %1098 = vmatprep.mubr.bf16.mxu0 %v907
      %1099 = vmatmul.mubr.bf16.gmra.mrb[0].mxu0 %v906
      %v1100 = vpop.f32.mrb[0].mxu0
      %v1101 = vadd.f32 %v853, %v1100
      %v1102 = vpop.f32.mrb[0].mxu0
      %v1103 = vpop.f32.mrb[0].mxu0
      %v1104 = vpop.f32.mrb[0].mxu0
      %1105 = vdwg.mxu0
      %v1106 = vmax.f32 %v1053, 0.0
      %v1107 = vmax.f32 %v1056, 0.0
      %v1108 = vmax.f32 %v1061, 0.0
      %v1109 = vmax.f32 %v1064, 0.0
      %v1110 = vmax.f32 %v1069, 0.0
      %v1111 = vmax.f32 %v1072, 0.0
      %v1112 = vmax.f32 %v1077, 0.0
      %v1113 = vmax.f32 %v1080, 0.0
      %v1114 = vmax.f32 %v1085, 0.0
      %v1115 = vmax.f32 %v1088, 0.0
      %v1116 = vmax.f32 %v1093, 0.0
      %v1117 = vmax.f32 %v1096, 0.0
      %v1118 = vmax.f32 %v1101, 0.0
      %v1119 = vpack.c.bf16 %v1107, %v1106
      %v1120 = vpack.c.bf16 %v1109, %v1108
      %v1121 = vpack.c.bf16 %v1111, %v1110
      %v1122 = vpack.c.bf16 %v1113, %v1112
      %v1123 = vpack.c.bf16 %v1115, %v1114
      %v1124 = vpack.c.bf16 %v1117, %v1116
      %v1125 = vpack.c.bf16 %v1118, %v1118
      %v1133 = vunpack.c.l.b16 %v1119
      %v1134 = vunpack.c.h.b16 %v1119
      %v1135 = vunpack.c.l.b16 %v1120
      %v1136 = vunpack.c.h.b16 %v1120
      %v1137 = vunpack.c.l.b16 %v1121
      %v1138 = vunpack.c.h.b16 %v1121
      %v1139 = vunpack.c.l.b16 %v1122
      %v1140 = vunpack.c.h.b16 %v1122
      %v1141 = vunpack.c.l.b16 %v1123
      %v1142 = vunpack.c.h.b16 %v1123
      %v1143 = vunpack.c.l.b16 %v1124
      %v1144 = vunpack.c.h.b16 %v1124
      %v1145 = vunpack.c.l.b16 %v1125
      %v1146 = vpack.c.b16 %v1133, %v1133
      %v1147 = vpack.c.b16 %v1134, %v1134
      %v1148 = vpack.c.b16 %v1135, %v1135
      %v1149 = vpack.c.b16 %v1136, %v1136
      %v1150 = vpack.c.b16 %v1137, %v1137
      %v1151 = vpack.c.b16 %v1138, %v1138
      %v1152 = vpack.c.b16 %v1139, %v1139
      %v1153 = vpack.c.b16 %v1140, %v1140
      %v1154 = vpack.c.b16 %v1141, %v1141
      %v1155 = vpack.c.b16 %v1142, %v1142
      %v1156 = vpack.c.b16 %v1143, %v1143
      %v1157 = vpack.c.b16 %v1144, %v1144
      %v1158 = vpack.c.b16 %v1145, %v1145
      %vm1172 = vcmask 125952
      %1173 = vst.msk [vmem:[#allocation3] sm:$0xf] %vm1172, %v1146
      %1174 = vst.msk [vmem:[#allocation3 + $0x4] sm:$0xf] %vm1172, %v1147
      %1175 = vst.msk [vmem:[#allocation3 + $0x8] sm:$0xf] %vm1172, %v1148
      %1176 = vst.msk [vmem:[#allocation3 + $0xc] sm:$0xf] %vm1172, %v1149
      %1177 = vst.msk [vmem:[#allocation3 + $0x10] sm:$0xf] %vm1172, %v1150
      %1178 = vst.msk [vmem:[#allocation3 + $0x14] sm:$0xf] %vm1172, %v1151
      %1179 = vst.msk [vmem:[#allocation3 + $0x18] sm:$0xf] %vm1172, %v1152
      %1180 = vst.msk [vmem:[#allocation3 + $0x1c] sm:$0xf] %vm1172, %v1153
      %1181 = vst.msk [vmem:[#allocation3 + $0x20] sm:$0xf] %vm1172, %v1154
      %1182 = vst.msk [vmem:[#allocation3 + $0x24] sm:$0xf] %vm1172, %v1155
      %1183 = vst.msk [vmem:[#allocation3 + $0x28] sm:$0xf] %vm1172, %v1156
      %1184 = vst.msk [vmem:[#allocation3 + $0x2c] sm:$0xf] %vm1172, %v1157
      %vm1185 = vcmask 123904
      %1186 = vst.msk [vmem:[#allocation3 + $0x30] sm:$0x3] %vm1185, %v1158
      %v1187 = vld [vmem:[%s228] sm:$0xf]
      %v1188 = vld [vmem:[%s228 + $0x4] sm:$0x1]
      %v1189 = vld [vmem:[%s219] sm:$0xf]
      %v1190 = vld [vmem:[%s219 + $0x4] sm:$0x3]
      %v1191 = vld [vmem:[%s234] sm:$0xf]
      %v1192 = vld [vmem:[%s234 + $0x4] sm:$0x1]
      %v1193 = vld [vmem:[%s231] sm:$0xf]
      %v1194 = vld [vmem:[%s231 + $0x4] sm:$0x3]
      %v1197 = vunpack.c.l.b16 %v1187
      %v1198 = vunpack.c.l.b16 %v1188
      %v1199 = vpack.c.b16 %v1198, %v1197
      %v1202 = vunpack.c.l.b16 %v1189
      %v1203 = vunpack.c.l.b16 %v1190
      %v1204 = vpack.c.b16 %v1203, %v1202
      %v1206 = vshrl.u32 %v1204, 16
      %v1208 = vshll.u32 %v1204, 16
      %v1210 = vrot.slane %v1208, 1
      %v1211 = vor.u32 %v1206, %v1210
      %1212 = vrot.lane.b32.xlu0 %v1211, 64
      %v1213 = vpop.permute.xlu0 %1212
      %v1216 = vunpack.c.l.b16 %v1191
      %v1217 = vunpack.c.l.b16 %v1192
      %v1218 = vpack.c.b16 %v1217, %v1216
      %v1221 = vunpack.c.l.b16 %v1193
      %v1222 = vunpack.c.l.b16 %v1194
      %v1223 = vpack.c.b16 %v1222, %v1221
      %v1225 = vshrl.u32 %v1223, 16
      %v1227 = vshll.u32 %v1223, 16
      %v1229 = vrot.slane %v1227, 1
      %v1230 = vor.u32 %v1225, %v1229
      %1231 = vrot.lane.b32.xlu0 %v1230, 64
      %v1232 = vpop.permute.xlu0 %1231
      %v1235 = vsel %vm261, %v1199, %v1213
      %v1238 = vsel %vm261, %v1218, %v1232
      %v1241 = vunpack.c.l.b16 %v1235
      %v1242 = vunpack.c.l.b16 %v1238
      %v1243 = vunpack.c.h.b16 %v1235
      %v1244 = vunpack.c.h.b16 %v1238
      %v1245 = vpack.c.b16 %v1242, %v1241
      %v1246 = vpack.c.b16 %v1244, %v1243
      %1249 = vst [vmem:[#allocation2] sm:$0xff] %v1245
      %1250 = vst [vmem:[#allocation2 + $0x8] sm:$0x11] %v1246
      %v1251 = vld [vmem:[%s283] sm:$0xf]
      %v1252 = vld [vmem:[%s283 + $0x4] sm:$0x1]
      %v1253 = vld [vmem:[%s280] sm:$0xf]
      %v1254 = vld [vmem:[%s280 + $0x4] sm:$0x3]
      %v1255 = vld [vmem:[%s289] sm:$0xf]
      %v1256 = vld [vmem:[%s289 + $0x4] sm:$0x1]
      %v1257 = vld [vmem:[%s286] sm:$0xf]
      %v1258 = vld [vmem:[%s286 + $0x4] sm:$0x3]
      %v1261 = vunpack.c.l.b16 %v1251
      %v1262 = vunpack.c.l.b16 %v1252
      %v1263 = vpack.c.b16 %v1262, %v1261
      %v1266 = vunpack.c.l.b16 %v1253
      %v1267 = vunpack.c.l.b16 %v1254
      %v1268 = vpack.c.b16 %v1267, %v1266
      %v1270 = vshrl.u32 %v1268, 16
      %v1272 = vshll.u32 %v1268, 16
      %v1274 = vrot.slane %v1272, 1
      %v1275 = vor.u32 %v1270, %v1274
      %1276 = vrot.lane.b32.xlu0 %v1275, 64
      %v1277 = vpop.permute.xlu0 %1276
      %v1280 = vunpack.c.l.b16 %v1255
      %v1281 = vunpack.c.l.b16 %v1256
      %v1282 = vpack.c.b16 %v1281, %v1280
      %v1285 = vunpack.c.l.b16 %v1257
      %v1286 = vunpack.c.l.b16 %v1258
      %v1287 = vpack.c.b16 %v1286, %v1285
      %v1289 = vshrl.u32 %v1287, 16
      %v1291 = vshll.u32 %v1287, 16
      %v1293 = vrot.slane %v1291, 1
      %v1294 = vor.u32 %v1289, %v1293
      %1295 = vrot.lane.b32.xlu0 %v1294, 64
      %v1296 = vpop.permute.xlu0 %1295
      %v1299 = vsel %vm261, %v1263, %v1277
      %v1302 = vsel %vm261, %v1282, %v1296
      %v1305 = vunpack.c.l.b16 %v1299
      %v1306 = vunpack.c.l.b16 %v1302
      %v1307 = vunpack.c.h.b16 %v1299
      %v1308 = vunpack.c.h.b16 %v1302
      %v1309 = vpack.c.b16 %v1306, %v1305
      %v1310 = vpack.c.b16 %v1308, %v1307
      %v1311 = vrot.slane %v1309, 7
      %v1312 = vrot.slane %v1311, 4
      %v1313 = vrot.slane %v1310, 7
      %v1314 = vsel %vm332, %v1312, %v1313
      %1317 = vst [vmem:[#allocation2 + $0x8] sm:$0xee] %v1311
      %1318 = vst [vmem:[#allocation2 + $0x10] sm:$0x33] %v1314
      %v1319 = vld [vmem:[%s344] sm:$0xf]
      %v1320 = vld [vmem:[%s344 + $0x4] sm:$0x1]
      %v1321 = vld [vmem:[%s341] sm:$0xf]
      %v1322 = vld [vmem:[%s341 + $0x4] sm:$0x3]
      %v1323 = vld [vmem:[%s350] sm:$0xf]
      %v1324 = vld [vmem:[%s350 + $0x4] sm:$0x1]
      %v1325 = vld [vmem:[%s347] sm:$0xf]
      %v1326 = vld [vmem:[%s347 + $0x4] sm:$0x3]
      %v1329 = vunpack.c.l.b16 %v1319
      %v1330 = vunpack.c.l.b16 %v1320
      %v1331 = vpack.c.b16 %v1330, %v1329
      %v1334 = vunpack.c.l.b16 %v1321
      %v1335 = vunpack.c.l.b16 %v1322
      %v1336 = vpack.c.b16 %v1335, %v1334
      %v1338 = vshrl.u32 %v1336, 16
      %v1340 = vshll.u32 %v1336, 16
      %v1342 = vrot.slane %v1340, 1
      %v1343 = vor.u32 %v1338, %v1342
      %1344 = vrot.lane.b32.xlu0 %v1343, 64
      %v1345 = vpop.permute.xlu0 %1344
      %v1348 = vunpack.c.l.b16 %v1323
      %v1349 = vunpack.c.l.b16 %v1324
      %v1350 = vpack.c.b16 %v1349, %v1348
      %v1353 = vunpack.c.l.b16 %v1325
      %v1354 = vunpack.c.l.b16 %v1326
      %v1355 = vpack.c.b16 %v1354, %v1353
      %v1357 = vshrl.u32 %v1355, 16
      %v1359 = vshll.u32 %v1355, 16
      %v1361 = vrot.slane %v1359, 1
      %v1362 = vor.u32 %v1357, %v1361
      %1363 = vrot.lane.b32.xlu0 %v1362, 64
      %v1364 = vpop.permute.xlu0 %1363
      %v1367 = vsel %vm261, %v1331, %v1345
      %v1370 = vsel %vm261, %v1350, %v1364
      %v1373 = vunpack.c.l.b16 %v1367
      %v1374 = vunpack.c.l.b16 %v1370
      %v1375 = vunpack.c.h.b16 %v1367
      %v1376 = vunpack.c.h.b16 %v1370
      %v1377 = vpack.c.b16 %v1374, %v1373
      %v1378 = vpack.c.b16 %v1376, %v1375
      %v1379 = vrot.slane %v1377, 6
      %v1380 = vrot.slane %v1379, 4
      %v1381 = vrot.slane %v1378, 6
      %v1382 = vsel %vm393, %v1380, %v1381
      %1385 = vst [vmem:[#allocation2 + $0x10] sm:$0xcc] %v1379
      %1386 = vst [vmem:[#allocation2 + $0x18] sm:$0x77] %v1382
      %v1387 = vld [vmem:[%s405] sm:$0xf]
      %v1388 = vld [vmem:[%s405 + $0x4] sm:$0x1]
      %v1389 = vld [vmem:[%s402] sm:$0xf]
      %v1390 = vld [vmem:[%s402 + $0x4] sm:$0x3]
      %v1391 = vld [vmem:[%s411] sm:$0xf]
      %v1392 = vld [vmem:[%s411 + $0x4] sm:$0x1]
      %v1393 = vld [vmem:[%s408] sm:$0xf]
      %v1394 = vld [vmem:[%s408 + $0x4] sm:$0x3]
      %v1397 = vunpack.c.l.b16 %v1387
      %v1398 = vunpack.c.l.b16 %v1388
      %v1399 = vpack.c.b16 %v1398, %v1397
      %v1402 = vunpack.c.l.b16 %v1389
      %v1403 = vunpack.c.l.b16 %v1390
      %v1404 = vpack.c.b16 %v1403, %v1402
      %v1406 = vshrl.u32 %v1404, 16
      %v1408 = vshll.u32 %v1404, 16
      %v1410 = vrot.slane %v1408, 1
      %v1411 = vor.u32 %v1406, %v1410
      %1412 = vrot.lane.b32.xlu0 %v1411, 64
      %v1413 = vpop.permute.xlu0 %1412
      %v1416 = vunpack.c.l.b16 %v1391
      %v1417 = vunpack.c.l.b16 %v1392
      %v1418 = vpack.c.b16 %v1417, %v1416
      %v1421 = vunpack.c.l.b16 %v1393
      %v1422 = vunpack.c.l.b16 %v1394
      %v1423 = vpack.c.b16 %v1422, %v1421
      %v1425 = vshrl.u32 %v1423, 16
      %v1427 = vshll.u32 %v1423, 16
      %v1429 = vrot.slane %v1427, 1
      %v1430 = vor.u32 %v1425, %v1429
      %1431 = vrot.lane.b32.xlu0 %v1430, 64
      %v1432 = vpop.permute.xlu0 %1431
      %v1435 = vsel %vm261, %v1399, %v1413
      %v1438 = vsel %vm261, %v1418, %v1432
      %v1441 = vunpack.c.l.b16 %v1435
      %v1442 = vunpack.c.l.b16 %v1438
      %v1443 = vunpack.c.h.b16 %v1435
      %v1444 = vunpack.c.h.b16 %v1438
      %v1445 = vpack.c.b16 %v1442, %v1441
      %v1446 = vpack.c.b16 %v1444, %v1443
      %v1447 = vrot.slane %v1445, 5
      %v1448 = vrot.slane %v1447, 4
      %v1449 = vrot.slane %v1446, 5
      %v1450 = vsel %vm454, %v1448, %v1449
      %1453 = vst [vmem:[#allocation2 + $0x18] sm:$0x88] %v1447
      %1454 = vst [vmem:[#allocation2 + $0x20] sm:$0xff] %v1450
      %v1455 = vld [vmem:[%s466] sm:$0xf]
      %v1456 = vld [vmem:[%s466 + $0x4] sm:$0x1]
      %v1457 = vld [vmem:[%s463] sm:$0xf]
      %v1458 = vld [vmem:[%s463 + $0x4] sm:$0x3]
      %v1459 = vld [vmem:[%s472] sm:$0xf]
      %v1460 = vld [vmem:[%s472 + $0x4] sm:$0x1]
      %v1461 = vld [vmem:[%s469] sm:$0xf]
      %v1462 = vld [vmem:[%s469 + $0x4] sm:$0x3]
      %v1465 = vunpack.c.l.b16 %v1455
      %v1466 = vunpack.c.l.b16 %v1456
      %v1467 = vpack.c.b16 %v1466, %v1465
      %v1470 = vunpack.c.l.b16 %v1457
      %v1471 = vunpack.c.l.b16 %v1458
      %v1472 = vpack.c.b16 %v1471, %v1470
      %v1474 = vshrl.u32 %v1472, 16
      %v1476 = vshll.u32 %v1472, 16
      %v1478 = vrot.slane %v1476, 1
      %v1479 = vor.u32 %v1474, %v1478
      %1480 = vrot.lane.b32.xlu0 %v1479, 64
      %v1481 = vpop.permute.xlu0 %1480
      %v1484 = vunpack.c.l.b16 %v1459
      %v1485 = vunpack.c.l.b16 %v1460
      %v1486 = vpack.c.b16 %v1485, %v1484
      %v1489 = vunpack.c.l.b16 %v1461
      %v1490 = vunpack.c.l.b16 %v1462
      %v1491 = vpack.c.b16 %v1490, %v1489
      %v1493 = vshrl.u32 %v1491, 16
      %v1495 = vshll.u32 %v1491, 16
      %v1497 = vrot.slane %v1495, 1
      %v1498 = vor.u32 %v1493, %v1497
      %1499 = vrot.lane.b32.xlu0 %v1498, 64
      %v1500 = vpop.permute.xlu0 %1499
      %v1503 = vsel %vm261, %v1467, %v1481
      %v1506 = vsel %vm261, %v1486, %v1500
      %v1509 = vunpack.c.l.b16 %v1503
      %v1510 = vunpack.c.l.b16 %v1506
      %v1511 = vunpack.c.h.b16 %v1503
      %v1512 = vunpack.c.h.b16 %v1506
      %v1513 = vpack.c.b16 %v1510, %v1509
      %v1514 = vpack.c.b16 %v1512, %v1511
      %1517 = vst [vmem:[#allocation2 + $0x28] sm:$0xff] %v1513
      %1518 = vst [vmem:[#allocation2 + $0x30] sm:$0x11] %v1514
      %v1519 = vld [vmem:[%s520] sm:$0xf]
      %v1520 = vld [vmem:[%s520 + $0x4] sm:$0x1]
      %v1521 = vld [vmem:[%s517] sm:$0xf]
      %v1522 = vld [vmem:[%s517 + $0x4] sm:$0x3]
      %v1523 = vld [vmem:[%s526] sm:$0xf]
      %v1524 = vld [vmem:[%s526 + $0x4] sm:$0x1]
      %v1525 = vld [vmem:[%s523] sm:$0xf]
      %v1526 = vld [vmem:[%s523 + $0x4] sm:$0x3]
      %v1529 = vunpack.c.l.b16 %v1519
      %v1530 = vunpack.c.l.b16 %v1520
      %v1531 = vpack.c.b16 %v1530, %v1529
      %v1534 = vunpack.c.l.b16 %v1521
      %v1535 = vunpack.c.l.b16 %v1522
      %v1536 = vpack.c.b16 %v1535, %v1534
      %v1538 = vshrl.u32 %v1536, 16
      %v1540 = vshll.u32 %v1536, 16
      %v1542 = vrot.slane %v1540, 1
      %v1543 = vor.u32 %v1538, %v1542
      %1544 = vrot.lane.b32.xlu0 %v1543, 64
      %v1545 = vpop.permute.xlu0 %1544
      %v1548 = vunpack.c.l.b16 %v1523
      %v1549 = vunpack.c.l.b16 %v1524
      %v1550 = vpack.c.b16 %v1549, %v1548
      %v1553 = vunpack.c.l.b16 %v1525
      %v1554 = vunpack.c.l.b16 %v1526
      %v1555 = vpack.c.b16 %v1554, %v1553
      %v1557 = vshrl.u32 %v1555, 16
      %v1559 = vshll.u32 %v1555, 16
      %v1561 = vrot.slane %v1559, 1
      %v1562 = vor.u32 %v1557, %v1561
      %1563 = vrot.lane.b32.xlu0 %v1562, 64
      %v1564 = vpop.permute.xlu0 %1563
      %v1567 = vsel %vm261, %v1531, %v1545
      %v1570 = vsel %vm261, %v1550, %v1564
      %v1573 = vunpack.c.l.b16 %v1567
      %v1574 = vunpack.c.l.b16 %v1570
      %v1575 = vunpack.c.h.b16 %v1567
      %v1576 = vunpack.c.h.b16 %v1570
      %v1577 = vpack.c.b16 %v1574, %v1573
      %v1578 = vpack.c.b16 %v1576, %v1575
      %v1579 = vrot.slane %v1577, 7
      %v1580 = vrot.slane %v1579, 4
      %v1581 = vrot.slane %v1578, 7
      %v1582 = vsel %vm332, %v1580, %v1581
      %1585 = vst [vmem:[#allocation2 + $0x30] sm:$0xee] %v1579
      %1586 = vst [vmem:[#allocation2 + $0x38] sm:$0x33] %v1582
      %v1587 = vld [vmem:[%s578] sm:$0xf]
      %v1588 = vld [vmem:[%s578 + $0x4] sm:$0x1]
      %v1589 = vld [vmem:[%s575] sm:$0xf]
      %v1590 = vld [vmem:[%s575 + $0x4] sm:$0x3]
      %v1591 = vld [vmem:[%s584] sm:$0xf]
      %v1592 = vld [vmem:[%s584 + $0x4] sm:$0x1]
      %v1593 = vld [vmem:[%s581] sm:$0xf]
      %v1594 = vld [vmem:[%s581 + $0x4] sm:$0x3]
      %v1597 = vunpack.c.l.b16 %v1587
      %v1598 = vunpack.c.l.b16 %v1588
      %v1599 = vpack.c.b16 %v1598, %v1597
      %v1602 = vunpack.c.l.b16 %v1589
      %v1603 = vunpack.c.l.b16 %v1590
      %v1604 = vpack.c.b16 %v1603, %v1602
      %v1606 = vshrl.u32 %v1604, 16
      %v1608 = vshll.u32 %v1604, 16
      %v1610 = vrot.slane %v1608, 1
      %v1611 = vor.u32 %v1606, %v1610
      %1612 = vrot.lane.b32.xlu0 %v1611, 64
      %v1613 = vpop.permute.xlu0 %1612
      %v1616 = vunpack.c.l.b16 %v1591
      %v1617 = vunpack.c.l.b16 %v1592
      %v1618 = vpack.c.b16 %v1617, %v1616
      %v1621 = vunpack.c.l.b16 %v1593
      %v1622 = vunpack.c.l.b16 %v1594
      %v1623 = vpack.c.b16 %v1622, %v1621
      %v1625 = vshrl.u32 %v1623, 16
      %v1627 = vshll.u32 %v1623, 16
      %v1629 = vrot.slane %v1627, 1
      %v1630 = vor.u32 %v1625, %v1629
      %1631 = vrot.lane.b32.xlu0 %v1630, 64
      %v1632 = vpop.permute.xlu0 %1631
      %v1635 = vsel %vm261, %v1599, %v1613
      %v1638 = vsel %vm261, %v1618, %v1632
      %v1641 = vunpack.c.l.b16 %v1635
      %v1642 = vunpack.c.l.b16 %v1638
      %v1643 = vunpack.c.h.b16 %v1635
      %v1644 = vunpack.c.h.b16 %v1638
      %v1645 = vpack.c.b16 %v1642, %v1641
      %v1646 = vpack.c.b16 %v1644, %v1643
      %v1647 = vrot.slane %v1645, 6
      %v1648 = vrot.slane %v1647, 4
      %v1649 = vrot.slane %v1646, 6
      %v1650 = vsel %vm393, %v1648, %v1649
      %1653 = vst [vmem:[#allocation2 + $0x38] sm:$0xcc] %v1647
      %1654 = vst [vmem:[#allocation2 + $0x40] sm:$0x77] %v1650
      %v1655 = vld [vmem:[%s636] sm:$0xf]
      %v1656 = vld [vmem:[%s636 + $0x4] sm:$0x1]
      %v1657 = vld [vmem:[%s633] sm:$0xf]
      %v1658 = vld [vmem:[%s633 + $0x4] sm:$0x3]
      %v1659 = vld [vmem:[%s642] sm:$0xf]
      %v1660 = vld [vmem:[%s642 + $0x4] sm:$0x1]
      %v1661 = vld [vmem:[%s639] sm:$0xf]
      %v1662 = vld [vmem:[%s639 + $0x4] sm:$0x3]
      %v1665 = vunpack.c.l.b16 %v1655
      %v1666 = vunpack.c.l.b16 %v1656
      %v1667 = vpack.c.b16 %v1666, %v1665
      %v1670 = vunpack.c.l.b16 %v1657
      %v1671 = vunpack.c.l.b16 %v1658
      %v1672 = vpack.c.b16 %v1671, %v1670
      %v1674 = vshrl.u32 %v1672, 16
      %v1676 = vshll.u32 %v1672, 16
      %v1678 = vrot.slane %v1676, 1
      %v1679 = vor.u32 %v1674, %v1678
      %1680 = vrot.lane.b32.xlu0 %v1679, 64
      %v1681 = vpop.permute.xlu0 %1680
      %v1684 = vunpack.c.l.b16 %v1659
      %v1685 = vunpack.c.l.b16 %v1660
      %v1686 = vpack.c.b16 %v1685, %v1684
      %v1689 = vunpack.c.l.b16 %v1661
      %v1690 = vunpack.c.l.b16 %v1662
      %v1691 = vpack.c.b16 %v1690, %v1689
      %v1693 = vshrl.u32 %v1691, 16
      %v1695 = vshll.u32 %v1691, 16
      %v1697 = vrot.slane %v1695, 1
      %v1698 = vor.u32 %v1693, %v1697
      %1699 = vrot.lane.b32.xlu0 %v1698, 64
      %v1700 = vpop.permute.xlu0 %1699
      %v1703 = vsel %vm261, %v1667, %v1681
      %v1706 = vsel %vm261, %v1686, %v1700
      %v1709 = vunpack.c.l.b16 %v1703
      %v1710 = vunpack.c.l.b16 %v1706
      %v1711 = vunpack.c.h.b16 %v1703
      %v1712 = vunpack.c.h.b16 %v1706
      %v1713 = vpack.c.b16 %v1710, %v1709
      %v1714 = vpack.c.b16 %v1712, %v1711
      %v1715 = vrot.slane %v1713, 5
      %v1716 = vrot.slane %v1715, 4
      %v1717 = vrot.slane %v1714, 5
      %v1718 = vsel %vm454, %v1716, %v1717
      %1721 = vst [vmem:[#allocation2 + $0x40] sm:$0x88] %v1715
      %1722 = vst [vmem:[#allocation2 + $0x48] sm:$0xff] %v1718
      %v1723 = vld [vmem:[%s694] sm:$0xf]
      %v1724 = vld [vmem:[%s694 + $0x4] sm:$0x1]
      %v1725 = vld [vmem:[%s691] sm:$0xf]
      %v1726 = vld [vmem:[%s691 + $0x4] sm:$0x3]
      %v1727 = vld [vmem:[%s700] sm:$0xf]
      %v1728 = vld [vmem:[%s700 + $0x4] sm:$0x1]
      %v1729 = vld [vmem:[%s697] sm:$0xf]
      %v1730 = vld [vmem:[%s697 + $0x4] sm:$0x3]
      %v1733 = vunpack.c.l.b16 %v1723
      %v1734 = vunpack.c.l.b16 %v1724
      %v1735 = vpack.c.b16 %v1734, %v1733
      %v1738 = vunpack.c.l.b16 %v1725
      %v1739 = vunpack.c.l.b16 %v1726
      %v1740 = vpack.c.b16 %v1739, %v1738
      %v1742 = vshrl.u32 %v1740, 16
      %v1744 = vshll.u32 %v1740, 16
      %v1746 = vrot.slane %v1744, 1
      %v1747 = vor.u32 %v1742, %v1746
      %1748 = vrot.lane.b32.xlu0 %v1747, 64
      %v1749 = vpop.permute.xlu0 %1748
      %v1752 = vunpack.c.l.b16 %v1727
      %v1753 = vunpack.c.l.b16 %v1728
      %v1754 = vpack.c.b16 %v1753, %v1752
      %v1757 = vunpack.c.l.b16 %v1729
      %v1758 = vunpack.c.l.b16 %v1730
      %v1759 = vpack.c.b16 %v1758, %v1757
      %v1761 = vshrl.u32 %v1759, 16
      %v1763 = vshll.u32 %v1759, 16
      %v1765 = vrot.slane %v1763, 1
      %v1766 = vor.u32 %v1761, %v1765
      %1767 = vrot.lane.b32.xlu0 %v1766, 64
      %v1768 = vpop.permute.xlu0 %1767
      %v1771 = vsel %vm261, %v1735, %v1749
      %v1774 = vsel %vm261, %v1754, %v1768
      %v1777 = vunpack.c.l.b16 %v1771
      %v1778 = vunpack.c.l.b16 %v1774
      %v1779 = vunpack.c.h.b16 %v1771
      %v1780 = vunpack.c.h.b16 %v1774
      %v1781 = vpack.c.b16 %v1778, %v1777
      %v1782 = vpack.c.b16 %v1780, %v1779
      %1785 = vst [vmem:[#allocation2 + $0x50] sm:$0xff] %v1781
      %1786 = vst [vmem:[#allocation2 + $0x58] sm:$0x11] %v1782
      %v1787 = vld [vmem:[%s748] sm:$0xf]
      %v1788 = vld [vmem:[%s748 + $0x4] sm:$0x1]
      %v1789 = vld [vmem:[%s745] sm:$0xf]
      %v1790 = vld [vmem:[%s745 + $0x4] sm:$0x3]
      %v1791 = vld [vmem:[%s754] sm:$0xf]
      %v1792 = vld [vmem:[%s754 + $0x4] sm:$0x1]
      %v1793 = vld [vmem:[%s751] sm:$0xf]
      %v1794 = vld [vmem:[%s751 + $0x4] sm:$0x3]
      %v1797 = vunpack.c.l.b16 %v1787
      %v1798 = vunpack.c.l.b16 %v1788
      %v1799 = vpack.c.b16 %v1798, %v1797
      %v1802 = vunpack.c.l.b16 %v1789
      %v1803 = vunpack.c.l.b16 %v1790
      %v1804 = vpack.c.b16 %v1803, %v1802
      %v1806 = vshrl.u32 %v1804, 16
      %v1808 = vshll.u32 %v1804, 16
      %v1810 = vrot.slane %v1808, 1
      %v1811 = vor.u32 %v1806, %v1810
      %1812 = vrot.lane.b32.xlu0 %v1811, 64
      %v1813 = vpop.permute.xlu0 %1812
      %v1816 = vunpack.c.l.b16 %v1791
      %v1817 = vunpack.c.l.b16 %v1792
      %v1818 = vpack.c.b16 %v1817, %v1816
      %v1821 = vunpack.c.l.b16 %v1793
      %v1822 = vunpack.c.l.b16 %v1794
      %v1823 = vpack.c.b16 %v1822, %v1821
      %v1825 = vshrl.u32 %v1823, 16
      %v1827 = vshll.u32 %v1823, 16
      %v1829 = vrot.slane %v1827, 1
      %v1830 = vor.u32 %v1825, %v1829
      %1831 = vrot.lane.b32.xlu0 %v1830, 64
      %v1832 = vpop.permute.xlu0 %1831
      %v1835 = vsel %vm261, %v1799, %v1813
      %v1838 = vsel %vm261, %v1818, %v1832
      %v1841 = vunpack.c.l.b16 %v1835
      %v1842 = vunpack.c.l.b16 %v1838
      %v1843 = vunpack.c.h.b16 %v1835
      %v1844 = vunpack.c.h.b16 %v1838
      %v1845 = vpack.c.b16 %v1842, %v1841
      %v1846 = vpack.c.b16 %v1844, %v1843
      %v1847 = vrot.slane %v1845, 7
      %v1848 = vrot.slane %v1847, 4
      %v1849 = vrot.slane %v1846, 7
      %v1850 = vsel %vm332, %v1848, %v1849
      %1853 = vst [vmem:[#allocation2 + $0x58] sm:$0xee] %v1847
      %1854 = vst [vmem:[#allocation2 + $0x60] sm:$0x33] %v1850
      %v1855 = vld [vmem:[#allocation2] sm:$0xff]
      %v1856 = vld [vmem:[#allocation2 + $0x8] sm:$0xff]
      %v1857 = vld [vmem:[#allocation2 + $0x10] sm:$0xff]
      %v1858 = vld [vmem:[#allocation2 + $0x18] sm:$0xff]
      %v1859 = vld [vmem:[#allocation2 + $0x20] sm:$0xff]
      %v1860 = vld [vmem:[#allocation2 + $0x28] sm:$0xff]
      %v1861 = vld [vmem:[#allocation2 + $0x30] sm:$0xff]
      %v1862 = vld [vmem:[#allocation2 + $0x38] sm:$0xff]
      %v1863 = vld [vmem:[#allocation2 + $0x40] sm:$0xff]
      %v1864 = vld [vmem:[#allocation2 + $0x48] sm:$0xff]
      %v1865 = vld [vmem:[#allocation2 + $0x50] sm:$0xff]
      %v1866 = vld [vmem:[#allocation2 + $0x58] sm:$0xff]
      %v1867 = vld [vmem:[#allocation2 + $0x60] sm:$0x33]
      %v1868 = vld [vmem:[%s1] sm:$0xf]
      %v1869 = vld [vmem:[%s1 + $0x4] sm:$0xf]
      %v1870 = vld [vmem:[%s1 + $0x8] sm:$0xf]
      %v1871 = vld [vmem:[%s1 + $0xc] sm:$0xf]
      %v1872 = vld [vmem:[%s1 + $0x10] sm:$0xf]
      %v1873 = vld [vmem:[%s1 + $0x14] sm:$0xf]
      %v1874 = vld [vmem:[%s1 + $0x18] sm:$0xf]
      %v1875 = vld [vmem:[%s1 + $0x1c] sm:$0xf]
      %v1876 = vld [vmem:[%s1 + $0x20] sm:$0xf]
      %v1877 = vld [vmem:[%s1 + $0x24] sm:$0xf]
      %v1878 = vld [vmem:[%s1 + $0x28] sm:$0xf]
      %v1879 = vld [vmem:[%s1 + $0x2c] sm:$0xf]
      %v1880 = vld [vmem:[%s1 + $0x30] sm:$0xf]
      %v1881 = vld [vmem:[%s1 + $0x34] sm:$0xf]
      %v1882 = vld [vmem:[%s1 + $0x38] sm:$0xf]
      %v1883 = vld [vmem:[%s1 + $0x3c] sm:$0xf]
      %v1884 = vld [vmem:[%s1 + $0x40] sm:$0xf]
      %v1885 = vld [vmem:[%s1 + $0x44] sm:$0xf]
      %v1886 = vld [vmem:[%s1 + $0x48] sm:$0xf]
      %v1887 = vld [vmem:[%s1 + $0x4c] sm:$0xf]
      %v1888 = vld [vmem:[%s1 + $0x50] sm:$0xf]
      %v1889 = vld [vmem:[%s1 + $0x54] sm:$0xf]
      %v1890 = vld [vmem:[%s1 + $0x58] sm:$0xf]
      %v1891 = vld [vmem:[%s1 + $0x5c] sm:$0xf]
      %v1892 = vld [vmem:[%s1 + $0x60] sm:$0xf]
      %v1893 = vld [vmem:[%s1 + $0x64] sm:$0xf]
      %v1894 = vld [vmem:[%s1 + $0x68] sm:$0xf]
      %v1895 = vld [vmem:[%s1 + $0x6c] sm:$0xf]
      %v1896 = vld [vmem:[%s1 + $0x70] sm:$0xf]
      %v1897 = vld [vmem:[%s1 + $0x74] sm:$0xf]
      %v1898 = vld [vmem:[%s1 + $0x78] sm:$0xf]
      %v1899 = vld [vmem:[%s1 + $0x7c] sm:$0xf]
      %v1900 = vld [vmem:[%s2] sm:$0x1]
      %v1902 = vlaneseq
      %v1903 = vshrl.u32 %v1902, 7
      %v1904 = vsub.s32 0, %v1903
      %v1905 = vrot.slane %v1900, %v1904
      %v1920 = vunpack.c.l.b16 %v1855
      %v1921 = vunpack.c.h.b16 %v1855
      %v1922 = vunpack.c.l.b16 %v1856
      %v1923 = vunpack.c.h.b16 %v1856
      %v1924 = vunpack.c.l.b16 %v1857
      %v1925 = vunpack.c.h.b16 %v1857
      %v1926 = vunpack.c.l.b16 %v1858
      %v1927 = vunpack.c.h.b16 %v1858
      %v1928 = vunpack.c.l.b16 %v1859
      %v1929 = vunpack.c.h.b16 %v1859
      %v1930 = vunpack.c.l.b16 %v1860
      %v1931 = vunpack.c.h.b16 %v1860
      %v1932 = vunpack.c.l.b16 %v1861
      %v1933 = vunpack.c.h.b16 %v1861
      %v1934 = vunpack.c.l.b16 %v1862
      %v1935 = vunpack.c.h.b16 %v1862
      %v1936 = vunpack.c.l.b16 %v1863
      %v1937 = vunpack.c.h.b16 %v1863
      %v1938 = vunpack.c.l.b16 %v1864
      %v1939 = vunpack.c.h.b16 %v1864
      %v1940 = vunpack.c.l.b16 %v1865
      %v1941 = vunpack.c.h.b16 %v1865
      %v1942 = vunpack.c.l.b16 %v1866
      %v1943 = vunpack.c.h.b16 %v1866
      %v1944 = vunpack.c.l.b16 %v1867
      %v1945 = vunpack.c.h.b16 %v1867
      %v1946 = vpack.c.b16 %v1922, %v1920
      %v1947 = vpack.c.b16 %v1923, %v1921
      %v1948 = vpack.c.b16 %v1926, %v1924
      %v1949 = vpack.c.b16 %v1927, %v1925
      %v1950 = vpack.c.b16 %v1930, %v1928
      %v1951 = vpack.c.b16 %v1931, %v1929
      %v1952 = vpack.c.b16 %v1934, %v1932
      %v1953 = vpack.c.b16 %v1935, %v1933
      %v1954 = vpack.c.b16 %v1938, %v1936
      %v1955 = vpack.c.b16 %v1939, %v1937
      %v1956 = vpack.c.b16 %v1942, %v1940
      %v1957 = vpack.c.b16 %v1943, %v1941
      %v1958 = vpack.c.b16 %v1944, %v1944
      %v1959 = vpack.c.b16 %v1945, %v1945
      %v2006 = vunpack.c.l.b16 %v1868
      %v2007 = vunpack.c.l.b16 %v1869
      %v2008 = vunpack.c.l.b16 %v1870
      %v2009 = vunpack.c.l.b16 %v1871
      %v2010 = vunpack.c.l.b16 %v1872
      %v2011 = vunpack.c.l.b16 %v1873
      %v2012 = vunpack.c.l.b16 %v1874
      %v2013 = vunpack.c.l.b16 %v1875
      %v2014 = vunpack.c.l.b16 %v1876
      %v2015 = vunpack.c.l.b16 %v1877
      %v2016 = vunpack.c.l.b16 %v1878
      %v2017 = vunpack.c.l.b16 %v1879
      %v2018 = vunpack.c.l.b16 %v1880
      %v2019 = vunpack.c.l.b16 %v1881
      %v2020 = vunpack.c.l.b16 %v1882
      %v2021 = vunpack.c.l.b16 %v1883
      %v2022 = vunpack.c.l.b16 %v1884
      %v2023 = vunpack.c.l.b16 %v1885
      %v2024 = vunpack.c.l.b16 %v1886
      %v2025 = vunpack.c.l.b16 %v1887
      %v2026 = vunpack.c.l.b16 %v1888
      %v2027 = vunpack.c.l.b16 %v1889
      %v2028 = vunpack.c.l.b16 %v1890
      %v2029 = vunpack.c.l.b16 %v1891
      %v2030 = vunpack.c.l.b16 %v1892
      %v2031 = vunpack.c.l.b16 %v1893
      %v2032 = vunpack.c.l.b16 %v1894
      %v2033 = vunpack.c.l.b16 %v1895
      %v2034 = vunpack.c.l.b16 %v1896
      %v2035 = vunpack.c.l.b16 %v1897
      %v2036 = vunpack.c.l.b16 %v1898
      %v2037 = vunpack.c.l.b16 %v1899
      %v2038 = vpack.c.b16 %v2007, %v2006
      %v2039 = vpack.c.b16 %v2009, %v2008
      %v2040 = vpack.c.b16 %v2011, %v2010
      %v2041 = vpack.c.b16 %v2013, %v2012
      %v2042 = vpack.c.b16 %v2015, %v2014
      %v2043 = vpack.c.b16 %v2017, %v2016
      %v2044 = vpack.c.b16 %v2019, %v2018
      %v2045 = vpack.c.b16 %v2021, %v2020
      %v2046 = vpack.c.b16 %v2023, %v2022
      %v2047 = vpack.c.b16 %v2025, %v2024
      %v2048 = vpack.c.b16 %v2027, %v2026
      %v2049 = vpack.c.b16 %v2029, %v2028
      %v2050 = vpack.c.b16 %v2031, %v2030
      %v2051 = vpack.c.b16 %v2033, %v2032
      %v2052 = vpack.c.b16 %v2035, %v2034
      %v2053 = vpack.c.b16 %v2037, %v2036
      %2070 = vmatprep.subr.bf16.mxu0 0
      %2071 = vmatpush1.bf16.msra.mxu0 %v2038
      %2072 = vmatprep.subr.bf16.mxu0 0
      %2073 = vmatpush1.bf16.msra.mxu0 %v2039
      %2074 = vmatprep.subr.bf16.mxu0 0
      %2075 = vmatpush1.bf16.msra.mxu0 %v2040
      %2076 = vmatprep.subr.bf16.mxu0 0
      %2077 = vmatpush1.bf16.msra.mxu0 %v2041
      %2078 = vmatprep.subr.bf16.mxu0 0
      %2079 = vmatpush1.bf16.msra.mxu0 %v2042
      %2080 = vmatprep.subr.bf16.mxu0 0
      %2081 = vmatpush1.bf16.msra.mxu0 %v2043
      %2082 = vmatprep.subr.bf16.mxu0 0
      %2083 = vmatpush1.bf16.msra.mxu0 %v2044
      %2084 = vmatprep.subr.bf16.mxu0 0
      %2085 = vmatpush1.bf16.msra.mxu0 %v2045
      %2086 = vmatprep.subr.bf16.mxu0 0
      %2087 = vmatpush1.bf16.msra.mxu0 %v2046
      %2088 = vmatprep.subr.bf16.mxu0 0
      %2089 = vmatpush1.bf16.msra.mxu0 %v2047
      %2090 = vmatprep.subr.bf16.mxu0 0
      %2091 = vmatpush1.bf16.msra.mxu0 %v2048
      %2092 = vmatprep.subr.bf16.mxu0 0
      %2093 = vmatpush1.bf16.msra.mxu0 %v2049
      %2094 = vmatprep.subr.bf16.mxu0 0
      %2095 = vmatpush1.bf16.msra.mxu0 %v2050
      %2096 = vmatprep.subr.bf16.mxu0 0
      %2097 = vmatpush1.bf16.msra.mxu0 %v2051
      %2098 = vmatprep.subr.bf16.mxu0 0
      %2099 = vmatpush1.bf16.msra.mxu0 %v2052
      %2100 = vmatprep.subr.bf16.mxu0 0
      %2101 = vmatpush1.bf16.msra.mxu0 %v2053
      %2102 = vmatprep.mubr.bf16.mxu0 %v1947
      %2103 = vmatmul.mubr.bf16.gmra.mrb[0].mxu0 %v1946
      %v2104 = vpop.f32.mrb[0].mxu0
      %v2105 = vadd.f32 %v1905, %v2104
      %v2106 = vpop.f32.mrb[0].mxu0
      %v2107 = vpop.f32.mrb[0].mxu0
      %v2108 = vadd.f32 %v1905, %v2107
      %v2109 = vpop.f32.mrb[0].mxu0
      %2110 = vmatprep.mubr.bf16.mxu0 %v1949
      %2111 = vmatmul.mubr.bf16.gmra.mrb[0].mxu0 %v1948
      %v2112 = vpop.f32.mrb[0].mxu0
      %v2113 = vadd.f32 %v1905, %v2112
      %v2114 = vpop.f32.mrb[0].mxu0
      %v2115 = vpop.f32.mrb[0].mxu0
      %v2116 = vadd.f32 %v1905, %v2115
      %v2117 = vpop.f32.mrb[0].mxu0
      %2118 = vmatprep.mubr.bf16.mxu0 %v1951
      %2119 = vmatmul.mubr.bf16.gmra.mrb[0].mxu0 %v1950
      %v2120 = vpop.f32.mrb[0].mxu0
      %v2121 = vadd.f32 %v1905, %v2120
      %v2122 = vpop.f32.mrb[0].mxu0
      %v2123 = vpop.f32.mrb[0].mxu0
      %v2124 = vadd.f32 %v1905, %v2123
      %v2125 = vpop.f32.mrb[0].mxu0
      %2126 = vmatprep.mubr.bf16.mxu0 %v1953
      %2127 = vmatmul.mubr.bf16.gmra.mrb[0].mxu0 %v1952
      %v2128 = vpop.f32.mrb[0].mxu0
      %v2129 = vadd.f32 %v1905, %v2128
      %v2130 = vpop.f32.mrb[0].mxu0
      %v2131 = vpop.f32.mrb[0].mxu0
      %v2132 = vadd.f32 %v1905, %v2131
      %v2133 = vpop.f32.mrb[0].mxu0
      %2134 = vmatprep.mubr.bf16.mxu0 %v1955
      %2135 = vmatmul.mubr.bf16.gmra.mrb[0].mxu0 %v1954
      %v2136 = vpop.f32.mrb[0].mxu0
      %v2137 = vadd.f32 %v1905, %v2136
      %v2138 = vpop.f32.mrb[0].mxu0
      %v2139 = vpop.f32.mrb[0].mxu0
      %v2140 = vadd.f32 %v1905, %v2139
      %v2141 = vpop.f32.mrb[0].mxu0
      %2142 = vmatprep.mubr.bf16.mxu0 %v1957
      %2143 = vmatmul.mubr.bf16.gmra.mrb[0].mxu0 %v1956
      %v2144 = vpop.f32.mrb[0].mxu0
      %v2145 = vadd.f32 %v1905, %v2144
      %v2146 = vpop.f32.mrb[0].mxu0
      %v2147 = vpop.f32.mrb[0].mxu0
      %v2148 = vadd.f32 %v1905, %v2147
      %v2149 = vpop.f32.mrb[0].mxu0
      %2150 = vmatprep.mubr.bf16.mxu0 %v1959
      %2151 = vmatmul.mubr.bf16.gmra.mrb[0].mxu0 %v1958
      %v2152 = vpop.f32.mrb[0].mxu0
      %v2153 = vadd.f32 %v1905, %v2152
      %v2154 = vpop.f32.mrb[0].mxu0
      %v2155 = vpop.f32.mrb[0].mxu0
      %v2156 = vpop.f32.mrb[0].mxu0
      %2157 = vdwg.mxu0
      %v2158 = vmax.f32 %v2105, 0.0
      %v2159 = vmax.f32 %v2108, 0.0
      %v2160 = vmax.f32 %v2113, 0.0
      %v2161 = vmax.f32 %v2116, 0.0
      %v2162 = vmax.f32 %v2121, 0.0
      %v2163 = vmax.f32 %v2124, 0.0
      %v2164 = vmax.f32 %v2129, 0.0
      %v2165 = vmax.f32 %v2132, 0.0
      %v2166 = vmax.f32 %v2137, 0.0
      %v2167 = vmax.f32 %v2140, 0.0
      %v2168 = vmax.f32 %v2145, 0.0
      %v2169 = vmax.f32 %v2148, 0.0
      %v2170 = vmax.f32 %v2153, 0.0
      %v2171 = vpack.c.bf16 %v2159, %v2158
      %v2172 = vpack.c.bf16 %v2161, %v2160
      %v2173 = vpack.c.bf16 %v2163, %v2162
      %v2174 = vpack.c.bf16 %v2165, %v2164
      %v2175 = vpack.c.bf16 %v2167, %v2166
      %v2176 = vpack.c.bf16 %v2169, %v2168
      %v2177 = vpack.c.bf16 %v2170, %v2170
      %v2185 = vunpack.c.l.b16 %v2171
      %v2186 = vunpack.c.h.b16 %v2171
      %v2187 = vunpack.c.l.b16 %v2172
      %v2188 = vunpack.c.h.b16 %v2172
      %v2189 = vunpack.c.l.b16 %v2173
      %v2190 = vunpack.c.h.b16 %v2173
      %v2191 = vunpack.c.l.b16 %v2174
      %v2192 = vunpack.c.h.b16 %v2174
      %v2193 = vunpack.c.l.b16 %v2175
      %v2194 = vunpack.c.h.b16 %v2175
      %v2195 = vunpack.c.l.b16 %v2176
      %v2196 = vunpack.c.h.b16 %v2176
      %v2197 = vunpack.c.l.b16 %v2177
      %v2198 = vpack.c.b16 %v2185, %v2185
      %v2199 = vpack.c.b16 %v2186, %v2186
      %v2200 = vpack.c.b16 %v2187, %v2187
      %v2201 = vpack.c.b16 %v2188, %v2188
      %v2202 = vpack.c.b16 %v2189, %v2189
      %v2203 = vpack.c.b16 %v2190, %v2190
      %v2204 = vpack.c.b16 %v2191, %v2191
      %v2205 = vpack.c.b16 %v2192, %v2192
      %v2206 = vpack.c.b16 %v2193, %v2193
      %v2207 = vpack.c.b16 %v2194, %v2194
      %v2208 = vpack.c.b16 %v2195, %v2195
      %v2209 = vpack.c.b16 %v2196, %v2196
      %v2210 = vpack.c.b16 %v2197, %v2197
      %2211 = vrot.lane.b32.xlu0 %v2198, 16
      %v2212 = vpop.permute.xlu0 %2211
      %2213 = vrot.lane.b32.xlu0 %v2199, 16
      %v2214 = vpop.permute.xlu0 %2213
      %2215 = vrot.lane.b32.xlu0 %v2200, 16
      %v2216 = vpop.permute.xlu0 %2215
      %2217 = vrot.lane.b32.xlu0 %v2201, 16
      %v2218 = vpop.permute.xlu0 %2217
      %2219 = vrot.lane.b32.xlu0 %v2202, 16
      %v2220 = vpop.permute.xlu0 %2219
      %2221 = vrot.lane.b32.xlu0 %v2203, 16
      %v2222 = vpop.permute.xlu0 %2221
      %2223 = vrot.lane.b32.xlu0 %v2204, 16
      %v2224 = vpop.permute.xlu0 %2223
      %2225 = vrot.lane.b32.xlu0 %v2205, 16
      %v2226 = vpop.permute.xlu0 %2225
      %2227 = vrot.lane.b32.xlu0 %v2206, 16
      %v2228 = vpop.permute.xlu0 %2227
      %2229 = vrot.lane.b32.xlu0 %v2207, 16
      %v2230 = vpop.permute.xlu0 %2229
      %2231 = vrot.lane.b32.xlu0 %v2208, 16
      %v2232 = vpop.permute.xlu0 %2231
      %2233 = vrot.lane.b32.xlu0 %v2209, 16
      %v2234 = vpop.permute.xlu0 %2233
      %2235 = vrot.lane.b32.xlu0 %v2210, 16
      %v2236 = vpop.permute.xlu0 %2235
      %vm2250 = vcmask 257152
      %2251 = vst.msk [vmem:[#allocation3] sm:$0xf] %vm2250, %v2212
      %2252 = vst.msk [vmem:[#allocation3 + $0x4] sm:$0xf] %vm2250, %v2214
      %2253 = vst.msk [vmem:[#allocation3 + $0x8] sm:$0xf] %vm2250, %v2216
      %2254 = vst.msk [vmem:[#allocation3 + $0xc] sm:$0xf] %vm2250, %v2218
      %2255 = vst.msk [vmem:[#allocation3 + $0x10] sm:$0xf] %vm2250, %v2220
      %2256 = vst.msk [vmem:[#allocation3 + $0x14] sm:$0xf] %vm2250, %v2222
      %2257 = vst.msk [vmem:[#allocation3 + $0x18] sm:$0xf] %vm2250, %v2224
      %2258 = vst.msk [vmem:[#allocation3 + $0x1c] sm:$0xf] %vm2250, %v2226
      %2259 = vst.msk [vmem:[#allocation3 + $0x20] sm:$0xf] %vm2250, %v2228
      %2260 = vst.msk [vmem:[#allocation3 + $0x24] sm:$0xf] %vm2250, %v2230
      %2261 = vst.msk [vmem:[#allocation3 + $0x28] sm:$0xf] %vm2250, %v2232
      %2262 = vst.msk [vmem:[#allocation3 + $0x2c] sm:$0xf] %vm2250, %v2234
      %vm2263 = vcmask 255104
      %2264 = vst.msk [vmem:[#allocation3 + $0x30] sm:$0x3] %vm2263, %v2236
      %v2265 = vld [vmem:[%s231] sm:$0xf]
      %v2266 = vld [vmem:[%s231 + $0x4] sm:$0x1]
      %v2267 = vld [vmem:[%s234] sm:$0xf]
      %v2268 = vld [vmem:[%s234 + $0x4] sm:$0x1]
      %v2269 = vld [vmem:[%s280] sm:$0xf]
      %v2270 = vld [vmem:[%s280 + $0x4] sm:$0x1]
      %v2271 = vld [vmem:[%s283] sm:$0xf]
      %v2272 = vld [vmem:[%s283 + $0x4] sm:$0x1]
      %v2275 = vunpack.c.l.b16 %v2265
      %v2276 = vunpack.c.l.b16 %v2266
      %v2277 = vpack.c.b16 %v2276, %v2275
      %v2280 = vunpack.c.l.b16 %v2267
      %v2281 = vunpack.c.l.b16 %v2268
      %v2282 = vpack.c.b16 %v2281, %v2280
      %2283 = vrot.lane.b32.xlu0 %v2282, 64
      %v2284 = vpop.permute.xlu0 %2283
      %v2287 = vunpack.c.l.b16 %v2269
      %v2288 = vunpack.c.l.b16 %v2270
      %v2289 = vpack.c.b16 %v2288, %v2287
      %v2292 = vunpack.c.l.b16 %v2271
      %v2293 = vunpack.c.l.b16 %v2272
      %v2294 = vpack.c.b16 %v2293, %v2292
      %2295 = vrot.lane.b32.xlu0 %v2294, 64
      %v2296 = vpop.permute.xlu0 %2295
      %v2299 = vsel %vm261, %v2277, %v2284
      %v2302 = vsel %vm261, %v2289, %v2296
      %v2305 = vunpack.c.l.b16 %v2299
      %v2306 = vunpack.c.l.b16 %v2302
      %v2307 = vunpack.c.h.b16 %v2299
      %v2308 = vunpack.c.h.b16 %v2302
      %v2309 = vpack.c.b16 %v2306, %v2305
      %v2310 = vpack.c.b16 %v2308, %v2307
      %2313 = vst [vmem:[#allocation2] sm:$0xff] %v2309
      %2314 = vst [vmem:[#allocation2 + $0x8] sm:$0x11] %v2310
      %v2315 = vld [vmem:[%s286] sm:$0xf]
      %v2316 = vld [vmem:[%s286 + $0x4] sm:$0x1]
      %v2317 = vld [vmem:[%s289] sm:$0xf]
      %v2318 = vld [vmem:[%s289 + $0x4] sm:$0x1]
      %v2319 = vld [vmem:[%s341] sm:$0xf]
      %v2320 = vld [vmem:[%s341 + $0x4] sm:$0x1]
      %v2321 = vld [vmem:[%s344] sm:$0xf]
      %v2322 = vld [vmem:[%s344 + $0x4] sm:$0x1]
      %v2325 = vunpack.c.l.b16 %v2315
      %v2326 = vunpack.c.l.b16 %v2316
      %v2327 = vpack.c.b16 %v2326, %v2325
      %v2330 = vunpack.c.l.b16 %v2317
      %v2331 = vunpack.c.l.b16 %v2318
      %v2332 = vpack.c.b16 %v2331, %v2330
      %2333 = vrot.lane.b32.xlu0 %v2332, 64
      %v2334 = vpop.permute.xlu0 %2333
      %v2337 = vunpack.c.l.b16 %v2319
      %v2338 = vunpack.c.l.b16 %v2320
      %v2339 = vpack.c.b16 %v2338, %v2337
      %v2342 = vunpack.c.l.b16 %v2321
      %v2343 = vunpack.c.l.b16 %v2322
      %v2344 = vpack.c.b16 %v2343, %v2342
      %2345 = vrot.lane.b32.xlu0 %v2344, 64
      %v2346 = vpop.permute.xlu0 %2345
      %v2349 = vsel %vm261, %v2327, %v2334
      %v2352 = vsel %vm261, %v2339, %v2346
      %v2355 = vunpack.c.l.b16 %v2349
      %v2356 = vunpack.c.l.b16 %v2352
      %v2357 = vunpack.c.h.b16 %v2349
      %v2358 = vunpack.c.h.b16 %v2352
      %v2359 = vpack.c.b16 %v2356, %v2355
      %v2360 = vpack.c.b16 %v2358, %v2357
      %v2361 = vrot.slane %v2359, 7
      %v2362 = vrot.slane %v2361, 4
      %v2363 = vrot.slane %v2360, 7
      %v2364 = vsel %vm332, %v2362, %v2363
      %2367 = vst [vmem:[#allocation2 + $0x8] sm:$0xee] %v2361
      %2368 = vst [vmem:[#allocation2 + $0x10] sm:$0x33] %v2364
      %v2369 = vld [vmem:[%s347] sm:$0xf]
      %v2370 = vld [vmem:[%s347 + $0x4] sm:$0x1]
      %v2371 = vld [vmem:[%s350] sm:$0xf]
      %v2372 = vld [vmem:[%s350 + $0x4] sm:$0x1]
      %v2373 = vld [vmem:[%s402] sm:$0xf]
      %v2374 = vld [vmem:[%s402 + $0x4] sm:$0x1]
      %v2375 = vld [vmem:[%s405] sm:$0xf]
      %v2376 = vld [vmem:[%s405 + $0x4] sm:$0x1]
      %v2379 = vunpack.c.l.b16 %v2369
      %v2380 = vunpack.c.l.b16 %v2370
      %v2381 = vpack.c.b16 %v2380, %v2379
      %v2384 = vunpack.c.l.b16 %v2371
      %v2385 = vunpack.c.l.b16 %v2372
      %v2386 = vpack.c.b16 %v2385, %v2384
      %2387 = vrot.lane.b32.xlu0 %v2386, 64
      %v2388 = vpop.permute.xlu0 %2387
      %v2391 = vunpack.c.l.b16 %v2373
      %v2392 = vunpack.c.l.b16 %v2374
      %v2393 = vpack.c.b16 %v2392, %v2391
      %v2396 = vunpack.c.l.b16 %v2375
      %v2397 = vunpack.c.l.b16 %v2376
      %v2398 = vpack.c.b16 %v2397, %v2396
      %2399 = vrot.lane.b32.xlu0 %v2398, 64
      %v2400 = vpop.permute.xlu0 %2399
      %v2403 = vsel %vm261, %v2381, %v2388
      %v2406 = vsel %vm261, %v2393, %v2400
      %v2409 = vunpack.c.l.b16 %v2403
      %v2410 = vunpack.c.l.b16 %v2406
      %v2411 = vunpack.c.h.b16 %v2403
      %v2412 = vunpack.c.h.b16 %v2406
      %v2413 = vpack.c.b16 %v2410, %v2409
      %v2414 = vpack.c.b16 %v2412, %v2411
      %v2415 = vrot.slane %v2413, 6
      %v2416 = vrot.slane %v2415, 4
      %v2417 = vrot.slane %v2414, 6
      %v2418 = vsel %vm393, %v2416, %v2417
      %2421 = vst [vmem:[#allocation2 + $0x10] sm:$0xcc] %v2415
      %2422 = vst [vmem:[#allocation2 + $0x18] sm:$0x77] %v2418
      %v2423 = vld [vmem:[%s408] sm:$0xf]
      %v2424 = vld [vmem:[%s408 + $0x4] sm:$0x1]
      %v2425 = vld [vmem:[%s411] sm:$0xf]
      %v2426 = vld [vmem:[%s411 + $0x4] sm:$0x1]
      %v2427 = vld [vmem:[%s463] sm:$0xf]
      %v2428 = vld [vmem:[%s463 + $0x4] sm:$0x1]
      %v2429 = vld [vmem:[%s466] sm:$0xf]
      %v2430 = vld [vmem:[%s466 + $0x4] sm:$0x1]
      %v2433 = vunpack.c.l.b16 %v2423
      %v2434 = vunpack.c.l.b16 %v2424
      %v2435 = vpack.c.b16 %v2434, %v2433
      %v2438 = vunpack.c.l.b16 %v2425
      %v2439 = vunpack.c.l.b16 %v2426
      %v2440 = vpack.c.b16 %v2439, %v2438
      %2441 = vrot.lane.b32.xlu0 %v2440, 64
      %v2442 = vpop.permute.xlu0 %2441
      %v2445 = vunpack.c.l.b16 %v2427
      %v2446 = vunpack.c.l.b16 %v2428
      %v2447 = vpack.c.b16 %v2446, %v2445
      %v2450 = vunpack.c.l.b16 %v2429
      %v2451 = vunpack.c.l.b16 %v2430
      %v2452 = vpack.c.b16 %v2451, %v2450
      %2453 = vrot.lane.b32.xlu0 %v2452, 64
      %v2454 = vpop.permute.xlu0 %2453
      %v2457 = vsel %vm261, %v2435, %v2442
      %v2460 = vsel %vm261, %v2447, %v2454
      %v2463 = vunpack.c.l.b16 %v2457
      %v2464 = vunpack.c.l.b16 %v2460
      %v2465 = vunpack.c.h.b16 %v2457
      %v2466 = vunpack.c.h.b16 %v2460
      %v2467 = vpack.c.b16 %v2464, %v2463
      %v2468 = vpack.c.b16 %v2466, %v2465
      %v2469 = vrot.slane %v2467, 5
      %v2470 = vrot.slane %v2469, 4
      %v2471 = vrot.slane %v2468, 5
      %v2472 = vsel %vm454, %v2470, %v2471
      %2475 = vst [vmem:[#allocation2 + $0x18] sm:$0x88] %v2469
      %2476 = vst [vmem:[#allocation2 + $0x20] sm:$0xff] %v2472
      %v2477 = vld [vmem:[%s469] sm:$0xf]
      %v2478 = vld [vmem:[%s469 + $0x4] sm:$0x1]
      %v2479 = vld [vmem:[%s472] sm:$0xf]
      %v2480 = vld [vmem:[%s472 + $0x4] sm:$0x1]
      %v2481 = vld [vmem:[%s517] sm:$0xf]
      %v2482 = vld [vmem:[%s517 + $0x4] sm:$0x1]
      %v2483 = vld [vmem:[%s520] sm:$0xf]
      %v2484 = vld [vmem:[%s520 + $0x4] sm:$0x1]
      %v2487 = vunpack.c.l.b16 %v2477
      %v2488 = vunpack.c.l.b16 %v2478
      %v2489 = vpack.c.b16 %v2488, %v2487
      %v2492 = vunpack.c.l.b16 %v2479
      %v2493 = vunpack.c.l.b16 %v2480
      %v2494 = vpack.c.b16 %v2493, %v2492
      %2495 = vrot.lane.b32.xlu0 %v2494, 64
      %v2496 = vpop.permute.xlu0 %2495
      %v2499 = vunpack.c.l.b16 %v2481
      %v2500 = vunpack.c.l.b16 %v2482
      %v2501 = vpack.c.b16 %v2500, %v2499
      %v2504 = vunpack.c.l.b16 %v2483
      %v2505 = vunpack.c.l.b16 %v2484
      %v2506 = vpack.c.b16 %v2505, %v2504
      %2507 = vrot.lane.b32.xlu0 %v2506, 64
      %v2508 = vpop.permute.xlu0 %2507
      %v2511 = vsel %vm261, %v2489, %v2496
      %v2514 = vsel %vm261, %v2501, %v2508
      %v2517 = vunpack.c.l.b16 %v2511
      %v2518 = vunpack.c.l.b16 %v2514
      %v2519 = vunpack.c.h.b16 %v2511
      %v2520 = vunpack.c.h.b16 %v2514
      %v2521 = vpack.c.b16 %v2518, %v2517
      %v2522 = vpack.c.b16 %v2520, %v2519
      %2525 = vst [vmem:[#allocation2 + $0x28] sm:$0xff] %v2521
      %2526 = vst [vmem:[#allocation2 + $0x30] sm:$0x11] %v2522
      %v2527 = vld [vmem:[%s523] sm:$0xf]
      %v2528 = vld [vmem:[%s523 + $0x4] sm:$0x1]
      %v2529 = vld [vmem:[%s526] sm:$0xf]
      %v2530 = vld [vmem:[%s526 + $0x4] sm:$0x1]
      %v2531 = vld [vmem:[%s575] sm:$0xf]
      %v2532 = vld [vmem:[%s575 + $0x4] sm:$0x1]
      %v2533 = vld [vmem:[%s578] sm:$0xf]
      %v2534 = vld [vmem:[%s578 + $0x4] sm:$0x1]
      %v2537 = vunpack.c.l.b16 %v2527
      %v2538 = vunpack.c.l.b16 %v2528
      %v2539 = vpack.c.b16 %v2538, %v2537
      %v2542 = vunpack.c.l.b16 %v2529
      %v2543 = vunpack.c.l.b16 %v2530
      %v2544 = vpack.c.b16 %v2543, %v2542
      %2545 = vrot.lane.b32.xlu0 %v2544, 64
      %v2546 = vpop.permute.xlu0 %2545
      %v2549 = vunpack.c.l.b16 %v2531
      %v2550 = vunpack.c.l.b16 %v2532
      %v2551 = vpack.c.b16 %v2550, %v2549
      %v2554 = vunpack.c.l.b16 %v2533
      %v2555 = vunpack.c.l.b16 %v2534
      %v2556 = vpack.c.b16 %v2555, %v2554
      %2557 = vrot.lane.b32.xlu0 %v2556, 64
      %v2558 = vpop.permute.xlu0 %2557
      %v2561 = vsel %vm261, %v2539, %v2546
      %v2564 = vsel %vm261, %v2551, %v2558
      %v2567 = vunpack.c.l.b16 %v2561
      %v2568 = vunpack.c.l.b16 %v2564
      %v2569 = vunpack.c.h.b16 %v2561
      %v2570 = vunpack.c.h.b16 %v2564
      %v2571 = vpack.c.b16 %v2568, %v2567
      %v2572 = vpack.c.b16 %v2570, %v2569
      %v2573 = vrot.slane %v2571, 7
      %v2574 = vrot.slane %v2573, 4
      %v2575 = vrot.slane %v2572, 7
      %v2576 = vsel %vm332, %v2574, %v2575
      %2579 = vst [vmem:[#allocation2 + $0x30] sm:$0xee] %v2573
      %2580 = vst [vmem:[#allocation2 + $0x38] sm:$0x33] %v2576
      %v2581 = vld [vmem:[%s581] sm:$0xf]
      %v2582 = vld [vmem:[%s581 + $0x4] sm:$0x1]
      %v2583 = vld [vmem:[%s584] sm:$0xf]
      %v2584 = vld [vmem:[%s584 + $0x4] sm:$0x1]
      %v2585 = vld [vmem:[%s633] sm:$0xf]
      %v2586 = vld [vmem:[%s633 + $0x4] sm:$0x1]
      %v2587 = vld [vmem:[%s636] sm:$0xf]
      %v2588 = vld [vmem:[%s636 + $0x4] sm:$0x1]
      %v2591 = vunpack.c.l.b16 %v2581
      %v2592 = vunpack.c.l.b16 %v2582
      %v2593 = vpack.c.b16 %v2592, %v2591
      %v2596 = vunpack.c.l.b16 %v2583
      %v2597 = vunpack.c.l.b16 %v2584
      %v2598 = vpack.c.b16 %v2597, %v2596
      %2599 = vrot.lane.b32.xlu0 %v2598, 64
      %v2600 = vpop.permute.xlu0 %2599
      %v2603 = vunpack.c.l.b16 %v2585
      %v2604 = vunpack.c.l.b16 %v2586
      %v2605 = vpack.c.b16 %v2604, %v2603
      %v2608 = vunpack.c.l.b16 %v2587
      %v2609 = vunpack.c.l.b16 %v2588
      %v2610 = vpack.c.b16 %v2609, %v2608
      %2611 = vrot.lane.b32.xlu0 %v2610, 64
      %v2612 = vpop.permute.xlu0 %2611
      %v2615 = vsel %vm261, %v2593, %v2600
      %v2618 = vsel %vm261, %v2605, %v2612
      %v2621 = vunpack.c.l.b16 %v2615
      %v2622 = vunpack.c.l.b16 %v2618
      %v2623 = vunpack.c.h.b16 %v2615
      %v2624 = vunpack.c.h.b16 %v2618
      %v2625 = vpack.c.b16 %v2622, %v2621
      %v2626 = vpack.c.b16 %v2624, %v2623
      %v2627 = vrot.slane %v2625, 6
      %v2628 = vrot.slane %v2627, 4
      %v2629 = vrot.slane %v2626, 6
      %v2630 = vsel %vm393, %v2628, %v2629
      %2633 = vst [vmem:[#allocation2 + $0x38] sm:$0xcc] %v2627
      %2634 = vst [vmem:[#allocation2 + $0x40] sm:$0x77] %v2630
      %v2635 = vld [vmem:[%s639] sm:$0xf]
      %v2636 = vld [vmem:[%s639 + $0x4] sm:$0x1]
      %v2637 = vld [vmem:[%s642] sm:$0xf]
      %v2638 = vld [vmem:[%s642 + $0x4] sm:$0x1]
      %v2639 = vld [vmem:[%s691] sm:$0xf]
      %v2640 = vld [vmem:[%s691 + $0x4] sm:$0x1]
      %v2641 = vld [vmem:[%s694] sm:$0xf]
      %v2642 = vld [vmem:[%s694 + $0x4] sm:$0x1]
      %v2645 = vunpack.c.l.b16 %v2635
      %v2646 = vunpack.c.l.b16 %v2636
      %v2647 = vpack.c.b16 %v2646, %v2645
      %v2650 = vunpack.c.l.b16 %v2637
      %v2651 = vunpack.c.l.b16 %v2638
      %v2652 = vpack.c.b16 %v2651, %v2650
      %2653 = vrot.lane.b32.xlu0 %v2652, 64
      %v2654 = vpop.permute.xlu0 %2653
      %v2657 = vunpack.c.l.b16 %v2639
      %v2658 = vunpack.c.l.b16 %v2640
      %v2659 = vpack.c.b16 %v2658, %v2657
      %v2662 = vunpack.c.l.b16 %v2641
      %v2663 = vunpack.c.l.b16 %v2642
      %v2664 = vpack.c.b16 %v2663, %v2662
      %2665 = vrot.lane.b32.xlu0 %v2664, 64
      %v2666 = vpop.permute.xlu0 %2665
      %v2669 = vsel %vm261, %v2647, %v2654
      %v2672 = vsel %vm261, %v2659, %v2666
      %v2675 = vunpack.c.l.b16 %v2669
      %v2676 = vunpack.c.l.b16 %v2672
      %v2677 = vunpack.c.h.b16 %v2669
      %v2678 = vunpack.c.h.b16 %v2672
      %v2679 = vpack.c.b16 %v2676, %v2675
      %v2680 = vpack.c.b16 %v2678, %v2677
      %v2681 = vrot.slane %v2679, 5
      %v2682 = vrot.slane %v2681, 4
      %v2683 = vrot.slane %v2680, 5
      %v2684 = vsel %vm454, %v2682, %v2683
      %2687 = vst [vmem:[#allocation2 + $0x40] sm:$0x88] %v2681
      %2688 = vst [vmem:[#allocation2 + $0x48] sm:$0xff] %v2684
      %v2689 = vld [vmem:[%s697] sm:$0xf]
      %v2690 = vld [vmem:[%s697 + $0x4] sm:$0x1]
      %v2691 = vld [vmem:[%s700] sm:$0xf]
      %v2692 = vld [vmem:[%s700 + $0x4] sm:$0x1]
      %v2693 = vld [vmem:[%s745] sm:$0xf]
      %v2694 = vld [vmem:[%s745 + $0x4] sm:$0x1]
      %v2695 = vld [vmem:[%s748] sm:$0xf]
      %v2696 = vld [vmem:[%s748 + $0x4] sm:$0x1]
      %v2699 = vunpack.c.l.b16 %v2689
      %v2700 = vunpack.c.l.b16 %v2690
      %v2701 = vpack.c.b16 %v2700, %v2699
      %v2704 = vunpack.c.l.b16 %v2691
      %v2705 = vunpack.c.l.b16 %v2692
      %v2706 = vpack.c.b16 %v2705, %v2704
      %2707 = vrot.lane.b32.xlu0 %v2706, 64
      %v2708 = vpop.permute.xlu0 %2707
      %v2711 = vunpack.c.l.b16 %v2693
      %v2712 = vunpack.c.l.b16 %v2694
      %v2713 = vpack.c.b16 %v2712, %v2711
      %v2716 = vunpack.c.l.b16 %v2695
      %v2717 = vunpack.c.l.b16 %v2696
      %v2718 = vpack.c.b16 %v2717, %v2716
      %2719 = vrot.lane.b32.xlu0 %v2718, 64
      %v2720 = vpop.permute.xlu0 %2719
      %v2723 = vsel %vm261, %v2701, %v2708
      %v2726 = vsel %vm261, %v2713, %v2720
      %v2729 = vunpack.c.l.b16 %v2723
      %v2730 = vunpack.c.l.b16 %v2726
      %v2731 = vunpack.c.h.b16 %v2723
      %v2732 = vunpack.c.h.b16 %v2726
      %v2733 = vpack.c.b16 %v2730, %v2729
      %v2734 = vpack.c.b16 %v2732, %v2731
      %2737 = vst [vmem:[#allocation2 + $0x50] sm:$0xff] %v2733
      %2738 = vst [vmem:[#allocation2 + $0x58] sm:$0x11] %v2734
      %v2739 = vld [vmem:[%s751] sm:$0xf]
      %v2740 = vld [vmem:[%s751 + $0x4] sm:$0x1]
      %v2741 = vld [vmem:[%s754] sm:$0xf]
      %v2742 = vld [vmem:[%s754 + $0x4] sm:$0x1]
      %s2743 = scalar_lea.vmem %s219, 80
      %v2744 = vld [vmem:[%s2743] sm:$0xf]
      %v2745 = vld [vmem:[%s2743 + $0x4] sm:$0x1]
      %s2746 = scalar_lea.vmem %s219, 168
      %v2747 = vld [vmem:[%s2746] sm:$0xf]
      %v2748 = vld [vmem:[%s2746 + $0x4] sm:$0x1]
      %v2751 = vunpack.c.l.b16 %v2739
      %v2752 = vunpack.c.l.b16 %v2740
      %v2753 = vpack.c.b16 %v2752, %v2751
      %v2756 = vunpack.c.l.b16 %v2741
      %v2757 = vunpack.c.l.b16 %v2742
      %v2758 = vpack.c.b16 %v2757, %v2756
      %2759 = vrot.lane.b32.xlu0 %v2758, 64
      %v2760 = vpop.permute.xlu0 %2759
      %v2763 = vunpack.c.l.b16 %v2744
      %v2764 = vunpack.c.l.b16 %v2745
      %v2765 = vpack.c.b16 %v2764, %v2763
      %v2768 = vunpack.c.l.b16 %v2747
      %v2769 = vunpack.c.l.b16 %v2748
      %v2770 = vpack.c.b16 %v2769, %v2768
      %2771 = vrot.lane.b32.xlu0 %v2770, 64
      %v2772 = vpop.permute.xlu0 %2771
      %v2775 = vsel %vm261, %v2753, %v2760
      %v2778 = vsel %vm261, %v2765, %v2772
      %v2781 = vunpack.c.l.b16 %v2775
      %v2782 = vunpack.c.l.b16 %v2778
      %v2783 = vunpack.c.h.b16 %v2775
      %v2784 = vunpack.c.h.b16 %v2778
      %v2785 = vpack.c.b16 %v2782, %v2781
      %v2786 = vpack.c.b16 %v2784, %v2783
      %v2787 = vrot.slane %v2785, 7
      %v2788 = vrot.slane %v2787, 4
      %v2789 = vrot.slane %v2786, 7
      %v2790 = vsel %vm332, %v2788, %v2789
      %2793 = vst [vmem:[#allocation2 + $0x58] sm:$0xee] %v2787
      %2794 = vst [vmem:[#allocation2 + $0x60] sm:$0x33] %v2790
      %v2795 = vld [vmem:[#allocation2] sm:$0xff]
      %v2796 = vld [vmem:[#allocation2 + $0x8] sm:$0xff]
      %v2797 = vld [vmem:[#allocation2 + $0x10] sm:$0xff]
      %v2798 = vld [vmem:[#allocation2 + $0x18] sm:$0xff]
      %v2799 = vld [vmem:[#allocation2 + $0x20] sm:$0xff]
      %v2800 = vld [vmem:[#allocation2 + $0x28] sm:$0xff]
      %v2801 = vld [vmem:[#allocation2 + $0x30] sm:$0xff]
      %v2802 = vld [vmem:[#allocation2 + $0x38] sm:$0xff]
      %v2803 = vld [vmem:[#allocation2 + $0x40] sm:$0xff]
      %v2804 = vld [vmem:[#allocation2 + $0x48] sm:$0xff]
      %v2805 = vld [vmem:[#allocation2 + $0x50] sm:$0xff]
      %v2806 = vld [vmem:[#allocation2 + $0x58] sm:$0xff]
      %v2807 = vld [vmem:[#allocation2 + $0x60] sm:$0x33]
      %v2808 = vld [vmem:[%s1] sm:$0xf]
      %v2809 = vld [vmem:[%s1 + $0x4] sm:$0xf]
      %v2810 = vld [vmem:[%s1 + $0x8] sm:$0xf]
      %v2811 = vld [vmem:[%s1 + $0xc] sm:$0xf]
      %v2812 = vld [vmem:[%s1 + $0x10] sm:$0xf]
      %v2813 = vld [vmem:[%s1 + $0x14] sm:$0xf]
      %v2814 = vld [vmem:[%s1 + $0x18] sm:$0xf]
      %v2815 = vld [vmem:[%s1 + $0x1c] sm:$0xf]
      %v2816 = vld [vmem:[%s1 + $0x20] sm:$0xf]
      %v2817 = vld [vmem:[%s1 + $0x24] sm:$0xf]
      %v2818 = vld [vmem:[%s1 + $0x28] sm:$0xf]
      %v2819 = vld [vmem:[%s1 + $0x2c] sm:$0xf]
      %v2820 = vld [vmem:[%s1 + $0x30] sm:$0xf]
      %v2821 = vld [vmem:[%s1 + $0x34] sm:$0xf]
      %v2822 = vld [vmem:[%s1 + $0x38] sm:$0xf]
      %v2823 = vld [vmem:[%s1 + $0x3c] sm:$0xf]
      %v2824 = vld [vmem:[%s1 + $0x40] sm:$0xf]
      %v2825 = vld [vmem:[%s1 + $0x44] sm:$0xf]
      %v2826 = vld [vmem:[%s1 + $0x48] sm:$0xf]
      %v2827 = vld [vmem:[%s1 + $0x4c] sm:$0xf]
      %v2828 = vld [vmem:[%s1 + $0x50] sm:$0xf]
      %v2829 = vld [vmem:[%s1 + $0x54] sm:$0xf]
      %v2830 = vld [vmem:[%s1 + $0x58] sm:$0xf]
      %v2831 = vld [vmem:[%s1 + $0x5c] sm:$0xf]
      %v2832 = vld [vmem:[%s1 + $0x60] sm:$0xf]
      %v2833 = vld [vmem:[%s1 + $0x64] sm:$0xf]
      %v2834 = vld [vmem:[%s1 + $0x68] sm:$0xf]
      %v2835 = vld [vmem:[%s1 + $0x6c] sm:$0xf]
      %v2836 = vld [vmem:[%s1 + $0x70] sm:$0xf]
      %v2837 = vld [vmem:[%s1 + $0x74] sm:$0xf]
      %v2838 = vld [vmem:[%s1 + $0x78] sm:$0xf]
      %v2839 = vld [vmem:[%s1 + $0x7c] sm:$0xf]
      %v2840 = vld [vmem:[%s2] sm:$0x1]
      %v2842 = vlaneseq
      %v2843 = vshrl.u32 %v2842, 7
      %v2844 = vsub.s32 0, %v2843
      %v2845 = vrot.slane %v2840, %v2844
      %v2860 = vunpack.c.l.b16 %v2795
      %v2861 = vunpack.c.h.b16 %v2795
      %v2862 = vunpack.c.l.b16 %v2796
      %v2863 = vunpack.c.h.b16 %v2796
      %v2864 = vunpack.c.l.b16 %v2797
      %v2865 = vunpack.c.h.b16 %v2797
      %v2866 = vunpack.c.l.b16 %v2798
      %v2867 = vunpack.c.h.b16 %v2798
      %v2868 = vunpack.c.l.b16 %v2799
      %v2869 = vunpack.c.h.b16 %v2799
      %v2870 = vunpack.c.l.b16 %v2800
      %v2871 = vunpack.c.h.b16 %v2800
      %v2872 = vunpack.c.l.b16 %v2801
      %v2873 = vunpack.c.h.b16 %v2801
      %v2874 = vunpack.c.l.b16 %v2802
      %v2875 = vunpack.c.h.b16 %v2802
      %v2876 = vunpack.c.l.b16 %v2803
      %v2877 = vunpack.c.h.b16 %v2803
      %v2878 = vunpack.c.l.b16 %v2804
      %v2879 = vunpack.c.h.b16 %v2804
      %v2880 = vunpack.c.l.b16 %v2805
      %v2881 = vunpack.c.h.b16 %v2805
      %v2882 = vunpack.c.l.b16 %v2806
      %v2883 = vunpack.c.h.b16 %v2806
      %v2884 = vunpack.c.l.b16 %v2807
      %v2885 = vunpack.c.h.b16 %v2807
      %v2886 = vpack.c.b16 %v2862, %v2860
      %v2887 = vpack.c.b16 %v2863, %v2861
      %v2888 = vpack.c.b16 %v2866, %v2864
      %v2889 = vpack.c.b16 %v2867, %v2865
      %v2890 = vpack.c.b16 %v2870, %v2868
      %v2891 = vpack.c.b16 %v2871, %v2869
      %v2892 = vpack.c.b16 %v2874, %v2872
      %v2893 = vpack.c.b16 %v2875, %v2873
      %v2894 = vpack.c.b16 %v2878, %v2876
      %v2895 = vpack.c.b16 %v2879, %v2877
      %v2896 = vpack.c.b16 %v2882, %v2880
      %v2897 = vpack.c.b16 %v2883, %v2881
      %v2898 = vpack.c.b16 %v2884, %v2884
      %v2899 = vpack.c.b16 %v2885, %v2885
      %v2946 = vunpack.c.l.b16 %v2808
      %v2947 = vunpack.c.l.b16 %v2809
      %v2948 = vunpack.c.l.b16 %v2810
      %v2949 = vunpack.c.l.b16 %v2811
      %v2950 = vunpack.c.l.b16 %v2812
      %v2951 = vunpack.c.l.b16 %v2813
      %v2952 = vunpack.c.l.b16 %v2814
      %v2953 = vunpack.c.l.b16 %v2815
      %v2954 = vunpack.c.l.b16 %v2816
      %v2955 = vunpack.c.l.b16 %v2817
      %v2956 = vunpack.c.l.b16 %v2818
      %v2957 = vunpack.c.l.b16 %v2819
      %v2958 = vunpack.c.l.b16 %v2820
      %v2959 = vunpack.c.l.b16 %v2821
      %v2960 = vunpack.c.l.b16 %v2822
      %v2961 = vunpack.c.l.b16 %v2823
      %v2962 = vunpack.c.l.b16 %v2824
      %v2963 = vunpack.c.l.b16 %v2825
      %v2964 = vunpack.c.l.b16 %v2826
      %v2965 = vunpack.c.l.b16 %v2827
      %v2966 = vunpack.c.l.b16 %v2828
      %v2967 = vunpack.c.l.b16 %v2829
      %v2968 = vunpack.c.l.b16 %v2830
      %v2969 = vunpack.c.l.b16 %v2831
      %v2970 = vunpack.c.l.b16 %v2832
      %v2971 = vunpack.c.l.b16 %v2833
      %v2972 = vunpack.c.l.b16 %v2834
      %v2973 = vunpack.c.l.b16 %v2835
      %v2974 = vunpack.c.l.b16 %v2836
      %v2975 = vunpack.c.l.b16 %v2837
      %v2976 = vunpack.c.l.b16 %v2838
      %v2977 = vunpack.c.l.b16 %v2839
      %v2978 = vpack.c.b16 %v2947, %v2946
      %v2979 = vpack.c.b16 %v2949, %v2948
      %v2980 = vpack.c.b16 %v2951, %v2950
      %v2981 = vpack.c.b16 %v2953, %v2952
      %v2982 = vpack.c.b16 %v2955, %v2954
      %v2983 = vpack.c.b16 %v2957, %v2956
      %v2984 = vpack.c.b16 %v2959, %v2958
      %v2985 = vpack.c.b16 %v2961, %v2960
      %v2986 = vpack.c.b16 %v2963, %v2962
      %v2987 = vpack.c.b16 %v2965, %v2964
      %v2988 = vpack.c.b16 %v2967, %v2966
      %v2989 = vpack.c.b16 %v2969, %v2968
      %v2990 = vpack.c.b16 %v2971, %v2970
      %v2991 = vpack.c.b16 %v2973, %v2972
      %v2992 = vpack.c.b16 %v2975, %v2974
      %v2993 = vpack.c.b16 %v2977, %v2976
      %3010 = vmatprep.subr.bf16.mxu0 0
      %3011 = vmatpush1.bf16.msra.mxu0 %v2978
      %3012 = vmatprep.subr.bf16.mxu0 0
      %3013 = vmatpush1.bf16.msra.mxu0 %v2979
      %3014 = vmatprep.subr.bf16.mxu0 0
      %3015 = vmatpush1.bf16.msra.mxu0 %v2980
      %3016 = vmatprep.subr.bf16.mxu0 0
      %3017 = vmatpush1.bf16.msra.mxu0 %v2981
      %3018 = vmatprep.subr.bf16.mxu0 0
      %3019 = vmatpush1.bf16.msra.mxu0 %v2982
      %3020 = vmatprep.subr.bf16.mxu0 0
      %3021 = vmatpush1.bf16.msra.mxu0 %v2983
      %3022 = vmatprep.subr.bf16.mxu0 0
      %3023 = vmatpush1.bf16.msra.mxu0 %v2984
      %3024 = vmatprep.subr.bf16.mxu0 0
      %3025 = vmatpush1.bf16.msra.mxu0 %v2985
      %3026 = vmatprep.subr.bf16.mxu0 0
      %3027 = vmatpush1.bf16.msra.mxu0 %v2986
      %3028 = vmatprep.subr.bf16.mxu0 0
      %3029 = vmatpush1.bf16.msra.mxu0 %v2987
      %3030 = vmatprep.subr.bf16.mxu0 0
      %3031 = vmatpush1.bf16.msra.mxu0 %v2988
      %3032 = vmatprep.subr.bf16.mxu0 0
      %3033 = vmatpush1.bf16.msra.mxu0 %v2989
      %3034 = vmatprep.subr.bf16.mxu0 0
      %3035 = vmatpush1.bf16.msra.mxu0 %v2990
      %3036 = vmatprep.subr.bf16.mxu0 0
      %3037 = vmatpush1.bf16.msra.mxu0 %v2991
      %3038 = vmatprep.subr.bf16.mxu0 0
      %3039 = vmatpush1.bf16.msra.mxu0 %v2992
      %3040 = vmatprep.subr.bf16.mxu0 0
      %3041 = vmatpush1.bf16.msra.mxu0 %v2993
      %3042 = vmatprep.mubr.bf16.mxu0 %v2887
      %3043 = vmatmul.mubr.bf16.gmra.mrb[0].mxu0 %v2886
      %v3044 = vpop.f32.mrb[0].mxu0
      %v3045 = vadd.f32 %v2845, %v3044
      %v3046 = vpop.f32.mrb[0].mxu0
      %v3047 = vpop.f32.mrb[0].mxu0
      %v3048 = vadd.f32 %v2845, %v3047
      %v3049 = vpop.f32.mrb[0].mxu0
      %3050 = vmatprep.mubr.bf16.mxu0 %v2889
      %3051 = vmatmul.mubr.bf16.gmra.mrb[0].mxu0 %v2888
      %v3052 = vpop.f32.mrb[0].mxu0
      %v3053 = vadd.f32 %v2845, %v3052
      %v3054 = vpop.f32.mrb[0].mxu0
      %v3055 = vpop.f32.mrb[0].mxu0
      %v3056 = vadd.f32 %v2845, %v3055
      %v3057 = vpop.f32.mrb[0].mxu0
      %3058 = vmatprep.mubr.bf16.mxu0 %v2891
      %3059 = vmatmul.mubr.bf16.gmra.mrb[0].mxu0 %v2890
      %v3060 = vpop.f32.mrb[0].mxu0
      %v3061 = vadd.f32 %v2845, %v3060
      %v3062 = vpop.f32.mrb[0].mxu0
      %v3063 = vpop.f32.mrb[0].mxu0
      %v3064 = vadd.f32 %v2845, %v3063
      %v3065 = vpop.f32.mrb[0].mxu0
      %3066 = vmatprep.mubr.bf16.mxu0 %v2893
      %3067 = vmatmul.mubr.bf16.gmra.mrb[0].mxu0 %v2892
      %v3068 = vpop.f32.mrb[0].mxu0
      %v3069 = vadd.f32 %v2845, %v3068
      %v3070 = vpop.f32.mrb[0].mxu0
      %v3071 = vpop.f32.mrb[0].mxu0
      %v3072 = vadd.f32 %v2845, %v3071
      %v3073 = vpop.f32.mrb[0].mxu0
      %3074 = vmatprep.mubr.bf16.mxu0 %v2895
      %3075 = vmatmul.mubr.bf16.gmra.mrb[0].mxu0 %v2894
      %v3076 = vpop.f32.mrb[0].mxu0
      %v3077 = vadd.f32 %v2845, %v3076
      %v3078 = vpop.f32.mrb[0].mxu0
      %v3079 = vpop.f32.mrb[0].mxu0
      %v3080 = vadd.f32 %v2845, %v3079
      %v3081 = vpop.f32.mrb[0].mxu0
      %3082 = vmatprep.mubr.bf16.mxu0 %v2897
      %3083 = vmatmul.mubr.bf16.gmra.mrb[0].mxu0 %v2896
      %v3084 = vpop.f32.mrb[0].mxu0
      %v3085 = vadd.f32 %v2845, %v3084
      %v3086 = vpop.f32.mrb[0].mxu0
      %v3087 = vpop.f32.mrb[0].mxu0
      %v3088 = vadd.f32 %v2845, %v3087
      %v3089 = vpop.f32.mrb[0].mxu0
      %3090 = vmatprep.mubr.bf16.mxu0 %v2899
      %3091 = vmatmul.mubr.bf16.gmra.mrb[0].mxu0 %v2898
      %v3092 = vpop.f32.mrb[0].mxu0
      %v3093 = vadd.f32 %v2845, %v3092
      %v3094 = vpop.f32.mrb[0].mxu0
      %v3095 = vpop.f32.mrb[0].mxu0
      %v3096 = vpop.f32.mrb[0].mxu0
      %3097 = vdwg.mxu0
      %v3098 = vmax.f32 %v3045, 0.0
      %v3099 = vmax.f32 %v3048, 0.0
      %v3100 = vmax.f32 %v3053, 0.0
      %v3101 = vmax.f32 %v3056, 0.0
      %v3102 = vmax.f32 %v3061, 0.0
      %v3103 = vmax.f32 %v3064, 0.0
      %v3104 = vmax.f32 %v3069, 0.0
      %v3105 = vmax.f32 %v3072, 0.0
      %v3106 = vmax.f32 %v3077, 0.0
      %v3107 = vmax.f32 %v3080, 0.0
      %v3108 = vmax.f32 %v3085, 0.0
      %v3109 = vmax.f32 %v3088, 0.0
      %v3110 = vmax.f32 %v3093, 0.0
      %v3111 = vpack.c.bf16 %v3099, %v3098
      %v3112 = vpack.c.bf16 %v3101, %v3100
      %v3113 = vpack.c.bf16 %v3103, %v3102
      %v3114 = vpack.c.bf16 %v3105, %v3104
      %v3115 = vpack.c.bf16 %v3107, %v3106
      %v3116 = vpack.c.bf16 %v3109, %v3108
      %v3117 = vpack.c.bf16 %v3110, %v3110
      %v3125 = vunpack.c.l.b16 %v3111
      %v3126 = vunpack.c.h.b16 %v3111
      %v3127 = vunpack.c.l.b16 %v3112
      %v3128 = vunpack.c.h.b16 %v3112
      %v3129 = vunpack.c.l.b16 %v3113
      %v3130 = vunpack.c.h.b16 %v3113
      %v3131 = vunpack.c.l.b16 %v3114
      %v3132 = vunpack.c.h.b16 %v3114
      %v3133 = vunpack.c.l.b16 %v3115
      %v3134 = vunpack.c.h.b16 %v3115
      %v3135 = vunpack.c.l.b16 %v3116
      %v3136 = vunpack.c.h.b16 %v3116
      %v3137 = vunpack.c.l.b16 %v3117
      %v3138 = vpack.c.b16 %v3125, %v3125
      %v3139 = vpack.c.b16 %v3126, %v3126
      %v3140 = vpack.c.b16 %v3127, %v3127
      %v3141 = vpack.c.b16 %v3128, %v3128
      %v3142 = vpack.c.b16 %v3129, %v3129
      %v3143 = vpack.c.b16 %v3130, %v3130
      %v3144 = vpack.c.b16 %v3131, %v3131
      %v3145 = vpack.c.b16 %v3132, %v3132
      %v3146 = vpack.c.b16 %v3133, %v3133
      %v3147 = vpack.c.b16 %v3134, %v3134
      %v3148 = vpack.c.b16 %v3135, %v3135
      %v3149 = vpack.c.b16 %v3136, %v3136
      %v3150 = vpack.c.b16 %v3137, %v3137
      %3151 = vrot.lane.b32.xlu0 %v3138, 32
      %v3152 = vpop.permute.xlu0 %3151
      %3153 = vrot.lane.b32.xlu0 %v3139, 32
      %v3154 = vpop.permute.xlu0 %3153
      %3155 = vrot.lane.b32.xlu0 %v3140, 32
      %v3156 = vpop.permute.xlu0 %3155
      %3157 = vrot.lane.b32.xlu0 %v3141, 32
      %v3158 = vpop.permute.xlu0 %3157
      %3159 = vrot.lane.b32.xlu0 %v3142, 32
      %v3160 = vpop.permute.xlu0 %3159
      %3161 = vrot.lane.b32.xlu0 %v3143, 32
      %v3162 = vpop.permute.xlu0 %3161
      %3163 = vrot.lane.b32.xlu0 %v3144, 32
      %v3164 = vpop.permute.xlu0 %3163
      %3165 = vrot.lane.b32.xlu0 %v3145, 32
      %v3166 = vpop.permute.xlu0 %3165
      %3167 = vrot.lane.b32.xlu0 %v3146, 32
      %v3168 = vpop.permute.xlu0 %3167
      %3169 = vrot.lane.b32.xlu0 %v3147, 32
      %v3170 = vpop.permute.xlu0 %3169
      %3171 = vrot.lane.b32.xlu0 %v3148, 32
      %v3172 = vpop.permute.xlu0 %3171
      %3173 = vrot.lane.b32.xlu0 %v3149, 32
      %v3174 = vpop.permute.xlu0 %3173
      %3175 = vrot.lane.b32.xlu0 %v3150, 32
      %v3176 = vpop.permute.xlu0 %3175
      %vm3190 = vcmask 388352
      %3191 = vst.msk [vmem:[#allocation3] sm:$0xf] %vm3190, %v3152
      %3192 = vst.msk [vmem:[#allocation3 + $0x4] sm:$0xf] %vm3190, %v3154
      %3193 = vst.msk [vmem:[#allocation3 + $0x8] sm:$0xf] %vm3190, %v3156
      %3194 = vst.msk [vmem:[#allocation3 + $0xc] sm:$0xf] %vm3190, %v3158
      %3195 = vst.msk [vmem:[#allocation3 + $0x10] sm:$0xf] %vm3190, %v3160
      %3196 = vst.msk [vmem:[#allocation3 + $0x14] sm:$0xf] %vm3190, %v3162
      %3197 = vst.msk [vmem:[#allocation3 + $0x18] sm:$0xf] %vm3190, %v3164
      %3198 = vst.msk [vmem:[#allocation3 + $0x1c] sm:$0xf] %vm3190, %v3166
      %3199 = vst.msk [vmem:[#allocation3 + $0x20] sm:$0xf] %vm3190, %v3168
      %3200 = vst.msk [vmem:[#allocation3 + $0x24] sm:$0xf] %vm3190, %v3170
      %3201 = vst.msk [vmem:[#allocation3 + $0x28] sm:$0xf] %vm3190, %v3172
      %3202 = vst.msk [vmem:[#allocation3 + $0x2c] sm:$0xf] %vm3190, %v3174
      %vm3203 = vcmask 386304
      %3204 = vst.msk [vmem:[#allocation3 + $0x30] sm:$0x3] %vm3203, %v3176
      %v3205 = vld [vmem:[%s234] sm:$0xf]
      %v3206 = vld [vmem:[%s234 + $0x4] sm:$0x1]
      %v3207 = vld [vmem:[%s231] sm:$0xf]
      %v3208 = vld [vmem:[%s231 + $0x4] sm:$0x3]
      %v3209 = vld [vmem:[%s283] sm:$0xf]
      %v3210 = vld [vmem:[%s283 + $0x4] sm:$0x1]
      %v3211 = vld [vmem:[%s280] sm:$0xf]
      %v3212 = vld [vmem:[%s280 + $0x4] sm:$0x3]
      %v3215 = vunpack.c.l.b16 %v3205
      %v3216 = vunpack.c.l.b16 %v3206
      %v3217 = vpack.c.b16 %v3216, %v3215
      %v3220 = vunpack.c.l.b16 %v3207
      %v3221 = vunpack.c.l.b16 %v3208
      %v3222 = vpack.c.b16 %v3221, %v3220
      %v3224 = vshrl.u32 %v3222, 16
      %v3226 = vshll.u32 %v3222, 16
      %v3228 = vrot.slane %v3226, 1
      %v3229 = vor.u32 %v3224, %v3228
      %3230 = vrot.lane.b32.xlu0 %v3229, 64
      %v3231 = vpop.permute.xlu0 %3230
      %v3234 = vunpack.c.l.b16 %v3209
      %v3235 = vunpack.c.l.b16 %v3210
      %v3236 = vpack.c.b16 %v3235, %v3234
      %v3239 = vunpack.c.l.b16 %v3211
      %v3240 = vunpack.c.l.b16 %v3212
      %v3241 = vpack.c.b16 %v3240, %v3239
      %v3243 = vshrl.u32 %v3241, 16
      %v3245 = vshll.u32 %v3241, 16
      %v3247 = vrot.slane %v3245, 1
      %v3248 = vor.u32 %v3243, %v3247
      %3249 = vrot.lane.b32.xlu0 %v3248, 64
      %v3250 = vpop.permute.xlu0 %3249
      %v3253 = vsel %vm261, %v3217, %v3231
      %v3256 = vsel %vm261, %v3236, %v3250
      %v3259 = vunpack.c.l.b16 %v3253
      %v3260 = vunpack.c.l.b16 %v3256
      %v3261 = vunpack.c.h.b16 %v3253
      %v3262 = vunpack.c.h.b16 %v3256
      %v3263 = vpack.c.b16 %v3260, %v3259
      %v3264 = vpack.c.b16 %v3262, %v3261
      %3267 = vst [vmem:[#allocation2] sm:$0xff] %v3263
      %3268 = vst [vmem:[#allocation2 + $0x8] sm:$0x11] %v3264
      %v3269 = vld [vmem:[%s289] sm:$0xf]
      %v3270 = vld [vmem:[%s289 + $0x4] sm:$0x1]
      %v3271 = vld [vmem:[%s286] sm:$0xf]
      %v3272 = vld [vmem:[%s286 + $0x4] sm:$0x3]
      %v3273 = vld [vmem:[%s344] sm:$0xf]
      %v3274 = vld [vmem:[%s344 + $0x4] sm:$0x1]
      %v3275 = vld [vmem:[%s341] sm:$0xf]
      %v3276 = vld [vmem:[%s341 + $0x4] sm:$0x3]
      %v3279 = vunpack.c.l.b16 %v3269
      %v3280 = vunpack.c.l.b16 %v3270
      %v3281 = vpack.c.b16 %v3280, %v3279
      %v3284 = vunpack.c.l.b16 %v3271
      %v3285 = vunpack.c.l.b16 %v3272
      %v3286 = vpack.c.b16 %v3285, %v3284
      %v3288 = vshrl.u32 %v3286, 16
      %v3290 = vshll.u32 %v3286, 16
      %v3292 = vrot.slane %v3290, 1
      %v3293 = vor.u32 %v3288, %v3292
      %3294 = vrot.lane.b32.xlu0 %v3293, 64
      %v3295 = vpop.permute.xlu0 %3294
      %v3298 = vunpack.c.l.b16 %v3273
      %v3299 = vunpack.c.l.b16 %v3274
      %v3300 = vpack.c.b16 %v3299, %v3298
      %v3303 = vunpack.c.l.b16 %v3275
      %v3304 = vunpack.c.l.b16 %v3276
      %v3305 = vpack.c.b16 %v3304, %v3303
      %v3307 = vshrl.u32 %v3305, 16
      %v3309 = vshll.u32 %v3305, 16
      %v3311 = vrot.slane %v3309, 1
      %v3312 = vor.u32 %v3307, %v3311
      %3313 = vrot.lane.b32.xlu0 %v3312, 64
      %v3314 = vpop.permute.xlu0 %3313
      %v3317 = vsel %vm261, %v3281, %v3295
      %v3320 = vsel %vm261, %v3300, %v3314
      %v3323 = vunpack.c.l.b16 %v3317
      %v3324 = vunpack.c.l.b16 %v3320
      %v3325 = vunpack.c.h.b16 %v3317
      %v3326 = vunpack.c.h.b16 %v3320
      %v3327 = vpack.c.b16 %v3324, %v3323
      %v3328 = vpack.c.b16 %v3326, %v3325
      %v3329 = vrot.slane %v3327, 7
      %v3330 = vrot.slane %v3329, 4
      %v3331 = vrot.slane %v3328, 7
      %v3332 = vsel %vm332, %v3330, %v3331
      %3335 = vst [vmem:[#allocation2 + $0x8] sm:$0xee] %v3329
      %3336 = vst [vmem:[#allocation2 + $0x10] sm:$0x33] %v3332
      %v3337 = vld [vmem:[%s350] sm:$0xf]
      %v3338 = vld [vmem:[%s350 + $0x4] sm:$0x1]
      %v3339 = vld [vmem:[%s347] sm:$0xf]
      %v3340 = vld [vmem:[%s347 + $0x4] sm:$0x3]
      %v3341 = vld [vmem:[%s405] sm:$0xf]
      %v3342 = vld [vmem:[%s405 + $0x4] sm:$0x1]
      %v3343 = vld [vmem:[%s402] sm:$0xf]
      %v3344 = vld [vmem:[%s402 + $0x4] sm:$0x3]
      %v3347 = vunpack.c.l.b16 %v3337
      %v3348 = vunpack.c.l.b16 %v3338
      %v3349 = vpack.c.b16 %v3348, %v3347
      %v3352 = vunpack.c.l.b16 %v3339
      %v3353 = vunpack.c.l.b16 %v3340
      %v3354 = vpack.c.b16 %v3353, %v3352
      %v3356 = vshrl.u32 %v3354, 16
      %v3358 = vshll.u32 %v3354, 16
      %v3360 = vrot.slane %v3358, 1
      %v3361 = vor.u32 %v3356, %v3360
      %3362 = vrot.lane.b32.xlu0 %v3361, 64
      %v3363 = vpop.permute.xlu0 %3362
      %v3366 = vunpack.c.l.b16 %v3341
      %v3367 = vunpack.c.l.b16 %v3342
      %v3368 = vpack.c.b16 %v3367, %v3366
      %v3371 = vunpack.c.l.b16 %v3343
      %v3372 = vunpack.c.l.b16 %v3344
      %v3373 = vpack.c.b16 %v3372, %v3371
      %v3375 = vshrl.u32 %v3373, 16
      %v3377 = vshll.u32 %v3373, 16
      %v3379 = vrot.slane %v3377, 1
      %v3380 = vor.u32 %v3375, %v3379
      %3381 = vrot.lane.b32.xlu0 %v3380, 64
      %v3382 = vpop.permute.xlu0 %3381
      %v3385 = vsel %vm261, %v3349, %v3363
      %v3388 = vsel %vm261, %v3368, %v3382
      %v3391 = vunpack.c.l.b16 %v3385
      %v3392 = vunpack.c.l.b16 %v3388
      %v3393 = vunpack.c.h.b16 %v3385
      %v3394 = vunpack.c.h.b16 %v3388
      %v3395 = vpack.c.b16 %v3392, %v3391
      %v3396 = vpack.c.b16 %v3394, %v3393
      %v3397 = vrot.slane %v3395, 6
      %v3398 = vrot.slane %v3397, 4
      %v3399 = vrot.slane %v3396, 6
      %v3400 = vsel %vm393, %v3398, %v3399
      %3403 = vst [vmem:[#allocation2 + $0x10] sm:$0xcc] %v3397
      %3404 = vst [vmem:[#allocation2 + $0x18] sm:$0x77] %v3400
      %v3405 = vld [vmem:[%s411] sm:$0xf]
      %v3406 = vld [vmem:[%s411 + $0x4] sm:$0x1]
      %v3407 = vld [vmem:[%s408] sm:$0xf]
      %v3408 = vld [vmem:[%s408 + $0x4] sm:$0x3]
      %v3409 = vld [vmem:[%s466] sm:$0xf]
      %v3410 = vld [vmem:[%s466 + $0x4] sm:$0x1]
      %v3411 = vld [vmem:[%s463] sm:$0xf]
      %v3412 = vld [vmem:[%s463 + $0x4] sm:$0x3]
      %v3415 = vunpack.c.l.b16 %v3405
      %v3416 = vunpack.c.l.b16 %v3406
      %v3417 = vpack.c.b16 %v3416, %v3415
      %v3420 = vunpack.c.l.b16 %v3407
      %v3421 = vunpack.c.l.b16 %v3408
      %v3422 = vpack.c.b16 %v3421, %v3420
      %v3424 = vshrl.u32 %v3422, 16
      %v3426 = vshll.u32 %v3422, 16
      %v3428 = vrot.slane %v3426, 1
      %v3429 = vor.u32 %v3424, %v3428
      %3430 = vrot.lane.b32.xlu0 %v3429, 64
      %v3431 = vpop.permute.xlu0 %3430
      %v3434 = vunpack.c.l.b16 %v3409
      %v3435 = vunpack.c.l.b16 %v3410
      %v3436 = vpack.c.b16 %v3435, %v3434
      %v3439 = vunpack.c.l.b16 %v3411
      %v3440 = vunpack.c.l.b16 %v3412
      %v3441 = vpack.c.b16 %v3440, %v3439
      %v3443 = vshrl.u32 %v3441, 16
      %v3445 = vshll.u32 %v3441, 16
      %v3447 = vrot.slane %v3445, 1
      %v3448 = vor.u32 %v3443, %v3447
      %3449 = vrot.lane.b32.xlu0 %v3448, 64
      %v3450 = vpop.permute.xlu0 %3449
      %v3453 = vsel %vm261, %v3417, %v3431
      %v3456 = vsel %vm261, %v3436, %v3450
      %v3459 = vunpack.c.l.b16 %v3453
      %v3460 = vunpack.c.l.b16 %v3456
      %v3461 = vunpack.c.h.b16 %v3453
      %v3462 = vunpack.c.h.b16 %v3456
      %v3463 = vpack.c.b16 %v3460, %v3459
      %v3464 = vpack.c.b16 %v3462, %v3461
      %v3465 = vrot.slane %v3463, 5
      %v3466 = vrot.slane %v3465, 4
      %v3467 = vrot.slane %v3464, 5
      %v3468 = vsel %vm454, %v3466, %v3467
      %3471 = vst [vmem:[#allocation2 + $0x18] sm:$0x88] %v3465
      %3472 = vst [vmem:[#allocation2 + $0x20] sm:$0xff] %v3468
      %v3473 = vld [vmem:[%s472] sm:$0xf]
      %v3474 = vld [vmem:[%s472 + $0x4] sm:$0x1]
      %v3475 = vld [vmem:[%s469] sm:$0xf]
      %v3476 = vld [vmem:[%s469 + $0x4] sm:$0x3]
      %v3477 = vld [vmem:[%s520] sm:$0xf]
      %v3478 = vld [vmem:[%s520 + $0x4] sm:$0x1]
      %v3479 = vld [vmem:[%s517] sm:$0xf]
      %v3480 = vld [vmem:[%s517 + $0x4] sm:$0x3]
      %v3483 = vunpack.c.l.b16 %v3473
      %v3484 = vunpack.c.l.b16 %v3474
      %v3485 = vpack.c.b16 %v3484, %v3483
      %v3488 = vunpack.c.l.b16 %v3475
      %v3489 = vunpack.c.l.b16 %v3476
      %v3490 = vpack.c.b16 %v3489, %v3488
      %v3492 = vshrl.u32 %v3490, 16
      %v3494 = vshll.u32 %v3490, 16
      %v3496 = vrot.slane %v3494, 1
      %v3497 = vor.u32 %v3492, %v3496
      %3498 = vrot.lane.b32.xlu0 %v3497, 64
      %v3499 = vpop.permute.xlu0 %3498
      %v3502 = vunpack.c.l.b16 %v3477
      %v3503 = vunpack.c.l.b16 %v3478
      %v3504 = vpack.c.b16 %v3503, %v3502
      %v3507 = vunpack.c.l.b16 %v3479
      %v3508 = vunpack.c.l.b16 %v3480
      %v3509 = vpack.c.b16 %v3508, %v3507
      %v3511 = vshrl.u32 %v3509, 16
      %v3513 = vshll.u32 %v3509, 16
      %v3515 = vrot.slane %v3513, 1
      %v3516 = vor.u32 %v3511, %v3515
      %3517 = vrot.lane.b32.xlu0 %v3516, 64
      %v3518 = vpop.permute.xlu0 %3517
      %v3521 = vsel %vm261, %v3485, %v3499
      %v3524 = vsel %vm261, %v3504, %v3518
      %v3527 = vunpack.c.l.b16 %v3521
      %v3528 = vunpack.c.l.b16 %v3524
      %v3529 = vunpack.c.h.b16 %v3521
      %v3530 = vunpack.c.h.b16 %v3524
      %v3531 = vpack.c.b16 %v3528, %v3527
      %v3532 = vpack.c.b16 %v3530, %v3529
      %3535 = vst [vmem:[#allocation2 + $0x28] sm:$0xff] %v3531
      %3536 = vst [vmem:[#allocation2 + $0x30] sm:$0x11] %v3532
      %v3537 = vld [vmem:[%s526] sm:$0xf]
      %v3538 = vld [vmem:[%s526 + $0x4] sm:$0x1]
      %v3539 = vld [vmem:[%s523] sm:$0xf]
      %v3540 = vld [vmem:[%s523 + $0x4] sm:$0x3]
      %v3541 = vld [vmem:[%s578] sm:$0xf]
      %v3542 = vld [vmem:[%s578 + $0x4] sm:$0x1]
      %v3543 = vld [vmem:[%s575] sm:$0xf]
      %v3544 = vld [vmem:[%s575 + $0x4] sm:$0x3]
      %v3547 = vunpack.c.l.b16 %v3537
      %v3548 = vunpack.c.l.b16 %v3538
      %v3549 = vpack.c.b16 %v3548, %v3547
      %v3552 = vunpack.c.l.b16 %v3539
      %v3553 = vunpack.c.l.b16 %v3540
      %v3554 = vpack.c.b16 %v3553, %v3552
      %v3556 = vshrl.u32 %v3554, 16
      %v3558 = vshll.u32 %v3554, 16
      %v3560 = vrot.slane %v3558, 1
      %v3561 = vor.u32 %v3556, %v3560
      %3562 = vrot.lane.b32.xlu0 %v3561, 64
      %v3563 = vpop.permute.xlu0 %3562
      %v3566 = vunpack.c.l.b16 %v3541
      %v3567 = vunpack.c.l.b16 %v3542
      %v3568 = vpack.c.b16 %v3567, %v3566
      %v3571 = vunpack.c.l.b16 %v3543
      %v3572 = vunpack.c.l.b16 %v3544
      %v3573 = vpack.c.b16 %v3572, %v3571
      %v3575 = vshrl.u32 %v3573, 16
      %v3577 = vshll.u32 %v3573, 16
      %v3579 = vrot.slane %v3577, 1
      %v3580 = vor.u32 %v3575, %v3579
      %3581 = vrot.lane.b32.xlu0 %v3580, 64
      %v3582 = vpop.permute.xlu0 %3581
      %v3585 = vsel %vm261, %v3549, %v3563
      %v3588 = vsel %vm261, %v3568, %v3582
      %v3591 = vunpack.c.l.b16 %v3585
      %v3592 = vunpack.c.l.b16 %v3588
      %v3593 = vunpack.c.h.b16 %v3585
      %v3594 = vunpack.c.h.b16 %v3588
      %v3595 = vpack.c.b16 %v3592, %v3591
      %v3596 = vpack.c.b16 %v3594, %v3593
      %v3597 = vrot.slane %v3595, 7
      %v3598 = vrot.slane %v3597, 4
      %v3599 = vrot.slane %v3596, 7
      %v3600 = vsel %vm332, %v3598, %v3599
      %3603 = vst [vmem:[#allocation2 + $0x30] sm:$0xee] %v3597
      %3604 = vst [vmem:[#allocation2 + $0x38] sm:$0x33] %v3600
      %v3605 = vld [vmem:[%s584] sm:$0xf]
      %v3606 = vld [vmem:[%s584 + $0x4] sm:$0x1]
      %v3607 = vld [vmem:[%s581] sm:$0xf]
      %v3608 = vld [vmem:[%s581 + $0x4] sm:$0x3]
      %v3609 = vld [vmem:[%s636] sm:$0xf]
      %v3610 = vld [vmem:[%s636 + $0x4] sm:$0x1]
      %v3611 = vld [vmem:[%s633] sm:$0xf]
      %v3612 = vld [vmem:[%s633 + $0x4] sm:$0x3]
      %v3615 = vunpack.c.l.b16 %v3605
      %v3616 = vunpack.c.l.b16 %v3606
      %v3617 = vpack.c.b16 %v3616, %v3615
      %v3620 = vunpack.c.l.b16 %v3607
      %v3621 = vunpack.c.l.b16 %v3608
      %v3622 = vpack.c.b16 %v3621, %v3620
      %v3624 = vshrl.u32 %v3622, 16
      %v3626 = vshll.u32 %v3622, 16
      %v3628 = vrot.slane %v3626, 1
      %v3629 = vor.u32 %v3624, %v3628
      %3630 = vrot.lane.b32.xlu0 %v3629, 64
      %v3631 = vpop.permute.xlu0 %3630
      %v3634 = vunpack.c.l.b16 %v3609
      %v3635 = vunpack.c.l.b16 %v3610
      %v3636 = vpack.c.b16 %v3635, %v3634
      %v3639 = vunpack.c.l.b16 %v3611
      %v3640 = vunpack.c.l.b16 %v3612
      %v3641 = vpack.c.b16 %v3640, %v3639
      %v3643 = vshrl.u32 %v3641, 16
      %v3645 = vshll.u32 %v3641, 16
      %v3647 = vrot.slane %v3645, 1
      %v3648 = vor.u32 %v3643, %v3647
      %3649 = vrot.lane.b32.xlu0 %v3648, 64
      %v3650 = vpop.permute.xlu0 %3649
      %v3653 = vsel %vm261, %v3617, %v3631
      %v3656 = vsel %vm261, %v3636, %v3650
      %v3659 = vunpack.c.l.b16 %v3653
      %v3660 = vunpack.c.l.b16 %v3656
      %v3661 = vunpack.c.h.b16 %v3653
      %v3662 = vunpack.c.h.b16 %v3656
      %v3663 = vpack.c.b16 %v3660, %v3659
      %v3664 = vpack.c.b16 %v3662, %v3661
      %v3665 = vrot.slane %v3663, 6
      %v3666 = vrot.slane %v3665, 4
      %v3667 = vrot.slane %v3664, 6
      %v3668 = vsel %vm393, %v3666, %v3667
      %3671 = vst [vmem:[#allocation2 + $0x38] sm:$0xcc] %v3665
      %3672 = vst [vmem:[#allocation2 + $0x40] sm:$0x77] %v3668
      %v3673 = vld [vmem:[%s642] sm:$0xf]
      %v3674 = vld [vmem:[%s642 + $0x4] sm:$0x1]
      %v3675 = vld [vmem:[%s639] sm:$0xf]
      %v3676 = vld [vmem:[%s639 + $0x4] sm:$0x3]
      %v3677 = vld [vmem:[%s694] sm:$0xf]
      %v3678 = vld [vmem:[%s694 + $0x4] sm:$0x1]
      %v3679 = vld [vmem:[%s691] sm:$0xf]
      %v3680 = vld [vmem:[%s691 + $0x4] sm:$0x3]
      %v3683 = vunpack.c.l.b16 %v3673
      %v3684 = vunpack.c.l.b16 %v3674
      %v3685 = vpack.c.b16 %v3684, %v3683
      %v3688 = vunpack.c.l.b16 %v3675
      %v3689 = vunpack.c.l.b16 %v3676
      %v3690 = vpack.c.b16 %v3689, %v3688
      %v3692 = vshrl.u32 %v3690, 16
      %v3694 = vshll.u32 %v3690, 16
      %v3696 = vrot.slane %v3694, 1
      %v3697 = vor.u32 %v3692, %v3696
      %3698 = vrot.lane.b32.xlu0 %v3697, 64
      %v3699 = vpop.permute.xlu0 %3698
      %v3702 = vunpack.c.l.b16 %v3677
      %v3703 = vunpack.c.l.b16 %v3678
      %v3704 = vpack.c.b16 %v3703, %v3702
      %v3707 = vunpack.c.l.b16 %v3679
      %v3708 = vunpack.c.l.b16 %v3680
      %v3709 = vpack.c.b16 %v3708, %v3707
      %v3711 = vshrl.u32 %v3709, 16
      %v3713 = vshll.u32 %v3709, 16
      %v3715 = vrot.slane %v3713, 1
      %v3716 = vor.u32 %v3711, %v3715
      %3717 = vrot.lane.b32.xlu0 %v3716, 64
      %v3718 = vpop.permute.xlu0 %3717
      %v3721 = vsel %vm261, %v3685, %v3699
      %v3724 = vsel %vm261, %v3704, %v3718
      %v3727 = vunpack.c.l.b16 %v3721
      %v3728 = vunpack.c.l.b16 %v3724
      %v3729 = vunpack.c.h.b16 %v3721
      %v3730 = vunpack.c.h.b16 %v3724
      %v3731 = vpack.c.b16 %v3728, %v3727
      %v3732 = vpack.c.b16 %v3730, %v3729
      %v3733 = vrot.slane %v3731, 5
      %v3734 = vrot.slane %v3733, 4
      %v3735 = vrot.slane %v3732, 5
      %v3736 = vsel %vm454, %v3734, %v3735
      %3739 = vst [vmem:[#allocation2 + $0x40] sm:$0x88] %v3733
      %3740 = vst [vmem:[#allocation2 + $0x48] sm:$0xff] %v3736
      %v3741 = vld [vmem:[%s700] sm:$0xf]
      %v3742 = vld [vmem:[%s700 + $0x4] sm:$0x1]
      %v3743 = vld [vmem:[%s697] sm:$0xf]
      %v3744 = vld [vmem:[%s697 + $0x4] sm:$0x3]
      %v3745 = vld [vmem:[%s748] sm:$0xf]
      %v3746 = vld [vmem:[%s748 + $0x4] sm:$0x1]
      %v3747 = vld [vmem:[%s745] sm:$0xf]
      %v3748 = vld [vmem:[%s745 + $0x4] sm:$0x3]
      %v3751 = vunpack.c.l.b16 %v3741
      %v3752 = vunpack.c.l.b16 %v3742
      %v3753 = vpack.c.b16 %v3752, %v3751
      %v3756 = vunpack.c.l.b16 %v3743
      %v3757 = vunpack.c.l.b16 %v3744
      %v3758 = vpack.c.b16 %v3757, %v3756
      %v3760 = vshrl.u32 %v3758, 16
      %v3762 = vshll.u32 %v3758, 16
      %v3764 = vrot.slane %v3762, 1
      %v3765 = vor.u32 %v3760, %v3764
      %3766 = vrot.lane.b32.xlu0 %v3765, 64
      %v3767 = vpop.permute.xlu0 %3766
      %v3770 = vunpack.c.l.b16 %v3745
      %v3771 = vunpack.c.l.b16 %v3746
      %v3772 = vpack.c.b16 %v3771, %v3770
      %v3775 = vunpack.c.l.b16 %v3747
      %v3776 = vunpack.c.l.b16 %v3748
      %v3777 = vpack.c.b16 %v3776, %v3775
      %v3779 = vshrl.u32 %v3777, 16
      %v3781 = vshll.u32 %v3777, 16
      %v3783 = vrot.slane %v3781, 1
      %v3784 = vor.u32 %v3779, %v3783
      %3785 = vrot.lane.b32.xlu0 %v3784, 64
      %v3786 = vpop.permute.xlu0 %3785
      %v3789 = vsel %vm261, %v3753, %v3767
      %v3792 = vsel %vm261, %v3772, %v3786
      %v3795 = vunpack.c.l.b16 %v3789
      %v3796 = vunpack.c.l.b16 %v3792
      %v3797 = vunpack.c.h.b16 %v3789
      %v3798 = vunpack.c.h.b16 %v3792
      %v3799 = vpack.c.b16 %v3796, %v3795
      %v3800 = vpack.c.b16 %v3798, %v3797
      %3803 = vst [vmem:[#allocation2 + $0x50] sm:$0xff] %v3799
      %3804 = vst [vmem:[#allocation2 + $0x58] sm:$0x11] %v3800
      %v3805 = vld [vmem:[%s754] sm:$0xf]
      %v3806 = vld [vmem:[%s754 + $0x4] sm:$0x1]
      %v3807 = vld [vmem:[%s751] sm:$0xf]
      %v3808 = vld [vmem:[%s751 + $0x4] sm:$0x3]
      %v3809 = vld [vmem:[%s2746] sm:$0xf]
      %v3810 = vld [vmem:[%s2746 + $0x4] sm:$0x1]
      %v3811 = vld [vmem:[%s2743] sm:$0xf]
      %v3812 = vld [vmem:[%s2743 + $0x4] sm:$0x3]
      %v3815 = vunpack.c.l.b16 %v3805
      %v3816 = vunpack.c.l.b16 %v3806
      %v3817 = vpack.c.b16 %v3816, %v3815
      %v3820 = vunpack.c.l.b16 %v3807
      %v3821 = vunpack.c.l.b16 %v3808
      %v3822 = vpack.c.b16 %v3821, %v3820
      %v3824 = vshrl.u32 %v3822, 16
      %v3826 = vshll.u32 %v3822, 16
      %v3828 = vrot.slane %v3826, 1
      %v3829 = vor.u32 %v3824, %v3828
      %3830 = vrot.lane.b32.xlu0 %v3829, 64
      %v3831 = vpop.permute.xlu0 %3830
      %v3834 = vunpack.c.l.b16 %v3809
      %v3835 = vunpack.c.l.b16 %v3810
      %v3836 = vpack.c.b16 %v3835, %v3834
      %v3839 = vunpack.c.l.b16 %v3811
      %v3840 = vunpack.c.l.b16 %v3812
      %v3841 = vpack.c.b16 %v3840, %v3839
      %v3843 = vshrl.u32 %v3841, 16
      %v3845 = vshll.u32 %v3841, 16
      %v3847 = vrot.slane %v3845, 1
      %v3848 = vor.u32 %v3843, %v3847
      %3849 = vrot.lane.b32.xlu0 %v3848, 64
      %v3850 = vpop.permute.xlu0 %3849
      %v3853 = vsel %vm261, %v3817, %v3831
      %v3856 = vsel %vm261, %v3836, %v3850
      %v3859 = vunpack.c.l.b16 %v3853
      %v3860 = vunpack.c.l.b16 %v3856
      %v3861 = vunpack.c.h.b16 %v3853
      %v3862 = vunpack.c.h.b16 %v3856
      %v3863 = vpack.c.b16 %v3860, %v3859
      %v3864 = vpack.c.b16 %v3862, %v3861
      %v3865 = vrot.slane %v3863, 7
      %v3866 = vrot.slane %v3865, 4
      %v3867 = vrot.slane %v3864, 7
      %v3868 = vsel %vm332, %v3866, %v3867
      %3871 = vst [vmem:[#allocation2 + $0x58] sm:$0xee] %v3865
      %3872 = vst [vmem:[#allocation2 + $0x60] sm:$0x33] %v3868
      %v3873 = vld [vmem:[#allocation2] sm:$0xff]
      %v3874 = vld [vmem:[#allocation2 + $0x8] sm:$0xff]
      %v3875 = vld [vmem:[#allocation2 + $0x10] sm:$0xff]
      %v3876 = vld [vmem:[#allocation2 + $0x18] sm:$0xff]
      %v3877 = vld [vmem:[#allocation2 + $0x20] sm:$0xff]
      %v3878 = vld [vmem:[#allocation2 + $0x28] sm:$0xff]
      %v3879 = vld [vmem:[#allocation2 + $0x30] sm:$0xff]
      %v3880 = vld [vmem:[#allocation2 + $0x38] sm:$0xff]
      %v3881 = vld [vmem:[#allocation2 + $0x40] sm:$0xff]
      %v3882 = vld [vmem:[#allocation2 + $0x48] sm:$0xff]
      %v3883 = vld [vmem:[#allocation2 + $0x50] sm:$0xff]
      %v3884 = vld [vmem:[#allocation2 + $0x58] sm:$0xff]
      %v3885 = vld [vmem:[#allocation2 + $0x60] sm:$0x33]
      %v3886 = vld [vmem:[%s1] sm:$0xf]
      %v3887 = vld [vmem:[%s1 + $0x4] sm:$0xf]
      %v3888 = vld [vmem:[%s1 + $0x8] sm:$0xf]
      %v3889 = vld [vmem:[%s1 + $0xc] sm:$0xf]
      %v3890 = vld [vmem:[%s1 + $0x10] sm:$0xf]
      %v3891 = vld [vmem:[%s1 + $0x14] sm:$0xf]
      %v3892 = vld [vmem:[%s1 + $0x18] sm:$0xf]
      %v3893 = vld [vmem:[%s1 + $0x1c] sm:$0xf]
      %v3894 = vld [vmem:[%s1 + $0x20] sm:$0xf]
      %v3895 = vld [vmem:[%s1 + $0x24] sm:$0xf]
      %v3896 = vld [vmem:[%s1 + $0x28] sm:$0xf]
      %v3897 = vld [vmem:[%s1 + $0x2c] sm:$0xf]
      %v3898 = vld [vmem:[%s1 + $0x30] sm:$0xf]
      %v3899 = vld [vmem:[%s1 + $0x34] sm:$0xf]
      %v3900 = vld [vmem:[%s1 + $0x38] sm:$0xf]
      %v3901 = vld [vmem:[%s1 + $0x3c] sm:$0xf]
      %v3902 = vld [vmem:[%s1 + $0x40] sm:$0xf]
      %v3903 = vld [vmem:[%s1 + $0x44] sm:$0xf]
      %v3904 = vld [vmem:[%s1 + $0x48] sm:$0xf]
      %v3905 = vld [vmem:[%s1 + $0x4c] sm:$0xf]
      %v3906 = vld [vmem:[%s1 + $0x50] sm:$0xf]
      %v3907 = vld [vmem:[%s1 + $0x54] sm:$0xf]
      %v3908 = vld [vmem:[%s1 + $0x58] sm:$0xf]
      %v3909 = vld [vmem:[%s1 + $0x5c] sm:$0xf]
      %v3910 = vld [vmem:[%s1 + $0x60] sm:$0xf]
      %v3911 = vld [vmem:[%s1 + $0x64] sm:$0xf]
      %v3912 = vld [vmem:[%s1 + $0x68] sm:$0xf]
      %v3913 = vld [vmem:[%s1 + $0x6c] sm:$0xf]
      %v3914 = vld [vmem:[%s1 + $0x70] sm:$0xf]
      %v3915 = vld [vmem:[%s1 + $0x74] sm:$0xf]
      %v3916 = vld [vmem:[%s1 + $0x78] sm:$0xf]
      %v3917 = vld [vmem:[%s1 + $0x7c] sm:$0xf]
      %v3918 = vld [vmem:[%s2] sm:$0x1]
      %v3920 = vlaneseq
      %v3921 = vshrl.u32 %v3920, 7
      %v3922 = vsub.s32 0, %v3921
      %v3923 = vrot.slane %v3918, %v3922
      %v3938 = vunpack.c.l.b16 %v3873
      %v3939 = vunpack.c.h.b16 %v3873
      %v3940 = vunpack.c.l.b16 %v3874
      %v3941 = vunpack.c.h.b16 %v3874
      %v3942 = vunpack.c.l.b16 %v3875
      %v3943 = vunpack.c.h.b16 %v3875
      %v3944 = vunpack.c.l.b16 %v3876
      %v3945 = vunpack.c.h.b16 %v3876
      %v3946 = vunpack.c.l.b16 %v3877
      %v3947 = vunpack.c.h.b16 %v3877
      %v3948 = vunpack.c.l.b16 %v3878
      %v3949 = vunpack.c.h.b16 %v3878
      %v3950 = vunpack.c.l.b16 %v3879
      %v3951 = vunpack.c.h.b16 %v3879
      %v3952 = vunpack.c.l.b16 %v3880
      %v3953 = vunpack.c.h.b16 %v3880
      %v3954 = vunpack.c.l.b16 %v3881
      %v3955 = vunpack.c.h.b16 %v3881
      %v3956 = vunpack.c.l.b16 %v3882
      %v3957 = vunpack.c.h.b16 %v3882
      %v3958 = vunpack.c.l.b16 %v3883
      %v3959 = vunpack.c.h.b16 %v3883
      %v3960 = vunpack.c.l.b16 %v3884
      %v3961 = vunpack.c.h.b16 %v3884
      %v3962 = vunpack.c.l.b16 %v3885
      %v3963 = vunpack.c.h.b16 %v3885
      %v3964 = vpack.c.b16 %v3940, %v3938
      %v3965 = vpack.c.b16 %v3941, %v3939
      %v3966 = vpack.c.b16 %v3944, %v3942
      %v3967 = vpack.c.b16 %v3945, %v3943
      %v3968 = vpack.c.b16 %v3948, %v3946
      %v3969 = vpack.c.b16 %v3949, %v3947
      %v3970 = vpack.c.b16 %v3952, %v3950
      %v3971 = vpack.c.b16 %v3953, %v3951
      %v3972 = vpack.c.b16 %v3956, %v3954
      %v3973 = vpack.c.b16 %v3957, %v3955
      %v3974 = vpack.c.b16 %v3960, %v3958
      %v3975 = vpack.c.b16 %v3961, %v3959
      %v3976 = vpack.c.b16 %v3962, %v3962
      %v3977 = vpack.c.b16 %v3963, %v3963
      %v4024 = vunpack.c.l.b16 %v3886
      %v4025 = vunpack.c.l.b16 %v3887
      %v4026 = vunpack.c.l.b16 %v3888
      %v4027 = vunpack.c.l.b16 %v3889
      %v4028 = vunpack.c.l.b16 %v3890
      %v4029 = vunpack.c.l.b16 %v3891
      %v4030 = vunpack.c.l.b16 %v3892
      %v4031 = vunpack.c.l.b16 %v3893
      %v4032 = vunpack.c.l.b16 %v3894
      %v4033 = vunpack.c.l.b16 %v3895
      %v4034 = vunpack.c.l.b16 %v3896
      %v4035 = vunpack.c.l.b16 %v3897
      %v4036 = vunpack.c.l.b16 %v3898
      %v4037 = vunpack.c.l.b16 %v3899
      %v4038 = vunpack.c.l.b16 %v3900
      %v4039 = vunpack.c.l.b16 %v3901
      %v4040 = vunpack.c.l.b16 %v3902
      %v4041 = vunpack.c.l.b16 %v3903
      %v4042 = vunpack.c.l.b16 %v3904
      %v4043 = vunpack.c.l.b16 %v3905
      %v4044 = vunpack.c.l.b16 %v3906
      %v4045 = vunpack.c.l.b16 %v3907
      %v4046 = vunpack.c.l.b16 %v3908
      %v4047 = vunpack.c.l.b16 %v3909
      %v4048 = vunpack.c.l.b16 %v3910
      %v4049 = vunpack.c.l.b16 %v3911
      %v4050 = vunpack.c.l.b16 %v3912
      %v4051 = vunpack.c.l.b16 %v3913
      %v4052 = vunpack.c.l.b16 %v3914
      %v4053 = vunpack.c.l.b16 %v3915
      %v4054 = vunpack.c.l.b16 %v3916
      %v4055 = vunpack.c.l.b16 %v3917
      %v4056 = vpack.c.b16 %v4025, %v4024
      %v4057 = vpack.c.b16 %v4027, %v4026
      %v4058 = vpack.c.b16 %v4029, %v4028
      %v4059 = vpack.c.b16 %v4031, %v4030
      %v4060 = vpack.c.b16 %v4033, %v4032
      %v4061 = vpack.c.b16 %v4035, %v4034
      %v4062 = vpack.c.b16 %v4037, %v4036
      %v4063 = vpack.c.b16 %v4039, %v4038
      %v4064 = vpack.c.b16 %v4041, %v4040
      %v4065 = vpack.c.b16 %v4043, %v4042
      %v4066 = vpack.c.b16 %v4045, %v4044
      %v4067 = vpack.c.b16 %v4047, %v4046
      %v4068 = vpack.c.b16 %v4049, %v4048
      %v4069 = vpack.c.b16 %v4051, %v4050
      %v4070 = vpack.c.b16 %v4053, %v4052
      %v4071 = vpack.c.b16 %v4055, %v4054
      %4088 = vmatprep.subr.bf16.mxu0 0
      %4089 = vmatpush1.bf16.msra.mxu0 %v4056
      %4090 = vmatprep.subr.bf16.mxu0 0
      %4091 = vmatpush1.bf16.msra.mxu0 %v4057
      %4092 = vmatprep.subr.bf16.mxu0 0
      %4093 = vmatpush1.bf16.msra.mxu0 %v4058
      %4094 = vmatprep.subr.bf16.mxu0 0
      %4095 = vmatpush1.bf16.msra.mxu0 %v4059
      %4096 = vmatprep.subr.bf16.mxu0 0
      %4097 = vmatpush1.bf16.msra.mxu0 %v4060
      %4098 = vmatprep.subr.bf16.mxu0 0
      %4099 = vmatpush1.bf16.msra.mxu0 %v4061
      %4100 = vmatprep.subr.bf16.mxu0 0
      %4101 = vmatpush1.bf16.msra.mxu0 %v4062
      %4102 = vmatprep.subr.bf16.mxu0 0
      %4103 = vmatpush1.bf16.msra.mxu0 %v4063
      %4104 = vmatprep.subr.bf16.mxu0 0
      %4105 = vmatpush1.bf16.msra.mxu0 %v4064
      %4106 = vmatprep.subr.bf16.mxu0 0
      %4107 = vmatpush1.bf16.msra.mxu0 %v4065
      %4108 = vmatprep.subr.bf16.mxu0 0
      %4109 = vmatpush1.bf16.msra.mxu0 %v4066
      %4110 = vmatprep.subr.bf16.mxu0 0
      %4111 = vmatpush1.bf16.msra.mxu0 %v4067
      %4112 = vmatprep.subr.bf16.mxu0 0
      %4113 = vmatpush1.bf16.msra.mxu0 %v4068
      %4114 = vmatprep.subr.bf16.mxu0 0
      %4115 = vmatpush1.bf16.msra.mxu0 %v4069
      %4116 = vmatprep.subr.bf16.mxu0 0
      %4117 = vmatpush1.bf16.msra.mxu0 %v4070
      %4118 = vmatprep.subr.bf16.mxu0 0
      %4119 = vmatpush1.bf16.msra.mxu0 %v4071
      %4120 = vmatprep.mubr.bf16.mxu0 %v3965
      %4121 = vmatmul.mubr.bf16.gmra.mrb[0].mxu0 %v3964
      %v4122 = vpop.f32.mrb[0].mxu0
      %v4123 = vadd.f32 %v3923, %v4122
      %v4124 = vpop.f32.mrb[0].mxu0
      %v4125 = vpop.f32.mrb[0].mxu0
      %v4126 = vadd.f32 %v3923, %v4125
      %v4127 = vpop.f32.mrb[0].mxu0
      %4128 = vmatprep.mubr.bf16.mxu0 %v3967
      %4129 = vmatmul.mubr.bf16.gmra.mrb[0].mxu0 %v3966
      %v4130 = vpop.f32.mrb[0].mxu0
      %v4131 = vadd.f32 %v3923, %v4130
      %v4132 = vpop.f32.mrb[0].mxu0
      %v4133 = vpop.f32.mrb[0].mxu0
      %v4134 = vadd.f32 %v3923, %v4133
      %v4135 = vpop.f32.mrb[0].mxu0
      %4136 = vmatprep.mubr.bf16.mxu0 %v3969
      %4137 = vmatmul.mubr.bf16.gmra.mrb[0].mxu0 %v3968
      %v4138 = vpop.f32.mrb[0].mxu0
      %v4139 = vadd.f32 %v3923, %v4138
      %v4140 = vpop.f32.mrb[0].mxu0
      %v4141 = vpop.f32.mrb[0].mxu0
      %v4142 = vadd.f32 %v3923, %v4141
      %v4143 = vpop.f32.mrb[0].mxu0
      %4144 = vmatprep.mubr.bf16.mxu0 %v3971
      %4145 = vmatmul.mubr.bf16.gmra.mrb[0].mxu0 %v3970
      %v4146 = vpop.f32.mrb[0].mxu0
      %v4147 = vadd.f32 %v3923, %v4146
      %v4148 = vpop.f32.mrb[0].mxu0
      %v4149 = vpop.f32.mrb[0].mxu0
      %v4150 = vadd.f32 %v3923, %v4149
      %v4151 = vpop.f32.mrb[0].mxu0
      %4152 = vmatprep.mubr.bf16.mxu0 %v3973
      %4153 = vmatmul.mubr.bf16.gmra.mrb[0].mxu0 %v3972
      %v4154 = vpop.f32.mrb[0].mxu0
      %v4155 = vadd.f32 %v3923, %v4154
      %v4156 = vpop.f32.mrb[0].mxu0
      %v4157 = vpop.f32.mrb[0].mxu0
      %v4158 = vadd.f32 %v3923, %v4157
      %v4159 = vpop.f32.mrb[0].mxu0
      %4160 = vmatprep.mubr.bf16.mxu0 %v3975
      %4161 = vmatmul.mubr.bf16.gmra.mrb[0].mxu0 %v3974
      %v4162 = vpop.f32.mrb[0].mxu0
      %v4163 = vadd.f32 %v3923, %v4162
      %v4164 = vpop.f32.mrb[0].mxu0
      %v4165 = vpop.f32.mrb[0].mxu0
      %v4166 = vadd.f32 %v3923, %v4165
      %v4167 = vpop.f32.mrb[0].mxu0
      %4168 = vmatprep.mubr.bf16.mxu0 %v3977
      %4169 = vmatmul.mubr.bf16.gmra.mrb[0].mxu0 %v3976
      %v4170 = vpop.f32.mrb[0].mxu0
      %v4171 = vadd.f32 %v3923, %v4170
      %v4172 = vpop.f32.mrb[0].mxu0
      %v4173 = vpop.f32.mrb[0].mxu0
      %v4174 = vpop.f32.mrb[0].mxu0
      %4175 = vdwg.mxu0
      %v4176 = vmax.f32 %v4123, 0.0
      %v4177 = vmax.f32 %v4126, 0.0
      %v4178 = vmax.f32 %v4131, 0.0
      %v4179 = vmax.f32 %v4134, 0.0
      %v4180 = vmax.f32 %v4139, 0.0
      %v4181 = vmax.f32 %v4142, 0.0
      %v4182 = vmax.f32 %v4147, 0.0
      %v4183 = vmax.f32 %v4150, 0.0
      %v4184 = vmax.f32 %v4155, 0.0
      %v4185 = vmax.f32 %v4158, 0.0
      %v4186 = vmax.f32 %v4163, 0.0
      %v4187 = vmax.f32 %v4166, 0.0
      %v4188 = vmax.f32 %v4171, 0.0
      %v4189 = vpack.c.bf16 %v4177, %v4176
      %v4190 = vpack.c.bf16 %v4179, %v4178
      %v4191 = vpack.c.bf16 %v4181, %v4180
      %v4192 = vpack.c.bf16 %v4183, %v4182
      %v4193 = vpack.c.bf16 %v4185, %v4184
      %v4194 = vpack.c.bf16 %v4187, %v4186
      %v4195 = vpack.c.bf16 %v4188, %v4188
      %v4203 = vunpack.c.l.b16 %v4189
      %v4204 = vunpack.c.h.b16 %v4189
      %v4205 = vunpack.c.l.b16 %v4190
      %v4206 = vunpack.c.h.b16 %v4190
      %v4207 = vunpack.c.l.b16 %v4191
      %v4208 = vunpack.c.h.b16 %v4191
      %v4209 = vunpack.c.l.b16 %v4192
      %v4210 = vunpack.c.h.b16 %v4192
      %v4211 = vunpack.c.l.b16 %v4193
      %v4212 = vunpack.c.h.b16 %v4193
      %v4213 = vunpack.c.l.b16 %v4194
      %v4214 = vunpack.c.h.b16 %v4194
      %v4215 = vunpack.c.l.b16 %v4195
      %v4216 = vpack.c.b16 %v4203, %v4203
      %v4217 = vpack.c.b16 %v4204, %v4204
      %v4218 = vpack.c.b16 %v4205, %v4205
      %v4219 = vpack.c.b16 %v4206, %v4206
      %v4220 = vpack.c.b16 %v4207, %v4207
      %v4221 = vpack.c.b16 %v4208, %v4208
      %v4222 = vpack.c.b16 %v4209, %v4209
      %v4223 = vpack.c.b16 %v4210, %v4210
      %v4224 = vpack.c.b16 %v4211, %v4211
      %v4225 = vpack.c.b16 %v4212, %v4212
      %v4226 = vpack.c.b16 %v4213, %v4213
      %v4227 = vpack.c.b16 %v4214, %v4214
      %v4228 = vpack.c.b16 %v4215, %v4215
      %4229 = vrot.lane.b32.xlu0 %v4216, 48
      %v4230 = vpop.permute.xlu0 %4229
      %4231 = vrot.lane.b32.xlu0 %v4217, 48
      %v4232 = vpop.permute.xlu0 %4231
      %4233 = vrot.lane.b32.xlu0 %v4218, 48
      %v4234 = vpop.permute.xlu0 %4233
      %4235 = vrot.lane.b32.xlu0 %v4219, 48
      %v4236 = vpop.permute.xlu0 %4235
      %4237 = vrot.lane.b32.xlu0 %v4220, 48
      %v4238 = vpop.permute.xlu0 %4237
      %4239 = vrot.lane.b32.xlu0 %v4221, 48
      %v4240 = vpop.permute.xlu0 %4239
      %4241 = vrot.lane.b32.xlu0 %v4222, 48
      %v4242 = vpop.permute.xlu0 %4241
      %4243 = vrot.lane.b32.xlu0 %v4223, 48
      %v4244 = vpop.permute.xlu0 %4243
      %4245 = vrot.lane.b32.xlu0 %v4224, 48
      %v4246 = vpop.permute.xlu0 %4245
      %4247 = vrot.lane.b32.xlu0 %v4225, 48
      %v4248 = vpop.permute.xlu0 %4247
      %4249 = vrot.lane.b32.xlu0 %v4226, 48
      %v4250 = vpop.permute.xlu0 %4249
      %4251 = vrot.lane.b32.xlu0 %v4227, 48
      %v4252 = vpop.permute.xlu0 %4251
      %4253 = vrot.lane.b32.xlu0 %v4228, 48
      %v4254 = vpop.permute.xlu0 %4253
      %vm4268 = vcmask 519552
      %4269 = vst.msk [vmem:[#allocation3] sm:$0xf] %vm4268, %v4230
      %4270 = vst.msk [vmem:[#allocation3 + $0x4] sm:$0xf] %vm4268, %v4232
      %4271 = vst.msk [vmem:[#allocation3 + $0x8] sm:$0xf] %vm4268, %v4234
      %4272 = vst.msk [vmem:[#allocation3 + $0xc] sm:$0xf] %vm4268, %v4236
      %4273 = vst.msk [vmem:[#allocation3 + $0x10] sm:$0xf] %vm4268, %v4238
      %4274 = vst.msk [vmem:[#allocation3 + $0x14] sm:$0xf] %vm4268, %v4240
      %4275 = vst.msk [vmem:[#allocation3 + $0x18] sm:$0xf] %vm4268, %v4242
      %4276 = vst.msk [vmem:[#allocation3 + $0x1c] sm:$0xf] %vm4268, %v4244
      %4277 = vst.msk [vmem:[#allocation3 + $0x20] sm:$0xf] %vm4268, %v4246
      %4278 = vst.msk [vmem:[#allocation3 + $0x24] sm:$0xf] %vm4268, %v4248
      %4279 = vst.msk [vmem:[#allocation3 + $0x28] sm:$0xf] %vm4268, %v4250
      %4280 = vst.msk [vmem:[#allocation3 + $0x2c] sm:$0xf] %vm4268, %v4252
      %vm4281 = vcmask 517504
      %4282 = vst.msk [vmem:[#allocation3 + $0x30] sm:$0x3] %vm4281, %v4254
      %v4283 = vld [vmem:[#allocation3] sm:$0xf]
      %v4284 = vld [vmem:[#allocation3 + $0x4] sm:$0x1]
      %v4285 = vld [vmem:[#allocation3 + $0x4] sm:$0xe]
      %v4286 = vld [vmem:[#allocation3 + $0x8] sm:$0x3]
      %v4289 = vunpack.c.l.b16 %v4283
      %v4290 = vunpack.c.l.b16 %v4284
      %v4291 = vpack.c.b16 %v4290, %v4289
      %v4293 = vshrl.u32 %v4291, 16
      %v4295 = vshll.u32 %v4291, 16
      %v4297 = vrot.slane %v4295, 1
      %v4298 = vor.u32 %v4293, %v4297
      %4299 = vrot.lane.b32.xlu0 %v4298, 64
      %v4300 = vpop.permute.xlu0 %4299
      %v4303 = vunpack.c.l.b16 %v4285
      %v4304 = vunpack.c.l.b16 %v4286
      %v4305 = vpack.c.b16 %v4304, %v4303
      %v4306 = vrot.slane %v4305, 1
      %v4308 = vshrl.u32 %v4305, 16
      %v4310 = vrot.slane %v4308, 1
      %v4311 = vshll.u32 %v4305, 16
      %v4313 = vrot.slane %v4311, 2
      %v4314 = vor.u32 %v4310, %v4313
      %4315 = vrot.lane.b32.xlu0 %v4314, 64
      %v4316 = vpop.permute.xlu0 %4315
      %v4318 = vsel %vm261, %v4291, %v4300
      %v4321 = vsel %vm261, %v4306, %v4316
      %v4324 = vunpack.c.l.b16 %v4318
      %v4325 = vunpack.c.l.b16 %v4321
      %v4326 = vunpack.c.h.b16 %v4318
      %v4327 = vunpack.c.h.b16 %v4321
      %v4328 = vpack.c.b16 %v4325, %v4324
      %v4329 = vpack.c.b16 %v4327, %v4326
      %4332 = vst [vmem:[#allocation4] sm:$0xff] %v4328
      %vm4333 = vsmask.f32 256
      %vm4334 = vmand %vm330, %vm4333
      %vm4335 = vsmask.f32 4352
      %vm4336 = vmand %vm331, %vm4335
      %vm4337 = vmor %vm4336, %vm4334
      %v4338 = vld [vmem:[#allocation4 + $0x8] sm:$0x11]
      %v4339 = vsel %vm4337, %v4329, %v4338
      %4340 = vst [vmem:[#allocation4 + $0x8] sm:$0x11] %v4339
      %v4341 = vld [vmem:[#allocation3 + $0x4] sm:$0xe]
      %v4342 = vld [vmem:[#allocation3 + $0x8] sm:$0x3]
      %v4343 = vld [vmem:[#allocation3 + $0x8] sm:$0xc]
      %v4344 = vld [vmem:[#allocation3 + $0xc] sm:$0x7]
      %v4347 = vunpack.c.l.b16 %v4341
      %v4348 = vunpack.c.l.b16 %v4342
      %v4349 = vpack.c.b16 %v4348, %v4347
      %v4351 = vshrl.u32 %v4349, 16
      %v4353 = vshll.u32 %v4349, 16
      %v4355 = vrot.slane %v4353, 1
      %v4356 = vor.u32 %v4351, %v4355
      %4357 = vrot.lane.b32.xlu0 %v4356, 64
      %v4358 = vpop.permute.xlu0 %4357
      %v4361 = vunpack.c.l.b16 %v4343
      %v4362 = vunpack.c.l.b16 %v4344
      %v4363 = vpack.c.b16 %v4362, %v4361
      %v4364 = vrot.slane %v4363, 1
      %v4366 = vshrl.u32 %v4363, 16
      %v4368 = vrot.slane %v4366, 1
      %v4369 = vshll.u32 %v4363, 16
      %v4371 = vrot.slane %v4369, 2
      %v4372 = vor.u32 %v4368, %v4371
      %4373 = vrot.lane.b32.xlu0 %v4372, 64
      %v4374 = vpop.permute.xlu0 %4373
      %v4376 = vsel %vm261, %v4349, %v4358
      %v4379 = vsel %vm261, %v4364, %v4374
      %v4382 = vunpack.c.l.b16 %v4376
      %v4383 = vunpack.c.l.b16 %v4379
      %v4384 = vunpack.c.h.b16 %v4376
      %v4385 = vunpack.c.h.b16 %v4379
      %v4386 = vpack.c.b16 %v4383, %v4382
      %v4387 = vpack.c.b16 %v4385, %v4384
      %vm4388 = vsmask.f32 3328
      %vm4389 = vsmask.f32 7440
      %vm4390 = vmor %vm4388, %vm4389
      %v4392 = vshrl.u32 %v4386, 16
      %v4394 = vrot.slane %v4392, 4
      %v4395 = vshll.u32 %v4386, 16
      %v4397 = vrot.slane %v4395, 5
      %v4398 = vor.u32 %v4394, %v4397
      %v4399 = vrot.slane %v4398, 4
      %v4401 = vshll.u32 %v4387, 16
      %v4403 = vrot.slane %v4401, 5
      %v4404 = vsel %vm4390, %v4399, %v4403
      %v4405 = vshrl.u32 %v4387, 16
      %v4407 = vrot.slane %v4405, 4
      %v4408 = vor.u32 %v4407, %v4403
      %v4409 = vrot.slane %v4408, 4
      %vm4412 = vcmask 1043456
      %vm4413 = vsmask.f32 7938
      %vm4414 = vmand %vm4412, %vm4413
      %vm4415 = vcmask 1047556
      %vm4416 = vsmask.f32 7954
      %vm4417 = vmand %vm4415, %vm4416
      %vm4418 = vmor %vm4417, %vm4414
      %v4419 = vld [vmem:[#allocation4 + $0x8] sm:$0xff]
      %v4420 = vsel %vm4418, %v4404, %v4419
      %4421 = vst [vmem:[#allocation4 + $0x8] sm:$0xff] %v4420
      %4422 = vst [vmem:[#allocation4 + $0x10] sm:$0x11] %v4409
      %v4423 = vld [vmem:[#allocation3 + $0x8] sm:$0xc]
      %v4424 = vld [vmem:[#allocation3 + $0xc] sm:$0x7]
      %v4425 = vld [vmem:[#allocation3 + $0xc] sm:$0x8]
      %v4426 = vld [vmem:[#allocation3 + $0x10] sm:$0xf]
      %v4429 = vunpack.c.l.b16 %v4423
      %v4430 = vunpack.c.l.b16 %v4424
      %v4431 = vpack.c.b16 %v4430, %v4429
      %v4433 = vshrl.u32 %v4431, 16
      %v4435 = vshll.u32 %v4431, 16
      %v4437 = vrot.slane %v4435, 1
      %v4438 = vor.u32 %v4433, %v4437
      %4439 = vrot.lane.b32.xlu0 %v4438, 64
      %v4440 = vpop.permute.xlu0 %4439
      %v4443 = vunpack.c.l.b16 %v4425
      %v4444 = vunpack.c.l.b16 %v4426
      %v4445 = vpack.c.b16 %v4444, %v4443
      %v4446 = vrot.slane %v4445, 1
      %v4448 = vshrl.u32 %v4445, 16
      %v4450 = vrot.slane %v4448, 1
      %v4451 = vshll.u32 %v4445, 16
      %v4453 = vrot.slane %v4451, 2
      %v4454 = vor.u32 %v4450, %v4453
      %4455 = vrot.lane.b32.xlu0 %v4454, 64
      %v4456 = vpop.permute.xlu0 %4455
      %v4458 = vsel %vm261, %v4431, %v4440
      %v4461 = vsel %vm261, %v4446, %v4456
      %v4464 = vunpack.c.l.b16 %v4458
      %v4465 = vunpack.c.l.b16 %v4461
      %v4466 = vunpack.c.h.b16 %v4458
      %v4467 = vunpack.c.h.b16 %v4461
      %v4468 = vpack.c.b16 %v4465, %v4464
      %v4469 = vpack.c.b16 %v4467, %v4466
      %v4470 = vrot.slane %v4468, 5
      %v4471 = vrot.slane %v4470, 4
      %v4472 = vrot.slane %v4469, 5
      %v4473 = vsel %vm454, %v4471, %v4472
      %v4474 = vrot.slane %v4472, 4
      %4477 = vst [vmem:[#allocation4 + $0x10] sm:$0xee] %v4473
      %vm4478 = vsmask.f32 1280
      %vm4479 = vmand %vm391, %vm4478
      %vm4480 = vsmask.f32 5376
      %vm4481 = vmand %vm392, %vm4480
      %vm4482 = vmor %vm4481, %vm4479
      %v4483 = vld [vmem:[#allocation4 + $0x18] sm:$0x33]
      %v4484 = vsel %vm4482, %v4474, %v4483
      %4485 = vst [vmem:[#allocation4 + $0x18] sm:$0x33] %v4484
      %v4486 = vld [vmem:[#allocation3 + $0xc] sm:$0x8]
      %v4487 = vld [vmem:[#allocation3 + $0x10] sm:$0xf]
      %v4488 = vld [vmem:[#allocation3 + $0x14] sm:$0xf]
      %v4489 = vld [vmem:[#allocation3 + $0x18] sm:$0x1]
      %v4492 = vunpack.c.l.b16 %v4486
      %v4493 = vunpack.c.l.b16 %v4487
      %v4494 = vpack.c.b16 %v4493, %v4492
      %v4496 = vshrl.u32 %v4494, 16
      %v4498 = vshll.u32 %v4494, 16
      %v4500 = vrot.slane %v4498, 1
      %v4501 = vor.u32 %v4496, %v4500
      %4502 = vrot.lane.b32.xlu0 %v4501, 64
      %v4503 = vpop.permute.xlu0 %4502
      %v4506 = vunpack.c.l.b16 %v4488
      %v4507 = vunpack.c.l.b16 %v4489
      %v4508 = vpack.c.b16 %v4507, %v4506
      %v4509 = vrot.slane %v4508, 5
      %v4511 = vshrl.u32 %v4508, 16
      %v4513 = vrot.slane %v4511, 5
      %v4514 = vshll.u32 %v4508, 16
      %v4516 = vrot.slane %v4514, 6
      %v4517 = vor.u32 %v4513, %v4516
      %4518 = vrot.lane.b32.xlu0 %v4517, 64
      %v4519 = vpop.permute.xlu0 %4518
      %v4521 = vsel %vm261, %v4494, %v4503
      %v4524 = vsel %vm261, %v4509, %v4519
      %v4527 = vunpack.c.l.b16 %v4521
      %v4528 = vunpack.c.l.b16 %v4524
      %v4529 = vunpack.c.h.b16 %v4521
      %v4530 = vunpack.c.h.b16 %v4524
      %v4531 = vpack.c.b16 %v4528, %v4527
      %v4532 = vpack.c.b16 %v4530, %v4529
      %vm4533 = vsmask.f32 2304
      %vm4534 = vsmask.f32 6416
      %vm4535 = vmor %vm4533, %vm4534
      %v4537 = vshrl.u32 %v4531, 16
      %v4539 = vrot.slane %v4537, 5
      %v4540 = vshll.u32 %v4531, 16
      %v4542 = vrot.slane %v4540, 6
      %v4543 = vor.u32 %v4539, %v4542
      %v4544 = vrot.slane %v4543, 4
      %v4546 = vshrl.u32 %v4532, 16
      %v4548 = vrot.slane %v4546, 5
      %v4549 = vshll.u32 %v4532, 16
      %v4551 = vrot.slane %v4549, 6
      %v4552 = vor.u32 %v4548, %v4551
      %v4553 = vsel %vm4535, %v4544, %v4552
      %v4554 = vrot.slane %v4552, 4
      %vm4557 = vcmask 1043457
      %vm4558 = vsmask.f32 7942
      %vm4559 = vmand %vm4557, %vm4558
      %vm4560 = vcmask 1047557
      %vm4561 = vsmask.f32 7958
      %vm4562 = vmand %vm4560, %vm4561
      %vm4563 = vmor %vm4562, %vm4559
      %v4564 = vld [vmem:[#allocation4 + $0x18] sm:$0xee]
      %v4565 = vsel %vm4563, %v4553, %v4564
      %4566 = vst [vmem:[#allocation4 + $0x18] sm:$0xee] %v4565
      %4567 = vst [vmem:[#allocation4 + $0x20] sm:$0x33] %v4554
      %v4568 = vld [vmem:[#allocation3 + $0x14] sm:$0xf]
      %v4569 = vld [vmem:[#allocation3 + $0x18] sm:$0x1]
      %v4570 = vld [vmem:[#allocation3 + $0x18] sm:$0xe]
      %v4571 = vld [vmem:[#allocation3 + $0x1c] sm:$0x3]
      %v4574 = vunpack.c.l.b16 %v4568
      %v4575 = vunpack.c.l.b16 %v4569
      %v4576 = vpack.c.b16 %v4575, %v4574
      %v4578 = vshrl.u32 %v4576, 16
      %v4580 = vshll.u32 %v4576, 16
      %v4582 = vrot.slane %v4580, 1
      %v4583 = vor.u32 %v4578, %v4582
      %4584 = vrot.lane.b32.xlu0 %v4583, 64
      %v4585 = vpop.permute.xlu0 %4584
      %v4588 = vunpack.c.l.b16 %v4570
      %v4589 = vunpack.c.l.b16 %v4571
      %v4590 = vpack.c.b16 %v4589, %v4588
      %v4591 = vrot.slane %v4590, 1
      %v4593 = vshrl.u32 %v4590, 16
      %v4595 = vrot.slane %v4593, 1
      %v4596 = vshll.u32 %v4590, 16
      %v4598 = vrot.slane %v4596, 2
      %v4599 = vor.u32 %v4595, %v4598
      %4600 = vrot.lane.b32.xlu0 %v4599, 64
      %v4601 = vpop.permute.xlu0 %4600
      %v4603 = vsel %vm261, %v4576, %v4585
      %v4606 = vsel %vm261, %v4591, %v4601
      %v4609 = vunpack.c.l.b16 %v4603
      %v4610 = vunpack.c.l.b16 %v4606
      %v4611 = vunpack.c.h.b16 %v4603
      %v4612 = vunpack.c.h.b16 %v4606
      %v4613 = vpack.c.b16 %v4610, %v4609
      %v4614 = vpack.c.b16 %v4612, %v4611
      %v4615 = vrot.slane %v4613, 6
      %v4616 = vrot.slane %v4615, 4
      %v4617 = vrot.slane %v4614, 6
      %v4618 = vsel %vm393, %v4616, %v4617
      %4621 = vst [vmem:[#allocation4 + $0x20] sm:$0xcc] %v4615
      %vm4622 = vmand %vm452, %vm4533
      %vm4623 = vsmask.f32 6400
      %vm4624 = vmand %vm453, %vm4623
      %vm4625 = vmor %vm4624, %vm4622
      %v4626 = vld [vmem:[#allocation4 + $0x28] sm:$0x77]
      %v4627 = vsel %vm4625, %v4618, %v4626
      %4628 = vst [vmem:[#allocation4 + $0x28] sm:$0x77] %v4627
      %v4629 = vld [vmem:[#allocation3 + $0x18] sm:$0xe]
      %v4630 = vld [vmem:[#allocation3 + $0x1c] sm:$0x3]
      %v4631 = vld [vmem:[#allocation3 + $0x1c] sm:$0xc]
      %v4632 = vld [vmem:[#allocation3 + $0x20] sm:$0x7]
      %v4635 = vunpack.c.l.b16 %v4629
      %v4636 = vunpack.c.l.b16 %v4630
      %v4637 = vpack.c.b16 %v4636, %v4635
      %v4639 = vshrl.u32 %v4637, 16
      %v4641 = vshll.u32 %v4637, 16
      %v4643 = vrot.slane %v4641, 1
      %v4644 = vor.u32 %v4639, %v4643
      %4645 = vrot.lane.b32.xlu0 %v4644, 64
      %v4646 = vpop.permute.xlu0 %4645
      %v4649 = vunpack.c.l.b16 %v4631
      %v4650 = vunpack.c.l.b16 %v4632
      %v4651 = vpack.c.b16 %v4650, %v4649
      %v4652 = vrot.slane %v4651, 1
      %v4654 = vshrl.u32 %v4651, 16
      %v4656 = vrot.slane %v4654, 1
      %v4657 = vshll.u32 %v4651, 16
      %v4659 = vrot.slane %v4657, 2
      %v4660 = vor.u32 %v4656, %v4659
      %4661 = vrot.lane.b32.xlu0 %v4660, 64
      %v4662 = vpop.permute.xlu0 %4661
      %v4664 = vsel %vm261, %v4637, %v4646
      %v4667 = vsel %vm261, %v4652, %v4662
      %v4670 = vunpack.c.l.b16 %v4664
      %v4671 = vunpack.c.l.b16 %v4667
      %v4672 = vunpack.c.h.b16 %v4664
      %v4673 = vunpack.c.h.b16 %v4667
      %v4674 = vpack.c.b16 %v4671, %v4670
      %v4675 = vpack.c.b16 %v4673, %v4672
      %vm4676 = vsmask.f32 5392
      %vm4677 = vmor %vm4478, %vm4676
      %v4679 = vshrl.u32 %v4674, 16
      %v4681 = vrot.slane %v4679, 6
      %v4682 = vshll.u32 %v4674, 16
      %v4684 = vrot.slane %v4682, 7
      %v4685 = vor.u32 %v4681, %v4684
      %v4686 = vrot.slane %v4685, 4
      %v4688 = vshrl.u32 %v4675, 16
      %v4690 = vrot.slane %v4688, 6
      %v4691 = vshll.u32 %v4675, 16
      %v4693 = vrot.slane %v4691, 7
      %v4694 = vor.u32 %v4690, %v4693
      %v4695 = vsel %vm4677, %v4686, %v4694
      %vm4698 = vcmask 1043458
      %vm4699 = vsmask.f32 7946
      %vm4700 = vmand %vm4698, %vm4699
      %vm4701 = vcmask 1047558
      %vm4702 = vsmask.f32 7962
      %vm4703 = vmand %vm4701, %vm4702
      %vm4704 = vmor %vm4703, %vm4700
      %v4705 = vld [vmem:[#allocation4 + $0x28] sm:$0xcc]
      %v4706 = vsel %vm4704, %v4685, %v4705
      %4707 = vst [vmem:[#allocation4 + $0x28] sm:$0xcc] %v4706
      %4708 = vst [vmem:[#allocation4 + $0x30] sm:$0x77] %v4695
      %v4709 = vld [vmem:[#allocation3 + $0x1c] sm:$0xc]
      %v4710 = vld [vmem:[#allocation3 + $0x20] sm:$0x7]
      %v4711 = vld [vmem:[#allocation3 + $0x20] sm:$0x8]
      %v4712 = vld [vmem:[#allocation3 + $0x24] sm:$0xf]
      %v4715 = vunpack.c.l.b16 %v4709
      %v4716 = vunpack.c.l.b16 %v4710
      %v4717 = vpack.c.b16 %v4716, %v4715
      %v4719 = vshrl.u32 %v4717, 16
      %v4721 = vshll.u32 %v4717, 16
      %v4723 = vrot.slane %v4721, 1
      %v4724 = vor.u32 %v4719, %v4723
      %4725 = vrot.lane.b32.xlu0 %v4724, 64
      %v4726 = vpop.permute.xlu0 %4725
      %v4729 = vunpack.c.l.b16 %v4711
      %v4730 = vunpack.c.l.b16 %v4712
      %v4731 = vpack.c.b16 %v4730, %v4729
      %v4732 = vrot.slane %v4731, 1
      %v4734 = vshrl.u32 %v4731, 16
      %v4736 = vrot.slane %v4734, 1
      %v4737 = vshll.u32 %v4731, 16
      %v4739 = vrot.slane %v4737, 2
      %v4740 = vor.u32 %v4736, %v4739
      %4741 = vrot.lane.b32.xlu0 %v4740, 64
      %v4742 = vpop.permute.xlu0 %4741
      %v4744 = vsel %vm261, %v4717, %v4726
      %v4747 = vsel %vm261, %v4732, %v4742
      %v4750 = vunpack.c.l.b16 %v4744
      %v4751 = vunpack.c.l.b16 %v4747
      %v4752 = vunpack.c.h.b16 %v4744
      %v4753 = vunpack.c.h.b16 %v4747
      %v4754 = vpack.c.b16 %v4751, %v4750
      %v4755 = vpack.c.b16 %v4753, %v4752
      %v4756 = vrot.slane %v4754, 7
      %v4757 = vrot.slane %v4756, 4
      %v4758 = vrot.slane %v4755, 7
      %v4759 = vsel %vm332, %v4757, %v4758
      %4762 = vst [vmem:[#allocation4 + $0x30] sm:$0x88] %v4756
      %vm4763 = vmand %vm4412, %vm4388
      %vm4764 = vsmask.f32 7424
      %vm4765 = vmand %vm4415, %vm4764
      %vm4766 = vmor %vm4765, %vm4763
      %v4767 = vld [vmem:[#allocation4 + $0x38] sm:$0xff]
      %v4768 = vsel %vm4766, %v4759, %v4767
      %4769 = vst [vmem:[#allocation4 + $0x38] sm:$0xff] %v4768
      %v4770 = vld [vmem:[#allocation3 + $0x20] sm:$0x8]
      %v4771 = vld [vmem:[#allocation3 + $0x24] sm:$0xf]
      %v4772 = vld [vmem:[#allocation3 + $0x28] sm:$0xf]
      %v4773 = vld [vmem:[#allocation3 + $0x2c] sm:$0x1]
      %v4776 = vunpack.c.l.b16 %v4770
      %v4777 = vunpack.c.l.b16 %v4771
      %v4778 = vpack.c.b16 %v4777, %v4776
      %v4780 = vshrl.u32 %v4778, 16
      %v4782 = vshll.u32 %v4778, 16
      %v4784 = vrot.slane %v4782, 1
      %v4785 = vor.u32 %v4780, %v4784
      %4786 = vrot.lane.b32.xlu0 %v4785, 64
      %v4787 = vpop.permute.xlu0 %4786
      %v4790 = vunpack.c.l.b16 %v4772
      %v4791 = vunpack.c.l.b16 %v4773
      %v4792 = vpack.c.b16 %v4791, %v4790
      %v4793 = vrot.slane %v4792, 5
      %v4795 = vshrl.u32 %v4792, 16
      %v4797 = vrot.slane %v4795, 5
      %v4798 = vshll.u32 %v4792, 16
      %v4800 = vrot.slane %v4798, 6
      %v4801 = vor.u32 %v4797, %v4800
      %4802 = vrot.lane.b32.xlu0 %v4801, 64
      %v4803 = vpop.permute.xlu0 %4802
      %v4805 = vsel %vm261, %v4778, %v4787
      %v4808 = vsel %vm261, %v4793, %v4803
      %v4811 = vunpack.c.l.b16 %v4805
      %v4812 = vunpack.c.l.b16 %v4808
      %v4813 = vunpack.c.h.b16 %v4805
      %v4814 = vunpack.c.h.b16 %v4808
      %v4815 = vpack.c.b16 %v4812, %v4811
      %v4816 = vpack.c.b16 %v4814, %v4813
      %vm4817 = vsmask.f32 4368
      %vm4818 = vmor %vm4333, %vm4817
      %v4820 = vshll.u32 %v4815, 16
      %v4822 = vshrl.u32 %v4815, 16
      %v4824 = vrot.slane %v4822, 7
      %v4825 = vrot.slane %v4824, 4
      %v4827 = vshrl.u32 %v4816, 16
      %v4829 = vrot.slane %v4827, 7
      %v4830 = vshll.u32 %v4816, 16
      %v4832 = vor.u32 %v4829, %v4830
      %v4833 = vsel %vm4818, %v4825, %v4832
      %vm4836 = vcmask 1043459
      %vm4837 = vsmask.f32 7950
      %vm4838 = vmand %vm4836, %vm4837
      %vm4839 = vcmask 1047559
      %vm4840 = vsmask.f32 7966
      %vm4841 = vmand %vm4839, %vm4840
      %vm4842 = vmor %vm4841, %vm4838
      %v4843 = vld [vmem:[#allocation4 + $0x38] sm:$0x88]
      %v4844 = vsel %vm4842, %v4820, %v4843
      %4845 = vst [vmem:[#allocation4 + $0x38] sm:$0x88] %v4844
      %4846 = vst [vmem:[#allocation4 + $0x40] sm:$0xff] %v4833
      %v4847 = vld [vmem:[#allocation3 + $0x28] sm:$0xf]
      %v4848 = vld [vmem:[#allocation3 + $0x2c] sm:$0x1]
      %v4849 = vld [vmem:[#allocation3 + $0x2c] sm:$0xe]
      %v4850 = vld [vmem:[#allocation3 + $0x30] sm:$0x3]
      %v4853 = vunpack.c.l.b16 %v4847
      %v4854 = vunpack.c.l.b16 %v4848
      %v4855 = vpack.c.b16 %v4854, %v4853
      %v4857 = vshrl.u32 %v4855, 16
      %v4859 = vshll.u32 %v4855, 16
      %v4861 = vrot.slane %v4859, 1
      %v4862 = vor.u32 %v4857, %v4861
      %4863 = vrot.lane.b32.xlu0 %v4862, 64
      %v4864 = vpop.permute.xlu0 %4863
      %v4867 = vunpack.c.l.b16 %v4849
      %v4868 = vunpack.c.l.b16 %v4850
      %v4869 = vpack.c.b16 %v4868, %v4867
      %v4870 = vrot.slane %v4869, 1
      %v4872 = vshrl.u32 %v4869, 16
      %v4874 = vrot.slane %v4872, 1
      %v4875 = vshll.u32 %v4869, 16
      %v4877 = vrot.slane %v4875, 2
      %v4878 = vor.u32 %v4874, %v4877
      %4879 = vrot.lane.b32.xlu0 %v4878, 64
      %v4880 = vpop.permute.xlu0 %4879
      %v4882 = vsel %vm261, %v4855, %v4864
      %v4885 = vsel %vm261, %v4870, %v4880
      %v4888 = vunpack.c.l.b16 %v4882
      %v4889 = vunpack.c.l.b16 %v4885
      %v4890 = vunpack.c.h.b16 %v4882
      %v4891 = vunpack.c.h.b16 %v4885
      %v4892 = vpack.c.b16 %v4889, %v4888
      %v4893 = vpack.c.b16 %v4891, %v4890
      %4896 = vst [vmem:[#allocation4 + $0x48] sm:$0xff] %v4892
      %v4897 = vld [vmem:[#allocation4 + $0x50] sm:$0x11]
      %v4898 = vsel %vm4337, %v4893, %v4897
      %4899 = vst [vmem:[#allocation4 + $0x50] sm:$0x11] %v4898
      %v4900 = vld [vmem:[#allocation4] sm:$0xff]
      %v4901 = vld [vmem:[#allocation4 + $0x8] sm:$0xff]
      %v4902 = vld [vmem:[#allocation4 + $0x10] sm:$0xff]
      %v4903 = vld [vmem:[#allocation4 + $0x18] sm:$0xff]
      %v4904 = vld [vmem:[#allocation4 + $0x20] sm:$0xff]
      %v4905 = vld [vmem:[#allocation4 + $0x28] sm:$0xff]
      %v4906 = vld [vmem:[#allocation4 + $0x30] sm:$0xff]
      %v4907 = vld [vmem:[#allocation4 + $0x38] sm:$0xff]
      %v4908 = vld [vmem:[#allocation4 + $0x40] sm:$0xff]
      %v4909 = vld [vmem:[#allocation4 + $0x48] sm:$0xff]
      %v4910 = vld [vmem:[#allocation4 + $0x50] sm:$0x11]
      %v4911 = vld [vmem:[%s3] sm:$0xf]
      %v4912 = vld [vmem:[%s3 + $0x4] sm:$0xf]
      %v4913 = vld [vmem:[%s3 + $0x8] sm:$0xf]
      %v4914 = vld [vmem:[%s3 + $0xc] sm:$0xf]
      %v4915 = vld [vmem:[%s3 + $0x10] sm:$0xf]
      %v4916 = vld [vmem:[%s3 + $0x14] sm:$0xf]
      %v4917 = vld [vmem:[%s3 + $0x18] sm:$0xf]
      %v4918 = vld [vmem:[%s3 + $0x1c] sm:$0xf]
      %v4919 = vld [vmem:[%s3 + $0x20] sm:$0xf]
      %v4920 = vld [vmem:[%s3 + $0x24] sm:$0xf]
      %v4921 = vld [vmem:[%s3 + $0x28] sm:$0xf]
      %v4922 = vld [vmem:[%s3 + $0x2c] sm:$0xf]
      %v4923 = vld [vmem:[%s3 + $0x30] sm:$0xf]
      %v4924 = vld [vmem:[%s3 + $0x34] sm:$0xf]
      %v4925 = vld [vmem:[%s3 + $0x38] sm:$0xf]
      %v4926 = vld [vmem:[%s3 + $0x3c] sm:$0xf]
      %v4927 = vld [vmem:[%s3 + $0x40] sm:$0xf]
      %v4928 = vld [vmem:[%s3 + $0x44] sm:$0xf]
      %v4929 = vld [vmem:[%s3 + $0x48] sm:$0xf]
      %v4930 = vld [vmem:[%s3 + $0x4c] sm:$0xf]
      %v4931 = vld [vmem:[%s3 + $0x50] sm:$0xf]
      %v4932 = vld [vmem:[%s3 + $0x54] sm:$0xf]
      %v4933 = vld [vmem:[%s3 + $0x58] sm:$0xf]
      %v4934 = vld [vmem:[%s3 + $0x5c] sm:$0xf]
      %v4935 = vld [vmem:[%s3 + $0x60] sm:$0xf]
      %v4936 = vld [vmem:[%s3 + $0x64] sm:$0xf]
      %v4937 = vld [vmem:[%s3 + $0x68] sm:$0xf]
      %v4938 = vld [vmem:[%s3 + $0x6c] sm:$0xf]
      %v4939 = vld [vmem:[%s3 + $0x70] sm:$0xf]
      %v4940 = vld [vmem:[%s3 + $0x74] sm:$0xf]
      %v4941 = vld [vmem:[%s3 + $0x78] sm:$0xf]
      %v4942 = vld [vmem:[%s3 + $0x7c] sm:$0xf]
      %v4943 = vld [vmem:[%s4] sm:$0x1]
      %v4945 = vlaneseq
      %v4946 = vshrl.u32 %v4945, 7
      %v4947 = vsub.s32 0, %v4946
      %v4948 = vrot.slane %v4943, %v4947
      %v4961 = vunpack.c.l.b16 %v4900
      %v4962 = vunpack.c.h.b16 %v4900
      %v4963 = vunpack.c.l.b16 %v4901
      %v4964 = vunpack.c.h.b16 %v4901
      %v4965 = vunpack.c.l.b16 %v4902
      %v4966 = vunpack.c.h.b16 %v4902
      %v4967 = vunpack.c.l.b16 %v4903
      %v4968 = vunpack.c.h.b16 %v4903
      %v4969 = vunpack.c.l.b16 %v4904
      %v4970 = vunpack.c.h.b16 %v4904
      %v4971 = vunpack.c.l.b16 %v4905
      %v4972 = vunpack.c.h.b16 %v4905
      %v4973 = vunpack.c.l.b16 %v4906
      %v4974 = vunpack.c.h.b16 %v4906
      %v4975 = vunpack.c.l.b16 %v4907
      %v4976 = vunpack.c.h.b16 %v4907
      %v4977 = vunpack.c.l.b16 %v4908
      %v4978 = vunpack.c.h.b16 %v4908
      %v4979 = vunpack.c.l.b16 %v4909
      %v4980 = vunpack.c.h.b16 %v4909
      %v4981 = vunpack.c.l.b16 %v4910
      %v4982 = vunpack.c.h.b16 %v4910
      %v4983 = vpack.c.b16 %v4963, %v4961
      %v4984 = vpack.c.b16 %v4964, %v4962
      %v4985 = vpack.c.b16 %v4967, %v4965
      %v4986 = vpack.c.b16 %v4968, %v4966
      %v4987 = vpack.c.b16 %v4971, %v4969
      %v4988 = vpack.c.b16 %v4972, %v4970
      %v4989 = vpack.c.b16 %v4975, %v4973
      %v4990 = vpack.c.b16 %v4976, %v4974
      %v4991 = vpack.c.b16 %v4979, %v4977
      %v4992 = vpack.c.b16 %v4980, %v4978
      %v4993 = vpack.c.b16 %v4981, %v4981
      %v4994 = vpack.c.b16 %v4982, %v4982
      %v5039 = vunpack.c.l.b16 %v4911
      %v5040 = vunpack.c.l.b16 %v4912
      %v5041 = vunpack.c.l.b16 %v4913
      %v5042 = vunpack.c.l.b16 %v4914
      %v5043 = vunpack.c.l.b16 %v4915
      %v5044 = vunpack.c.l.b16 %v4916
      %v5045 = vunpack.c.l.b16 %v4917
      %v5046 = vunpack.c.l.b16 %v4918
      %v5047 = vunpack.c.l.b16 %v4919
      %v5048 = vunpack.c.l.b16 %v4920
      %v5049 = vunpack.c.l.b16 %v4921
      %v5050 = vunpack.c.l.b16 %v4922
      %v5051 = vunpack.c.l.b16 %v4923
      %v5052 = vunpack.c.l.b16 %v4924
      %v5053 = vunpack.c.l.b16 %v4925
      %v5054 = vunpack.c.l.b16 %v4926
      %v5055 = vunpack.c.l.b16 %v4927
      %v5056 = vunpack.c.l.b16 %v4928
      %v5057 = vunpack.c.l.b16 %v4929
      %v5058 = vunpack.c.l.b16 %v4930
      %v5059 = vunpack.c.l.b16 %v4931
      %v5060 = vunpack.c.l.b16 %v4932
      %v5061 = vunpack.c.l.b16 %v4933
      %v5062 = vunpack.c.l.b16 %v4934
      %v5063 = vunpack.c.l.b16 %v4935
      %v5064 = vunpack.c.l.b16 %v4936
      %v5065 = vunpack.c.l.b16 %v4937
      %v5066 = vunpack.c.l.b16 %v4938
      %v5067 = vunpack.c.l.b16 %v4939
      %v5068 = vunpack.c.l.b16 %v4940
      %v5069 = vunpack.c.l.b16 %v4941
      %v5070 = vunpack.c.l.b16 %v4942
      %v5071 = vpack.c.b16 %v5040, %v5039
      %v5072 = vpack.c.b16 %v5042, %v5041
      %v5073 = vpack.c.b16 %v5044, %v5043
      %v5074 = vpack.c.b16 %v5046, %v5045
      %v5075 = vpack.c.b16 %v5048, %v5047
      %v5076 = vpack.c.b16 %v5050, %v5049
      %v5077 = vpack.c.b16 %v5052, %v5051
      %v5078 = vpack.c.b16 %v5054, %v5053
      %v5079 = vpack.c.b16 %v5056, %v5055
      %v5080 = vpack.c.b16 %v5058, %v5057
      %v5081 = vpack.c.b16 %v5060, %v5059
      %v5082 = vpack.c.b16 %v5062, %v5061
      %v5083 = vpack.c.b16 %v5064, %v5063
      %v5084 = vpack.c.b16 %v5066, %v5065
      %v5085 = vpack.c.b16 %v5068, %v5067
      %v5086 = vpack.c.b16 %v5070, %v5069
      %5103 = vmatprep.subr.bf16.mxu0 0
      %5104 = vmatpush1.bf16.msra.mxu0 %v5071
      %5105 = vmatprep.subr.bf16.mxu0 0
      %5106 = vmatpush1.bf16.msra.mxu0 %v5072
      %5107 = vmatprep.subr.bf16.mxu0 0
      %5108 = vmatpush1.bf16.msra.mxu0 %v5073
      %5109 = vmatprep.subr.bf16.mxu0 0
      %5110 = vmatpush1.bf16.msra.mxu0 %v5074
      %5111 = vmatprep.subr.bf16.mxu0 0
      %5112 = vmatpush1.bf16.msra.mxu0 %v5075
      %5113 = vmatprep.subr.bf16.mxu0 0
      %5114 = vmatpush1.bf16.msra.mxu0 %v5076
      %5115 = vmatprep.subr.bf16.mxu0 0
      %5116 = vmatpush1.bf16.msra.mxu0 %v5077
      %5117 = vmatprep.subr.bf16.mxu0 0
      %5118 = vmatpush1.bf16.msra.mxu0 %v5078
      %5119 = vmatprep.subr.bf16.mxu0 0
      %5120 = vmatpush1.bf16.msra.mxu0 %v5079
      %5121 = vmatprep.subr.bf16.mxu0 0
      %5122 = vmatpush1.bf16.msra.mxu0 %v5080
      %5123 = vmatprep.subr.bf16.mxu0 0
      %5124 = vmatpush1.bf16.msra.mxu0 %v5081
      %5125 = vmatprep.subr.bf16.mxu0 0
      %5126 = vmatpush1.bf16.msra.mxu0 %v5082
      %5127 = vmatprep.subr.bf16.mxu0 0
      %5128 = vmatpush1.bf16.msra.mxu0 %v5083
      %5129 = vmatprep.subr.bf16.mxu0 0
      %5130 = vmatpush1.bf16.msra.mxu0 %v5084
      %5131 = vmatprep.subr.bf16.mxu0 0
      %5132 = vmatpush1.bf16.msra.mxu0 %v5085
      %5133 = vmatprep.subr.bf16.mxu0 0
      %5134 = vmatpush1.bf16.msra.mxu0 %v5086
      %5135 = vmatprep.mubr.bf16.mxu0 %v4984
      %5136 = vmatmul.mubr.bf16.gmra.mrb[0].mxu0 %v4983
      %v5137 = vpop.f32.mrb[0].mxu0
      %v5138 = vadd.f32 %v4948, %v5137
      %v5139 = vpop.f32.mrb[0].mxu0
      %v5140 = vpop.f32.mrb[0].mxu0
      %v5141 = vadd.f32 %v4948, %v5140
      %v5142 = vpop.f32.mrb[0].mxu0
      %5143 = vmatprep.mubr.bf16.mxu0 %v4986
      %5144 = vmatmul.mubr.bf16.gmra.mrb[0].mxu0 %v4985
      %v5145 = vpop.f32.mrb[0].mxu0
      %v5146 = vadd.f32 %v4948, %v5145
      %v5147 = vpop.f32.mrb[0].mxu0
      %v5148 = vpop.f32.mrb[0].mxu0
      %v5149 = vadd.f32 %v4948, %v5148
      %v5150 = vpop.f32.mrb[0].mxu0
      %5151 = vmatprep.mubr.bf16.mxu0 %v4988
      %5152 = vmatmul.mubr.bf16.gmra.mrb[0].mxu0 %v4987
      %v5153 = vpop.f32.mrb[0].mxu0
      %v5154 = vadd.f32 %v4948, %v5153
      %v5155 = vpop.f32.mrb[0].mxu0
      %v5156 = vpop.f32.mrb[0].mxu0
      %v5157 = vadd.f32 %v4948, %v5156
      %v5158 = vpop.f32.mrb[0].mxu0
      %5159 = vmatprep.mubr.bf16.mxu0 %v4990
      %5160 = vmatmul.mubr.bf16.gmra.mrb[0].mxu0 %v4989
      %v5161 = vpop.f32.mrb[0].mxu0
      %v5162 = vadd.f32 %v4948, %v5161
      %v5163 = vpop.f32.mrb[0].mxu0
      %v5164 = vpop.f32.mrb[0].mxu0
      %v5165 = vadd.f32 %v4948, %v5164
      %v5166 = vpop.f32.mrb[0].mxu0
      %5167 = vmatprep.mubr.bf16.mxu0 %v4992
      %5168 = vmatmul.mubr.bf16.gmra.mrb[0].mxu0 %v4991
      %v5169 = vpop.f32.mrb[0].mxu0
      %v5170 = vadd.f32 %v4948, %v5169
      %v5171 = vpop.f32.mrb[0].mxu0
      %v5172 = vpop.f32.mrb[0].mxu0
      %v5173 = vadd.f32 %v4948, %v5172
      %v5174 = vpop.f32.mrb[0].mxu0
      %5175 = vmatprep.mubr.bf16.mxu0 %v4994
      %5176 = vmatmul.mubr.bf16.gmra.mrb[0].mxu0 %v4993
      %v5177 = vpop.f32.mrb[0].mxu0
      %v5178 = vadd.f32 %v4948, %v5177
      %v5179 = vpop.f32.mrb[0].mxu0
      %v5180 = vpop.f32.mrb[0].mxu0
      %v5181 = vpop.f32.mrb[0].mxu0
      %5182 = vdwg.mxu0
      %v5183 = vmax.f32 %v5138, 0.0
      %v5184 = vmax.f32 %v5141, 0.0
      %v5185 = vmax.f32 %v5146, 0.0
      %v5186 = vmax.f32 %v5149, 0.0
      %v5187 = vmax.f32 %v5154, 0.0
      %v5188 = vmax.f32 %v5157, 0.0
      %v5189 = vmax.f32 %v5162, 0.0
      %v5190 = vmax.f32 %v5165, 0.0
      %v5191 = vmax.f32 %v5170, 0.0
      %v5192 = vmax.f32 %v5173, 0.0
      %v5193 = vmax.f32 %v5178, 0.0
      %v5194 = vpack.c.bf16 %v5184, %v5183
      %v5195 = vpack.c.bf16 %v5186, %v5185
      %v5196 = vpack.c.bf16 %v5188, %v5187
      %v5197 = vpack.c.bf16 %v5190, %v5189
      %v5198 = vpack.c.bf16 %v5192, %v5191
      %v5199 = vpack.c.bf16 %v5193, %v5193
      %v5206 = vunpack.c.l.b16 %v5194
      %v5207 = vunpack.c.h.b16 %v5194
      %v5208 = vunpack.c.l.b16 %v5195
      %v5209 = vunpack.c.h.b16 %v5195
      %v5210 = vunpack.c.l.b16 %v5196
      %v5211 = vunpack.c.h.b16 %v5196
      %v5212 = vunpack.c.l.b16 %v5197
      %v5213 = vunpack.c.h.b16 %v5197
      %v5214 = vunpack.c.l.b16 %v5198
      %v5215 = vunpack.c.h.b16 %v5198
      %v5216 = vunpack.c.l.b16 %v5199
      %v5217 = vpack.c.b16 %v5206, %v5206
      %v5218 = vpack.c.b16 %v5207, %v5207
      %v5219 = vpack.c.b16 %v5208, %v5208
      %v5220 = vpack.c.b16 %v5209, %v5209
      %v5221 = vpack.c.b16 %v5210, %v5210
      %v5222 = vpack.c.b16 %v5211, %v5211
      %v5223 = vpack.c.b16 %v5212, %v5212
      %v5224 = vpack.c.b16 %v5213, %v5213
      %v5225 = vpack.c.b16 %v5214, %v5214
      %v5226 = vpack.c.b16 %v5215, %v5215
      %v5227 = vpack.c.b16 %v5216, %v5216
      %vm5239 = vcmask 257024
      %5240 = vst.msk [vmem:[%s224] sm:$0xf] %vm5239, %v5217
      %5241 = vst.msk [vmem:[%s224 + $0x4] sm:$0xf] %vm5239, %v5218
      %5242 = vst.msk [vmem:[%s224 + $0x8] sm:$0xf] %vm5239, %v5219
      %5243 = vst.msk [vmem:[%s224 + $0xc] sm:$0xf] %vm5239, %v5220
      %5244 = vst.msk [vmem:[%s224 + $0x10] sm:$0xf] %vm5239, %v5221
      %5245 = vst.msk [vmem:[%s224 + $0x14] sm:$0xf] %vm5239, %v5222
      %5246 = vst.msk [vmem:[%s224 + $0x18] sm:$0xf] %vm5239, %v5223
      %5247 = vst.msk [vmem:[%s224 + $0x1c] sm:$0xf] %vm5239, %v5224
      %5248 = vst.msk [vmem:[%s224 + $0x20] sm:$0xf] %vm5239, %v5225
      %5249 = vst.msk [vmem:[%s224 + $0x24] sm:$0xf] %vm5239, %v5226
      %vm5250 = vcmask 253952
      %vm5251 = vmand %vm5250, %vm4333
      %v5252 = vld [vmem:[%s224 + $0x28] sm:$0x1]
      %v5253 = vsel %vm5251, %v5227, %v5252
      %5254 = vst [vmem:[%s224 + $0x28] sm:$0x1] %v5253
      %p5255 = scmp.lt.s32.totalorder %s16, 1
      %s5256 = scalar_select %p5255, %s16, 1
      %s5257 = smul.addr %s5256, 11
      %s5258 = smul.addr %s5257, 4
      %s5259 = scalar_lea.vmem %s5, %s5258
      // Predicated region
      $region41: #{dqn_forward.2} parent=39 // pred_check
        %p5260 = pneg %p144
      $region42: #{dqn_forward.2} parent=39 // pred_check_branch
        %5262 = sbr.rel (%p5260) target = $region44
      $region43: #{dqn_forward.2} parent=39 // pred_region
        _
      $region44: #{dqn_forward.2} parent=39 // pred_fallthru
        _
    $region40: #{dqn_forward.2} parent=5 // pred_fallthru
      _
    %p5263 = scmp.le.s32.totalorder 2, %s11
    // Predicated region
    $region45: #{dqn_forward.2} parent=5 // pred_check
      %p5264 = pneg %p5263
    $region46: #{dqn_forward.2} parent=5 // pred_check_branch
      %5266 = sbr.rel (%p5264) target = $region48
    $region47: #{dqn_forward.2} parent=5 // pred_region
      %s5267 = ssub.s32 %s11, 2
      // Predicated region
      $region49: #{dqn_forward.2} parent=47 // pred_check
        %p5268 = pneg %p150
      $region50: #{dqn_forward.2} parent=47 // pred_check_branch
        %5270 = sbr.rel (%p5268) target = $region52
      $region51: #{dqn_forward.2} parent=47 // pred_region
        %p5271 = scmp.lt.s32.totalorder %s17, 1
        %s5272 = scalar_select %p5271, %s17, 1
        %s5273 = smul.addr %s5272, 11
        %s5274 = smul.addr %s5273, 4
        %s5275 = scalar_lea.vmem %s5, %s5274
      $region52: #{dqn_forward.2} parent=47 // pred_fallthru
        _
    $region48: #{dqn_forward.2} parent=5 // pred_fallthru
      _
  $region6: #{dqn_forward.2} parent=0 // loop_footer
    %s15 = sadd.s32 1, %s11
  $region7: #{dqn_forward.2} parent=0 // loop_footer_branch
    %10 = sbr.rel target = $region3
  $region8: #{dqn_forward.2} parent=0 // loop_exit
    _

</llo_original>
